<compile_context>
chip_gen: v5e
topology: v5e:2x2
jax: 0.10.0
libtpu: 0.0.40
codegen_flags: <defaults>
</compile_context>

<pallas_src>
import functools
import math

import jax
import jax.numpy as jnp
from jax import lax
from jax.scipy.linalg import block_diag
from jax.experimental import pallas as pl
from jax.experimental.pallas import tpu as pltpu


def _kleaky(x, slope=0.01):
    return jnp.where(x >= 0, x, slope * x)


# ----------------------------------------------------------------------------
# The single fused kernel
# ----------------------------------------------------------------------------
def _bic_kernel(desB_ref, sta_ref, gfeat_ref, key_bias_ref, gmask_ref, ahat_ref,
                tdes_w_ref, tdes_b_ref, tsta_w_ref, tsta_b_ref, gw_ref, gb_ref,
                t_wqkv_ref, t_bqkv_ref, t_wo_ref, t_bo_ref,
                gcn_w_ref, gcn_b_ref, g_wqkv_ref, g_bqkv_ref, g_wo_ref, g_bo_ref,
                wt_ref, wg_ref,
                sem_w_ref, sem_b_ref, fc_w_ref, fc_b_ref, cls_w_ref, cls_b_ref,
                out_ref,
                tstate_ref, gstate_ref,
                *, batch, seq, num_heads, num_layers, fixed_size):
    f32 = jnp.float32
    B, H, L, F = batch, num_heads, num_layers, fixed_size
    S = seq + 1
    BS = B * S
    D = tdes_w_ref.shape[1]
    Dh = D // H
    N = gfeat_ref.shape[0]
    scale = 1.0 / math.sqrt(Dh)
    cw = -(-S // F)                       # pooling window (both axes)

    # ---------------- encodings (TextEncoding + fused GraphEncoding) --------
    t_des = jnp.dot(desB_ref[...], tdes_w_ref[...],
                    preferred_element_type=f32) + tdes_b_ref[...]      # (B, D)
    t_sta = jnp.dot(sta_ref[...], tsta_w_ref[...],
                    preferred_element_type=f32) + tsta_b_ref[...]      # (B*seq, D)
    g0 = jnp.dot(gfeat_ref[...], gw_ref[...],
                 preferred_element_type=f32) + gb_ref[...]             # (N, D)

    res_t = t_des                          # pre-activation residual (head token)
    res_g = g0[0:B, :]                     # pre-activation residual (user nodes)

    # activated initial state, assembled with plain sub-window stores
    tstate_ref[:, 0:1, :] = _kleaky(t_des).reshape(B, 1, D)
    tstate_ref[:, 1:, :] = _kleaky(t_sta).reshape(B, seq, D)
    gstate_ref[...] = _kleaky(g0)

    key_bias = key_bias_ref[...]           # (B, S)  0 / -1e30 additive key mask
    gmask = gmask_ref[...]                 # (B, N)  neighbourhood mask
    ahat = ahat_ref[...]                   # (N, N)  normalized GCN adjacency

    sem_acc = jnp.zeros((B, D), f32)       # sum over layers of pooled @ sem_w
    col3 = lax.broadcasted_iota(jnp.int32, (B, S, S), 2)
    row2 = lax.broadcasted_iota(jnp.int32, (B, S), 1)

    for l in range(L):                     # num_layers statically unrolled
        x = tstate_ref[...].reshape(BS, D)
        g_in = gstate_ref[...]

        # ---- text multi-head self-attention: per-batch (S,S) tiles --------
        qkv = (jnp.dot(x, t_wqkv_ref[l], preferred_element_type=f32)
               + t_bqkv_ref[l])                                        # (BS, 3D)
        attn_acc = jnp.zeros((B, S, S), f32)
        t_out = jnp.zeros((BS, D), f32)
        t_wo = t_wo_ref[l]
        for h in range(H):
            qh = qkv[:, h * Dh:(h + 1) * Dh].reshape(B, S, Dh)
            kh = qkv[:, D + h * Dh:D + (h + 1) * Dh].reshape(B, S, Dh)
            vh = qkv[:, 2 * D + h * Dh:2 * D + (h + 1) * Dh].reshape(B, S, Dh)
            s = jnp.einsum('bqd,bkd->bqk', qh, kh,
                           preferred_element_type=f32) * scale
            s = s + key_bias[:, None, :]
            s = s - jnp.max(s, axis=-1, keepdims=True)
            e = jnp.exp(s)
            p = e / jnp.sum(e, axis=-1, keepdims=True)
            attn_acc = attn_acc + p
            oh = jnp.einsum('bqk,bkd->bqd', p, vh, preferred_element_type=f32)
            t_out = t_out + jnp.dot(oh.reshape(BS, Dh),
                                    t_wo[h * Dh:(h + 1) * Dh, :],
                                    preferred_element_type=f32)
        t_out = t_out + t_bo_ref[l]

        # ---- SemanticEncoding: max-pool of head-avg attention, folded fc ---
        attn_avg = attn_acc * (1.0 / H)                                # (B, S, S)
        for j in range(F):
            cmask = jnp.logical_and(col3 >= j * cw, col3 < (j + 1) * cw)
            colmax = jnp.max(jnp.where(cmask, attn_avg, 0.0), axis=2)  # (B, S)
            for i in range(F):
                rmask = jnp.logical_and(row2 >= i * cw, row2 < (i + 1) * cw)
                cell = jnp.max(jnp.where(rmask, colmax, 0.0),
                               axis=1, keepdims=True)                  # (B, 1)
                k = i * F + j
                sem_acc = sem_acc + cell * sem_w_ref[k:k + 1, :]

        # ---- graph: dense GCN + masked neighbourhood attention -------------
        xw = jnp.dot(g_in, gcn_w_ref[l], preferred_element_type=f32)
        res = jnp.dot(ahat, xw, preferred_element_type=f32) + gcn_b_ref[l]  # (N, D)
        qkv_g = (jnp.dot(res, g_wqkv_ref[l], preferred_element_type=f32)
                 + g_bqkv_ref[l])                                      # (N, 3D)
        users = jnp.zeros((B, D), f32)
        g_wo = g_wo_ref[l]
        for h in range(H):
            qh = qkv_g[0:B, h * Dh:(h + 1) * Dh]                       # user queries
            kh = qkv_g[:, D + h * Dh:D + (h + 1) * Dh]
            vh = qkv_g[:, 2 * D + h * Dh:2 * D + (h + 1) * Dh]
            s = lax.dot_general(qh, kh, (((1,), (1,)), ((), ())),
                                preferred_element_type=f32) * scale + gmask
            s = s - jnp.max(s, axis=-1, keepdims=True)
            e = jnp.exp(s)
            p = e / jnp.sum(e, axis=-1, keepdims=True)
            head = jnp.dot(p, vh, preferred_element_type=f32)          # (B, Dh)
            users = users + jnp.dot(head, g_wo[h * Dh:(h + 1) * Dh, :],
                                    preferred_element_type=f32)
        users = users + g_bo_ref[l]                                    # (B, D)

        # ---- InterHead fusion (pairwise softmax) ----------------------------
        tstate_ref[...] = t_out.reshape(B, S, D)
        t_head = tstate_ref[:, 0:1, :].reshape(B, D)
        g_head = users
        ts = jnp.dot(t_head, wt_ref[l], preferred_element_type=f32)
        gs = jnp.dot(g_head, wg_ref[l], preferred_element_type=f32)
        a_tt = jnp.sum(t_head * ts, axis=-1, keepdims=True)
        a_tg = jnp.sum(t_head * gs, axis=-1, keepdims=True)
        a_gt = jnp.sum(g_head * ts, axis=-1, keepdims=True)
        a_gg = jnp.sum(g_head * gs, axis=-1, keepdims=True)
        m1 = jnp.maximum(a_tt, a_tg)
        e_tt = jnp.exp(a_tt - m1); e_tg = jnp.exp(a_tg - m1)
        d1 = e_tt + e_tg
        m2 = jnp.maximum(a_gt, a_gg)
        e_gt = jnp.exp(a_gt - m2); e_gg = jnp.exp(a_gg - m2)
        d2 = e_gt + e_gg
        t_new = (e_tt / d1) * t_head + (e_tg / d1) * g_head
        # PyTorch reference forms graph from the *updated* text head.
        g_new = (e_gt / d2) * t_new + (e_gg / d2) * g_head

        # ---- state write-back with plain stores -----------------------------
        tstate_ref[:, 0:1, :] = t_new.reshape(B, 1, D)
        gstate_ref[...] = res
        gstate_ref[0:B, :] = g_new

    # ---------------- head: residual + LeakyReLU + fc + classifier ----------
    t_head_f = tstate_ref[:, 0:1, :].reshape(B, D)
    g_head_f = gstate_ref[0:B, :]
    th = _kleaky(res_t + t_head_f)
    gh = _kleaky(res_g + g_head_f)
    sem = _kleaky(sem_acc * (1.0 / L) + sem_b_ref[...])
    fcw = fc_w_ref[...]
    rep = (jnp.dot(th, fcw[0:D, :], preferred_element_type=f32)
           + jnp.dot(gh, fcw[D:2 * D, :], preferred_element_type=f32)
           + jnp.dot(sem, fcw[2 * D:3 * D, :], preferred_element_type=f32)
           + fc_b_ref[...])
    rep = _kleaky(rep)
    out_ref[...] = (jnp.dot(rep, cls_w_ref[...], preferred_element_type=f32)
                    + cls_b_ref[...])


# ----------------------------------------------------------------------------
# Forward (JAX glue: layout-only precompute + ONE pallas_call)
# ----------------------------------------------------------------------------
def bic_forward(params, text, padding_mask, edge_index, edge_type, tweet,
                description, numerical, categorical, *,
                batch_size, num_layers, num_heads, fixed_size):
    # TODO(synk): Dropout layers are identity (dropout=0 / inference); only
    #             graph_mode='gcn' and semantic_mode='mean' are implemented.
    del edge_type  # only used by the 'rgcn' graph mode
    B = batch_size
    seq = text.shape[1]
    S = seq + 1
    D = params["text_enc"]["des_w"].shape[1]
    N = description.shape[0]

    desB = description[:B].astype(jnp.float32)
    sta_flat = text[:B].astype(jnp.float32).reshape(B * seq, -1)
    gfeat = jnp.concatenate([numerical, categorical, description, tweet],
                            axis=-1).astype(jnp.float32)

    # additive key-padding bias (des token is never masked)
    key_bias = jnp.concatenate(
        [jnp.zeros((B, 1), jnp.float32),
         jnp.where(padding_mask[:B], -1e30, 0.0).astype(jnp.float32)], axis=1)

    # dense normalized GCN adjacency + neighbourhood attention mask
    # TODO(synk): matches the PyTorch per-node loop only when edge_index has
    #             no self-loops / duplicate edges (true for this dataset).
    src, dst = edge_index[0], edge_index[1]
    A = jnp.zeros((N, N), jnp.float32).at[dst, src].set(1.0)
    A_loop = A + jnp.eye(N, dtype=jnp.float32)
    dinv = lax.rsqrt(jnp.sum(A_loop, axis=1))
    a_hat = dinv[:, None] * A_loop * dinv[None, :]
    allowed = jnp.logical_or((A + A.T) > 0, jnp.eye(N, dtype=bool))[:B]
    gmask = jnp.where(allowed, 0.0, -1e30).astype(jnp.float32)

    te = params["text_enc"]
    lp = params["layers"]
    kern = functools.partial(_bic_kernel, batch=B, seq=seq,
                             num_heads=num_heads, num_layers=num_layers,
                             fixed_size=fixed_size)
    return pl.pallas_call(
        kern,
        out_shape=jax.ShapeDtypeStruct((B, params["cls_w"].shape[1]),
                                       jnp.float32),
        scratch_shapes=[pltpu.VMEM((B, S, D), jnp.float32),   # text state
                        pltpu.VMEM((N, D), jnp.float32)],     # graph state
    )(desB, sta_flat, gfeat, key_bias, gmask, a_hat,
      te["des_w"], te["des_b"], te["sta_w"], te["sta_b"],
      params["graph_w"], params["graph_b"],
      lp["t_wqkv"], lp["t_bqkv"], lp["t_wo"], lp["t_bo"],
      lp["gcn_w"], lp["gcn_b"], lp["g_wqkv"], lp["g_bqkv"], lp["g_wo"], lp["g_bo"],
      lp["wt"], lp["wg"],
      params["sem_w"], params["sem_b"], params["fc_w"], params["fc_b"],
      params["cls_w"], params["cls_b"])


# ----------------------------------------------------------------------------
# Deterministic parameter init (weights pre-fused / layer-stacked here, so the
# per-call path has zero parameter-reshaping ops)
# ----------------------------------------------------------------------------
def init_params(key, hidden, des_dim, sta_dim, twe_dim, num_dim, cat_dim,
                num_layers, fixed_size):
    keys = iter(jax.random.split(key, 512))

    def W(shape):
        return 0.1 * jax.random.normal(next(keys), shape, jnp.float32)

    q = hidden // 4
    # GraphEncoding: four linears fused into one block-diagonal weight (once).
    gnum_w, gcat_w = W((num_dim, q)), W((cat_dim, q))
    gdes_w, gtwe_w = W((des_dim, q)), W((twe_dim, q))
    graph_w = block_diag(gnum_w, gcat_w, gdes_w, gtwe_w).astype(jnp.float32)
    graph_b = jnp.concatenate([W((q,)), W((q,)), W((q,)), W((q,))]).reshape(1, hidden)

    L = num_layers
    layers = dict(
        t_wqkv=W((L, hidden, 3 * hidden)), t_bqkv=W((L, 1, 3 * hidden)),
        t_wo=W((L, hidden, hidden)), t_bo=W((L, 1, hidden)),
        gcn_w=W((L, hidden, hidden)), gcn_b=W((L, 1, hidden)),
        g_wqkv=W((L, hidden, 3 * hidden)), g_bqkv=W((L, 1, 3 * hidden)),
        g_wo=W((L, hidden, hidden)), g_bo=W((L, 1, hidden)),
        wt=W((L, hidden, hidden)), wg=W((L, hidden, hidden)))

    return dict(
        text_enc=dict(des_w=W((des_dim, hidden)), des_b=W((1, hidden)),
                      sta_w=W((sta_dim, hidden)), sta_b=W((1, hidden))),
        graph_w=graph_w, graph_b=graph_b,
        layers=layers,
        sem_w=W((fixed_size * fixed_size, hidden)), sem_b=W((1, hidden)),
        fc_w=W((3 * hidden, hidden)), fc_b=W((1, hidden)),
        cls_w=W((hidden, 2)), cls_b=W((1, 2)),
    )


# ----------------------------------------------------------------------------
if __name__ == "__main__":
    hidden_dim = 32
    num_layers = 2
    num_heads = 4
    fixed_size = 4
    des_dim, sta_dim, twe_dim, num_dim, cat_dim = 16, 12, 16, 5, 3
    batch_size = 4          # number of user nodes
    num_nodes = 10          # users + tweets
    seq = 7                 # status sequence length (text seq = seq + 1 with des)

    key = jax.random.PRNGKey(0)
    pkey, dkey = jax.random.split(key)
    params = init_params(pkey, hidden_dim, des_dim, sta_dim, twe_dim, num_dim,
                         cat_dim, num_layers, fixed_size)

    dkeys = jax.random.split(dkey, 8)
    text = jax.random.normal(dkeys[0], (batch_size + 2, seq, sta_dim), jnp.float32)
    padding_mask = jnp.zeros((batch_size + 2, seq), bool).at[:, seq - 2:].set(True)
    description = jax.random.normal(dkeys[1], (num_nodes, des_dim), jnp.float32)
    tweet = jax.random.normal(dkeys[2], (num_nodes, twe_dim), jnp.float32)
    numerical = jax.random.normal(dkeys[3], (num_nodes, num_dim), jnp.float32)
    categorical = jax.random.normal(dkeys[4], (num_nodes, cat_dim), jnp.float32)
    edge_index = jnp.array(
        [[4, 5, 6, 7, 8, 9, 0, 1, 2, 3, 1, 2],
         [0, 1, 2, 3, 0, 1, 4, 5, 6, 7, 0, 3]], jnp.int32)
    edge_type = jnp.zeros((edge_index.shape[1],), jnp.int32)

    fwd = jax.jit(functools.partial(
        bic_forward, batch_size=batch_size, num_layers=num_layers,
        num_heads=num_heads, fixed_size=fixed_size))

    out = fwd(params, text, padding_mask, edge_index, edge_type, tweet,
              description, numerical, categorical)
    out = jax.block_until_ready(out)
    assert out.shape == (batch_size, 2) and out.dtype == jnp.float32
    assert bool(jnp.all(jnp.isfinite(out)))
    print("KERNEL_OK")
</pallas_src>

<mosaic_0001>
module attributes {stable_mosaic.version = 11 : i64} {
  func.func @_bic_kernel(%arg0: memref<4x16xf32, #tpu.memory_space<vmem>>, %arg1: memref<28x12xf32, #tpu.memory_space<vmem>>, %arg2: memref<10x40xf32, #tpu.memory_space<vmem>>, %arg3: memref<4x8xf32, #tpu.memory_space<vmem>>, %arg4: memref<4x10xf32, #tpu.memory_space<vmem>>, %arg5: memref<10x10xf32, #tpu.memory_space<vmem>>, %arg6: memref<16x32xf32, #tpu.memory_space<vmem>>, %arg7: memref<1x32xf32, #tpu.memory_space<vmem>>, %arg8: memref<12x32xf32, #tpu.memory_space<vmem>>, %arg9: memref<1x32xf32, #tpu.memory_space<vmem>>, %arg10: memref<40x32xf32, #tpu.memory_space<vmem>>, %arg11: memref<1x32xf32, #tpu.memory_space<vmem>>, %arg12: memref<2x32x96xf32, #tpu.memory_space<vmem>>, %arg13: memref<2x1x96xf32, #tpu.memory_space<vmem>>, %arg14: memref<2x32x32xf32, #tpu.memory_space<vmem>>, %arg15: memref<2x1x32xf32, #tpu.memory_space<vmem>>, %arg16: memref<2x32x32xf32, #tpu.memory_space<vmem>>, %arg17: memref<2x1x32xf32, #tpu.memory_space<vmem>>, %arg18: memref<2x32x96xf32, #tpu.memory_space<vmem>>, %arg19: memref<2x1x96xf32, #tpu.memory_space<vmem>>, %arg20: memref<2x32x32xf32, #tpu.memory_space<vmem>>, %arg21: memref<2x1x32xf32, #tpu.memory_space<vmem>>, %arg22: memref<2x32x32xf32, #tpu.memory_space<vmem>>, %arg23: memref<2x32x32xf32, #tpu.memory_space<vmem>>, %arg24: memref<16x32xf32, #tpu.memory_space<vmem>>, %arg25: memref<1x32xf32, #tpu.memory_space<vmem>>, %arg26: memref<96x32xf32, #tpu.memory_space<vmem>>, %arg27: memref<1x32xf32, #tpu.memory_space<vmem>>, %arg28: memref<32x2xf32, #tpu.memory_space<vmem>>, %arg29: memref<1x2xf32, #tpu.memory_space<vmem>>, %arg30: memref<4x2xf32, #tpu.memory_space<vmem>>, %arg31: memref<4x8x32xf32, #tpu.memory_space<vmem>>, %arg32: memref<10x32xf32, #tpu.memory_space<vmem>>) attributes {dimension_semantics = [], scalar_prefetch = 0 : i64, scratch_operands = 2 : i64, tpu.core_type = #tpu.core_type<tc>} {
    %c0 = arith.constant 0 : index
    %c0_0 = arith.constant 0 : index
    %0 = vector.load %arg0[%c0, %c0_0] : memref<4x16xf32, #tpu.memory_space<vmem>>, vector<4x16xf32>
    %c0_1 = arith.constant 0 : index
    %c0_2 = arith.constant 0 : index
    %1 = vector.load %arg6[%c0_1, %c0_2] : memref<16x32xf32, #tpu.memory_space<vmem>>, vector<16x32xf32>
    %cst = arith.constant dense<0.000000e+00> : vector<4x32xf32>
    %2 = tpu.matmul %0, %1, %cst {dimension_numbers = #tpu.dot_dimension_numbers<[1], [0], [0], [1], [0, 0, 1, 1], [], []>} : vector<4x16xf32>, vector<16x32xf32>, vector<4x32xf32> -> vector<4x32xf32>
    %c0_3 = arith.constant 0 : index
    %c0_4 = arith.constant 0 : index
    %3 = vector.load %arg7[%c0_3, %c0_4] : memref<1x32xf32, #tpu.memory_space<vmem>>, vector<1x32xf32>
    %4 = vector.broadcast %3 : vector<1x32xf32> to vector<4x32xf32>
    %5 = arith.addf %2, %4 : vector<4x32xf32>
    %c0_5 = arith.constant 0 : index
    %c0_6 = arith.constant 0 : index
    %6 = vector.load %arg1[%c0_5, %c0_6] : memref<28x12xf32, #tpu.memory_space<vmem>>, vector<28x12xf32>
    %c0_7 = arith.constant 0 : index
    %c0_8 = arith.constant 0 : index
    %7 = vector.load %arg8[%c0_7, %c0_8] : memref<12x32xf32, #tpu.memory_space<vmem>>, vector<12x32xf32>
    %cst_9 = arith.constant dense<0.000000e+00> : vector<28x32xf32>
    %8 = tpu.matmul %6, %7, %cst_9 {dimension_numbers = #tpu.dot_dimension_numbers<[1], [0], [0], [1], [0, 0, 1, 1], [], []>} : vector<28x12xf32>, vector<12x32xf32>, vector<28x32xf32> -> vector<28x32xf32>
    %c0_10 = arith.constant 0 : index
    %c0_11 = arith.constant 0 : index
    %9 = vector.load %arg9[%c0_10, %c0_11] : memref<1x32xf32, #tpu.memory_space<vmem>>, vector<1x32xf32>
    %10 = vector.broadcast %9 : vector<1x32xf32> to vector<28x32xf32>
    %11 = arith.addf %8, %10 : vector<28x32xf32>
    %c0_12 = arith.constant 0 : index
    %c0_13 = arith.constant 0 : index
    %12 = vector.load %arg2[%c0_12, %c0_13] : memref<10x40xf32, #tpu.memory_space<vmem>>, vector<10x40xf32>
    %c0_14 = arith.constant 0 : index
    %c0_15 = arith.constant 0 : index
    %13 = vector.load %arg10[%c0_14, %c0_15] : memref<40x32xf32, #tpu.memory_space<vmem>>, vector<40x32xf32>
    %cst_16 = arith.constant dense<0.000000e+00> : vector<10x32xf32>
    %14 = tpu.matmul %12, %13, %cst_16 {dimension_numbers = #tpu.dot_dimension_numbers<[1], [0], [0], [1], [0, 0, 1, 1], [], []>} : vector<10x40xf32>, vector<40x32xf32>, vector<10x32xf32> -> vector<10x32xf32>
    %c0_17 = arith.constant 0 : index
    %c0_18 = arith.constant 0 : index
    %15 = vector.load %arg11[%c0_17, %c0_18] : memref<1x32xf32, #tpu.memory_space<vmem>>, vector<1x32xf32>
    %16 = vector.broadcast %15 : vector<1x32xf32> to vector<10x32xf32>
    %17 = arith.addf %14, %16 : vector<10x32xf32>
    %18 = vector.extract_strided_slice %17 {offsets = [0, 0], sizes = [4, 32], strides = [1, 1]} : vector<10x32xf32> to vector<4x32xf32>
    %cst_19 = arith.constant 0.000000e+00 : f32
    %19 = vector.broadcast %cst_19 : f32 to vector<4x32xf32>
    %20 = arith.cmpf oge, %5, %19 : vector<4x32xf32>
    %cst_20 = arith.constant 0.00999999977 : f32
    %21 = vector.broadcast %cst_20 : f32 to vector<4x32xf32>
    %22 = arith.mulf %21, %5 : vector<4x32xf32>
    %23 = arith.select %20, %5, %22 : vector<4x32xi1>, vector<4x32xf32>
    %24 = vector.shape_cast %23 : vector<4x32xf32> to vector<4x1x32xf32>
    %c0_21 = arith.constant 0 : index
    %c0_22 = arith.constant 0 : index
    %c0_23 = arith.constant 0 : index
    %25 = vector.load %arg31[%c0_21, %c0_22, %c0_23] : memref<4x8x32xf32, #tpu.memory_space<vmem>>, vector<4x1x32xf32>
    tpu.vector_store %arg31[%c0_21, %c0_22, %c0_23], %24 {strides = array<i32>} : memref<4x8x32xf32, #tpu.memory_space<vmem>>, vector<4x1x32xf32>,
    %cst_24 = arith.constant 0.000000e+00 : f32
    %26 = vector.broadcast %cst_24 : f32 to vector<28x32xf32>
    %27 = arith.cmpf oge, %11, %26 : vector<28x32xf32>
    %cst_25 = arith.constant 0.00999999977 : f32
    %28 = vector.broadcast %cst_25 : f32 to vector<28x32xf32>
    %29 = arith.mulf %28, %11 : vector<28x32xf32>
    %30 = arith.select %27, %11, %29 : vector<28x32xi1>, vector<28x32xf32>
    %31 = vector.shape_cast %30 : vector<28x32xf32> to vector<4x7x32xf32>
    %c0_26 = arith.constant 0 : index
    %c1 = arith.constant 1 : index
    %c0_27 = arith.constant 0 : index
    %32 = vector.load %arg31[%c0_26, %c1, %c0_27] : memref<4x8x32xf32, #tpu.memory_space<vmem>>, vector<4x7x32xf32>
    tpu.vector_store %arg31[%c0_26, %c1, %c0_27], %31 {strides = array<i32>} : memref<4x8x32xf32, #tpu.memory_space<vmem>>, vector<4x7x32xf32>,
    %cst_28 = arith.constant 0.000000e+00 : f32
    %33 = vector.broadcast %cst_28 : f32 to vector<10x32xf32>
    %34 = arith.cmpf oge, %17, %33 : vector<10x32xf32>
    %cst_29 = arith.constant 0.00999999977 : f32
    %35 = vector.broadcast %cst_29 : f32 to vector<10x32xf32>
    %36 = arith.mulf %35, %17 : vector<10x32xf32>
    %37 = arith.select %34, %17, %36 : vector<10x32xi1>, vector<10x32xf32>
    %c0_30 = arith.constant 0 : index
    %c0_31 = arith.constant 0 : index
    %38 = vector.load %arg32[%c0_30, %c0_31] : memref<10x32xf32, #tpu.memory_space<vmem>>, vector<10x32xf32>
    tpu.vector_store %arg32[%c0_30, %c0_31], %37 {strides = array<i32>} : memref<10x32xf32, #tpu.memory_space<vmem>>, vector<10x32xf32>,
    %c0_32 = arith.constant 0 : index
    %c0_33 = arith.constant 0 : index
    %39 = vector.load %arg3[%c0_32, %c0_33] : memref<4x8xf32, #tpu.memory_space<vmem>>, vector<4x8xf32>
    %c0_34 = arith.constant 0 : index
    %c0_35 = arith.constant 0 : index
    %40 = vector.load %arg4[%c0_34, %c0_35] : memref<4x10xf32, #tpu.memory_space<vmem>>, vector<4x10xf32>
    %c0_36 = arith.constant 0 : index
    %c0_37 = arith.constant 0 : index
    %41 = vector.load %arg5[%c0_36, %c0_37] : memref<10x10xf32, #tpu.memory_space<vmem>>, vector<10x10xf32>
    %cst_38 = arith.constant 0.000000e+00 : f32
    %42 = vector.broadcast %cst_38 : f32 to vector<4x32xf32>
    %43 = tpu.iota {dimensions = array<i32: 2>} : vector<4x8x8xi32>
    %44 = tpu.iota {dimensions = array<i32: 1>} : vector<4x8xi32>
    %c0_39 = arith.constant 0 : index
    %c0_40 = arith.constant 0 : index
    %c0_41 = arith.constant 0 : index
    %45 = vector.load %arg31[%c0_39, %c0_40, %c0_41] : memref<4x8x32xf32, #tpu.memory_space<vmem>>, vector<4x8x32xf32>
    %46 = vector.shape_cast %45 : vector<4x8x32xf32> to vector<32x32xf32>
    %c0_42 = arith.constant 0 : index
    %c0_43 = arith.constant 0 : index
    %47 = vector.load %arg32[%c0_42, %c0_43] : memref<10x32xf32, #tpu.memory_space<vmem>>, vector<10x32xf32>
    %c0_44 = arith.constant 0 : index
    %c0_45 = arith.constant 0 : index
    %c0_46 = arith.constant 0 : index
    %48 = vector.load %arg12[%c0_44, %c0_45, %c0_46] : memref<2x32x96xf32, #tpu.memory_space<vmem>>, vector<1x32x96xf32>
    %49 = vector.shape_cast %48 : vector<1x32x96xf32> to vector<32x96xf32>
    %cst_47 = arith.constant dense<0.000000e+00> : vector<32x96xf32>
    %50 = tpu.matmul %46, %49, %cst_47 {dimension_numbers = #tpu.dot_dimension_numbers<[1], [0], [0], [1], [0, 0, 1, 1], [], []>} : vector<32x32xf32>, vector<32x96xf32>, vector<32x96xf32> -> vector<32x96xf32>
    %c0_48 = arith.constant 0 : index
    %c0_49 = arith.constant 0 : index
    %c0_50 = arith.constant 0 : index
    %51 = vector.load %arg13[%c0_48, %c0_49, %c0_50] : memref<2x1x96xf32, #tpu.memory_space<vmem>>, vector<1x1x96xf32>
    %52 = vector.shape_cast %51 : vector<1x1x96xf32> to vector<1x96xf32>
    %53 = vector.broadcast %52 : vector<1x96xf32> to vector<32x96xf32>
    %54 = arith.addf %50, %53 : vector<32x96xf32>
    %cst_51 = arith.constant 0.000000e+00 : f32
    %55 = vector.broadcast %cst_51 : f32 to vector<4x8x8xf32>
    %cst_52 = arith.constant 0.000000e+00 : f32
    %56 = vector.broadcast %cst_52 : f32 to vector<32x32xf32>
    %c0_53 = arith.constant 0 : index
    %c0_54 = arith.constant 0 : index
    %c0_55 = arith.constant 0 : index
    %57 = vector.load %arg14[%c0_53, %c0_54, %c0_55] : memref<2x32x32xf32, #tpu.memory_space<vmem>>, vector<1x32x32xf32>
    %58 = vector.shape_cast %57 : vector<1x32x32xf32> to vector<32x32xf32>
    %59 = vector.extract_strided_slice %54 {offsets = [0, 0], sizes = [32, 8], strides = [1, 1]} : vector<32x96xf32> to vector<32x8xf32>
    %60 = vector.shape_cast %59 : vector<32x8xf32> to vector<4x8x8xf32>
    %61 = vector.extract_strided_slice %54 {offsets = [0, 32], sizes = [32, 8], strides = [1, 1]} : vector<32x96xf32> to vector<32x8xf32>
    %62 = vector.shape_cast %61 : vector<32x8xf32> to vector<4x8x8xf32>
    %63 = vector.extract_strided_slice %54 {offsets = [0, 64], sizes = [32, 8], strides = [1, 1]} : vector<32x96xf32> to vector<32x8xf32>
    %64 = vector.shape_cast %63 : vector<32x8xf32> to vector<4x8x8xf32>
    "tpu.trace_start"() <{level = 10 : i32, message = "bqd,bkd->bqk"}> : () -> ()
    %cst_56 = arith.constant dense<0.000000e+00> : vector<4x8x8xf32>
    %65 = tpu.matmul %60, %62, %cst_56 {dimension_numbers = #tpu.dot_dimension_numbers<[2], [2], [1], [1], [0, 0, 0, 1, 1, 1], [0], [0]>} : vector<4x8x8xf32>, vector<4x8x8xf32>, vector<4x8x8xf32> -> vector<4x8x8xf32>
    "tpu.trace_stop"() : () -> ()
    %cst_57 = arith.constant 0.353553385 : f32
    %66 = vector.broadcast %cst_57 : f32 to vector<4x8x8xf32>
    %67 = arith.mulf %65, %66 : vector<4x8x8xf32>
    %68 = vector.shape_cast %39 : vector<4x8xf32> to vector<4x1x8xf32>
    %69 = vector.broadcast %68 : vector<4x1x8xf32> to vector<4x8x8xf32>
    %70 = arith.addf %67, %69 : vector<4x8x8xf32>
    %cst_58 = arith.constant dense<0xFF800000> : vector<4x8xf32>
    %71 = vector.multi_reduction <maximumf>, %70, %cst_58 [2] : vector<4x8x8xf32> to vector<4x8xf32>
    %72 = vector.shape_cast %71 : vector<4x8xf32> to vector<4x8x1xf32>
    %73 = vector.broadcast %72 : vector<4x8x1xf32> to vector<4x8x8xf32>
    %74 = arith.subf %70, %73 : vector<4x8x8xf32>
    %75 = math.exp %74 : vector<4x8x8xf32>
    %cst_59 = arith.constant dense<0.000000e+00> : vector<4x8xf32>
    %76 = vector.multi_reduction <add>, %75, %cst_59 [2] : vector<4x8x8xf32> to vector<4x8xf32>
    %77 = vector.shape_cast %76 : vector<4x8xf32> to vector<4x8x1xf32>
    %78 = vector.broadcast %77 : vector<4x8x1xf32> to vector<4x8x8xf32>
    %79 = arith.divf %75, %78 : vector<4x8x8xf32>
    %80 = arith.addf %55, %79 : vector<4x8x8xf32>
    "tpu.trace_start"() <{level = 10 : i32, message = "bqk,bkd->bqd"}> : () -> ()
    %cst_60 = arith.constant dense<0.000000e+00> : vector<4x8x8xf32>
    %81 = tpu.matmul %79, %64, %cst_60 {dimension_numbers = #tpu.dot_dimension_numbers<[2], [1], [1], [2], [0, 0, 0, 1, 1, 2], [0], [0]>} : vector<4x8x8xf32>, vector<4x8x8xf32>, vector<4x8x8xf32> -> vector<4x8x8xf32>
    "tpu.trace_stop"() : () -> ()
    %82 = vector.shape_cast %81 : vector<4x8x8xf32> to vector<32x8xf32>
    %83 = vector.extract_strided_slice %58 {offsets = [0, 0], sizes = [8, 32], strides = [1, 1]} : vector<32x32xf32> to vector<8x32xf32>
    %cst_61 = arith.constant dense<0.000000e+00> : vector<32x32xf32>
    %84 = tpu.matmul %82, %83, %cst_61 {dimension_numbers = #tpu.dot_dimension_numbers<[1], [0], [0], [1], [0, 0, 1, 1], [], []>} : vector<32x8xf32>, vector<8x32xf32>, vector<32x32xf32> -> vector<32x32xf32>
    %85 = arith.addf %56, %84 : vector<32x32xf32>
    %86 = vector.extract_strided_slice %54 {offsets = [0, 8], sizes = [32, 8], strides = [1, 1]} : vector<32x96xf32> to vector<32x8xf32>
    %87 = vector.shape_cast %86 : vector<32x8xf32> to vector<4x8x8xf32>
    %88 = vector.extract_strided_slice %54 {offsets = [0, 40], sizes = [32, 8], strides = [1, 1]} : vector<32x96xf32> to vector<32x8xf32>
    %89 = vector.shape_cast %88 : vector<32x8xf32> to vector<4x8x8xf32>
    %90 = vector.extract_strided_slice %54 {offsets = [0, 72], sizes = [32, 8], strides = [1, 1]} : vector<32x96xf32> to vector<32x8xf32>
    %91 = vector.shape_cast %90 : vector<32x8xf32> to vector<4x8x8xf32>
    "tpu.trace_start"() <{level = 10 : i32, message = "bqd,bkd->bqk"}> : () -> ()
    %cst_62 = arith.constant dense<0.000000e+00> : vector<4x8x8xf32>
    %92 = tpu.matmul %87, %89, %cst_62 {dimension_numbers = #tpu.dot_dimension_numbers<[2], [2], [1], [1], [0, 0, 0, 1, 1, 1], [0], [0]>} : vector<4x8x8xf32>, vector<4x8x8xf32>, vector<4x8x8xf32> -> vector<4x8x8xf32>
    "tpu.trace_stop"() : () -> ()
    %cst_63 = arith.constant 0.353553385 : f32
    %93 = vector.broadcast %cst_63 : f32 to vector<4x8x8xf32>
    %94 = arith.mulf %92, %93 : vector<4x8x8xf32>
    %95 = vector.shape_cast %39 : vector<4x8xf32> to vector<4x1x8xf32>
    %96 = vector.broadcast %95 : vector<4x1x8xf32> to vector<4x8x8xf32>
    %97 = arith.addf %94, %96 : vector<4x8x8xf32>
    %cst_64 = arith.constant dense<0xFF800000> : vector<4x8xf32>
    %98 = vector.multi_reduction <maximumf>, %97, %cst_64 [2] : vector<4x8x8xf32> to vector<4x8xf32>
    %99 = vector.shape_cast %98 : vector<4x8xf32> to vector<4x8x1xf32>
    %100 = vector.broadcast %99 : vector<4x8x1xf32> to vector<4x8x8xf32>
    %101 = arith.subf %97, %100 : vector<4x8x8xf32>
    %102 = math.exp %101 : vector<4x8x8xf32>
    %cst_65 = arith.constant dense<0.000000e+00> : vector<4x8xf32>
    %103 = vector.multi_reduction <add>, %102, %cst_65 [2] : vector<4x8x8xf32> to vector<4x8xf32>
    %104 = vector.shape_cast %103 : vector<4x8xf32> to vector<4x8x1xf32>
    %105 = vector.broadcast %104 : vector<4x8x1xf32> to vector<4x8x8xf32>
    %106 = arith.divf %102, %105 : vector<4x8x8xf32>
    %107 = arith.addf %80, %106 : vector<4x8x8xf32>
    "tpu.trace_start"() <{level = 10 : i32, message = "bqk,bkd->bqd"}> : () -> ()
    %cst_66 = arith.constant dense<0.000000e+00> : vector<4x8x8xf32>
    %108 = tpu.matmul %106, %91, %cst_66 {dimension_numbers = #tpu.dot_dimension_numbers<[2], [1], [1], [2], [0, 0, 0, 1, 1, 2], [0], [0]>} : vector<4x8x8xf32>, vector<4x8x8xf32>, vector<4x8x8xf32> -> vector<4x8x8xf32>
    "tpu.trace_stop"() : () -> ()
    %109 = vector.shape_cast %108 : vector<4x8x8xf32> to vector<32x8xf32>
    %110 = vector.extract_strided_slice %58 {offsets = [8, 0], sizes = [8, 32], strides = [1, 1]} : vector<32x32xf32> to vector<8x32xf32>
    %cst_67 = arith.constant dense<0.000000e+00> : vector<32x32xf32>
    %111 = tpu.matmul %109, %110, %cst_67 {dimension_numbers = #tpu.dot_dimension_numbers<[1], [0], [0], [1], [0, 0, 1, 1], [], []>} : vector<32x8xf32>, vector<8x32xf32>, vector<32x32xf32> -> vector<32x32xf32>
    %112 = arith.addf %85, %111 : vector<32x32xf32>
    %113 = vector.extract_strided_slice %54 {offsets = [0, 16], sizes = [32, 8], strides = [1, 1]} : vector<32x96xf32> to vector<32x8xf32>
    %114 = vector.shape_cast %113 : vector<32x8xf32> to vector<4x8x8xf32>
    %115 = vector.extract_strided_slice %54 {offsets = [0, 48], sizes = [32, 8], strides = [1, 1]} : vector<32x96xf32> to vector<32x8xf32>
    %116 = vector.shape_cast %115 : vector<32x8xf32> to vector<4x8x8xf32>
    %117 = vector.extract_strided_slice %54 {offsets = [0, 80], sizes = [32, 8], strides = [1, 1]} : vector<32x96xf32> to vector<32x8xf32>
    %118 = vector.shape_cast %117 : vector<32x8xf32> to vector<4x8x8xf32>
    "tpu.trace_start"() <{level = 10 : i32, message = "bqd,bkd->bqk"}> : () -> ()
    %cst_68 = arith.constant dense<0.000000e+00> : vector<4x8x8xf32>
    %119 = tpu.matmul %114, %116, %cst_68 {dimension_numbers = #tpu.dot_dimension_numbers<[2], [2], [1], [1], [0, 0, 0, 1, 1, 1], [0], [0]>} : vector<4x8x8xf32>, vector<4x8x8xf32>, vector<4x8x8xf32> -> vector<4x8x8xf32>
    "tpu.trace_stop"() : () -> ()
    %cst_69 = arith.constant 0.353553385 : f32
    %120 = vector.broadcast %cst_69 : f32 to vector<4x8x8xf32>
    %121 = arith.mulf %119, %120 : vector<4x8x8xf32>
    %122 = vector.shape_cast %39 : vector<4x8xf32> to vector<4x1x8xf32>
    %123 = vector.broadcast %122 : vector<4x1x8xf32> to vector<4x8x8xf32>
    %124 = arith.addf %121, %123 : vector<4x8x8xf32>
    %cst_70 = arith.constant dense<0xFF800000> : vector<4x8xf32>
    %125 = vector.multi_reduction <maximumf>, %124, %cst_70 [2] : vector<4x8x8xf32> to vector<4x8xf32>
    %126 = vector.shape_cast %125 : vector<4x8xf32> to vector<4x8x1xf32>
    %127 = vector.broadcast %126 : vector<4x8x1xf32> to vector<4x8x8xf32>
    %128 = arith.subf %124, %127 : vector<4x8x8xf32>
    %129 = math.exp %128 : vector<4x8x8xf32>
    %cst_71 = arith.constant dense<0.000000e+00> : vector<4x8xf32>
    %130 = vector.multi_reduction <add>, %129, %cst_71 [2] : vector<4x8x8xf32> to vector<4x8xf32>
    %131 = vector.shape_cast %130 : vector<4x8xf32> to vector<4x8x1xf32>
    %132 = vector.broadcast %131 : vector<4x8x1xf32> to vector<4x8x8xf32>
    %133 = arith.divf %129, %132 : vector<4x8x8xf32>
    %134 = arith.addf %107, %133 : vector<4x8x8xf32>
    "tpu.trace_start"() <{level = 10 : i32, message = "bqk,bkd->bqd"}> : () -> ()
    %cst_72 = arith.constant dense<0.000000e+00> : vector<4x8x8xf32>
    %135 = tpu.matmul %133, %118, %cst_72 {dimension_numbers = #tpu.dot_dimension_numbers<[2], [1], [1], [2], [0, 0, 0, 1, 1, 2], [0], [0]>} : vector<4x8x8xf32>, vector<4x8x8xf32>, vector<4x8x8xf32> -> vector<4x8x8xf32>
    "tpu.trace_stop"() : () -> ()
    %136 = vector.shape_cast %135 : vector<4x8x8xf32> to vector<32x8xf32>
    %137 = vector.extract_strided_slice %58 {offsets = [16, 0], sizes = [8, 32], strides = [1, 1]} : vector<32x32xf32> to vector<8x32xf32>
    %cst_73 = arith.constant dense<0.000000e+00> : vector<32x32xf32>
    %138 = tpu.matmul %136, %137, %cst_73 {dimension_numbers = #tpu.dot_dimension_numbers<[1], [0], [0], [1], [0, 0, 1, 1], [], []>} : vector<32x8xf32>, vector<8x32xf32>, vector<32x32xf32> -> vector<32x32xf32>
    %139 = arith.addf %112, %138 : vector<32x32xf32>
    %140 = vector.extract_strided_slice %54 {offsets = [0, 24], sizes = [32, 8], strides = [1, 1]} : vector<32x96xf32> to vector<32x8xf32>
    %141 = vector.shape_cast %140 : vector<32x8xf32> to vector<4x8x8xf32>
    %142 = vector.extract_strided_slice %54 {offsets = [0, 56], sizes = [32, 8], strides = [1, 1]} : vector<32x96xf32> to vector<32x8xf32>
    %143 = vector.shape_cast %142 : vector<32x8xf32> to vector<4x8x8xf32>
    %144 = vector.extract_strided_slice %54 {offsets = [0, 88], sizes = [32, 8], strides = [1, 1]} : vector<32x96xf32> to vector<32x8xf32>
    %145 = vector.shape_cast %144 : vector<32x8xf32> to vector<4x8x8xf32>
    "tpu.trace_start"() <{level = 10 : i32, message = "bqd,bkd->bqk"}> : () -> ()
    %cst_74 = arith.constant dense<0.000000e+00> : vector<4x8x8xf32>
    %146 = tpu.matmul %141, %143, %cst_74 {dimension_numbers = #tpu.dot_dimension_numbers<[2], [2], [1], [1], [0, 0, 0, 1, 1, 1], [0], [0]>} : vector<4x8x8xf32>, vector<4x8x8xf32>, vector<4x8x8xf32> -> vector<4x8x8xf32>
    "tpu.trace_stop"() : () -> ()
    %cst_75 = arith.constant 0.353553385 : f32
    %147 = vector.broadcast %cst_75 : f32 to vector<4x8x8xf32>
    %148 = arith.mulf %146, %147 : vector<4x8x8xf32>
    %149 = vector.shape_cast %39 : vector<4x8xf32> to vector<4x1x8xf32>
    %150 = vector.broadcast %149 : vector<4x1x8xf32> to vector<4x8x8xf32>
    %151 = arith.addf %148, %150 : vector<4x8x8xf32>
    %cst_76 = arith.constant dense<0xFF800000> : vector<4x8xf32>
    %152 = vector.multi_reduction <maximumf>, %151, %cst_76 [2] : vector<4x8x8xf32> to vector<4x8xf32>
    %153 = vector.shape_cast %152 : vector<4x8xf32> to vector<4x8x1xf32>
    %154 = vector.broadcast %153 : vector<4x8x1xf32> to vector<4x8x8xf32>
    %155 = arith.subf %151, %154 : vector<4x8x8xf32>
    %156 = math.exp %155 : vector<4x8x8xf32>
    %cst_77 = arith.constant dense<0.000000e+00> : vector<4x8xf32>
    %157 = vector.multi_reduction <add>, %156, %cst_77 [2] : vector<4x8x8xf32> to vector<4x8xf32>
    %158 = vector.shape_cast %157 : vector<4x8xf32> to vector<4x8x1xf32>
    %159 = vector.broadcast %158 : vector<4x8x1xf32> to vector<4x8x8xf32>
    %160 = arith.divf %156, %159 : vector<4x8x8xf32>
    %161 = arith.addf %134, %160 : vector<4x8x8xf32>
    "tpu.trace_start"() <{level = 10 : i32, message = "bqk,bkd->bqd"}> : () -> ()
    %cst_78 = arith.constant dense<0.000000e+00> : vector<4x8x8xf32>
    %162 = tpu.matmul %160, %145, %cst_78 {dimension_numbers = #tpu.dot_dimension_numbers<[2], [1], [1], [2], [0, 0, 0, 1, 1, 2], [0], [0]>} : vector<4x8x8xf32>, vector<4x8x8xf32>, vector<4x8x8xf32> -> vector<4x8x8xf32>
    "tpu.trace_stop"() : () -> ()
    %163 = vector.shape_cast %162 : vector<4x8x8xf32> to vector<32x8xf32>
    %164 = vector.extract_strided_slice %58 {offsets = [24, 0], sizes = [8, 32], strides = [1, 1]} : vector<32x32xf32> to vector<8x32xf32>
    %cst_79 = arith.constant dense<0.000000e+00> : vector<32x32xf32>
    %165 = tpu.matmul %163, %164, %cst_79 {dimension_numbers = #tpu.dot_dimension_numbers<[1], [0], [0], [1], [0, 0, 1, 1], [], []>} : vector<32x8xf32>, vector<8x32xf32>, vector<32x32xf32> -> vector<32x32xf32>
    %166 = arith.addf %139, %165 : vector<32x32xf32>
    %c0_80 = arith.constant 0 : index
    %c0_81 = arith.constant 0 : index
    %c0_82 = arith.constant 0 : index
    %167 = vector.load %arg15[%c0_80, %c0_81, %c0_82] : memref<2x1x32xf32, #tpu.memory_space<vmem>>, vector<1x1x32xf32>
    %168 = vector.shape_cast %167 : vector<1x1x32xf32> to vector<1x32xf32>
    %169 = vector.broadcast %168 : vector<1x32xf32> to vector<32x32xf32>
    %170 = arith.addf %166, %169 : vector<32x32xf32>
    %cst_83 = arith.constant 2.500000e-01 : f32
    %171 = vector.broadcast %cst_83 : f32 to vector<4x8x8xf32>
    %172 = arith.mulf %161, %171 : vector<4x8x8xf32>
    %c0_i32 = arith.constant 0 : i32
    %173 = vector.broadcast %c0_i32 : i32 to vector<4x8x8xi32>
    %174 = arith.cmpi sge, %43, %173 : vector<4x8x8xi32>
    %c2_i32 = arith.constant 2 : i32
    %175 = vector.broadcast %c2_i32 : i32 to vector<4x8x8xi32>
    %176 = arith.cmpi slt, %43, %175 : vector<4x8x8xi32>
    %177 = arith.andi %174, %176 : vector<4x8x8xi1>
    %cst_84 = arith.constant 0.000000e+00 : f32
    %178 = vector.broadcast %cst_84 : f32 to vector<4x8x8xf32>
    %179 = arith.select %177, %172, %178 : vector<4x8x8xi1>, vector<4x8x8xf32>
    %cst_85 = arith.constant dense<0xFF800000> : vector<4x8xf32>
    %180 = vector.multi_reduction <maximumf>, %179, %cst_85 [2] : vector<4x8x8xf32> to vector<4x8xf32>
    %c0_i32_86 = arith.constant 0 : i32
    %181 = vector.broadcast %c0_i32_86 : i32 to vector<4x8xi32>
    %182 = arith.cmpi sge, %44, %181 : vector<4x8xi32>
    %c2_i32_87 = arith.constant 2 : i32
    %183 = vector.broadcast %c2_i32_87 : i32 to vector<4x8xi32>
    %184 = arith.cmpi slt, %44, %183 : vector<4x8xi32>
    %185 = arith.andi %182, %184 : vector<4x8xi1>
    %cst_88 = arith.constant 0.000000e+00 : f32
    %186 = vector.broadcast %cst_88 : f32 to vector<4x8xf32>
    %187 = arith.select %185, %180, %186 : vector<4x8xi1>, vector<4x8xf32>
    %cst_89 = arith.constant dense<0xFF800000> : vector<4xf32>
    %188 = vector.multi_reduction <maximumf>, %187, %cst_89 [1] : vector<4x8xf32> to vector<4xf32>
    %189 = vector.shape_cast %188 : vector<4xf32> to vector<4x1xf32>
    %c0_90 = arith.constant 0 : index
    %c0_91 = arith.constant 0 : index
    %190 = vector.load %arg24[%c0_90, %c0_91] : memref<16x32xf32, #tpu.memory_space<vmem>>, vector<1x32xf32>
    %191 = vector.broadcast %189 : vector<4x1xf32> to vector<4x32xf32>
    %192 = vector.broadcast %190 : vector<1x32xf32> to vector<4x32xf32>
    %193 = arith.mulf %191, %192 : vector<4x32xf32>
    %194 = arith.addf %42, %193 : vector<4x32xf32>
    %c2_i32_92 = arith.constant 2 : i32
    %195 = vector.broadcast %c2_i32_92 : i32 to vector<4x8xi32>
    %196 = arith.cmpi sge, %44, %195 : vector<4x8xi32>
    %c4_i32 = arith.constant 4 : i32
    %197 = vector.broadcast %c4_i32 : i32 to vector<4x8xi32>
    %198 = arith.cmpi slt, %44, %197 : vector<4x8xi32>
    %199 = arith.andi %196, %198 : vector<4x8xi1>
    %cst_93 = arith.constant 0.000000e+00 : f32
    %200 = vector.broadcast %cst_93 : f32 to vector<4x8xf32>
    %201 = arith.select %199, %180, %200 : vector<4x8xi1>, vector<4x8xf32>
    %cst_94 = arith.constant dense<0xFF800000> : vector<4xf32>
    %202 = vector.multi_reduction <maximumf>, %201, %cst_94 [1] : vector<4x8xf32> to vector<4xf32>
    %203 = vector.shape_cast %202 : vector<4xf32> to vector<4x1xf32>
    %c4 = arith.constant 4 : index
    %c0_95 = arith.constant 0 : index
    %204 = vector.load %arg24[%c4, %c0_95] : memref<16x32xf32, #tpu.memory_space<vmem>>, vector<1x32xf32>
    %205 = vector.broadcast %203 : vector<4x1xf32> to vector<4x32xf32>
    %206 = vector.broadcast %204 : vector<1x32xf32> to vector<4x32xf32>
    %207 = arith.mulf %205, %206 : vector<4x32xf32>
    %208 = arith.addf %194, %207 : vector<4x32xf32>
    %c4_i32_96 = arith.constant 4 : i32
    %209 = vector.broadcast %c4_i32_96 : i32 to vector<4x8xi32>
    %210 = arith.cmpi sge, %44, %209 : vector<4x8xi32>
    %c6_i32 = arith.constant 6 : i32
    %211 = vector.broadcast %c6_i32 : i32 to vector<4x8xi32>
    %212 = arith.cmpi slt, %44, %211 : vector<4x8xi32>
    %213 = arith.andi %210, %212 : vector<4x8xi1>
    %cst_97 = arith.constant 0.000000e+00 : f32
    %214 = vector.broadcast %cst_97 : f32 to vector<4x8xf32>
    %215 = arith.select %213, %180, %214 : vector<4x8xi1>, vector<4x8xf32>
    %cst_98 = arith.constant dense<0xFF800000> : vector<4xf32>
    %216 = vector.multi_reduction <maximumf>, %215, %cst_98 [1] : vector<4x8xf32> to vector<4xf32>
    %217 = vector.shape_cast %216 : vector<4xf32> to vector<4x1xf32>
    %c8 = arith.constant 8 : index
    %c0_99 = arith.constant 0 : index
    %218 = vector.load %arg24[%c8, %c0_99] : memref<16x32xf32, #tpu.memory_space<vmem>>, vector<1x32xf32>
    %219 = vector.broadcast %217 : vector<4x1xf32> to vector<4x32xf32>
    %220 = vector.broadcast %218 : vector<1x32xf32> to vector<4x32xf32>
    %221 = arith.mulf %219, %220 : vector<4x32xf32>
    %222 = arith.addf %208, %221 : vector<4x32xf32>
    %c6_i32_100 = arith.constant 6 : i32
    %223 = vector.broadcast %c6_i32_100 : i32 to vector<4x8xi32>
    %224 = arith.cmpi sge, %44, %223 : vector<4x8xi32>
    %c8_i32 = arith.constant 8 : i32
    %225 = vector.broadcast %c8_i32 : i32 to vector<4x8xi32>
    %226 = arith.cmpi slt, %44, %225 : vector<4x8xi32>
    %227 = arith.andi %224, %226 : vector<4x8xi1>
    %cst_101 = arith.constant 0.000000e+00 : f32
    %228 = vector.broadcast %cst_101 : f32 to vector<4x8xf32>
    %229 = arith.select %227, %180, %228 : vector<4x8xi1>, vector<4x8xf32>
    %cst_102 = arith.constant dense<0xFF800000> : vector<4xf32>
    %230 = vector.multi_reduction <maximumf>, %229, %cst_102 [1] : vector<4x8xf32> to vector<4xf32>
    %231 = vector.shape_cast %230 : vector<4xf32> to vector<4x1xf32>
    %c12 = arith.constant 12 : index
    %c0_103 = arith.constant 0 : index
    %232 = vector.load %arg24[%c12, %c0_103] : memref<16x32xf32, #tpu.memory_space<vmem>>, vector<1x32xf32>
    %233 = vector.broadcast %231 : vector<4x1xf32> to vector<4x32xf32>
    %234 = vector.broadcast %232 : vector<1x32xf32> to vector<4x32xf32>
    %235 = arith.mulf %233, %234 : vector<4x32xf32>
    %236 = arith.addf %222, %235 : vector<4x32xf32>
    %c2_i32_104 = arith.constant 2 : i32
    %237 = vector.broadcast %c2_i32_104 : i32 to vector<4x8x8xi32>
    %238 = arith.cmpi sge, %43, %237 : vector<4x8x8xi32>
    %c4_i32_105 = arith.constant 4 : i32
    %239 = vector.broadcast %c4_i32_105 : i32 to vector<4x8x8xi32>
    %240 = arith.cmpi slt, %43, %239 : vector<4x8x8xi32>
    %241 = arith.andi %238, %240 : vector<4x8x8xi1>
    %cst_106 = arith.constant 0.000000e+00 : f32
    %242 = vector.broadcast %cst_106 : f32 to vector<4x8x8xf32>
    %243 = arith.select %241, %172, %242 : vector<4x8x8xi1>, vector<4x8x8xf32>
    %cst_107 = arith.constant dense<0xFF800000> : vector<4x8xf32>
    %244 = vector.multi_reduction <maximumf>, %243, %cst_107 [2] : vector<4x8x8xf32> to vector<4x8xf32>
    %c0_i32_108 = arith.constant 0 : i32
    %245 = vector.broadcast %c0_i32_108 : i32 to vector<4x8xi32>
    %246 = arith.cmpi sge, %44, %245 : vector<4x8xi32>
    %c2_i32_109 = arith.constant 2 : i32
    %247 = vector.broadcast %c2_i32_109 : i32 to vector<4x8xi32>
    %248 = arith.cmpi slt, %44, %247 : vector<4x8xi32>
    %249 = arith.andi %246, %248 : vector<4x8xi1>
    %cst_110 = arith.constant 0.000000e+00 : f32
    %250 = vector.broadcast %cst_110 : f32 to vector<4x8xf32>
    %251 = arith.select %249, %244, %250 : vector<4x8xi1>, vector<4x8xf32>
    %cst_111 = arith.constant dense<0xFF800000> : vector<4xf32>
    %252 = vector.multi_reduction <maximumf>, %251, %cst_111 [1] : vector<4x8xf32> to vector<4xf32>
    %253 = vector.shape_cast %252 : vector<4xf32> to vector<4x1xf32>
    %c1_112 = arith.constant 1 : index
    %c0_113 = arith.constant 0 : index
    %254 = vector.load %arg24[%c1_112, %c0_113] : memref<16x32xf32, #tpu.memory_space<vmem>>, vector<1x32xf32>
    %255 = vector.broadcast %253 : vector<4x1xf32> to vector<4x32xf32>
    %256 = vector.broadcast %254 : vector<1x32xf32> to vector<4x32xf32>
    %257 = arith.mulf %255, %256 : vector<4x32xf32>
    %258 = arith.addf %236, %257 : vector<4x32xf32>
    %c2_i32_114 = arith.constant 2 : i32
    %259 = vector.broadcast %c2_i32_114 : i32 to vector<4x8xi32>
    %260 = arith.cmpi sge, %44, %259 : vector<4x8xi32>
    %c4_i32_115 = arith.constant 4 : i32
    %261 = vector.broadcast %c4_i32_115 : i32 to vector<4x8xi32>
    %262 = arith.cmpi slt, %44, %261 : vector<4x8xi32>
    %263 = arith.andi %260, %262 : vector<4x8xi1>
    %cst_116 = arith.constant 0.000000e+00 : f32
    %264 = vector.broadcast %cst_116 : f32 to vector<4x8xf32>
    %265 = arith.select %263, %244, %264 : vector<4x8xi1>, vector<4x8xf32>
    %cst_117 = arith.constant dense<0xFF800000> : vector<4xf32>
    %266 = vector.multi_reduction <maximumf>, %265, %cst_117 [1] : vector<4x8xf32> to vector<4xf32>
    %267 = vector.shape_cast %266 : vector<4xf32> to vector<4x1xf32>
    %c5 = arith.constant 5 : index
    %c0_118 = arith.constant 0 : index
    %268 = vector.load %arg24[%c5, %c0_118] : memref<16x32xf32, #tpu.memory_space<vmem>>, vector<1x32xf32>
    %269 = vector.broadcast %267 : vector<4x1xf32> to vector<4x32xf32>
    %270 = vector.broadcast %268 : vector<1x32xf32> to vector<4x32xf32>
    %271 = arith.mulf %269, %270 : vector<4x32xf32>
    %272 = arith.addf %258, %271 : vector<4x32xf32>
    %c4_i32_119 = arith.constant 4 : i32
    %273 = vector.broadcast %c4_i32_119 : i32 to vector<4x8xi32>
    %274 = arith.cmpi sge, %44, %273 : vector<4x8xi32>
    %c6_i32_120 = arith.constant 6 : i32
    %275 = vector.broadcast %c6_i32_120 : i32 to vector<4x8xi32>
    %276 = arith.cmpi slt, %44, %275 : vector<4x8xi32>
    %277 = arith.andi %274, %276 : vector<4x8xi1>
    %cst_121 = arith.constant 0.000000e+00 : f32
    %278 = vector.broadcast %cst_121 : f32 to vector<4x8xf32>
    %279 = arith.select %277, %244, %278 : vector<4x8xi1>, vector<4x8xf32>
    %cst_122 = arith.constant dense<0xFF800000> : vector<4xf32>
    %280 = vector.multi_reduction <maximumf>, %279, %cst_122 [1] : vector<4x8xf32> to vector<4xf32>
    %281 = vector.shape_cast %280 : vector<4xf32> to vector<4x1xf32>
    %c9 = arith.constant 9 : index
    %c0_123 = arith.constant 0 : index
    %282 = vector.load %arg24[%c9, %c0_123] : memref<16x32xf32, #tpu.memory_space<vmem>>, vector<1x32xf32>
    %283 = vector.broadcast %281 : vector<4x1xf32> to vector<4x32xf32>
    %284 = vector.broadcast %282 : vector<1x32xf32> to vector<4x32xf32>
    %285 = arith.mulf %283, %284 : vector<4x32xf32>
    %286 = arith.addf %272, %285 : vector<4x32xf32>
    %c6_i32_124 = arith.constant 6 : i32
    %287 = vector.broadcast %c6_i32_124 : i32 to vector<4x8xi32>
    %288 = arith.cmpi sge, %44, %287 : vector<4x8xi32>
    %c8_i32_125 = arith.constant 8 : i32
    %289 = vector.broadcast %c8_i32_125 : i32 to vector<4x8xi32>
    %290 = arith.cmpi slt, %44, %289 : vector<4x8xi32>
    %291 = arith.andi %288, %290 : vector<4x8xi1>
    %cst_126 = arith.constant 0.000000e+00 : f32
    %292 = vector.broadcast %cst_126 : f32 to vector<4x8xf32>
    %293 = arith.select %291, %244, %292 : vector<4x8xi1>, vector<4x8xf32>
    %cst_127 = arith.constant dense<0xFF800000> : vector<4xf32>
    %294 = vector.multi_reduction <maximumf>, %293, %cst_127 [1] : vector<4x8xf32> to vector<4xf32>
    %295 = vector.shape_cast %294 : vector<4xf32> to vector<4x1xf32>
    %c13 = arith.constant 13 : index
    %c0_128 = arith.constant 0 : index
    %296 = vector.load %arg24[%c13, %c0_128] : memref<16x32xf32, #tpu.memory_space<vmem>>, vector<1x32xf32>
    %297 = vector.broadcast %295 : vector<4x1xf32> to vector<4x32xf32>
    %298 = vector.broadcast %296 : vector<1x32xf32> to vector<4x32xf32>
    %299 = arith.mulf %297, %298 : vector<4x32xf32>
    %300 = arith.addf %286, %299 : vector<4x32xf32>
    %c4_i32_129 = arith.constant 4 : i32
    %301 = vector.broadcast %c4_i32_129 : i32 to vector<4x8x8xi32>
    %302 = arith.cmpi sge, %43, %301 : vector<4x8x8xi32>
    %c6_i32_130 = arith.constant 6 : i32
    %303 = vector.broadcast %c6_i32_130 : i32 to vector<4x8x8xi32>
    %304 = arith.cmpi slt, %43, %303 : vector<4x8x8xi32>
    %305 = arith.andi %302, %304 : vector<4x8x8xi1>
    %cst_131 = arith.constant 0.000000e+00 : f32
    %306 = vector.broadcast %cst_131 : f32 to vector<4x8x8xf32>
    %307 = arith.select %305, %172, %306 : vector<4x8x8xi1>, vector<4x8x8xf32>
    %cst_132 = arith.constant dense<0xFF800000> : vector<4x8xf32>
    %308 = vector.multi_reduction <maximumf>, %307, %cst_132 [2] : vector<4x8x8xf32> to vector<4x8xf32>
    %c0_i32_133 = arith.constant 0 : i32
    %309 = vector.broadcast %c0_i32_133 : i32 to vector<4x8xi32>
    %310 = arith.cmpi sge, %44, %309 : vector<4x8xi32>
    %c2_i32_134 = arith.constant 2 : i32
    %311 = vector.broadcast %c2_i32_134 : i32 to vector<4x8xi32>
    %312 = arith.cmpi slt, %44, %311 : vector<4x8xi32>
    %313 = arith.andi %310, %312 : vector<4x8xi1>
    %cst_135 = arith.constant 0.000000e+00 : f32
    %314 = vector.broadcast %cst_135 : f32 to vector<4x8xf32>
    %315 = arith.select %313, %308, %314 : vector<4x8xi1>, vector<4x8xf32>
    %cst_136 = arith.constant dense<0xFF800000> : vector<4xf32>
    %316 = vector.multi_reduction <maximumf>, %315, %cst_136 [1] : vector<4x8xf32> to vector<4xf32>
    %317 = vector.shape_cast %316 : vector<4xf32> to vector<4x1xf32>
    %c2 = arith.constant 2 : index
    %c0_137 = arith.constant 0 : index
    %318 = vector.load %arg24[%c2, %c0_137] : memref<16x32xf32, #tpu.memory_space<vmem>>, vector<1x32xf32>
    %319 = vector.broadcast %317 : vector<4x1xf32> to vector<4x32xf32>
    %320 = vector.broadcast %318 : vector<1x32xf32> to vector<4x32xf32>
    %321 = arith.mulf %319, %320 : vector<4x32xf32>
    %322 = arith.addf %300, %321 : vector<4x32xf32>
    %c2_i32_138 = arith.constant 2 : i32
    %323 = vector.broadcast %c2_i32_138 : i32 to vector<4x8xi32>
    %324 = arith.cmpi sge, %44, %323 : vector<4x8xi32>
    %c4_i32_139 = arith.constant 4 : i32
    %325 = vector.broadcast %c4_i32_139 : i32 to vector<4x8xi32>
    %326 = arith.cmpi slt, %44, %325 : vector<4x8xi32>
    %327 = arith.andi %324, %326 : vector<4x8xi1>
    %cst_140 = arith.constant 0.000000e+00 : f32
    %328 = vector.broadcast %cst_140 : f32 to vector<4x8xf32>
    %329 = arith.select %327, %308, %328 : vector<4x8xi1>, vector<4x8xf32>
    %cst_141 = arith.constant dense<0xFF800000> : vector<4xf32>
    %330 = vector.multi_reduction <maximumf>, %329, %cst_141 [1] : vector<4x8xf32> to vector<4xf32>
    %331 = vector.shape_cast %330 : vector<4xf32> to vector<4x1xf32>
    %c6 = arith.constant 6 : index
    %c0_142 = arith.constant 0 : index
    %332 = vector.load %arg24[%c6, %c0_142] : memref<16x32xf32, #tpu.memory_space<vmem>>, vector<1x32xf32>
    %333 = vector.broadcast %331 : vector<4x1xf32> to vector<4x32xf32>
    %334 = vector.broadcast %332 : vector<1x32xf32> to vector<4x32xf32>
    %335 = arith.mulf %333, %334 : vector<4x32xf32>
    %336 = arith.addf %322, %335 : vector<4x32xf32>
    %c4_i32_143 = arith.constant 4 : i32
    %337 = vector.broadcast %c4_i32_143 : i32 to vector<4x8xi32>
    %338 = arith.cmpi sge, %44, %337 : vector<4x8xi32>
    %c6_i32_144 = arith.constant 6 : i32
    %339 = vector.broadcast %c6_i32_144 : i32 to vector<4x8xi32>
    %340 = arith.cmpi slt, %44, %339 : vector<4x8xi32>
    %341 = arith.andi %338, %340 : vector<4x8xi1>
    %cst_145 = arith.constant 0.000000e+00 : f32
    %342 = vector.broadcast %cst_145 : f32 to vector<4x8xf32>
    %343 = arith.select %341, %308, %342 : vector<4x8xi1>, vector<4x8xf32>
    %cst_146 = arith.constant dense<0xFF800000> : vector<4xf32>
    %344 = vector.multi_reduction <maximumf>, %343, %cst_146 [1] : vector<4x8xf32> to vector<4xf32>
    %345 = vector.shape_cast %344 : vector<4xf32> to vector<4x1xf32>
    %c10 = arith.constant 10 : index
    %c0_147 = arith.constant 0 : index
    %346 = vector.load %arg24[%c10, %c0_147] : memref<16x32xf32, #tpu.memory_space<vmem>>, vector<1x32xf32>
    %347 = vector.broadcast %345 : vector<4x1xf32> to vector<4x32xf32>
    %348 = vector.broadcast %346 : vector<1x32xf32> to vector<4x32xf32>
    %349 = arith.mulf %347, %348 : vector<4x32xf32>
    %350 = arith.addf %336, %349 : vector<4x32xf32>
    %c6_i32_148 = arith.constant 6 : i32
    %351 = vector.broadcast %c6_i32_148 : i32 to vector<4x8xi32>
    %352 = arith.cmpi sge, %44, %351 : vector<4x8xi32>
    %c8_i32_149 = arith.constant 8 : i32
    %353 = vector.broadcast %c8_i32_149 : i32 to vector<4x8xi32>
    %354 = arith.cmpi slt, %44, %353 : vector<4x8xi32>
    %355 = arith.andi %352, %354 : vector<4x8xi1>
    %cst_150 = arith.constant 0.000000e+00 : f32
    %356 = vector.broadcast %cst_150 : f32 to vector<4x8xf32>
    %357 = arith.select %355, %308, %356 : vector<4x8xi1>, vector<4x8xf32>
    %cst_151 = arith.constant dense<0xFF800000> : vector<4xf32>
    %358 = vector.multi_reduction <maximumf>, %357, %cst_151 [1] : vector<4x8xf32> to vector<4xf32>
    %359 = vector.shape_cast %358 : vector<4xf32> to vector<4x1xf32>
    %c14 = arith.constant 14 : index
    %c0_152 = arith.constant 0 : index
    %360 = vector.load %arg24[%c14, %c0_152] : memref<16x32xf32, #tpu.memory_space<vmem>>, vector<1x32xf32>
    %361 = vector.broadcast %359 : vector<4x1xf32> to vector<4x32xf32>
    %362 = vector.broadcast %360 : vector<1x32xf32> to vector<4x32xf32>
    %363 = arith.mulf %361, %362 : vector<4x32xf32>
    %364 = arith.addf %350, %363 : vector<4x32xf32>
    %c6_i32_153 = arith.constant 6 : i32
    %365 = vector.broadcast %c6_i32_153 : i32 to vector<4x8x8xi32>
    %366 = arith.cmpi sge, %43, %365 : vector<4x8x8xi32>
    %c8_i32_154 = arith.constant 8 : i32
    %367 = vector.broadcast %c8_i32_154 : i32 to vector<4x8x8xi32>
    %368 = arith.cmpi slt, %43, %367 : vector<4x8x8xi32>
    %369 = arith.andi %366, %368 : vector<4x8x8xi1>
    %cst_155 = arith.constant 0.000000e+00 : f32
    %370 = vector.broadcast %cst_155 : f32 to vector<4x8x8xf32>
    %371 = arith.select %369, %172, %370 : vector<4x8x8xi1>, vector<4x8x8xf32>
    %cst_156 = arith.constant dense<0xFF800000> : vector<4x8xf32>
    %372 = vector.multi_reduction <maximumf>, %371, %cst_156 [2] : vector<4x8x8xf32> to vector<4x8xf32>
    %c0_i32_157 = arith.constant 0 : i32
    %373 = vector.broadcast %c0_i32_157 : i32 to vector<4x8xi32>
    %374 = arith.cmpi sge, %44, %373 : vector<4x8xi32>
    %c2_i32_158 = arith.constant 2 : i32
    %375 = vector.broadcast %c2_i32_158 : i32 to vector<4x8xi32>
    %376 = arith.cmpi slt, %44, %375 : vector<4x8xi32>
    %377 = arith.andi %374, %376 : vector<4x8xi1>
    %cst_159 = arith.constant 0.000000e+00 : f32
    %378 = vector.broadcast %cst_159 : f32 to vector<4x8xf32>
    %379 = arith.select %377, %372, %378 : vector<4x8xi1>, vector<4x8xf32>
    %cst_160 = arith.constant dense<0xFF800000> : vector<4xf32>
    %380 = vector.multi_reduction <maximumf>, %379, %cst_160 [1] : vector<4x8xf32> to vector<4xf32>
    %381 = vector.shape_cast %380 : vector<4xf32> to vector<4x1xf32>
    %c3 = arith.constant 3 : index
    %c0_161 = arith.constant 0 : index
    %382 = vector.load %arg24[%c3, %c0_161] : memref<16x32xf32, #tpu.memory_space<vmem>>, vector<1x32xf32>
    %383 = vector.broadcast %381 : vector<4x1xf32> to vector<4x32xf32>
    %384 = vector.broadcast %382 : vector<1x32xf32> to vector<4x32xf32>
    %385 = arith.mulf %383, %384 : vector<4x32xf32>
    %386 = arith.addf %364, %385 : vector<4x32xf32>
    %c2_i32_162 = arith.constant 2 : i32
    %387 = vector.broadcast %c2_i32_162 : i32 to vector<4x8xi32>
    %388 = arith.cmpi sge, %44, %387 : vector<4x8xi32>
    %c4_i32_163 = arith.constant 4 : i32
    %389 = vector.broadcast %c4_i32_163 : i32 to vector<4x8xi32>
    %390 = arith.cmpi slt, %44, %389 : vector<4x8xi32>
    %391 = arith.andi %388, %390 : vector<4x8xi1>
    %cst_164 = arith.constant 0.000000e+00 : f32
    %392 = vector.broadcast %cst_164 : f32 to vector<4x8xf32>
    %393 = arith.select %391, %372, %392 : vector<4x8xi1>, vector<4x8xf32>
    %cst_165 = arith.constant dense<0xFF800000> : vector<4xf32>
    %394 = vector.multi_reduction <maximumf>, %393, %cst_165 [1] : vector<4x8xf32> to vector<4xf32>
    %395 = vector.shape_cast %394 : vector<4xf32> to vector<4x1xf32>
    %c7 = arith.constant 7 : index
    %c0_166 = arith.constant 0 : index
    %396 = vector.load %arg24[%c7, %c0_166] : memref<16x32xf32, #tpu.memory_space<vmem>>, vector<1x32xf32>
    %397 = vector.broadcast %395 : vector<4x1xf32> to vector<4x32xf32>
    %398 = vector.broadcast %396 : vector<1x32xf32> to vector<4x32xf32>
    %399 = arith.mulf %397, %398 : vector<4x32xf32>
    %400 = arith.addf %386, %399 : vector<4x32xf32>
    %c4_i32_167 = arith.constant 4 : i32
    %401 = vector.broadcast %c4_i32_167 : i32 to vector<4x8xi32>
    %402 = arith.cmpi sge, %44, %401 : vector<4x8xi32>
    %c6_i32_168 = arith.constant 6 : i32
    %403 = vector.broadcast %c6_i32_168 : i32 to vector<4x8xi32>
    %404 = arith.cmpi slt, %44, %403 : vector<4x8xi32>
    %405 = arith.andi %402, %404 : vector<4x8xi1>
    %cst_169 = arith.constant 0.000000e+00 : f32
    %406 = vector.broadcast %cst_169 : f32 to vector<4x8xf32>
    %407 = arith.select %405, %372, %406 : vector<4x8xi1>, vector<4x8xf32>
    %cst_170 = arith.constant dense<0xFF800000> : vector<4xf32>
    %408 = vector.multi_reduction <maximumf>, %407, %cst_170 [1] : vector<4x8xf32> to vector<4xf32>
    %409 = vector.shape_cast %408 : vector<4xf32> to vector<4x1xf32>
    %c11 = arith.constant 11 : index
    %c0_171 = arith.constant 0 : index
    %410 = vector.load %arg24[%c11, %c0_171] : memref<16x32xf32, #tpu.memory_space<vmem>>, vector<1x32xf32>
    %411 = vector.broadcast %409 : vector<4x1xf32> to vector<4x32xf32>
    %412 = vector.broadcast %410 : vector<1x32xf32> to vector<4x32xf32>
    %413 = arith.mulf %411, %412 : vector<4x32xf32>
    %414 = arith.addf %400, %413 : vector<4x32xf32>
    %c6_i32_172 = arith.constant 6 : i32
    %415 = vector.broadcast %c6_i32_172 : i32 to vector<4x8xi32>
    %416 = arith.cmpi sge, %44, %415 : vector<4x8xi32>
    %c8_i32_173 = arith.constant 8 : i32
    %417 = vector.broadcast %c8_i32_173 : i32 to vector<4x8xi32>
    %418 = arith.cmpi slt, %44, %417 : vector<4x8xi32>
    %419 = arith.andi %416, %418 : vector<4x8xi1>
    %cst_174 = arith.constant 0.000000e+00 : f32
    %420 = vector.broadcast %cst_174 : f32 to vector<4x8xf32>
    %421 = arith.select %419, %372, %420 : vector<4x8xi1>, vector<4x8xf32>
    %cst_175 = arith.constant dense<0xFF800000> : vector<4xf32>
    %422 = vector.multi_reduction <maximumf>, %421, %cst_175 [1] : vector<4x8xf32> to vector<4xf32>
    %423 = vector.shape_cast %422 : vector<4xf32> to vector<4x1xf32>
    %c15 = arith.constant 15 : index
    %c0_176 = arith.constant 0 : index
    %424 = vector.load %arg24[%c15, %c0_176] : memref<16x32xf32, #tpu.memory_space<vmem>>, vector<1x32xf32>
    %425 = vector.broadcast %423 : vector<4x1xf32> to vector<4x32xf32>
    %426 = vector.broadcast %424 : vector<1x32xf32> to vector<4x32xf32>
    %427 = arith.mulf %425, %426 : vector<4x32xf32>
    %428 = arith.addf %414, %427 : vector<4x32xf32>
    %c0_177 = arith.constant 0 : index
    %c0_178 = arith.constant 0 : index
    %c0_179 = arith.constant 0 : index
    %429 = vector.load %arg16[%c0_177, %c0_178, %c0_179] : memref<2x32x32xf32, #tpu.memory_space<vmem>>, vector<1x32x32xf32>
    %430 = vector.shape_cast %429 : vector<1x32x32xf32> to vector<32x32xf32>
    %cst_180 = arith.constant dense<0.000000e+00> : vector<10x32xf32>
    %431 = tpu.matmul %47, %430, %cst_180 {dimension_numbers = #tpu.dot_dimension_numbers<[1], [0], [0], [1], [0, 0, 1, 1], [], []>} : vector<10x32xf32>, vector<32x32xf32>, vector<10x32xf32> -> vector<10x32xf32>
    %cst_181 = arith.constant dense<0.000000e+00> : vector<10x32xf32>
    %432 = tpu.matmul %41, %431, %cst_181 {dimension_numbers = #tpu.dot_dimension_numbers<[1], [0], [0], [1], [0, 0, 1, 1], [], []>} : vector<10x10xf32>, vector<10x32xf32>, vector<10x32xf32> -> vector<10x32xf32>
    %c0_182 = arith.constant 0 : index
    %c0_183 = arith.constant 0 : index
    %c0_184 = arith.constant 0 : index
    %433 = vector.load %arg17[%c0_182, %c0_183, %c0_184] : memref<2x1x32xf32, #tpu.memory_space<vmem>>, vector<1x1x32xf32>
    %434 = vector.shape_cast %433 : vector<1x1x32xf32> to vector<1x32xf32>
    %435 = vector.broadcast %434 : vector<1x32xf32> to vector<10x32xf32>
    %436 = arith.addf %432, %435 : vector<10x32xf32>
    %c0_185 = arith.constant 0 : index
    %c0_186 = arith.constant 0 : index
    %c0_187 = arith.constant 0 : index
    %437 = vector.load %arg18[%c0_185, %c0_186, %c0_187] : memref<2x32x96xf32, #tpu.memory_space<vmem>>, vector<1x32x96xf32>
    %438 = vector.shape_cast %437 : vector<1x32x96xf32> to vector<32x96xf32>
    %cst_188 = arith.constant dense<0.000000e+00> : vector<10x96xf32>
    %439 = tpu.matmul %436, %438, %cst_188 {dimension_numbers = #tpu.dot_dimension_numbers<[1], [0], [0], [1], [0, 0, 1, 1], [], []>} : vector<10x32xf32>, vector<32x96xf32>, vector<10x96xf32> -> vector<10x96xf32>
    %c0_189 = arith.constant 0 : index
    %c0_190 = arith.constant 0 : index
    %c0_191 = arith.constant 0 : index
    %440 = vector.load %arg19[%c0_189, %c0_190, %c0_191] : memref<2x1x96xf32, #tpu.memory_space<vmem>>, vector<1x1x96xf32>
    %441 = vector.shape_cast %440 : vector<1x1x96xf32> to vector<1x96xf32>
    %442 = vector.broadcast %441 : vector<1x96xf32> to vector<10x96xf32>
    %443 = arith.addf %439, %442 : vector<10x96xf32>
    %cst_192 = arith.constant 0.000000e+00 : f32
    %444 = vector.broadcast %cst_192 : f32 to vector<4x32xf32>
    %c0_193 = arith.constant 0 : index
    %c0_194 = arith.constant 0 : index
    %c0_195 = arith.constant 0 : index
    %445 = vector.load %arg20[%c0_193, %c0_194, %c0_195] : memref<2x32x32xf32, #tpu.memory_space<vmem>>, vector<1x32x32xf32>
    %446 = vector.shape_cast %445 : vector<1x32x32xf32> to vector<32x32xf32>
    %447 = vector.extract_strided_slice %443 {offsets = [0, 0], sizes = [4, 8], strides = [1, 1]} : vector<10x96xf32> to vector<4x8xf32>
    %448 = vector.extract_strided_slice %443 {offsets = [0, 32], sizes = [10, 8], strides = [1, 1]} : vector<10x96xf32> to vector<10x8xf32>
    %449 = vector.extract_strided_slice %443 {offsets = [0, 64], sizes = [10, 8], strides = [1, 1]} : vector<10x96xf32> to vector<10x8xf32>
    %cst_196 = arith.constant dense<0.000000e+00> : vector<4x10xf32>
    %450 = tpu.matmul %447, %448, %cst_196 {dimension_numbers = #tpu.dot_dimension_numbers<[1], [1], [0], [0], [0, 0, 1, 0], [], []>} : vector<4x8xf32>, vector<10x8xf32>, vector<4x10xf32> -> vector<4x10xf32>
    %cst_197 = arith.constant 0.353553385 : f32
    %451 = vector.broadcast %cst_197 : f32 to vector<4x10xf32>
    %452 = arith.mulf %450, %451 : vector<4x10xf32>
    %453 = arith.addf %452, %40 : vector<4x10xf32>
    %cst_198 = arith.constant dense<0xFF800000> : vector<4xf32>
    %454 = vector.multi_reduction <maximumf>, %453, %cst_198 [1] : vector<4x10xf32> to vector<4xf32>
    %455 = vector.shape_cast %454 : vector<4xf32> to vector<4x1xf32>
    %456 = vector.broadcast %455 : vector<4x1xf32> to vector<4x10xf32>
    %457 = arith.subf %453, %456 : vector<4x10xf32>
    %458 = math.exp %457 : vector<4x10xf32>
    %cst_199 = arith.constant dense<0.000000e+00> : vector<4xf32>
    %459 = vector.multi_reduction <add>, %458, %cst_199 [1] : vector<4x10xf32> to vector<4xf32>
    %460 = vector.shape_cast %459 : vector<4xf32> to vector<4x1xf32>
    %461 = vector.broadcast %460 : vector<4x1xf32> to vector<4x10xf32>
    %462 = arith.divf %458, %461 : vector<4x10xf32>
    %cst_200 = arith.constant dense<0.000000e+00> : vector<4x8xf32>
    %463 = tpu.matmul %462, %449, %cst_200 {dimension_numbers = #tpu.dot_dimension_numbers<[1], [0], [0], [1], [0, 0, 1, 1], [], []>} : vector<4x10xf32>, vector<10x8xf32>, vector<4x8xf32> -> vector<4x8xf32>
    %464 = vector.extract_strided_slice %446 {offsets = [0, 0], sizes = [8, 32], strides = [1, 1]} : vector<32x32xf32> to vector<8x32xf32>
    %cst_201 = arith.constant dense<0.000000e+00> : vector<4x32xf32>
    %465 = tpu.matmul %463, %464, %cst_201 {dimension_numbers = #tpu.dot_dimension_numbers<[1], [0], [0], [1], [0, 0, 1, 1], [], []>} : vector<4x8xf32>, vector<8x32xf32>, vector<4x32xf32> -> vector<4x32xf32>
    %466 = arith.addf %444, %465 : vector<4x32xf32>
    %467 = vector.extract_strided_slice %443 {offsets = [0, 8], sizes = [4, 8], strides = [1, 1]} : vector<10x96xf32> to vector<4x8xf32>
    %468 = vector.extract_strided_slice %443 {offsets = [0, 40], sizes = [10, 8], strides = [1, 1]} : vector<10x96xf32> to vector<10x8xf32>
    %469 = vector.extract_strided_slice %443 {offsets = [0, 72], sizes = [10, 8], strides = [1, 1]} : vector<10x96xf32> to vector<10x8xf32>
    %cst_202 = arith.constant dense<0.000000e+00> : vector<4x10xf32>
    %470 = tpu.matmul %467, %468, %cst_202 {dimension_numbers = #tpu.dot_dimension_numbers<[1], [1], [0], [0], [0, 0, 1, 0], [], []>} : vector<4x8xf32>, vector<10x8xf32>, vector<4x10xf32> -> vector<4x10xf32>
    %cst_203 = arith.constant 0.353553385 : f32
    %471 = vector.broadcast %cst_203 : f32 to vector<4x10xf32>
    %472 = arith.mulf %470, %471 : vector<4x10xf32>
    %473 = arith.addf %472, %40 : vector<4x10xf32>
    %cst_204 = arith.constant dense<0xFF800000> : vector<4xf32>
    %474 = vector.multi_reduction <maximumf>, %473, %cst_204 [1] : vector<4x10xf32> to vector<4xf32>
    %475 = vector.shape_cast %474 : vector<4xf32> to vector<4x1xf32>
    %476 = vector.broadcast %475 : vector<4x1xf32> to vector<4x10xf32>
    %477 = arith.subf %473, %476 : vector<4x10xf32>
    %478 = math.exp %477 : vector<4x10xf32>
    %cst_205 = arith.constant dense<0.000000e+00> : vector<4xf32>
    %479 = vector.multi_reduction <add>, %478, %cst_205 [1] : vector<4x10xf32> to vector<4xf32>
    %480 = vector.shape_cast %479 : vector<4xf32> to vector<4x1xf32>
    %481 = vector.broadcast %480 : vector<4x1xf32> to vector<4x10xf32>
    %482 = arith.divf %478, %481 : vector<4x10xf32>
    %cst_206 = arith.constant dense<0.000000e+00> : vector<4x8xf32>
    %483 = tpu.matmul %482, %469, %cst_206 {dimension_numbers = #tpu.dot_dimension_numbers<[1], [0], [0], [1], [0, 0, 1, 1], [], []>} : vector<4x10xf32>, vector<10x8xf32>, vector<4x8xf32> -> vector<4x8xf32>
    %484 = vector.extract_strided_slice %446 {offsets = [8, 0], sizes = [8, 32], strides = [1, 1]} : vector<32x32xf32> to vector<8x32xf32>
    %cst_207 = arith.constant dense<0.000000e+00> : vector<4x32xf32>
    %485 = tpu.matmul %483, %484, %cst_207 {dimension_numbers = #tpu.dot_dimension_numbers<[1], [0], [0], [1], [0, 0, 1, 1], [], []>} : vector<4x8xf32>, vector<8x32xf32>, vector<4x32xf32> -> vector<4x32xf32>
    %486 = arith.addf %466, %485 : vector<4x32xf32>
    %487 = vector.extract_strided_slice %443 {offsets = [0, 16], sizes = [4, 8], strides = [1, 1]} : vector<10x96xf32> to vector<4x8xf32>
    %488 = vector.extract_strided_slice %443 {offsets = [0, 48], sizes = [10, 8], strides = [1, 1]} : vector<10x96xf32> to vector<10x8xf32>
    %489 = vector.extract_strided_slice %443 {offsets = [0, 80], sizes = [10, 8], strides = [1, 1]} : vector<10x96xf32> to vector<10x8xf32>
    %cst_208 = arith.constant dense<0.000000e+00> : vector<4x10xf32>
    %490 = tpu.matmul %487, %488, %cst_208 {dimension_numbers = #tpu.dot_dimension_numbers<[1], [1], [0], [0], [0, 0, 1, 0], [], []>} : vector<4x8xf32>, vector<10x8xf32>, vector<4x10xf32> -> vector<4x10xf32>
    %cst_209 = arith.constant 0.353553385 : f32
    %491 = vector.broadcast %cst_209 : f32 to vector<4x10xf32>
    %492 = arith.mulf %490, %491 : vector<4x10xf32>
    %493 = arith.addf %492, %40 : vector<4x10xf32>
    %cst_210 = arith.constant dense<0xFF800000> : vector<4xf32>
    %494 = vector.multi_reduction <maximumf>, %493, %cst_210 [1] : vector<4x10xf32> to vector<4xf32>
    %495 = vector.shape_cast %494 : vector<4xf32> to vector<4x1xf32>
    %496 = vector.broadcast %495 : vector<4x1xf32> to vector<4x10xf32>
    %497 = arith.subf %493, %496 : vector<4x10xf32>
    %498 = math.exp %497 : vector<4x10xf32>
    %cst_211 = arith.constant dense<0.000000e+00> : vector<4xf32>
    %499 = vector.multi_reduction <add>, %498, %cst_211 [1] : vector<4x10xf32> to vector<4xf32>
    %500 = vector.shape_cast %499 : vector<4xf32> to vector<4x1xf32>
    %501 = vector.broadcast %500 : vector<4x1xf32> to vector<4x10xf32>
    %502 = arith.divf %498, %501 : vector<4x10xf32>
    %cst_212 = arith.constant dense<0.000000e+00> : vector<4x8xf32>
    %503 = tpu.matmul %502, %489, %cst_212 {dimension_numbers = #tpu.dot_dimension_numbers<[1], [0], [0], [1], [0, 0, 1, 1], [], []>} : vector<4x10xf32>, vector<10x8xf32>, vector<4x8xf32> -> vector<4x8xf32>
    %504 = vector.extract_strided_slice %446 {offsets = [16, 0], sizes = [8, 32], strides = [1, 1]} : vector<32x32xf32> to vector<8x32xf32>
    %cst_213 = arith.constant dense<0.000000e+00> : vector<4x32xf32>
    %505 = tpu.matmul %503, %504, %cst_213 {dimension_numbers = #tpu.dot_dimension_numbers<[1], [0], [0], [1], [0, 0, 1, 1], [], []>} : vector<4x8xf32>, vector<8x32xf32>, vector<4x32xf32> -> vector<4x32xf32>
    %506 = arith.addf %486, %505 : vector<4x32xf32>
    %507 = vector.extract_strided_slice %443 {offsets = [0, 24], sizes = [4, 8], strides = [1, 1]} : vector<10x96xf32> to vector<4x8xf32>
    %508 = vector.extract_strided_slice %443 {offsets = [0, 56], sizes = [10, 8], strides = [1, 1]} : vector<10x96xf32> to vector<10x8xf32>
    %509 = vector.extract_strided_slice %443 {offsets = [0, 88], sizes = [10, 8], strides = [1, 1]} : vector<10x96xf32> to vector<10x8xf32>
    %cst_214 = arith.constant dense<0.000000e+00> : vector<4x10xf32>
    %510 = tpu.matmul %507, %508, %cst_214 {dimension_numbers = #tpu.dot_dimension_numbers<[1], [1], [0], [0], [0, 0, 1, 0], [], []>} : vector<4x8xf32>, vector<10x8xf32>, vector<4x10xf32> -> vector<4x10xf32>
    %cst_215 = arith.constant 0.353553385 : f32
    %511 = vector.broadcast %cst_215 : f32 to vector<4x10xf32>
    %512 = arith.mulf %510, %511 : vector<4x10xf32>
    %513 = arith.addf %512, %40 : vector<4x10xf32>
    %cst_216 = arith.constant dense<0xFF800000> : vector<4xf32>
    %514 = vector.multi_reduction <maximumf>, %513, %cst_216 [1] : vector<4x10xf32> to vector<4xf32>
    %515 = vector.shape_cast %514 : vector<4xf32> to vector<4x1xf32>
    %516 = vector.broadcast %515 : vector<4x1xf32> to vector<4x10xf32>
    %517 = arith.subf %513, %516 : vector<4x10xf32>
    %518 = math.exp %517 : vector<4x10xf32>
    %cst_217 = arith.constant dense<0.000000e+00> : vector<4xf32>
    %519 = vector.multi_reduction <add>, %518, %cst_217 [1] : vector<4x10xf32> to vector<4xf32>
    %520 = vector.shape_cast %519 : vector<4xf32> to vector<4x1xf32>
    %521 = vector.broadcast %520 : vector<4x1xf32> to vector<4x10xf32>
    %522 = arith.divf %518, %521 : vector<4x10xf32>
    %cst_218 = arith.constant dense<0.000000e+00> : vector<4x8xf32>
    %523 = tpu.matmul %522, %509, %cst_218 {dimension_numbers = #tpu.dot_dimension_numbers<[1], [0], [0], [1], [0, 0, 1, 1], [], []>} : vector<4x10xf32>, vector<10x8xf32>, vector<4x8xf32> -> vector<4x8xf32>
    %524 = vector.extract_strided_slice %446 {offsets = [24, 0], sizes = [8, 32], strides = [1, 1]} : vector<32x32xf32> to vector<8x32xf32>
    %cst_219 = arith.constant dense<0.000000e+00> : vector<4x32xf32>
    %525 = tpu.matmul %523, %524, %cst_219 {dimension_numbers = #tpu.dot_dimension_numbers<[1], [0], [0], [1], [0, 0, 1, 1], [], []>} : vector<4x8xf32>, vector<8x32xf32>, vector<4x32xf32> -> vector<4x32xf32>
    %526 = arith.addf %506, %525 : vector<4x32xf32>
    %c0_220 = arith.constant 0 : index
    %c0_221 = arith.constant 0 : index
    %c0_222 = arith.constant 0 : index
    %527 = vector.load %arg21[%c0_220, %c0_221, %c0_222] : memref<2x1x32xf32, #tpu.memory_space<vmem>>, vector<1x1x32xf32>
    %528 = vector.shape_cast %527 : vector<1x1x32xf32> to vector<1x32xf32>
    %529 = vector.broadcast %528 : vector<1x32xf32> to vector<4x32xf32>
    %530 = arith.addf %526, %529 : vector<4x32xf32>
    %531 = vector.shape_cast %170 : vector<32x32xf32> to vector<4x8x32xf32>
    %c0_223 = arith.constant 0 : index
    %c0_224 = arith.constant 0 : index
    %c0_225 = arith.constant 0 : index
    %532 = vector.load %arg31[%c0_223, %c0_224, %c0_225] : memref<4x8x32xf32, #tpu.memory_space<vmem>>, vector<4x8x32xf32>
    tpu.vector_store %arg31[%c0_223, %c0_224, %c0_225], %531 {strides = array<i32>} : memref<4x8x32xf32, #tpu.memory_space<vmem>>, vector<4x8x32xf32>,
    %c0_226 = arith.constant 0 : index
    %c0_227 = arith.constant 0 : index
    %c0_228 = arith.constant 0 : index
    %533 = vector.load %arg31[%c0_226, %c0_227, %c0_228] : memref<4x8x32xf32, #tpu.memory_space<vmem>>, vector<4x1x32xf32>
    %534 = vector.shape_cast %533 : vector<4x1x32xf32> to vector<4x32xf32>
    %c0_229 = arith.constant 0 : index
    %c0_230 = arith.constant 0 : index
    %c0_231 = arith.constant 0 : index
    %535 = vector.load %arg22[%c0_229, %c0_230, %c0_231] : memref<2x32x32xf32, #tpu.memory_space<vmem>>, vector<1x32x32xf32>
    %536 = vector.shape_cast %535 : vector<1x32x32xf32> to vector<32x32xf32>
    %cst_232 = arith.constant dense<0.000000e+00> : vector<4x32xf32>
    %537 = tpu.matmul %534, %536, %cst_232 {dimension_numbers = #tpu.dot_dimension_numbers<[1], [0], [0], [1], [0, 0, 1, 1], [], []>} : vector<4x32xf32>, vector<32x32xf32>, vector<4x32xf32> -> vector<4x32xf32>
    %c0_233 = arith.constant 0 : index
    %c0_234 = arith.constant 0 : index
    %c0_235 = arith.constant 0 : index
    %538 = vector.load %arg23[%c0_233, %c0_234, %c0_235] : memref<2x32x32xf32, #tpu.memory_space<vmem>>, vector<1x32x32xf32>
    %539 = vector.shape_cast %538 : vector<1x32x32xf32> to vector<32x32xf32>
    %cst_236 = arith.constant dense<0.000000e+00> : vector<4x32xf32>
    %540 = tpu.matmul %530, %539, %cst_236 {dimension_numbers = #tpu.dot_dimension_numbers<[1], [0], [0], [1], [0, 0, 1, 1], [], []>} : vector<4x32xf32>, vector<32x32xf32>, vector<4x32xf32> -> vector<4x32xf32>
    %541 = arith.mulf %534, %537 : vector<4x32xf32>
    %cst_237 = arith.constant dense<0.000000e+00> : vector<4xf32>
    %542 = vector.multi_reduction <add>, %541, %cst_237 [1] : vector<4x32xf32> to vector<4xf32>
    %543 = vector.shape_cast %542 : vector<4xf32> to vector<4x1xf32>
    %544 = arith.mulf %534, %540 : vector<4x32xf32>
    %cst_238 = arith.constant dense<0.000000e+00> : vector<4xf32>
    %545 = vector.multi_reduction <add>, %544, %cst_238 [1] : vector<4x32xf32> to vector<4xf32>
    %546 = vector.shape_cast %545 : vector<4xf32> to vector<4x1xf32>
    %547 = arith.mulf %530, %537 : vector<4x32xf32>
    %cst_239 = arith.constant dense<0.000000e+00> : vector<4xf32>
    %548 = vector.multi_reduction <add>, %547, %cst_239 [1] : vector<4x32xf32> to vector<4xf32>
    %549 = vector.shape_cast %548 : vector<4xf32> to vector<4x1xf32>
    %550 = arith.mulf %530, %540 : vector<4x32xf32>
    %cst_240 = arith.constant dense<0.000000e+00> : vector<4xf32>
    %551 = vector.multi_reduction <add>, %550, %cst_240 [1] : vector<4x32xf32> to vector<4xf32>
    %552 = vector.shape_cast %551 : vector<4xf32> to vector<4x1xf32>
    %553 = arith.maximumf %543, %546 : vector<4x1xf32>
    %554 = arith.subf %543, %553 : vector<4x1xf32>
    %555 = math.exp %554 : vector<4x1xf32>
    %556 = arith.subf %546, %553 : vector<4x1xf32>
    %557 = math.exp %556 : vector<4x1xf32>
    %558 = arith.addf %555, %557 : vector<4x1xf32>
    %559 = arith.maximumf %549, %552 : vector<4x1xf32>
    %560 = arith.subf %549, %559 : vector<4x1xf32>
    %561 = math.exp %560 : vector<4x1xf32>
    %562 = arith.subf %552, %559 : vector<4x1xf32>
    %563 = math.exp %562 : vector<4x1xf32>
    %564 = arith.addf %561, %563 : vector<4x1xf32>
    %565 = arith.divf %555, %558 : vector<4x1xf32>
    %566 = vector.broadcast %565 : vector<4x1xf32> to vector<4x32xf32>
    %567 = arith.mulf %566, %534 : vector<4x32xf32>
    %568 = arith.divf %557, %558 : vector<4x1xf32>
    %569 = vector.broadcast %568 : vector<4x1xf32> to vector<4x32xf32>
    %570 = arith.mulf %569, %530 : vector<4x32xf32>
    %571 = arith.addf %567, %570 : vector<4x32xf32>
    %572 = arith.divf %561, %564 : vector<4x1xf32>
    %573 = vector.broadcast %572 : vector<4x1xf32> to vector<4x32xf32>
    %574 = arith.mulf %573, %571 : vector<4x32xf32>
    %575 = arith.divf %563, %564 : vector<4x1xf32>
    %576 = vector.broadcast %575 : vector<4x1xf32> to vector<4x32xf32>
    %577 = arith.mulf %576, %530 : vector<4x32xf32>
    %578 = arith.addf %574, %577 : vector<4x32xf32>
    %579 = vector.shape_cast %571 : vector<4x32xf32> to vector<4x1x32xf32>
    %c0_241 = arith.constant 0 : index
    %c0_242 = arith.constant 0 : index
    %c0_243 = arith.constant 0 : index
    %580 = vector.load %arg31[%c0_241, %c0_242, %c0_243] : memref<4x8x32xf32, #tpu.memory_space<vmem>>, vector<4x1x32xf32>
    tpu.vector_store %arg31[%c0_241, %c0_242, %c0_243], %579 {strides = array<i32>} : memref<4x8x32xf32, #tpu.memory_space<vmem>>, vector<4x1x32xf32>,
    %c0_244 = arith.constant 0 : index
    %c0_245 = arith.constant 0 : index
    %581 = vector.load %arg32[%c0_244, %c0_245] : memref<10x32xf32, #tpu.memory_space<vmem>>, vector<10x32xf32>
    tpu.vector_store %arg32[%c0_244, %c0_245], %436 {strides = array<i32>} : memref<10x32xf32, #tpu.memory_space<vmem>>, vector<10x32xf32>,
    %c0_246 = arith.constant 0 : index
    %c0_247 = arith.constant 0 : index
    %582 = vector.load %arg32[%c0_246, %c0_247] : memref<10x32xf32, #tpu.memory_space<vmem>>, vector<4x32xf32>
    tpu.vector_store %arg32[%c0_246, %c0_247], %578 {strides = array<i32>} : memref<10x32xf32, #tpu.memory_space<vmem>>, vector<4x32xf32>,
    %c0_248 = arith.constant 0 : index
    %c0_249 = arith.constant 0 : index
    %c0_250 = arith.constant 0 : index
    %583 = vector.load %arg31[%c0_248, %c0_249, %c0_250] : memref<4x8x32xf32, #tpu.memory_space<vmem>>, vector<4x8x32xf32>
    %584 = vector.shape_cast %583 : vector<4x8x32xf32> to vector<32x32xf32>
    %c0_251 = arith.constant 0 : index
    %c0_252 = arith.constant 0 : index
    %585 = vector.load %arg32[%c0_251, %c0_252] : memref<10x32xf32, #tpu.memory_space<vmem>>, vector<10x32xf32>
    %c1_253 = arith.constant 1 : index
    %c0_254 = arith.constant 0 : index
    %c0_255 = arith.constant 0 : index
    %586 = vector.load %arg12[%c1_253, %c0_254, %c0_255] : memref<2x32x96xf32, #tpu.memory_space<vmem>>, vector<1x32x96xf32>
    %587 = vector.shape_cast %586 : vector<1x32x96xf32> to vector<32x96xf32>
    %cst_256 = arith.constant dense<0.000000e+00> : vector<32x96xf32>
    %588 = tpu.matmul %584, %587, %cst_256 {dimension_numbers = #tpu.dot_dimension_numbers<[1], [0], [0], [1], [0, 0, 1, 1], [], []>} : vector<32x32xf32>, vector<32x96xf32>, vector<32x96xf32> -> vector<32x96xf32>
    %c1_257 = arith.constant 1 : index
    %c0_258 = arith.constant 0 : index
    %c0_259 = arith.constant 0 : index
    %589 = vector.load %arg13[%c1_257, %c0_258, %c0_259] : memref<2x1x96xf32, #tpu.memory_space<vmem>>, vector<1x1x96xf32>
    %590 = vector.shape_cast %589 : vector<1x1x96xf32> to vector<1x96xf32>
    %591 = vector.broadcast %590 : vector<1x96xf32> to vector<32x96xf32>
    %592 = arith.addf %588, %591 : vector<32x96xf32>
    %cst_260 = arith.constant 0.000000e+00 : f32
    %593 = vector.broadcast %cst_260 : f32 to vector<4x8x8xf32>
    %cst_261 = arith.constant 0.000000e+00 : f32
    %594 = vector.broadcast %cst_261 : f32 to vector<32x32xf32>
    %c1_262 = arith.constant 1 : index
    %c0_263 = arith.constant 0 : index
    %c0_264 = arith.constant 0 : index
    %595 = vector.load %arg14[%c1_262, %c0_263, %c0_264] : memref<2x32x32xf32, #tpu.memory_space<vmem>>, vector<1x32x32xf32>
    %596 = vector.shape_cast %595 : vector<1x32x32xf32> to vector<32x32xf32>
    %597 = vector.extract_strided_slice %592 {offsets = [0, 0], sizes = [32, 8], strides = [1, 1]} : vector<32x96xf32> to vector<32x8xf32>
    %598 = vector.shape_cast %597 : vector<32x8xf32> to vector<4x8x8xf32>
    %599 = vector.extract_strided_slice %592 {offsets = [0, 32], sizes = [32, 8], strides = [1, 1]} : vector<32x96xf32> to vector<32x8xf32>
    %600 = vector.shape_cast %599 : vector<32x8xf32> to vector<4x8x8xf32>
    %601 = vector.extract_strided_slice %592 {offsets = [0, 64], sizes = [32, 8], strides = [1, 1]} : vector<32x96xf32> to vector<32x8xf32>
    %602 = vector.shape_cast %601 : vector<32x8xf32> to vector<4x8x8xf32>
    "tpu.trace_start"() <{level = 10 : i32, message = "bqd,bkd->bqk"}> : () -> ()
    %cst_265 = arith.constant dense<0.000000e+00> : vector<4x8x8xf32>
    %603 = tpu.matmul %598, %600, %cst_265 {dimension_numbers = #tpu.dot_dimension_numbers<[2], [2], [1], [1], [0, 0, 0, 1, 1, 1], [0], [0]>} : vector<4x8x8xf32>, vector<4x8x8xf32>, vector<4x8x8xf32> -> vector<4x8x8xf32>
    "tpu.trace_stop"() : () -> ()
    %cst_266 = arith.constant 0.353553385 : f32
    %604 = vector.broadcast %cst_266 : f32 to vector<4x8x8xf32>
    %605 = arith.mulf %603, %604 : vector<4x8x8xf32>
    %606 = vector.shape_cast %39 : vector<4x8xf32> to vector<4x1x8xf32>
    %607 = vector.broadcast %606 : vector<4x1x8xf32> to vector<4x8x8xf32>
    %608 = arith.addf %605, %607 : vector<4x8x8xf32>
    %cst_267 = arith.constant dense<0xFF800000> : vector<4x8xf32>
    %609 = vector.multi_reduction <maximumf>, %608, %cst_267 [2] : vector<4x8x8xf32> to vector<4x8xf32>
    %610 = vector.shape_cast %609 : vector<4x8xf32> to vector<4x8x1xf32>
    %611 = vector.broadcast %610 : vector<4x8x1xf32> to vector<4x8x8xf32>
    %612 = arith.subf %608, %611 : vector<4x8x8xf32>
    %613 = math.exp %612 : vector<4x8x8xf32>
    %cst_268 = arith.constant dense<0.000000e+00> : vector<4x8xf32>
    %614 = vector.multi_reduction <add>, %613, %cst_268 [2] : vector<4x8x8xf32> to vector<4x8xf32>
    %615 = vector.shape_cast %614 : vector<4x8xf32> to vector<4x8x1xf32>
    %616 = vector.broadcast %615 : vector<4x8x1xf32> to vector<4x8x8xf32>
    %617 = arith.divf %613, %616 : vector<4x8x8xf32>
    %618 = arith.addf %593, %617 : vector<4x8x8xf32>
    "tpu.trace_start"() <{level = 10 : i32, message = "bqk,bkd->bqd"}> : () -> ()
    %cst_269 = arith.constant dense<0.000000e+00> : vector<4x8x8xf32>
    %619 = tpu.matmul %617, %602, %cst_269 {dimension_numbers = #tpu.dot_dimension_numbers<[2], [1], [1], [2], [0, 0, 0, 1, 1, 2], [0], [0]>} : vector<4x8x8xf32>, vector<4x8x8xf32>, vector<4x8x8xf32> -> vector<4x8x8xf32>
    "tpu.trace_stop"() : () -> ()
    %620 = vector.shape_cast %619 : vector<4x8x8xf32> to vector<32x8xf32>
    %621 = vector.extract_strided_slice %596 {offsets = [0, 0], sizes = [8, 32], strides = [1, 1]} : vector<32x32xf32> to vector<8x32xf32>
    %cst_270 = arith.constant dense<0.000000e+00> : vector<32x32xf32>
    %622 = tpu.matmul %620, %621, %cst_270 {dimension_numbers = #tpu.dot_dimension_numbers<[1], [0], [0], [1], [0, 0, 1, 1], [], []>} : vector<32x8xf32>, vector<8x32xf32>, vector<32x32xf32> -> vector<32x32xf32>
    %623 = arith.addf %594, %622 : vector<32x32xf32>
    %624 = vector.extract_strided_slice %592 {offsets = [0, 8], sizes = [32, 8], strides = [1, 1]} : vector<32x96xf32> to vector<32x8xf32>
    %625 = vector.shape_cast %624 : vector<32x8xf32> to vector<4x8x8xf32>
    %626 = vector.extract_strided_slice %592 {offsets = [0, 40], sizes = [32, 8], strides = [1, 1]} : vector<32x96xf32> to vector<32x8xf32>
    %627 = vector.shape_cast %626 : vector<32x8xf32> to vector<4x8x8xf32>
    %628 = vector.extract_strided_slice %592 {offsets = [0, 72], sizes = [32, 8], strides = [1, 1]} : vector<32x96xf32> to vector<32x8xf32>
    %629 = vector.shape_cast %628 : vector<32x8xf32> to vector<4x8x8xf32>
    "tpu.trace_start"() <{level = 10 : i32, message = "bqd,bkd->bqk"}> : () -> ()
    %cst_271 = arith.constant dense<0.000000e+00> : vector<4x8x8xf32>
    %630 = tpu.matmul %625, %627, %cst_271 {dimension_numbers = #tpu.dot_dimension_numbers<[2], [2], [1], [1], [0, 0, 0, 1, 1, 1], [0], [0]>} : vector<4x8x8xf32>, vector<4x8x8xf32>, vector<4x8x8xf32> -> vector<4x8x8xf32>
    "tpu.trace_stop"() : () -> ()
    %cst_272 = arith.constant 0.353553385 : f32
    %631 = vector.broadcast %cst_272 : f32 to vector<4x8x8xf32>
    %632 = arith.mulf %630, %631 : vector<4x8x8xf32>
    %633 = vector.shape_cast %39 : vector<4x8xf32> to vector<4x1x8xf32>
    %634 = vector.broadcast %633 : vector<4x1x8xf32> to vector<4x8x8xf32>
    %635 = arith.addf %632, %634 : vector<4x8x8xf32>
    %cst_273 = arith.constant dense<0xFF800000> : vector<4x8xf32>
    %636 = vector.multi_reduction <maximumf>, %635, %cst_273 [2] : vector<4x8x8xf32> to vector<4x8xf32>
    %637 = vector.shape_cast %636 : vector<4x8xf32> to vector<4x8x1xf32>
    %638 = vector.broadcast %637 : vector<4x8x1xf32> to vector<4x8x8xf32>
    %639 = arith.subf %635, %638 : vector<4x8x8xf32>
    %640 = math.exp %639 : vector<4x8x8xf32>
    %cst_274 = arith.constant dense<0.000000e+00> : vector<4x8xf32>
    %641 = vector.multi_reduction <add>, %640, %cst_274 [2] : vector<4x8x8xf32> to vector<4x8xf32>
    %642 = vector.shape_cast %641 : vector<4x8xf32> to vector<4x8x1xf32>
    %643 = vector.broadcast %642 : vector<4x8x1xf32> to vector<4x8x8xf32>
    %644 = arith.divf %640, %643 : vector<4x8x8xf32>
    %645 = arith.addf %618, %644 : vector<4x8x8xf32>
    "tpu.trace_start"() <{level = 10 : i32, message = "bqk,bkd->bqd"}> : () -> ()
    %cst_275 = arith.constant dense<0.000000e+00> : vector<4x8x8xf32>
    %646 = tpu.matmul %644, %629, %cst_275 {dimension_numbers = #tpu.dot_dimension_numbers<[2], [1], [1], [2], [0, 0, 0, 1, 1, 2], [0], [0]>} : vector<4x8x8xf32>, vector<4x8x8xf32>, vector<4x8x8xf32> -> vector<4x8x8xf32>
    "tpu.trace_stop"() : () -> ()
    %647 = vector.shape_cast %646 : vector<4x8x8xf32> to vector<32x8xf32>
    %648 = vector.extract_strided_slice %596 {offsets = [8, 0], sizes = [8, 32], strides = [1, 1]} : vector<32x32xf32> to vector<8x32xf32>
    %cst_276 = arith.constant dense<0.000000e+00> : vector<32x32xf32>
    %649 = tpu.matmul %647, %648, %cst_276 {dimension_numbers = #tpu.dot_dimension_numbers<[1], [0], [0], [1], [0, 0, 1, 1], [], []>} : vector<32x8xf32>, vector<8x32xf32>, vector<32x32xf32> -> vector<32x32xf32>
    %650 = arith.addf %623, %649 : vector<32x32xf32>
    %651 = vector.extract_strided_slice %592 {offsets = [0, 16], sizes = [32, 8], strides = [1, 1]} : vector<32x96xf32> to vector<32x8xf32>
    %652 = vector.shape_cast %651 : vector<32x8xf32> to vector<4x8x8xf32>
    %653 = vector.extract_strided_slice %592 {offsets = [0, 48], sizes = [32, 8], strides = [1, 1]} : vector<32x96xf32> to vector<32x8xf32>
    %654 = vector.shape_cast %653 : vector<32x8xf32> to vector<4x8x8xf32>
    %655 = vector.extract_strided_slice %592 {offsets = [0, 80], sizes = [32, 8], strides = [1, 1]} : vector<32x96xf32> to vector<32x8xf32>
    %656 = vector.shape_cast %655 : vector<32x8xf32> to vector<4x8x8xf32>
    "tpu.trace_start"() <{level = 10 : i32, message = "bqd,bkd->bqk"}> : () -> ()
    %cst_277 = arith.constant dense<0.000000e+00> : vector<4x8x8xf32>
    %657 = tpu.matmul %652, %654, %cst_277 {dimension_numbers = #tpu.dot_dimension_numbers<[2], [2], [1], [1], [0, 0, 0, 1, 1, 1], [0], [0]>} : vector<4x8x8xf32>, vector<4x8x8xf32>, vector<4x8x8xf32> -> vector<4x8x8xf32>
    "tpu.trace_stop"() : () -> ()
    %cst_278 = arith.constant 0.353553385 : f32
    %658 = vector.broadcast %cst_278 : f32 to vector<4x8x8xf32>
    %659 = arith.mulf %657, %658 : vector<4x8x8xf32>
    %660 = vector.shape_cast %39 : vector<4x8xf32> to vector<4x1x8xf32>
    %661 = vector.broadcast %660 : vector<4x1x8xf32> to vector<4x8x8xf32>
    %662 = arith.addf %659, %661 : vector<4x8x8xf32>
    %cst_279 = arith.constant dense<0xFF800000> : vector<4x8xf32>
    %663 = vector.multi_reduction <maximumf>, %662, %cst_279 [2] : vector<4x8x8xf32> to vector<4x8xf32>
    %664 = vector.shape_cast %663 : vector<4x8xf32> to vector<4x8x1xf32>
    %665 = vector.broadcast %664 : vector<4x8x1xf32> to vector<4x8x8xf32>
    %666 = arith.subf %662, %665 : vector<4x8x8xf32>
    %667 = math.exp %666 : vector<4x8x8xf32>
    %cst_280 = arith.constant dense<0.000000e+00> : vector<4x8xf32>
    %668 = vector.multi_reduction <add>, %667, %cst_280 [2] : vector<4x8x8xf32> to vector<4x8xf32>
    %669 = vector.shape_cast %668 : vector<4x8xf32> to vector<4x8x1xf32>
    %670 = vector.broadcast %669 : vector<4x8x1xf32> to vector<4x8x8xf32>
    %671 = arith.divf %667, %670 : vector<4x8x8xf32>
    %672 = arith.addf %645, %671 : vector<4x8x8xf32>
    "tpu.trace_start"() <{level = 10 : i32, message = "bqk,bkd->bqd"}> : () -> ()
    %cst_281 = arith.constant dense<0.000000e+00> : vector<4x8x8xf32>
    %673 = tpu.matmul %671, %656, %cst_281 {dimension_numbers = #tpu.dot_dimension_numbers<[2], [1], [1], [2], [0, 0, 0, 1, 1, 2], [0], [0]>} : vector<4x8x8xf32>, vector<4x8x8xf32>, vector<4x8x8xf32> -> vector<4x8x8xf32>
    "tpu.trace_stop"() : () -> ()
    %674 = vector.shape_cast %673 : vector<4x8x8xf32> to vector<32x8xf32>
    %675 = vector.extract_strided_slice %596 {offsets = [16, 0], sizes = [8, 32], strides = [1, 1]} : vector<32x32xf32> to vector<8x32xf32>
    %cst_282 = arith.constant dense<0.000000e+00> : vector<32x32xf32>
    %676 = tpu.matmul %674, %675, %cst_282 {dimension_numbers = #tpu.dot_dimension_numbers<[1], [0], [0], [1], [0, 0, 1, 1], [], []>} : vector<32x8xf32>, vector<8x32xf32>, vector<32x32xf32> -> vector<32x32xf32>
    %677 = arith.addf %650, %676 : vector<32x32xf32>
    %678 = vector.extract_strided_slice %592 {offsets = [0, 24], sizes = [32, 8], strides = [1, 1]} : vector<32x96xf32> to vector<32x8xf32>
    %679 = vector.shape_cast %678 : vector<32x8xf32> to vector<4x8x8xf32>
    %680 = vector.extract_strided_slice %592 {offsets = [0, 56], sizes = [32, 8], strides = [1, 1]} : vector<32x96xf32> to vector<32x8xf32>
    %681 = vector.shape_cast %680 : vector<32x8xf32> to vector<4x8x8xf32>
    %682 = vector.extract_strided_slice %592 {offsets = [0, 88], sizes = [32, 8], strides = [1, 1]} : vector<32x96xf32> to vector<32x8xf32>
    %683 = vector.shape_cast %682 : vector<32x8xf32> to vector<4x8x8xf32>
    "tpu.trace_start"() <{level = 10 : i32, message = "bqd,bkd->bqk"}> : () -> ()
    %cst_283 = arith.constant dense<0.000000e+00> : vector<4x8x8xf32>
    %684 = tpu.matmul %679, %681, %cst_283 {dimension_numbers = #tpu.dot_dimension_numbers<[2], [2], [1], [1], [0, 0, 0, 1, 1, 1], [0], [0]>} : vector<4x8x8xf32>, vector<4x8x8xf32>, vector<4x8x8xf32> -> vector<4x8x8xf32>
    "tpu.trace_stop"() : () -> ()
    %cst_284 = arith.constant 0.353553385 : f32
    %685 = vector.broadcast %cst_284 : f32 to vector<4x8x8xf32>
    %686 = arith.mulf %684, %685 : vector<4x8x8xf32>
    %687 = vector.shape_cast %39 : vector<4x8xf32> to vector<4x1x8xf32>
    %688 = vector.broadcast %687 : vector<4x1x8xf32> to vector<4x8x8xf32>
    %689 = arith.addf %686, %688 : vector<4x8x8xf32>
    %cst_285 = arith.constant dense<0xFF800000> : vector<4x8xf32>
    %690 = vector.multi_reduction <maximumf>, %689, %cst_285 [2] : vector<4x8x8xf32> to vector<4x8xf32>
    %691 = vector.shape_cast %690 : vector<4x8xf32> to vector<4x8x1xf32>
    %692 = vector.broadcast %691 : vector<4x8x1xf32> to vector<4x8x8xf32>
    %693 = arith.subf %689, %692 : vector<4x8x8xf32>
    %694 = math.exp %693 : vector<4x8x8xf32>
    %cst_286 = arith.constant dense<0.000000e+00> : vector<4x8xf32>
    %695 = vector.multi_reduction <add>, %694, %cst_286 [2] : vector<4x8x8xf32> to vector<4x8xf32>
    %696 = vector.shape_cast %695 : vector<4x8xf32> to vector<4x8x1xf32>
    %697 = vector.broadcast %696 : vector<4x8x1xf32> to vector<4x8x8xf32>
    %698 = arith.divf %694, %697 : vector<4x8x8xf32>
    %699 = arith.addf %672, %698 : vector<4x8x8xf32>
    "tpu.trace_start"() <{level = 10 : i32, message = "bqk,bkd->bqd"}> : () -> ()
    %cst_287 = arith.constant dense<0.000000e+00> : vector<4x8x8xf32>
    %700 = tpu.matmul %698, %683, %cst_287 {dimension_numbers = #tpu.dot_dimension_numbers<[2], [1], [1], [2], [0, 0, 0, 1, 1, 2], [0], [0]>} : vector<4x8x8xf32>, vector<4x8x8xf32>, vector<4x8x8xf32> -> vector<4x8x8xf32>
    "tpu.trace_stop"() : () -> ()
    %701 = vector.shape_cast %700 : vector<4x8x8xf32> to vector<32x8xf32>
    %702 = vector.extract_strided_slice %596 {offsets = [24, 0], sizes = [8, 32], strides = [1, 1]} : vector<32x32xf32> to vector<8x32xf32>
    %cst_288 = arith.constant dense<0.000000e+00> : vector<32x32xf32>
    %703 = tpu.matmul %701, %702, %cst_288 {dimension_numbers = #tpu.dot_dimension_numbers<[1], [0], [0], [1], [0, 0, 1, 1], [], []>} : vector<32x8xf32>, vector<8x32xf32>, vector<32x32xf32> -> vector<32x32xf32>
    %704 = arith.addf %677, %703 : vector<32x32xf32>
    %c1_289 = arith.constant 1 : index
    %c0_290 = arith.constant 0 : index
    %c0_291 = arith.constant 0 : index
    %705 = vector.load %arg15[%c1_289, %c0_290, %c0_291] : memref<2x1x32xf32, #tpu.memory_space<vmem>>, vector<1x1x32xf32>
    %706 = vector.shape_cast %705 : vector<1x1x32xf32> to vector<1x32xf32>
    %707 = vector.broadcast %706 : vector<1x32xf32> to vector<32x32xf32>
    %708 = arith.addf %704, %707 : vector<32x32xf32>
    %cst_292 = arith.constant 2.500000e-01 : f32
    %709 = vector.broadcast %cst_292 : f32 to vector<4x8x8xf32>
    %710 = arith.mulf %699, %709 : vector<4x8x8xf32>
    %c0_i32_293 = arith.constant 0 : i32
    %711 = vector.broadcast %c0_i32_293 : i32 to vector<4x8x8xi32>
    %712 = arith.cmpi sge, %43, %711 : vector<4x8x8xi32>
    %c2_i32_294 = arith.constant 2 : i32
    %713 = vector.broadcast %c2_i32_294 : i32 to vector<4x8x8xi32>
    %714 = arith.cmpi slt, %43, %713 : vector<4x8x8xi32>
    %715 = arith.andi %712, %714 : vector<4x8x8xi1>
    %cst_295 = arith.constant 0.000000e+00 : f32
    %716 = vector.broadcast %cst_295 : f32 to vector<4x8x8xf32>
    %717 = arith.select %715, %710, %716 : vector<4x8x8xi1>, vector<4x8x8xf32>
    %cst_296 = arith.constant dense<0xFF800000> : vector<4x8xf32>
    %718 = vector.multi_reduction <maximumf>, %717, %cst_296 [2] : vector<4x8x8xf32> to vector<4x8xf32>
    %c0_i32_297 = arith.constant 0 : i32
    %719 = vector.broadcast %c0_i32_297 : i32 to vector<4x8xi32>
    %720 = arith.cmpi sge, %44, %719 : vector<4x8xi32>
    %c2_i32_298 = arith.constant 2 : i32
    %721 = vector.broadcast %c2_i32_298 : i32 to vector<4x8xi32>
    %722 = arith.cmpi slt, %44, %721 : vector<4x8xi32>
    %723 = arith.andi %720, %722 : vector<4x8xi1>
    %cst_299 = arith.constant 0.000000e+00 : f32
    %724 = vector.broadcast %cst_299 : f32 to vector<4x8xf32>
    %725 = arith.select %723, %718, %724 : vector<4x8xi1>, vector<4x8xf32>
    %cst_300 = arith.constant dense<0xFF800000> : vector<4xf32>
    %726 = vector.multi_reduction <maximumf>, %725, %cst_300 [1] : vector<4x8xf32> to vector<4xf32>
    %727 = vector.shape_cast %726 : vector<4xf32> to vector<4x1xf32>
    %c0_301 = arith.constant 0 : index
    %c0_302 = arith.constant 0 : index
    %728 = vector.load %arg24[%c0_301, %c0_302] : memref<16x32xf32, #tpu.memory_space<vmem>>, vector<1x32xf32>
    %729 = vector.broadcast %727 : vector<4x1xf32> to vector<4x32xf32>
    %730 = vector.broadcast %728 : vector<1x32xf32> to vector<4x32xf32>
    %731 = arith.mulf %729, %730 : vector<4x32xf32>
    %732 = arith.addf %428, %731 : vector<4x32xf32>
    %c2_i32_303 = arith.constant 2 : i32
    %733 = vector.broadcast %c2_i32_303 : i32 to vector<4x8xi32>
    %734 = arith.cmpi sge, %44, %733 : vector<4x8xi32>
    %c4_i32_304 = arith.constant 4 : i32
    %735 = vector.broadcast %c4_i32_304 : i32 to vector<4x8xi32>
    %736 = arith.cmpi slt, %44, %735 : vector<4x8xi32>
    %737 = arith.andi %734, %736 : vector<4x8xi1>
    %cst_305 = arith.constant 0.000000e+00 : f32
    %738 = vector.broadcast %cst_305 : f32 to vector<4x8xf32>
    %739 = arith.select %737, %718, %738 : vector<4x8xi1>, vector<4x8xf32>
    %cst_306 = arith.constant dense<0xFF800000> : vector<4xf32>
    %740 = vector.multi_reduction <maximumf>, %739, %cst_306 [1] : vector<4x8xf32> to vector<4xf32>
    %741 = vector.shape_cast %740 : vector<4xf32> to vector<4x1xf32>
    %c4_307 = arith.constant 4 : index
    %c0_308 = arith.constant 0 : index
    %742 = vector.load %arg24[%c4_307, %c0_308] : memref<16x32xf32, #tpu.memory_space<vmem>>, vector<1x32xf32>
    %743 = vector.broadcast %741 : vector<4x1xf32> to vector<4x32xf32>
    %744 = vector.broadcast %742 : vector<1x32xf32> to vector<4x32xf32>
    %745 = arith.mulf %743, %744 : vector<4x32xf32>
    %746 = arith.addf %732, %745 : vector<4x32xf32>
    %c4_i32_309 = arith.constant 4 : i32
    %747 = vector.broadcast %c4_i32_309 : i32 to vector<4x8xi32>
    %748 = arith.cmpi sge, %44, %747 : vector<4x8xi32>
    %c6_i32_310 = arith.constant 6 : i32
    %749 = vector.broadcast %c6_i32_310 : i32 to vector<4x8xi32>
    %750 = arith.cmpi slt, %44, %749 : vector<4x8xi32>
    %751 = arith.andi %748, %750 : vector<4x8xi1>
    %cst_311 = arith.constant 0.000000e+00 : f32
    %752 = vector.broadcast %cst_311 : f32 to vector<4x8xf32>
    %753 = arith.select %751, %718, %752 : vector<4x8xi1>, vector<4x8xf32>
    %cst_312 = arith.constant dense<0xFF800000> : vector<4xf32>
    %754 = vector.multi_reduction <maximumf>, %753, %cst_312 [1] : vector<4x8xf32> to vector<4xf32>
    %755 = vector.shape_cast %754 : vector<4xf32> to vector<4x1xf32>
    %c8_313 = arith.constant 8 : index
    %c0_314 = arith.constant 0 : index
    %756 = vector.load %arg24[%c8_313, %c0_314] : memref<16x32xf32, #tpu.memory_space<vmem>>, vector<1x32xf32>
    %757 = vector.broadcast %755 : vector<4x1xf32> to vector<4x32xf32>
    %758 = vector.broadcast %756 : vector<1x32xf32> to vector<4x32xf32>
    %759 = arith.mulf %757, %758 : vector<4x32xf32>
    %760 = arith.addf %746, %759 : vector<4x32xf32>
    %c6_i32_315 = arith.constant 6 : i32
    %761 = vector.broadcast %c6_i32_315 : i32 to vector<4x8xi32>
    %762 = arith.cmpi sge, %44, %761 : vector<4x8xi32>
    %c8_i32_316 = arith.constant 8 : i32
    %763 = vector.broadcast %c8_i32_316 : i32 to vector<4x8xi32>
    %764 = arith.cmpi slt, %44, %763 : vector<4x8xi32>
    %765 = arith.andi %762, %764 : vector<4x8xi1>
    %cst_317 = arith.constant 0.000000e+00 : f32
    %766 = vector.broadcast %cst_317 : f32 to vector<4x8xf32>
    %767 = arith.select %765, %718, %766 : vector<4x8xi1>, vector<4x8xf32>
    %cst_318 = arith.constant dense<0xFF800000> : vector<4xf32>
    %768 = vector.multi_reduction <maximumf>, %767, %cst_318 [1] : vector<4x8xf32> to vector<4xf32>
    %769 = vector.shape_cast %768 : vector<4xf32> to vector<4x1xf32>
    %c12_319 = arith.constant 12 : index
    %c0_320 = arith.constant 0 : index
    %770 = vector.load %arg24[%c12_319, %c0_320] : memref<16x32xf32, #tpu.memory_space<vmem>>, vector<1x32xf32>
    %771 = vector.broadcast %769 : vector<4x1xf32> to vector<4x32xf32>
    %772 = vector.broadcast %770 : vector<1x32xf32> to vector<4x32xf32>
    %773 = arith.mulf %771, %772 : vector<4x32xf32>
    %774 = arith.addf %760, %773 : vector<4x32xf32>
    %c2_i32_321 = arith.constant 2 : i32
    %775 = vector.broadcast %c2_i32_321 : i32 to vector<4x8x8xi32>
    %776 = arith.cmpi sge, %43, %775 : vector<4x8x8xi32>
    %c4_i32_322 = arith.constant 4 : i32
    %777 = vector.broadcast %c4_i32_322 : i32 to vector<4x8x8xi32>
    %778 = arith.cmpi slt, %43, %777 : vector<4x8x8xi32>
    %779 = arith.andi %776, %778 : vector<4x8x8xi1>
    %cst_323 = arith.constant 0.000000e+00 : f32
    %780 = vector.broadcast %cst_323 : f32 to vector<4x8x8xf32>
    %781 = arith.select %779, %710, %780 : vector<4x8x8xi1>, vector<4x8x8xf32>
    %cst_324 = arith.constant dense<0xFF800000> : vector<4x8xf32>
    %782 = vector.multi_reduction <maximumf>, %781, %cst_324 [2] : vector<4x8x8xf32> to vector<4x8xf32>
    %c0_i32_325 = arith.constant 0 : i32
    %783 = vector.broadcast %c0_i32_325 : i32 to vector<4x8xi32>
    %784 = arith.cmpi sge, %44, %783 : vector<4x8xi32>
    %c2_i32_326 = arith.constant 2 : i32
    %785 = vector.broadcast %c2_i32_326 : i32 to vector<4x8xi32>
    %786 = arith.cmpi slt, %44, %785 : vector<4x8xi32>
    %787 = arith.andi %784, %786 : vector<4x8xi1>
    %cst_327 = arith.constant 0.000000e+00 : f32
    %788 = vector.broadcast %cst_327 : f32 to vector<4x8xf32>
    %789 = arith.select %787, %782, %788 : vector<4x8xi1>, vector<4x8xf32>
    %cst_328 = arith.constant dense<0xFF800000> : vector<4xf32>
    %790 = vector.multi_reduction <maximumf>, %789, %cst_328 [1] : vector<4x8xf32> to vector<4xf32>
    %791 = vector.shape_cast %790 : vector<4xf32> to vector<4x1xf32>
    %c1_329 = arith.constant 1 : index
    %c0_330 = arith.constant 0 : index
    %792 = vector.load %arg24[%c1_329, %c0_330] : memref<16x32xf32, #tpu.memory_space<vmem>>, vector<1x32xf32>
    %793 = vector.broadcast %791 : vector<4x1xf32> to vector<4x32xf32>
    %794 = vector.broadcast %792 : vector<1x32xf32> to vector<4x32xf32>
    %795 = arith.mulf %793, %794 : vector<4x32xf32>
    %796 = arith.addf %774, %795 : vector<4x32xf32>
    %c2_i32_331 = arith.constant 2 : i32
    %797 = vector.broadcast %c2_i32_331 : i32 to vector<4x8xi32>
    %798 = arith.cmpi sge, %44, %797 : vector<4x8xi32>
    %c4_i32_332 = arith.constant 4 : i32
    %799 = vector.broadcast %c4_i32_332 : i32 to vector<4x8xi32>
    %800 = arith.cmpi slt, %44, %799 : vector<4x8xi32>
    %801 = arith.andi %798, %800 : vector<4x8xi1>
    %cst_333 = arith.constant 0.000000e+00 : f32
    %802 = vector.broadcast %cst_333 : f32 to vector<4x8xf32>
    %803 = arith.select %801, %782, %802 : vector<4x8xi1>, vector<4x8xf32>
    %cst_334 = arith.constant dense<0xFF800000> : vector<4xf32>
    %804 = vector.multi_reduction <maximumf>, %803, %cst_334 [1] : vector<4x8xf32> to vector<4xf32>
    %805 = vector.shape_cast %804 : vector<4xf32> to vector<4x1xf32>
    %c5_335 = arith.constant 5 : index
    %c0_336 = arith.constant 0 : index
    %806 = vector.load %arg24[%c5_335, %c0_336] : memref<16x32xf32, #tpu.memory_space<vmem>>, vector<1x32xf32>
    %807 = vector.broadcast %805 : vector<4x1xf32> to vector<4x32xf32>
    %808 = vector.broadcast %806 : vector<1x32xf32> to vector<4x32xf32>
    %809 = arith.mulf %807, %808 : vector<4x32xf32>
    %810 = arith.addf %796, %809 : vector<4x32xf32>
    %c4_i32_337 = arith.constant 4 : i32
    %811 = vector.broadcast %c4_i32_337 : i32 to vector<4x8xi32>
    %812 = arith.cmpi sge, %44, %811 : vector<4x8xi32>
    %c6_i32_338 = arith.constant 6 : i32
    %813 = vector.broadcast %c6_i32_338 : i32 to vector<4x8xi32>
    %814 = arith.cmpi slt, %44, %813 : vector<4x8xi32>
    %815 = arith.andi %812, %814 : vector<4x8xi1>
    %cst_339 = arith.constant 0.000000e+00 : f32
    %816 = vector.broadcast %cst_339 : f32 to vector<4x8xf32>
    %817 = arith.select %815, %782, %816 : vector<4x8xi1>, vector<4x8xf32>
    %cst_340 = arith.constant dense<0xFF800000> : vector<4xf32>
    %818 = vector.multi_reduction <maximumf>, %817, %cst_340 [1] : vector<4x8xf32> to vector<4xf32>
    %819 = vector.shape_cast %818 : vector<4xf32> to vector<4x1xf32>
    %c9_341 = arith.constant 9 : index
    %c0_342 = arith.constant 0 : index
    %820 = vector.load %arg24[%c9_341, %c0_342] : memref<16x32xf32, #tpu.memory_space<vmem>>, vector<1x32xf32>
    %821 = vector.broadcast %819 : vector<4x1xf32> to vector<4x32xf32>
    %822 = vector.broadcast %820 : vector<1x32xf32> to vector<4x32xf32>
    %823 = arith.mulf %821, %822 : vector<4x32xf32>
    %824 = arith.addf %810, %823 : vector<4x32xf32>
    %c6_i32_343 = arith.constant 6 : i32
    %825 = vector.broadcast %c6_i32_343 : i32 to vector<4x8xi32>
    %826 = arith.cmpi sge, %44, %825 : vector<4x8xi32>
    %c8_i32_344 = arith.constant 8 : i32
    %827 = vector.broadcast %c8_i32_344 : i32 to vector<4x8xi32>
    %828 = arith.cmpi slt, %44, %827 : vector<4x8xi32>
    %829 = arith.andi %826, %828 : vector<4x8xi1>
    %cst_345 = arith.constant 0.000000e+00 : f32
    %830 = vector.broadcast %cst_345 : f32 to vector<4x8xf32>
    %831 = arith.select %829, %782, %830 : vector<4x8xi1>, vector<4x8xf32>
    %cst_346 = arith.constant dense<0xFF800000> : vector<4xf32>
    %832 = vector.multi_reduction <maximumf>, %831, %cst_346 [1] : vector<4x8xf32> to vector<4xf32>
    %833 = vector.shape_cast %832 : vector<4xf32> to vector<4x1xf32>
    %c13_347 = arith.constant 13 : index
    %c0_348 = arith.constant 0 : index
    %834 = vector.load %arg24[%c13_347, %c0_348] : memref<16x32xf32, #tpu.memory_space<vmem>>, vector<1x32xf32>
    %835 = vector.broadcast %833 : vector<4x1xf32> to vector<4x32xf32>
    %836 = vector.broadcast %834 : vector<1x32xf32> to vector<4x32xf32>
    %837 = arith.mulf %835, %836 : vector<4x32xf32>
    %838 = arith.addf %824, %837 : vector<4x32xf32>
    %c4_i32_349 = arith.constant 4 : i32
    %839 = vector.broadcast %c4_i32_349 : i32 to vector<4x8x8xi32>
    %840 = arith.cmpi sge, %43, %839 : vector<4x8x8xi32>
    %c6_i32_350 = arith.constant 6 : i32
    %841 = vector.broadcast %c6_i32_350 : i32 to vector<4x8x8xi32>
    %842 = arith.cmpi slt, %43, %841 : vector<4x8x8xi32>
    %843 = arith.andi %840, %842 : vector<4x8x8xi1>
    %cst_351 = arith.constant 0.000000e+00 : f32
    %844 = vector.broadcast %cst_351 : f32 to vector<4x8x8xf32>
    %845 = arith.select %843, %710, %844 : vector<4x8x8xi1>, vector<4x8x8xf32>
    %cst_352 = arith.constant dense<0xFF800000> : vector<4x8xf32>
    %846 = vector.multi_reduction <maximumf>, %845, %cst_352 [2] : vector<4x8x8xf32> to vector<4x8xf32>
    %c0_i32_353 = arith.constant 0 : i32
    %847 = vector.broadcast %c0_i32_353 : i32 to vector<4x8xi32>
    %848 = arith.cmpi sge, %44, %847 : vector<4x8xi32>
    %c2_i32_354 = arith.constant 2 : i32
    %849 = vector.broadcast %c2_i32_354 : i32 to vector<4x8xi32>
    %850 = arith.cmpi slt, %44, %849 : vector<4x8xi32>
    %851 = arith.andi %848, %850 : vector<4x8xi1>
    %cst_355 = arith.constant 0.000000e+00 : f32
    %852 = vector.broadcast %cst_355 : f32 to vector<4x8xf32>
    %853 = arith.select %851, %846, %852 : vector<4x8xi1>, vector<4x8xf32>
    %cst_356 = arith.constant dense<0xFF800000> : vector<4xf32>
    %854 = vector.multi_reduction <maximumf>, %853, %cst_356 [1] : vector<4x8xf32> to vector<4xf32>
    %855 = vector.shape_cast %854 : vector<4xf32> to vector<4x1xf32>
    %c2_357 = arith.constant 2 : index
    %c0_358 = arith.constant 0 : index
    %856 = vector.load %arg24[%c2_357, %c0_358] : memref<16x32xf32, #tpu.memory_space<vmem>>, vector<1x32xf32>
    %857 = vector.broadcast %855 : vector<4x1xf32> to vector<4x32xf32>
    %858 = vector.broadcast %856 : vector<1x32xf32> to vector<4x32xf32>
    %859 = arith.mulf %857, %858 : vector<4x32xf32>
    %860 = arith.addf %838, %859 : vector<4x32xf32>
    %c2_i32_359 = arith.constant 2 : i32
    %861 = vector.broadcast %c2_i32_359 : i32 to vector<4x8xi32>
    %862 = arith.cmpi sge, %44, %861 : vector<4x8xi32>
    %c4_i32_360 = arith.constant 4 : i32
    %863 = vector.broadcast %c4_i32_360 : i32 to vector<4x8xi32>
    %864 = arith.cmpi slt, %44, %863 : vector<4x8xi32>
    %865 = arith.andi %862, %864 : vector<4x8xi1>
    %cst_361 = arith.constant 0.000000e+00 : f32
    %866 = vector.broadcast %cst_361 : f32 to vector<4x8xf32>
    %867 = arith.select %865, %846, %866 : vector<4x8xi1>, vector<4x8xf32>
    %cst_362 = arith.constant dense<0xFF800000> : vector<4xf32>
    %868 = vector.multi_reduction <maximumf>, %867, %cst_362 [1] : vector<4x8xf32> to vector<4xf32>
    %869 = vector.shape_cast %868 : vector<4xf32> to vector<4x1xf32>
    %c6_363 = arith.constant 6 : index
    %c0_364 = arith.constant 0 : index
    %870 = vector.load %arg24[%c6_363, %c0_364] : memref<16x32xf32, #tpu.memory_space<vmem>>, vector<1x32xf32>
    %871 = vector.broadcast %869 : vector<4x1xf32> to vector<4x32xf32>
    %872 = vector.broadcast %870 : vector<1x32xf32> to vector<4x32xf32>
    %873 = arith.mulf %871, %872 : vector<4x32xf32>
    %874 = arith.addf %860, %873 : vector<4x32xf32>
    %c4_i32_365 = arith.constant 4 : i32
    %875 = vector.broadcast %c4_i32_365 : i32 to vector<4x8xi32>
    %876 = arith.cmpi sge, %44, %875 : vector<4x8xi32>
    %c6_i32_366 = arith.constant 6 : i32
    %877 = vector.broadcast %c6_i32_366 : i32 to vector<4x8xi32>
    %878 = arith.cmpi slt, %44, %877 : vector<4x8xi32>
    %879 = arith.andi %876, %878 : vector<4x8xi1>
    %cst_367 = arith.constant 0.000000e+00 : f32
    %880 = vector.broadcast %cst_367 : f32 to vector<4x8xf32>
    %881 = arith.select %879, %846, %880 : vector<4x8xi1>, vector<4x8xf32>
    %cst_368 = arith.constant dense<0xFF800000> : vector<4xf32>
    %882 = vector.multi_reduction <maximumf>, %881, %cst_368 [1] : vector<4x8xf32> to vector<4xf32>
    %883 = vector.shape_cast %882 : vector<4xf32> to vector<4x1xf32>
    %c10_369 = arith.constant 10 : index
    %c0_370 = arith.constant 0 : index
    %884 = vector.load %arg24[%c10_369, %c0_370] : memref<16x32xf32, #tpu.memory_space<vmem>>, vector<1x32xf32>
    %885 = vector.broadcast %883 : vector<4x1xf32> to vector<4x32xf32>
    %886 = vector.broadcast %884 : vector<1x32xf32> to vector<4x32xf32>
    %887 = arith.mulf %885, %886 : vector<4x32xf32>
    %888 = arith.addf %874, %887 : vector<4x32xf32>
    %c6_i32_371 = arith.constant 6 : i32
    %889 = vector.broadcast %c6_i32_371 : i32 to vector<4x8xi32>
    %890 = arith.cmpi sge, %44, %889 : vector<4x8xi32>
    %c8_i32_372 = arith.constant 8 : i32
    %891 = vector.broadcast %c8_i32_372 : i32 to vector<4x8xi32>
    %892 = arith.cmpi slt, %44, %891 : vector<4x8xi32>
    %893 = arith.andi %890, %892 : vector<4x8xi1>
    %cst_373 = arith.constant 0.000000e+00 : f32
    %894 = vector.broadcast %cst_373 : f32 to vector<4x8xf32>
    %895 = arith.select %893, %846, %894 : vector<4x8xi1>, vector<4x8xf32>
    %cst_374 = arith.constant dense<0xFF800000> : vector<4xf32>
    %896 = vector.multi_reduction <maximumf>, %895, %cst_374 [1] : vector<4x8xf32> to vector<4xf32>
    %897 = vector.shape_cast %896 : vector<4xf32> to vector<4x1xf32>
    %c14_375 = arith.constant 14 : index
    %c0_376 = arith.constant 0 : index
    %898 = vector.load %arg24[%c14_375, %c0_376] : memref<16x32xf32, #tpu.memory_space<vmem>>, vector<1x32xf32>
    %899 = vector.broadcast %897 : vector<4x1xf32> to vector<4x32xf32>
    %900 = vector.broadcast %898 : vector<1x32xf32> to vector<4x32xf32>
    %901 = arith.mulf %899, %900 : vector<4x32xf32>
    %902 = arith.addf %888, %901 : vector<4x32xf32>
    %c6_i32_377 = arith.constant 6 : i32
    %903 = vector.broadcast %c6_i32_377 : i32 to vector<4x8x8xi32>
    %904 = arith.cmpi sge, %43, %903 : vector<4x8x8xi32>
    %c8_i32_378 = arith.constant 8 : i32
    %905 = vector.broadcast %c8_i32_378 : i32 to vector<4x8x8xi32>
    %906 = arith.cmpi slt, %43, %905 : vector<4x8x8xi32>
    %907 = arith.andi %904, %906 : vector<4x8x8xi1>
    %cst_379 = arith.constant 0.000000e+00 : f32
    %908 = vector.broadcast %cst_379 : f32 to vector<4x8x8xf32>
    %909 = arith.select %907, %710, %908 : vector<4x8x8xi1>, vector<4x8x8xf32>
    %cst_380 = arith.constant dense<0xFF800000> : vector<4x8xf32>
    %910 = vector.multi_reduction <maximumf>, %909, %cst_380 [2] : vector<4x8x8xf32> to vector<4x8xf32>
    %c0_i32_381 = arith.constant 0 : i32
    %911 = vector.broadcast %c0_i32_381 : i32 to vector<4x8xi32>
    %912 = arith.cmpi sge, %44, %911 : vector<4x8xi32>
    %c2_i32_382 = arith.constant 2 : i32
    %913 = vector.broadcast %c2_i32_382 : i32 to vector<4x8xi32>
    %914 = arith.cmpi slt, %44, %913 : vector<4x8xi32>
    %915 = arith.andi %912, %914 : vector<4x8xi1>
    %cst_383 = arith.constant 0.000000e+00 : f32
    %916 = vector.broadcast %cst_383 : f32 to vector<4x8xf32>
    %917 = arith.select %915, %910, %916 : vector<4x8xi1>, vector<4x8xf32>
    %cst_384 = arith.constant dense<0xFF800000> : vector<4xf32>
    %918 = vector.multi_reduction <maximumf>, %917, %cst_384 [1] : vector<4x8xf32> to vector<4xf32>
    %919 = vector.shape_cast %918 : vector<4xf32> to vector<4x1xf32>
    %c3_385 = arith.constant 3 : index
    %c0_386 = arith.constant 0 : index
    %920 = vector.load %arg24[%c3_385, %c0_386] : memref<16x32xf32, #tpu.memory_space<vmem>>, vector<1x32xf32>
    %921 = vector.broadcast %919 : vector<4x1xf32> to vector<4x32xf32>
    %922 = vector.broadcast %920 : vector<1x32xf32> to vector<4x32xf32>
    %923 = arith.mulf %921, %922 : vector<4x32xf32>
    %924 = arith.addf %902, %923 : vector<4x32xf32>
    %c2_i32_387 = arith.constant 2 : i32
    %925 = vector.broadcast %c2_i32_387 : i32 to vector<4x8xi32>
    %926 = arith.cmpi sge, %44, %925 : vector<4x8xi32>
    %c4_i32_388 = arith.constant 4 : i32
    %927 = vector.broadcast %c4_i32_388 : i32 to vector<4x8xi32>
    %928 = arith.cmpi slt, %44, %927 : vector<4x8xi32>
    %929 = arith.andi %926, %928 : vector<4x8xi1>
    %cst_389 = arith.constant 0.000000e+00 : f32
    %930 = vector.broadcast %cst_389 : f32 to vector<4x8xf32>
    %931 = arith.select %929, %910, %930 : vector<4x8xi1>, vector<4x8xf32>
    %cst_390 = arith.constant dense<0xFF800000> : vector<4xf32>
    %932 = vector.multi_reduction <maximumf>, %931, %cst_390 [1] : vector<4x8xf32> to vector<4xf32>
    %933 = vector.shape_cast %932 : vector<4xf32> to vector<4x1xf32>
    %c7_391 = arith.constant 7 : index
    %c0_392 = arith.constant 0 : index
    %934 = vector.load %arg24[%c7_391, %c0_392] : memref<16x32xf32, #tpu.memory_space<vmem>>, vector<1x32xf32>
    %935 = vector.broadcast %933 : vector<4x1xf32> to vector<4x32xf32>
    %936 = vector.broadcast %934 : vector<1x32xf32> to vector<4x32xf32>
    %937 = arith.mulf %935, %936 : vector<4x32xf32>
    %938 = arith.addf %924, %937 : vector<4x32xf32>
    %c4_i32_393 = arith.constant 4 : i32
    %939 = vector.broadcast %c4_i32_393 : i32 to vector<4x8xi32>
    %940 = arith.cmpi sge, %44, %939 : vector<4x8xi32>
    %c6_i32_394 = arith.constant 6 : i32
    %941 = vector.broadcast %c6_i32_394 : i32 to vector<4x8xi32>
    %942 = arith.cmpi slt, %44, %941 : vector<4x8xi32>
    %943 = arith.andi %940, %942 : vector<4x8xi1>
    %cst_395 = arith.constant 0.000000e+00 : f32
    %944 = vector.broadcast %cst_395 : f32 to vector<4x8xf32>
    %945 = arith.select %943, %910, %944 : vector<4x8xi1>, vector<4x8xf32>
    %cst_396 = arith.constant dense<0xFF800000> : vector<4xf32>
    %946 = vector.multi_reduction <maximumf>, %945, %cst_396 [1] : vector<4x8xf32> to vector<4xf32>
    %947 = vector.shape_cast %946 : vector<4xf32> to vector<4x1xf32>
    %c11_397 = arith.constant 11 : index
    %c0_398 = arith.constant 0 : index
    %948 = vector.load %arg24[%c11_397, %c0_398] : memref<16x32xf32, #tpu.memory_space<vmem>>, vector<1x32xf32>
    %949 = vector.broadcast %947 : vector<4x1xf32> to vector<4x32xf32>
    %950 = vector.broadcast %948 : vector<1x32xf32> to vector<4x32xf32>
    %951 = arith.mulf %949, %950 : vector<4x32xf32>
    %952 = arith.addf %938, %951 : vector<4x32xf32>
    %c6_i32_399 = arith.constant 6 : i32
    %953 = vector.broadcast %c6_i32_399 : i32 to vector<4x8xi32>
    %954 = arith.cmpi sge, %44, %953 : vector<4x8xi32>
    %c8_i32_400 = arith.constant 8 : i32
    %955 = vector.broadcast %c8_i32_400 : i32 to vector<4x8xi32>
    %956 = arith.cmpi slt, %44, %955 : vector<4x8xi32>
    %957 = arith.andi %954, %956 : vector<4x8xi1>
    %cst_401 = arith.constant 0.000000e+00 : f32
    %958 = vector.broadcast %cst_401 : f32 to vector<4x8xf32>
    %959 = arith.select %957, %910, %958 : vector<4x8xi1>, vector<4x8xf32>
    %cst_402 = arith.constant dense<0xFF800000> : vector<4xf32>
    %960 = vector.multi_reduction <maximumf>, %959, %cst_402 [1] : vector<4x8xf32> to vector<4xf32>
    %961 = vector.shape_cast %960 : vector<4xf32> to vector<4x1xf32>
    %c15_403 = arith.constant 15 : index
    %c0_404 = arith.constant 0 : index
    %962 = vector.load %arg24[%c15_403, %c0_404] : memref<16x32xf32, #tpu.memory_space<vmem>>, vector<1x32xf32>
    %963 = vector.broadcast %961 : vector<4x1xf32> to vector<4x32xf32>
    %964 = vector.broadcast %962 : vector<1x32xf32> to vector<4x32xf32>
    %965 = arith.mulf %963, %964 : vector<4x32xf32>
    %966 = arith.addf %952, %965 : vector<4x32xf32>
    %c1_405 = arith.constant 1 : index
    %c0_406 = arith.constant 0 : index
    %c0_407 = arith.constant 0 : index
    %967 = vector.load %arg16[%c1_405, %c0_406, %c0_407] : memref<2x32x32xf32, #tpu.memory_space<vmem>>, vector<1x32x32xf32>
    %968 = vector.shape_cast %967 : vector<1x32x32xf32> to vector<32x32xf32>
    %cst_408 = arith.constant dense<0.000000e+00> : vector<10x32xf32>
    %969 = tpu.matmul %585, %968, %cst_408 {dimension_numbers = #tpu.dot_dimension_numbers<[1], [0], [0], [1], [0, 0, 1, 1], [], []>} : vector<10x32xf32>, vector<32x32xf32>, vector<10x32xf32> -> vector<10x32xf32>
    %cst_409 = arith.constant dense<0.000000e+00> : vector<10x32xf32>
    %970 = tpu.matmul %41, %969, %cst_409 {dimension_numbers = #tpu.dot_dimension_numbers<[1], [0], [0], [1], [0, 0, 1, 1], [], []>} : vector<10x10xf32>, vector<10x32xf32>, vector<10x32xf32> -> vector<10x32xf32>
    %c1_410 = arith.constant 1 : index
    %c0_411 = arith.constant 0 : index
    %c0_412 = arith.constant 0 : index
    %971 = vector.load %arg17[%c1_410, %c0_411, %c0_412] : memref<2x1x32xf32, #tpu.memory_space<vmem>>, vector<1x1x32xf32>
    %972 = vector.shape_cast %971 : vector<1x1x32xf32> to vector<1x32xf32>
    %973 = vector.broadcast %972 : vector<1x32xf32> to vector<10x32xf32>
    %974 = arith.addf %970, %973 : vector<10x32xf32>
    %c1_413 = arith.constant 1 : index
    %c0_414 = arith.constant 0 : index
    %c0_415 = arith.constant 0 : index
    %975 = vector.load %arg18[%c1_413, %c0_414, %c0_415] : memref<2x32x96xf32, #tpu.memory_space<vmem>>, vector<1x32x96xf32>
    %976 = vector.shape_cast %975 : vector<1x32x96xf32> to vector<32x96xf32>
    %cst_416 = arith.constant dense<0.000000e+00> : vector<10x96xf32>
    %977 = tpu.matmul %974, %976, %cst_416 {dimension_numbers = #tpu.dot_dimension_numbers<[1], [0], [0], [1], [0, 0, 1, 1], [], []>} : vector<10x32xf32>, vector<32x96xf32>, vector<10x96xf32> -> vector<10x96xf32>
    %c1_417 = arith.constant 1 : index
    %c0_418 = arith.constant 0 : index
    %c0_419 = arith.constant 0 : index
    %978 = vector.load %arg19[%c1_417, %c0_418, %c0_419] : memref<2x1x96xf32, #tpu.memory_space<vmem>>, vector<1x1x96xf32>
    %979 = vector.shape_cast %978 : vector<1x1x96xf32> to vector<1x96xf32>
    %980 = vector.broadcast %979 : vector<1x96xf32> to vector<10x96xf32>
    %981 = arith.addf %977, %980 : vector<10x96xf32>
    %cst_420 = arith.constant 0.000000e+00 : f32
    %982 = vector.broadcast %cst_420 : f32 to vector<4x32xf32>
    %c1_421 = arith.constant 1 : index
    %c0_422 = arith.constant 0 : index
    %c0_423 = arith.constant 0 : index
    %983 = vector.load %arg20[%c1_421, %c0_422, %c0_423] : memref<2x32x32xf32, #tpu.memory_space<vmem>>, vector<1x32x32xf32>
    %984 = vector.shape_cast %983 : vector<1x32x32xf32> to vector<32x32xf32>
    %985 = vector.extract_strided_slice %981 {offsets = [0, 0], sizes = [4, 8], strides = [1, 1]} : vector<10x96xf32> to vector<4x8xf32>
    %986 = vector.extract_strided_slice %981 {offsets = [0, 32], sizes = [10, 8], strides = [1, 1]} : vector<10x96xf32> to vector<10x8xf32>
    %987 = vector.extract_strided_slice %981 {offsets = [0, 64], sizes = [10, 8], strides = [1, 1]} : vector<10x96xf32> to vector<10x8xf32>
    %cst_424 = arith.constant dense<0.000000e+00> : vector<4x10xf32>
    %988 = tpu.matmul %985, %986, %cst_424 {dimension_numbers = #tpu.dot_dimension_numbers<[1], [1], [0], [0], [0, 0, 1, 0], [], []>} : vector<4x8xf32>, vector<10x8xf32>, vector<4x10xf32> -> vector<4x10xf32>
    %cst_425 = arith.constant 0.353553385 : f32
    %989 = vector.broadcast %cst_425 : f32 to vector<4x10xf32>
    %990 = arith.mulf %988, %989 : vector<4x10xf32>
    %991 = arith.addf %990, %40 : vector<4x10xf32>
    %cst_426 = arith.constant dense<0xFF800000> : vector<4xf32>
    %992 = vector.multi_reduction <maximumf>, %991, %cst_426 [1] : vector<4x10xf32> to vector<4xf32>
    %993 = vector.shape_cast %992 : vector<4xf32> to vector<4x1xf32>
    %994 = vector.broadcast %993 : vector<4x1xf32> to vector<4x10xf32>
    %995 = arith.subf %991, %994 : vector<4x10xf32>
    %996 = math.exp %995 : vector<4x10xf32>
    %cst_427 = arith.constant dense<0.000000e+00> : vector<4xf32>
    %997 = vector.multi_reduction <add>, %996, %cst_427 [1] : vector<4x10xf32> to vector<4xf32>
    %998 = vector.shape_cast %997 : vector<4xf32> to vector<4x1xf32>
    %999 = vector.broadcast %998 : vector<4x1xf32> to vector<4x10xf32>
    %1000 = arith.divf %996, %999 : vector<4x10xf32>
    %cst_428 = arith.constant dense<0.000000e+00> : vector<4x8xf32>
    %1001 = tpu.matmul %1000, %987, %cst_428 {dimension_numbers = #tpu.dot_dimension_numbers<[1], [0], [0], [1], [0, 0, 1, 1], [], []>} : vector<4x10xf32>, vector<10x8xf32>, vector<4x8xf32> -> vector<4x8xf32>
    %1002 = vector.extract_strided_slice %984 {offsets = [0, 0], sizes = [8, 32], strides = [1, 1]} : vector<32x32xf32> to vector<8x32xf32>
    %cst_429 = arith.constant dense<0.000000e+00> : vector<4x32xf32>
    %1003 = tpu.matmul %1001, %1002, %cst_429 {dimension_numbers = #tpu.dot_dimension_numbers<[1], [0], [0], [1], [0, 0, 1, 1], [], []>} : vector<4x8xf32>, vector<8x32xf32>, vector<4x32xf32> -> vector<4x32xf32>
    %1004 = arith.addf %982, %1003 : vector<4x32xf32>
    %1005 = vector.extract_strided_slice %981 {offsets = [0, 8], sizes = [4, 8], strides = [1, 1]} : vector<10x96xf32> to vector<4x8xf32>
    %1006 = vector.extract_strided_slice %981 {offsets = [0, 40], sizes = [10, 8], strides = [1, 1]} : vector<10x96xf32> to vector<10x8xf32>
    %1007 = vector.extract_strided_slice %981 {offsets = [0, 72], sizes = [10, 8], strides = [1, 1]} : vector<10x96xf32> to vector<10x8xf32>
    %cst_430 = arith.constant dense<0.000000e+00> : vector<4x10xf32>
    %1008 = tpu.matmul %1005, %1006, %cst_430 {dimension_numbers = #tpu.dot_dimension_numbers<[1], [1], [0], [0], [0, 0, 1, 0], [], []>} : vector<4x8xf32>, vector<10x8xf32>, vector<4x10xf32> -> vector<4x10xf32>
    %cst_431 = arith.constant 0.353553385 : f32
    %1009 = vector.broadcast %cst_431 : f32 to vector<4x10xf32>
    %1010 = arith.mulf %1008, %1009 : vector<4x10xf32>
    %1011 = arith.addf %1010, %40 : vector<4x10xf32>
    %cst_432 = arith.constant dense<0xFF800000> : vector<4xf32>
    %1012 = vector.multi_reduction <maximumf>, %1011, %cst_432 [1] : vector<4x10xf32> to vector<4xf32>
    %1013 = vector.shape_cast %1012 : vector<4xf32> to vector<4x1xf32>
    %1014 = vector.broadcast %1013 : vector<4x1xf32> to vector<4x10xf32>
    %1015 = arith.subf %1011, %1014 : vector<4x10xf32>
    %1016 = math.exp %1015 : vector<4x10xf32>
    %cst_433 = arith.constant dense<0.000000e+00> : vector<4xf32>
    %1017 = vector.multi_reduction <add>, %1016, %cst_433 [1] : vector<4x10xf32> to vector<4xf32>
    %1018 = vector.shape_cast %1017 : vector<4xf32> to vector<4x1xf32>
    %1019 = vector.broadcast %1018 : vector<4x1xf32> to vector<4x10xf32>
    %1020 = arith.divf %1016, %1019 : vector<4x10xf32>
    %cst_434 = arith.constant dense<0.000000e+00> : vector<4x8xf32>
    %1021 = tpu.matmul %1020, %1007, %cst_434 {dimension_numbers = #tpu.dot_dimension_numbers<[1], [0], [0], [1], [0, 0, 1, 1], [], []>} : vector<4x10xf32>, vector<10x8xf32>, vector<4x8xf32> -> vector<4x8xf32>
    %1022 = vector.extract_strided_slice %984 {offsets = [8, 0], sizes = [8, 32], strides = [1, 1]} : vector<32x32xf32> to vector<8x32xf32>
    %cst_435 = arith.constant dense<0.000000e+00> : vector<4x32xf32>
    %1023 = tpu.matmul %1021, %1022, %cst_435 {dimension_numbers = #tpu.dot_dimension_numbers<[1], [0], [0], [1], [0, 0, 1, 1], [], []>} : vector<4x8xf32>, vector<8x32xf32>, vector<4x32xf32> -> vector<4x32xf32>
    %1024 = arith.addf %1004, %1023 : vector<4x32xf32>
    %1025 = vector.extract_strided_slice %981 {offsets = [0, 16], sizes = [4, 8], strides = [1, 1]} : vector<10x96xf32> to vector<4x8xf32>
    %1026 = vector.extract_strided_slice %981 {offsets = [0, 48], sizes = [10, 8], strides = [1, 1]} : vector<10x96xf32> to vector<10x8xf32>
    %1027 = vector.extract_strided_slice %981 {offsets = [0, 80], sizes = [10, 8], strides = [1, 1]} : vector<10x96xf32> to vector<10x8xf32>
    %cst_436 = arith.constant dense<0.000000e+00> : vector<4x10xf32>
    %1028 = tpu.matmul %1025, %1026, %cst_436 {dimension_numbers = #tpu.dot_dimension_numbers<[1], [1], [0], [0], [0, 0, 1, 0], [], []>} : vector<4x8xf32>, vector<10x8xf32>, vector<4x10xf32> -> vector<4x10xf32>
    %cst_437 = arith.constant 0.353553385 : f32
    %1029 = vector.broadcast %cst_437 : f32 to vector<4x10xf32>
    %1030 = arith.mulf %1028, %1029 : vector<4x10xf32>
    %1031 = arith.addf %1030, %40 : vector<4x10xf32>
    %cst_438 = arith.constant dense<0xFF800000> : vector<4xf32>
    %1032 = vector.multi_reduction <maximumf>, %1031, %cst_438 [1] : vector<4x10xf32> to vector<4xf32>
    %1033 = vector.shape_cast %1032 : vector<4xf32> to vector<4x1xf32>
    %1034 = vector.broadcast %1033 : vector<4x1xf32> to vector<4x10xf32>
    %1035 = arith.subf %1031, %1034 : vector<4x10xf32>
    %1036 = math.exp %1035 : vector<4x10xf32>
    %cst_439 = arith.constant dense<0.000000e+00> : vector<4xf32>
    %1037 = vector.multi_reduction <add>, %1036, %cst_439 [1] : vector<4x10xf32> to vector<4xf32>
    %1038 = vector.shape_cast %1037 : vector<4xf32> to vector<4x1xf32>
    %1039 = vector.broadcast %1038 : vector<4x1xf32> to vector<4x10xf32>
    %1040 = arith.divf %1036, %1039 : vector<4x10xf32>
    %cst_440 = arith.constant dense<0.000000e+00> : vector<4x8xf32>
    %1041 = tpu.matmul %1040, %1027, %cst_440 {dimension_numbers = #tpu.dot_dimension_numbers<[1], [0], [0], [1], [0, 0, 1, 1], [], []>} : vector<4x10xf32>, vector<10x8xf32>, vector<4x8xf32> -> vector<4x8xf32>
    %1042 = vector.extract_strided_slice %984 {offsets = [16, 0], sizes = [8, 32], strides = [1, 1]} : vector<32x32xf32> to vector<8x32xf32>
    %cst_441 = arith.constant dense<0.000000e+00> : vector<4x32xf32>
    %1043 = tpu.matmul %1041, %1042, %cst_441 {dimension_numbers = #tpu.dot_dimension_numbers<[1], [0], [0], [1], [0, 0, 1, 1], [], []>} : vector<4x8xf32>, vector<8x32xf32>, vector<4x32xf32> -> vector<4x32xf32>
    %1044 = arith.addf %1024, %1043 : vector<4x32xf32>
    %1045 = vector.extract_strided_slice %981 {offsets = [0, 24], sizes = [4, 8], strides = [1, 1]} : vector<10x96xf32> to vector<4x8xf32>
    %1046 = vector.extract_strided_slice %981 {offsets = [0, 56], sizes = [10, 8], strides = [1, 1]} : vector<10x96xf32> to vector<10x8xf32>
    %1047 = vector.extract_strided_slice %981 {offsets = [0, 88], sizes = [10, 8], strides = [1, 1]} : vector<10x96xf32> to vector<10x8xf32>
    %cst_442 = arith.constant dense<0.000000e+00> : vector<4x10xf32>
    %1048 = tpu.matmul %1045, %1046, %cst_442 {dimension_numbers = #tpu.dot_dimension_numbers<[1], [1], [0], [0], [0, 0, 1, 0], [], []>} : vector<4x8xf32>, vector<10x8xf32>, vector<4x10xf32> -> vector<4x10xf32>
    %cst_443 = arith.constant 0.353553385 : f32
    %1049 = vector.broadcast %cst_443 : f32 to vector<4x10xf32>
    %1050 = arith.mulf %1048, %1049 : vector<4x10xf32>
    %1051 = arith.addf %1050, %40 : vector<4x10xf32>
    %cst_444 = arith.constant dense<0xFF800000> : vector<4xf32>
    %1052 = vector.multi_reduction <maximumf>, %1051, %cst_444 [1] : vector<4x10xf32> to vector<4xf32>
    %1053 = vector.shape_cast %1052 : vector<4xf32> to vector<4x1xf32>
    %1054 = vector.broadcast %1053 : vector<4x1xf32> to vector<4x10xf32>
    %1055 = arith.subf %1051, %1054 : vector<4x10xf32>
    %1056 = math.exp %1055 : vector<4x10xf32>
    %cst_445 = arith.constant dense<0.000000e+00> : vector<4xf32>
    %1057 = vector.multi_reduction <add>, %1056, %cst_445 [1] : vector<4x10xf32> to vector<4xf32>
    %1058 = vector.shape_cast %1057 : vector<4xf32> to vector<4x1xf32>
    %1059 = vector.broadcast %1058 : vector<4x1xf32> to vector<4x10xf32>
    %1060 = arith.divf %1056, %1059 : vector<4x10xf32>
    %cst_446 = arith.constant dense<0.000000e+00> : vector<4x8xf32>
    %1061 = tpu.matmul %1060, %1047, %cst_446 {dimension_numbers = #tpu.dot_dimension_numbers<[1], [0], [0], [1], [0, 0, 1, 1], [], []>} : vector<4x10xf32>, vector<10x8xf32>, vector<4x8xf32> -> vector<4x8xf32>
    %1062 = vector.extract_strided_slice %984 {offsets = [24, 0], sizes = [8, 32], strides = [1, 1]} : vector<32x32xf32> to vector<8x32xf32>
    %cst_447 = arith.constant dense<0.000000e+00> : vector<4x32xf32>
    %1063 = tpu.matmul %1061, %1062, %cst_447 {dimension_numbers = #tpu.dot_dimension_numbers<[1], [0], [0], [1], [0, 0, 1, 1], [], []>} : vector<4x8xf32>, vector<8x32xf32>, vector<4x32xf32> -> vector<4x32xf32>
    %1064 = arith.addf %1044, %1063 : vector<4x32xf32>
    %c1_448 = arith.constant 1 : index
    %c0_449 = arith.constant 0 : index
    %c0_450 = arith.constant 0 : index
    %1065 = vector.load %arg21[%c1_448, %c0_449, %c0_450] : memref<2x1x32xf32, #tpu.memory_space<vmem>>, vector<1x1x32xf32>
    %1066 = vector.shape_cast %1065 : vector<1x1x32xf32> to vector<1x32xf32>
    %1067 = vector.broadcast %1066 : vector<1x32xf32> to vector<4x32xf32>
    %1068 = arith.addf %1064, %1067 : vector<4x32xf32>
    %1069 = vector.shape_cast %708 : vector<32x32xf32> to vector<4x8x32xf32>
    %c0_451 = arith.constant 0 : index
    %c0_452 = arith.constant 0 : index
    %c0_453 = arith.constant 0 : index
    %1070 = vector.load %arg31[%c0_451, %c0_452, %c0_453] : memref<4x8x32xf32, #tpu.memory_space<vmem>>, vector<4x8x32xf32>
    tpu.vector_store %arg31[%c0_451, %c0_452, %c0_453], %1069 {strides = array<i32>} : memref<4x8x32xf32, #tpu.memory_space<vmem>>, vector<4x8x32xf32>,
    %c0_454 = arith.constant 0 : index
    %c0_455 = arith.constant 0 : index
    %c0_456 = arith.constant 0 : index
    %1071 = vector.load %arg31[%c0_454, %c0_455, %c0_456] : memref<4x8x32xf32, #tpu.memory_space<vmem>>, vector<4x1x32xf32>
    %1072 = vector.shape_cast %1071 : vector<4x1x32xf32> to vector<4x32xf32>
    %c1_457 = arith.constant 1 : index
    %c0_458 = arith.constant 0 : index
    %c0_459 = arith.constant 0 : index
    %1073 = vector.load %arg22[%c1_457, %c0_458, %c0_459] : memref<2x32x32xf32, #tpu.memory_space<vmem>>, vector<1x32x32xf32>
    %1074 = vector.shape_cast %1073 : vector<1x32x32xf32> to vector<32x32xf32>
    %cst_460 = arith.constant dense<0.000000e+00> : vector<4x32xf32>
    %1075 = tpu.matmul %1072, %1074, %cst_460 {dimension_numbers = #tpu.dot_dimension_numbers<[1], [0], [0], [1], [0, 0, 1, 1], [], []>} : vector<4x32xf32>, vector<32x32xf32>, vector<4x32xf32> -> vector<4x32xf32>
    %c1_461 = arith.constant 1 : index
    %c0_462 = arith.constant 0 : index
    %c0_463 = arith.constant 0 : index
    %1076 = vector.load %arg23[%c1_461, %c0_462, %c0_463] : memref<2x32x32xf32, #tpu.memory_space<vmem>>, vector<1x32x32xf32>
    %1077 = vector.shape_cast %1076 : vector<1x32x32xf32> to vector<32x32xf32>
    %cst_464 = arith.constant dense<0.000000e+00> : vector<4x32xf32>
    %1078 = tpu.matmul %1068, %1077, %cst_464 {dimension_numbers = #tpu.dot_dimension_numbers<[1], [0], [0], [1], [0, 0, 1, 1], [], []>} : vector<4x32xf32>, vector<32x32xf32>, vector<4x32xf32> -> vector<4x32xf32>
    %1079 = arith.mulf %1072, %1075 : vector<4x32xf32>
    %cst_465 = arith.constant dense<0.000000e+00> : vector<4xf32>
    %1080 = vector.multi_reduction <add>, %1079, %cst_465 [1] : vector<4x32xf32> to vector<4xf32>
    %1081 = vector.shape_cast %1080 : vector<4xf32> to vector<4x1xf32>
    %1082 = arith.mulf %1072, %1078 : vector<4x32xf32>
    %cst_466 = arith.constant dense<0.000000e+00> : vector<4xf32>
    %1083 = vector.multi_reduction <add>, %1082, %cst_466 [1] : vector<4x32xf32> to vector<4xf32>
    %1084 = vector.shape_cast %1083 : vector<4xf32> to vector<4x1xf32>
    %1085 = arith.mulf %1068, %1075 : vector<4x32xf32>
    %cst_467 = arith.constant dense<0.000000e+00> : vector<4xf32>
    %1086 = vector.multi_reduction <add>, %1085, %cst_467 [1] : vector<4x32xf32> to vector<4xf32>
    %1087 = vector.shape_cast %1086 : vector<4xf32> to vector<4x1xf32>
    %1088 = arith.mulf %1068, %1078 : vector<4x32xf32>
    %cst_468 = arith.constant dense<0.000000e+00> : vector<4xf32>
    %1089 = vector.multi_reduction <add>, %1088, %cst_468 [1] : vector<4x32xf32> to vector<4xf32>
    %1090 = vector.shape_cast %1089 : vector<4xf32> to vector<4x1xf32>
    %1091 = arith.maximumf %1081, %1084 : vector<4x1xf32>
    %1092 = arith.subf %1081, %1091 : vector<4x1xf32>
    %1093 = math.exp %1092 : vector<4x1xf32>
    %1094 = arith.subf %1084, %1091 : vector<4x1xf32>
    %1095 = math.exp %1094 : vector<4x1xf32>
    %1096 = arith.addf %1093, %1095 : vector<4x1xf32>
    %1097 = arith.maximumf %1087, %1090 : vector<4x1xf32>
    %1098 = arith.subf %1087, %1097 : vector<4x1xf32>
    %1099 = math.exp %1098 : vector<4x1xf32>
    %1100 = arith.subf %1090, %1097 : vector<4x1xf32>
    %1101 = math.exp %1100 : vector<4x1xf32>
    %1102 = arith.addf %1099, %1101 : vector<4x1xf32>
    %1103 = arith.divf %1093, %1096 : vector<4x1xf32>
    %1104 = vector.broadcast %1103 : vector<4x1xf32> to vector<4x32xf32>
    %1105 = arith.mulf %1104, %1072 : vector<4x32xf32>
    %1106 = arith.divf %1095, %1096 : vector<4x1xf32>
    %1107 = vector.broadcast %1106 : vector<4x1xf32> to vector<4x32xf32>
    %1108 = arith.mulf %1107, %1068 : vector<4x32xf32>
    %1109 = arith.addf %1105, %1108 : vector<4x32xf32>
    %1110 = arith.divf %1099, %1102 : vector<4x1xf32>
    %1111 = vector.broadcast %1110 : vector<4x1xf32> to vector<4x32xf32>
    %1112 = arith.mulf %1111, %1109 : vector<4x32xf32>
    %1113 = arith.divf %1101, %1102 : vector<4x1xf32>
    %1114 = vector.broadcast %1113 : vector<4x1xf32> to vector<4x32xf32>
    %1115 = arith.mulf %1114, %1068 : vector<4x32xf32>
    %1116 = arith.addf %1112, %1115 : vector<4x32xf32>
    %1117 = vector.shape_cast %1109 : vector<4x32xf32> to vector<4x1x32xf32>
    %c0_469 = arith.constant 0 : index
    %c0_470 = arith.constant 0 : index
    %c0_471 = arith.constant 0 : index
    %1118 = vector.load %arg31[%c0_469, %c0_470, %c0_471] : memref<4x8x32xf32, #tpu.memory_space<vmem>>, vector<4x1x32xf32>
    tpu.vector_store %arg31[%c0_469, %c0_470, %c0_471], %1117 {strides = array<i32>} : memref<4x8x32xf32, #tpu.memory_space<vmem>>, vector<4x1x32xf32>,
    %c0_472 = arith.constant 0 : index
    %c0_473 = arith.constant 0 : index
    %1119 = vector.load %arg32[%c0_472, %c0_473] : memref<10x32xf32, #tpu.memory_space<vmem>>, vector<10x32xf32>
    tpu.vector_store %arg32[%c0_472, %c0_473], %974 {strides = array<i32>} : memref<10x32xf32, #tpu.memory_space<vmem>>, vector<10x32xf32>,
    %c0_474 = arith.constant 0 : index
    %c0_475 = arith.constant 0 : index
    %1120 = vector.load %arg32[%c0_474, %c0_475] : memref<10x32xf32, #tpu.memory_space<vmem>>, vector<4x32xf32>
    tpu.vector_store %arg32[%c0_474, %c0_475], %1116 {strides = array<i32>} : memref<10x32xf32, #tpu.memory_space<vmem>>, vector<4x32xf32>,
    %c0_476 = arith.constant 0 : index
    %c0_477 = arith.constant 0 : index
    %c0_478 = arith.constant 0 : index
    %1121 = vector.load %arg31[%c0_476, %c0_477, %c0_478] : memref<4x8x32xf32, #tpu.memory_space<vmem>>, vector<4x1x32xf32>
    %1122 = vector.shape_cast %1121 : vector<4x1x32xf32> to vector<4x32xf32>
    %c0_479 = arith.constant 0 : index
    %c0_480 = arith.constant 0 : index
    %1123 = vector.load %arg32[%c0_479, %c0_480] : memref<10x32xf32, #tpu.memory_space<vmem>>, vector<4x32xf32>
    %1124 = arith.addf %5, %1122 : vector<4x32xf32>
    %cst_481 = arith.constant 0.000000e+00 : f32
    %1125 = vector.broadcast %cst_481 : f32 to vector<4x32xf32>
    %1126 = arith.cmpf oge, %1124, %1125 : vector<4x32xf32>
    %cst_482 = arith.constant 0.00999999977 : f32
    %1127 = vector.broadcast %cst_482 : f32 to vector<4x32xf32>
    %1128 = arith.mulf %1127, %1124 : vector<4x32xf32>
    %1129 = arith.select %1126, %1124, %1128 : vector<4x32xi1>, vector<4x32xf32>
    %1130 = arith.addf %18, %1123 : vector<4x32xf32>
    %cst_483 = arith.constant 0.000000e+00 : f32
    %1131 = vector.broadcast %cst_483 : f32 to vector<4x32xf32>
    %1132 = arith.cmpf oge, %1130, %1131 : vector<4x32xf32>
    %cst_484 = arith.constant 0.00999999977 : f32
    %1133 = vector.broadcast %cst_484 : f32 to vector<4x32xf32>
    %1134 = arith.mulf %1133, %1130 : vector<4x32xf32>
    %1135 = arith.select %1132, %1130, %1134 : vector<4x32xi1>, vector<4x32xf32>
    %cst_485 = arith.constant 5.000000e-01 : f32
    %1136 = vector.broadcast %cst_485 : f32 to vector<4x32xf32>
    %1137 = arith.mulf %966, %1136 : vector<4x32xf32>
    %c0_486 = arith.constant 0 : index
    %c0_487 = arith.constant 0 : index
    %1138 = vector.load %arg25[%c0_486, %c0_487] : memref<1x32xf32, #tpu.memory_space<vmem>>, vector<1x32xf32>
    %1139 = vector.broadcast %1138 : vector<1x32xf32> to vector<4x32xf32>
    %1140 = arith.addf %1137, %1139 : vector<4x32xf32>
    %cst_488 = arith.constant 0.000000e+00 : f32
    %1141 = vector.broadcast %cst_488 : f32 to vector<4x32xf32>
    %1142 = arith.cmpf oge, %1140, %1141 : vector<4x32xf32>
    %cst_489 = arith.constant 0.00999999977 : f32
    %1143 = vector.broadcast %cst_489 : f32 to vector<4x32xf32>
    %1144 = arith.mulf %1143, %1140 : vector<4x32xf32>
    %1145 = arith.select %1142, %1140, %1144 : vector<4x32xi1>, vector<4x32xf32>
    %c0_490 = arith.constant 0 : index
    %c0_491 = arith.constant 0 : index
    %1146 = vector.load %arg26[%c0_490, %c0_491] : memref<96x32xf32, #tpu.memory_space<vmem>>, vector<96x32xf32>
    %1147 = vector.extract_strided_slice %1146 {offsets = [0, 0], sizes = [32, 32], strides = [1, 1]} : vector<96x32xf32> to vector<32x32xf32>
    %cst_492 = arith.constant dense<0.000000e+00> : vector<4x32xf32>
    %1148 = tpu.matmul %1129, %1147, %cst_492 {dimension_numbers = #tpu.dot_dimension_numbers<[1], [0], [0], [1], [0, 0, 1, 1], [], []>} : vector<4x32xf32>, vector<32x32xf32>, vector<4x32xf32> -> vector<4x32xf32>
    %1149 = vector.extract_strided_slice %1146 {offsets = [32, 0], sizes = [32, 32], strides = [1, 1]} : vector<96x32xf32> to vector<32x32xf32>
    %cst_493 = arith.constant dense<0.000000e+00> : vector<4x32xf32>
    %1150 = tpu.matmul %1135, %1149, %cst_493 {dimension_numbers = #tpu.dot_dimension_numbers<[1], [0], [0], [1], [0, 0, 1, 1], [], []>} : vector<4x32xf32>, vector<32x32xf32>, vector<4x32xf32> -> vector<4x32xf32>
    %1151 = arith.addf %1148, %1150 : vector<4x32xf32>
    %1152 = vector.extract_strided_slice %1146 {offsets = [64, 0], sizes = [32, 32], strides = [1, 1]} : vector<96x32xf32> to vector<32x32xf32>
    %cst_494 = arith.constant dense<0.000000e+00> : vector<4x32xf32>
    %1153 = tpu.matmul %1145, %1152, %cst_494 {dimension_numbers = #tpu.dot_dimension_numbers<[1], [0], [0], [1], [0, 0, 1, 1], [], []>} : vector<4x32xf32>, vector<32x32xf32>, vector<4x32xf32> -> vector<4x32xf32>
    %1154 = arith.addf %1151, %1153 : vector<4x32xf32>
    %c0_495 = arith.constant 0 : index
    %c0_496 = arith.constant 0 : index
    %1155 = vector.load %arg27[%c0_495, %c0_496] : memref<1x32xf32, #tpu.memory_space<vmem>>, vector<1x32xf32>
    %1156 = vector.broadcast %1155 : vector<1x32xf32> to vector<4x32xf32>
    %1157 = arith.addf %1154, %1156 : vector<4x32xf32>
    %cst_497 = arith.constant 0.000000e+00 : f32
    %1158 = vector.broadcast %cst_497 : f32 to vector<4x32xf32>
    %1159 = arith.cmpf oge, %1157, %1158 : vector<4x32xf32>
    %cst_498 = arith.constant 0.00999999977 : f32
    %1160 = vector.broadcast %cst_498 : f32 to vector<4x32xf32>
    %1161 = arith.mulf %1160, %1157 : vector<4x32xf32>
    %1162 = arith.select %1159, %1157, %1161 : vector<4x32xi1>, vector<4x32xf32>
    %c0_499 = arith.constant 0 : index
    %c0_500 = arith.constant 0 : index
    %1163 = vector.load %arg28[%c0_499, %c0_500] : memref<32x2xf32, #tpu.memory_space<vmem>>, vector<32x2xf32>
    %cst_501 = arith.constant dense<0.000000e+00> : vector<4x2xf32>
    %1164 = tpu.matmul %1162, %1163, %cst_501 {dimension_numbers = #tpu.dot_dimension_numbers<[1], [0], [0], [1], [0, 0, 1, 1], [], []>} : vector<4x32xf32>, vector<32x2xf32>, vector<4x2xf32> -> vector<4x2xf32>
    %c0_502 = arith.constant 0 : index
    %c0_503 = arith.constant 0 : index
    %1165 = vector.load %arg29[%c0_502, %c0_503] : memref<1x2xf32, #tpu.memory_space<vmem>>, vector<1x2xf32>
    %1166 = vector.broadcast %1165 : vector<1x2xf32> to vector<4x2xf32>
    %1167 = arith.addf %1164, %1166 : vector<4x2xf32>
    %c0_504 = arith.constant 0 : index
    %c0_505 = arith.constant 0 : index
    %1168 = vector.load %arg30[%c0_504, %c0_505] : memref<4x2xf32, #tpu.memory_space<vmem>>, vector<4x2xf32>
    tpu.vector_store %arg30[%c0_504, %c0_505], %1167 {strides = array<i32>} : memref<4x2xf32, #tpu.memory_space<vmem>>, vector<4x2xf32>,
    return
  }
}

</mosaic_0001>

<llo_original>
// kernel: bic_forward.1
$region0: #{bic_forward.1}
  #allocation0 [shape = 'u32[]', space=smem, size = 0x4, offset = 0x4, fixed_abs, tag = 'smem constant byte address 0x4 - core index']
  #allocation1 [shape = 'u32[72,128]{1,0:T(1,128)}', space=vmem, size = 0x9000, scoped, tag = 'internal scratch']
  #allocation2 [shape = 'f32[4,8,32]{2,1,0:T(8,128)}', space=vmem, size = 0x4000, scoped, tag = 'scratch operand']
  #allocation3 [shape = 'f32[10,32]{1,0:T(8,128)}', space=vmem, size = 0x2000, scoped, tag = 'scratch operand']
  %s0 = inlined_call_operand.smem [shape: u32[31], index: -1, kind: input, shape index: {}]
  %s1 = sld [smem:[%s0]]
  %s2 = scalar_lea.smem %s0, 1
  %s3 = sld [smem:[%s2]]
  %s4 = scalar_lea.smem %s0, 2
  %s5 = sld [smem:[%s4]]
  %s6 = scalar_lea.smem %s0, 3
  %s7 = sld [smem:[%s6]]
  %s8 = scalar_lea.smem %s0, 4
  %s9 = sld [smem:[%s8]]
  %s10 = scalar_lea.smem %s0, 5
  %s11 = sld [smem:[%s10]]
  %s12 = scalar_lea.smem %s0, 6
  %s13 = sld [smem:[%s12]]
  %s14 = scalar_lea.smem %s0, 7
  %s15 = sld [smem:[%s14]]
  %s16 = scalar_lea.smem %s0, 8
  %s17 = sld [smem:[%s16]]
  %s18 = scalar_lea.smem %s0, 9
  %s19 = sld [smem:[%s18]]
  %s20 = scalar_lea.smem %s0, 10
  %s21 = sld [smem:[%s20]]
  %s22 = scalar_lea.smem %s0, 11
  %s23 = sld [smem:[%s22]]
  %s24 = scalar_lea.smem %s0, 12
  %s25 = sld [smem:[%s24]]
  %s26 = scalar_lea.smem %s0, 13
  %s27 = sld [smem:[%s26]]
  %s28 = scalar_lea.smem %s0, 14
  %s29 = sld [smem:[%s28]]
  %s30 = scalar_lea.smem %s0, 15
  %s31 = sld [smem:[%s30]]
  %s32 = scalar_lea.smem %s0, 16
  %s33 = sld [smem:[%s32]]
  %s34 = scalar_lea.smem %s0, 17
  %s35 = sld [smem:[%s34]]
  %s36 = scalar_lea.smem %s0, 18
  %s37 = sld [smem:[%s36]]
  %s38 = scalar_lea.smem %s0, 19
  %s39 = sld [smem:[%s38]]
  %s40 = scalar_lea.smem %s0, 20
  %s41 = sld [smem:[%s40]]
  %s42 = scalar_lea.smem %s0, 21
  %s43 = sld [smem:[%s42]]
  %s44 = scalar_lea.smem %s0, 22
  %s45 = sld [smem:[%s44]]
  %s46 = scalar_lea.smem %s0, 23
  %s47 = sld [smem:[%s46]]
  %s48 = scalar_lea.smem %s0, 24
  %s49 = sld [smem:[%s48]]
  %s50 = scalar_lea.smem %s0, 25
  %s51 = sld [smem:[%s50]]
  %s52 = scalar_lea.smem %s0, 26
  %s53 = sld [smem:[%s52]]
  %s54 = scalar_lea.smem %s0, 27
  %s55 = sld [smem:[%s54]]
  %s56 = scalar_lea.smem %s0, 28
  %s57 = sld [smem:[%s56]]
  %s58 = scalar_lea.smem %s0, 29
  %s59 = sld [smem:[%s58]]
  %s60 = scalar_lea.smem %s0, 30
  %s61 = sld [smem:[%s60]]
  %s62 = sld [smem:[#allocation0]]
  $region130: #{bic_forward.1} parent=0
    _
  %s64 = ssub.s32 1, %s62
  %s65 = scalar_select 0, %s64, %s62
  // Predicated region
  $region2: #{bic_forward.1} parent=0 // pred_check
    _
  $region3: #{bic_forward.1} parent=0 // pred_check_branch
    %67 = sbr.rel (0) target = $region5
  $region4: #{bic_forward.1} parent=0 // pred_region
    _
  $region5: #{bic_forward.1} parent=0 // pred_fallthru
    _
  // Predicated region
  $region6: #{bic_forward.1} parent=0 // pred_check
    _
  $region7: #{bic_forward.1} parent=0 // pred_check_branch
    %69 = sbr.rel (0) target = $region9
  $region8: #{bic_forward.1} parent=0 // pred_region
    _
  $region9: #{bic_forward.1} parent=0 // pred_fallthru
    _
  // Predicated region
  $region10: #{bic_forward.1} parent=0 // pred_check
    _
  $region11: #{bic_forward.1} parent=0 // pred_check_branch
    %71 = sbr.rel (0) target = $region13
  $region12: #{bic_forward.1} parent=0 // pred_region
    _
  $region13: #{bic_forward.1} parent=0 // pred_fallthru
    _
  // Predicated region
  $region14: #{bic_forward.1} parent=0 // pred_check
    _
  $region15: #{bic_forward.1} parent=0 // pred_check_branch
    %73 = sbr.rel (0) target = $region17
  $region16: #{bic_forward.1} parent=0 // pred_region
    _
  $region17: #{bic_forward.1} parent=0 // pred_fallthru
    _
  // Predicated region
  $region18: #{bic_forward.1} parent=0 // pred_check
    _
  $region19: #{bic_forward.1} parent=0 // pred_check_branch
    %75 = sbr.rel (0) target = $region21
  $region20: #{bic_forward.1} parent=0 // pred_region
    _
  $region21: #{bic_forward.1} parent=0 // pred_fallthru
    _
  // Predicated region
  $region22: #{bic_forward.1} parent=0 // pred_check
    _
  $region23: #{bic_forward.1} parent=0 // pred_check_branch
    %77 = sbr.rel (0) target = $region25
  $region24: #{bic_forward.1} parent=0 // pred_region
    _
  $region25: #{bic_forward.1} parent=0 // pred_fallthru
    _
  // Predicated region
  $region26: #{bic_forward.1} parent=0 // pred_check
    _
  $region27: #{bic_forward.1} parent=0 // pred_check_branch
    %79 = sbr.rel (0) target = $region29
  $region28: #{bic_forward.1} parent=0 // pred_region
    _
  $region29: #{bic_forward.1} parent=0 // pred_fallthru
    _
  // Predicated region
  $region30: #{bic_forward.1} parent=0 // pred_check
    _
  $region31: #{bic_forward.1} parent=0 // pred_check_branch
    %81 = sbr.rel (0) target = $region33
  $region32: #{bic_forward.1} parent=0 // pred_region
    _
  $region33: #{bic_forward.1} parent=0 // pred_fallthru
    _
  // Predicated region
  $region34: #{bic_forward.1} parent=0 // pred_check
    _
  $region35: #{bic_forward.1} parent=0 // pred_check_branch
    %83 = sbr.rel (0) target = $region37
  $region36: #{bic_forward.1} parent=0 // pred_region
    _
  $region37: #{bic_forward.1} parent=0 // pred_fallthru
    _
  // Predicated region
  $region38: #{bic_forward.1} parent=0 // pred_check
    _
  $region39: #{bic_forward.1} parent=0 // pred_check_branch
    %85 = sbr.rel (0) target = $region41
  $region40: #{bic_forward.1} parent=0 // pred_region
    _
  $region41: #{bic_forward.1} parent=0 // pred_fallthru
    _
  // Predicated region
  $region42: #{bic_forward.1} parent=0 // pred_check
    _
  $region43: #{bic_forward.1} parent=0 // pred_check_branch
    %87 = sbr.rel (0) target = $region45
  $region44: #{bic_forward.1} parent=0 // pred_region
    _
  $region45: #{bic_forward.1} parent=0 // pred_fallthru
    _
  // Predicated region
  $region46: #{bic_forward.1} parent=0 // pred_check
    _
  $region47: #{bic_forward.1} parent=0 // pred_check_branch
    %89 = sbr.rel (0) target = $region49
  $region48: #{bic_forward.1} parent=0 // pred_region
    _
  $region49: #{bic_forward.1} parent=0 // pred_fallthru
    _
  // Predicated region
  $region50: #{bic_forward.1} parent=0 // pred_check
    _
  $region51: #{bic_forward.1} parent=0 // pred_check_branch
    %91 = sbr.rel (0) target = $region53
  $region52: #{bic_forward.1} parent=0 // pred_region
    _
  $region53: #{bic_forward.1} parent=0 // pred_fallthru
    _
  // Predicated region
  $region54: #{bic_forward.1} parent=0 // pred_check
    _
  $region55: #{bic_forward.1} parent=0 // pred_check_branch
    %93 = sbr.rel (0) target = $region57
  $region56: #{bic_forward.1} parent=0 // pred_region
    _
  $region57: #{bic_forward.1} parent=0 // pred_fallthru
    _
  // Predicated region
  $region58: #{bic_forward.1} parent=0 // pred_check
    _
  $region59: #{bic_forward.1} parent=0 // pred_check_branch
    %95 = sbr.rel (0) target = $region61
  $region60: #{bic_forward.1} parent=0 // pred_region
    _
  $region61: #{bic_forward.1} parent=0 // pred_fallthru
    _
  // Predicated region
  $region62: #{bic_forward.1} parent=0 // pred_check
    _
  $region63: #{bic_forward.1} parent=0 // pred_check_branch
    %97 = sbr.rel (0) target = $region65
  $region64: #{bic_forward.1} parent=0 // pred_region
    _
  $region65: #{bic_forward.1} parent=0 // pred_fallthru
    _
  // Predicated region
  $region66: #{bic_forward.1} parent=0 // pred_check
    _
  $region67: #{bic_forward.1} parent=0 // pred_check_branch
    %99 = sbr.rel (0) target = $region69
  $region68: #{bic_forward.1} parent=0 // pred_region
    _
  $region69: #{bic_forward.1} parent=0 // pred_fallthru
    _
  // Predicated region
  $region70: #{bic_forward.1} parent=0 // pred_check
    _
  $region71: #{bic_forward.1} parent=0 // pred_check_branch
    %101 = sbr.rel (0) target = $region73
  $region72: #{bic_forward.1} parent=0 // pred_region
    _
  $region73: #{bic_forward.1} parent=0 // pred_fallthru
    _
  // Predicated region
  $region74: #{bic_forward.1} parent=0 // pred_check
    _
  $region75: #{bic_forward.1} parent=0 // pred_check_branch
    %103 = sbr.rel (0) target = $region77
  $region76: #{bic_forward.1} parent=0 // pred_region
    _
  $region77: #{bic_forward.1} parent=0 // pred_fallthru
    _
  // Predicated region
  $region78: #{bic_forward.1} parent=0 // pred_check
    _
  $region79: #{bic_forward.1} parent=0 // pred_check_branch
    %105 = sbr.rel (0) target = $region81
  $region80: #{bic_forward.1} parent=0 // pred_region
    _
  $region81: #{bic_forward.1} parent=0 // pred_fallthru
    _
  // Predicated region
  $region82: #{bic_forward.1} parent=0 // pred_check
    _
  $region83: #{bic_forward.1} parent=0 // pred_check_branch
    %107 = sbr.rel (0) target = $region85
  $region84: #{bic_forward.1} parent=0 // pred_region
    _
  $region85: #{bic_forward.1} parent=0 // pred_fallthru
    _
  // Predicated region
  $region86: #{bic_forward.1} parent=0 // pred_check
    _
  $region87: #{bic_forward.1} parent=0 // pred_check_branch
    %109 = sbr.rel (0) target = $region89
  $region88: #{bic_forward.1} parent=0 // pred_region
    _
  $region89: #{bic_forward.1} parent=0 // pred_fallthru
    _
  // Predicated region
  $region90: #{bic_forward.1} parent=0 // pred_check
    _
  $region91: #{bic_forward.1} parent=0 // pred_check_branch
    %111 = sbr.rel (0) target = $region93
  $region92: #{bic_forward.1} parent=0 // pred_region
    _
  $region93: #{bic_forward.1} parent=0 // pred_fallthru
    _
  // Predicated region
  $region94: #{bic_forward.1} parent=0 // pred_check
    _
  $region95: #{bic_forward.1} parent=0 // pred_check_branch
    %113 = sbr.rel (0) target = $region97
  $region96: #{bic_forward.1} parent=0 // pred_region
    _
  $region97: #{bic_forward.1} parent=0 // pred_fallthru
    _
  // Predicated region
  $region98: #{bic_forward.1} parent=0 // pred_check
    _
  $region99: #{bic_forward.1} parent=0 // pred_check_branch
    %115 = sbr.rel (0) target = $region101
  $region100: #{bic_forward.1} parent=0 // pred_region
    _
  $region101: #{bic_forward.1} parent=0 // pred_fallthru
    _
  // Predicated region
  $region102: #{bic_forward.1} parent=0 // pred_check
    _
  $region103: #{bic_forward.1} parent=0 // pred_check_branch
    %117 = sbr.rel (0) target = $region105
  $region104: #{bic_forward.1} parent=0 // pred_region
    _
  $region105: #{bic_forward.1} parent=0 // pred_fallthru
    _
  // Predicated region
  $region106: #{bic_forward.1} parent=0 // pred_check
    _
  $region107: #{bic_forward.1} parent=0 // pred_check_branch
    %119 = sbr.rel (0) target = $region109
  $region108: #{bic_forward.1} parent=0 // pred_region
    _
  $region109: #{bic_forward.1} parent=0 // pred_fallthru
    _
  // Predicated region
  $region110: #{bic_forward.1} parent=0 // pred_check
    _
  $region111: #{bic_forward.1} parent=0 // pred_check_branch
    %121 = sbr.rel (0) target = $region113
  $region112: #{bic_forward.1} parent=0 // pred_region
    _
  $region113: #{bic_forward.1} parent=0 // pred_fallthru
    _
  // Predicated region
  $region114: #{bic_forward.1} parent=0 // pred_check
    _
  $region115: #{bic_forward.1} parent=0 // pred_check_branch
    %123 = sbr.rel (0) target = $region117
  $region116: #{bic_forward.1} parent=0 // pred_region
    _
  $region117: #{bic_forward.1} parent=0 // pred_fallthru
    _
  // Predicated region
  $region118: #{bic_forward.1} parent=0 // pred_check
    _
  $region119: #{bic_forward.1} parent=0 // pred_check_branch
    %125 = sbr.rel (0) target = $region121
  $region120: #{bic_forward.1} parent=0 // pred_region
    _
  $region121: #{bic_forward.1} parent=0 // pred_fallthru
    _
  %v126 = vld [vmem:[%s1] sm:$0xf]
  %v127 = vld [vmem:[%s13] sm:$0xff]
  %v128 = vld [vmem:[%s13 + $0x8] sm:$0xff]
  %v129 = vld [vmem:[%s15] sm:$0x1]
  %v131 = vperm.slane %v129, 0
  %vm133 = vcmask 130048
  %v135 = vsel %vm133, %v126, 0
  %137 = vmatpush.msra.mxu0 0.0
  %138 = vmatpush.msra.mxu0 0.0
  %139 = vmatpush.msra.mxu0 0.0
  %140 = vmatpush.msra.mxu0 0.0
  %141 = vmatpush.msra.mxu0 0.0
  %142 = vmatpush.msra.mxu0 0.0
  %143 = vmatpush.msra.mxu0 0.0
  %144 = vmatpush.msra.mxu0 0.0
  %145 = vmatpush.msra.mxu0 0.0
  %146 = vmatpush.msra.mxu0 0.0
  %147 = vmatpush.msra.mxu0 0.0
  %148 = vmatpush.msra.mxu0 0.0
  %149 = vmatpush.msra.mxu0 0.0
  %150 = vmatpush.msra.mxu0 0.0
  %151 = vmatpush.msra.mxu0 %v128
  %152 = vmatpush.msra.mxu0 %v127
  %153 = vmatmul.f32.gmra.mxu0 %v135
  %v154 = vpop.f32.mrf.mxu0
  %v155 = vadd.f32 %v131, %v154
  %156 = vdwg.mxu0
  %v157 = vld [vmem:[%s3] sm:$0xff]
  %v158 = vld [vmem:[%s3 + $0x8] sm:$0xff]
  %v159 = vld [vmem:[%s3 + $0x10] sm:$0xff]
  %v160 = vld [vmem:[%s3 + $0x18] sm:$0xf]
  %v161 = vld [vmem:[%s17] sm:$0xff]
  %v162 = vld [vmem:[%s17 + $0x8] sm:$0xf]
  %v163 = vld [vmem:[%s19] sm:$0x1]
  %v165 = vperm.slane %v163, 0
  %vm167 = vcmask 97280
  %v169 = vsel %vm167, %v157, 0
  %v172 = vsel %vm167, %v158, 0
  %v175 = vsel %vm167, %v159, 0
  %v178 = vsel %vm167, %v160, 0
  %vm180 = vcmask 1043456
  %v182 = vsel %vm180, %v162, 0
  %184 = vmatpush.msra.mxu0 0.0
  %185 = vmatpush.msra.mxu0 0.0
  %186 = vmatpush.msra.mxu0 0.0
  %187 = vmatpush.msra.mxu0 0.0
  %188 = vmatpush.msra.mxu0 0.0
  %189 = vmatpush.msra.mxu0 0.0
  %190 = vmatpush.msra.mxu0 0.0
  %191 = vmatpush.msra.mxu0 0.0
  %192 = vmatpush.msra.mxu0 0.0
  %193 = vmatpush.msra.mxu0 0.0
  %194 = vmatpush.msra.mxu0 0.0
  %195 = vmatpush.msra.mxu0 0.0
  %196 = vmatpush.msra.mxu0 0.0
  %197 = vmatpush.msra.mxu0 0.0
  %198 = vmatpush.msra.mxu0 %v182
  %199 = vmatpush.msra.mxu0 %v161
  %200 = vmatmul.f32.gmra.mxu0 %v169
  %v201 = vpop.f32.mrf.mxu0
  %v202 = vadd.f32 %v165, %v201
  %203 = vmatmul.f32.gmra.mxu0 %v172
  %v204 = vpop.f32.mrf.mxu0
  %v205 = vadd.f32 %v165, %v204
  %206 = vmatmul.f32.gmra.mxu0 %v175
  %v207 = vpop.f32.mrf.mxu0
  %v208 = vadd.f32 %v165, %v207
  %209 = vmatmul.f32.gmra.mxu0 %v178
  %v210 = vpop.f32.mrf.mxu0
  %v211 = vadd.f32 %v165, %v210
  %212 = vdwg.mxu0
  %v213 = vld [vmem:[%s5] sm:$0xff]
  %v214 = vld [vmem:[%s5 + $0x8] sm:$0x3]
  %v215 = vld [vmem:[%s21] sm:$0xff]
  %v216 = vld [vmem:[%s21 + $0x8] sm:$0xff]
  %v217 = vld [vmem:[%s21 + $0x10] sm:$0xff]
  %v218 = vld [vmem:[%s21 + $0x18] sm:$0xff]
  %v219 = vld [vmem:[%s21 + $0x20] sm:$0xff]
  %v220 = vld [vmem:[%s23] sm:$0x1]
  %v222 = vperm.slane %v220, 0
  %vm224 = vcmask 326656
  %v226 = vsel %vm224, %v213, 0
  %v229 = vsel %vm224, %v214, 0
  %231 = vmatpush.msra.mxu0 0.0
  %232 = vmatpush.msra.mxu0 0.0
  %233 = vmatpush.msra.mxu0 0.0
  %234 = vmatpush.msra.mxu0 0.0
  %235 = vmatpush.msra.mxu0 0.0
  %236 = vmatpush.msra.mxu0 0.0
  %237 = vmatpush.msra.mxu0 0.0
  %238 = vmatpush.msra.mxu0 0.0
  %239 = vmatpush.msra.mxu0 0.0
  %240 = vmatpush.msra.mxu0 0.0
  %241 = vmatpush.msra.mxu0 0.0
  %242 = vmatpush.msra.mxu0 %v219
  %243 = vmatpush.msra.mxu0 %v218
  %244 = vmatpush.msra.mxu0 %v217
  %245 = vmatpush.msra.mxu0 %v216
  %246 = vmatpush.msra.mxu0 %v215
  %247 = vmatmul.f32.gmra.mxu0 %v226
  %v248 = vpop.f32.mrf.mxu0
  %v249 = vadd.f32 %v222, %v248
  %250 = vmatmul.f32.gmra.mxu0 %v229
  %v251 = vpop.f32.mrf.mxu0
  %v252 = vadd.f32 %v222, %v251
  %253 = vdwg.mxu0
  %vm254 = vcmp.ge.f32.partialorder %v155, 0.0
  %v255 = vmul.f32 %v155, 0.01
  %v256 = vsel %vm254, %v155, %v255
  %v258 = vrot.slane %v256, 1
  %v259 = vrot.slane %v256, 2
  %v260 = vrot.slane %v256, 3
  %vm264 = vcmask 253952
  %265 = vst.msk [vmem:[#allocation2] sm:$0x1] %vm264, %v256
  %266 = vst.msk [vmem:[#allocation2 + $0x8] sm:$0x1] %vm264, %v258
  %267 = vst.msk [vmem:[#allocation2 + $0x10] sm:$0x1] %vm264, %v259
  %268 = vst.msk [vmem:[#allocation2 + $0x18] sm:$0x1] %vm264, %v260
  %vm269 = vcmp.ge.f32.partialorder %v202, 0.0
  %vm270 = vcmp.ge.f32.partialorder %v205, 0.0
  %vm271 = vcmp.ge.f32.partialorder %v208, 0.0
  %vm272 = vcmp.ge.f32.partialorder %v211, 0.0
  %v273 = vmul.f32 %v202, 0.01
  %v274 = vmul.f32 %v205, 0.01
  %v275 = vmul.f32 %v208, 0.01
  %v276 = vmul.f32 %v211, 0.01
  %v277 = vsel %vm269, %v202, %v273
  %v278 = vsel %vm270, %v205, %v274
  %v279 = vsel %vm271, %v208, %v275
  %v280 = vsel %vm272, %v211, %v276
  %v285 = vrot.slane %v277, 1
  %v286 = vrot.slane %v277, 2
  %v287 = vrot.slane %v277, 3
  %v288 = vrot.slane %v277, 4
  %v289 = vrot.slane %v277, 5
  %v290 = vrot.slane %v277, 6
  %v291 = vrot.slane %v277, 7
  %v292 = vrot.slane %v278, 1
  %v293 = vrot.slane %v278, 2
  %v294 = vrot.slane %v278, 3
  %v295 = vrot.slane %v278, 4
  %v296 = vrot.slane %v278, 5
  %v297 = vrot.slane %v278, 6
  %v298 = vrot.slane %v278, 7
  %v299 = vrot.slane %v279, 1
  %v300 = vrot.slane %v279, 2
  %v301 = vrot.slane %v279, 3
  %v302 = vrot.slane %v279, 4
  %v303 = vrot.slane %v279, 5
  %v304 = vrot.slane %v279, 6
  %v305 = vrot.slane %v279, 7
  %v306 = vrot.slane %v280, 1
  %v307 = vrot.slane %v280, 2
  %v308 = vrot.slane %v280, 3
  %309 = vst [vmem:[#allocation1] ss:$9 sm:$0xff] %v277
  %s310 = scalar_lea.vmem [#allocation1], 1
  %311 = vst [vmem:[%s310] ss:$9 sm:$0xff] %v285
  %s312 = scalar_lea.vmem [#allocation1], 2
  %313 = vst [vmem:[%s312] ss:$9 sm:$0xff] %v286
  %s314 = scalar_lea.vmem [#allocation1], 3
  %315 = vst [vmem:[%s314] ss:$9 sm:$0xff] %v287
  %s316 = scalar_lea.vmem [#allocation1], 4
  %317 = vst [vmem:[%s316] ss:$9 sm:$0xff] %v288
  %s318 = scalar_lea.vmem [#allocation1], 5
  %319 = vst [vmem:[%s318] ss:$9 sm:$0xff] %v289
  %s320 = scalar_lea.vmem [#allocation1], 6
  %321 = vst [vmem:[%s320] ss:$9 sm:$0xff] %v290
  %v322 = vld [vmem:[#allocation1] sm:$0xff]
  %323 = vst [vmem:[#allocation1] ss:$9 sm:$0xff] %v291
  %324 = vst [vmem:[%s310] ss:$9 sm:$0xff] %v278
  %325 = vst [vmem:[%s312] ss:$9 sm:$0xff] %v292
  %326 = vst [vmem:[%s314] ss:$9 sm:$0xff] %v293
  %327 = vst [vmem:[%s316] ss:$9 sm:$0xff] %v294
  %328 = vst [vmem:[%s318] ss:$9 sm:$0xff] %v295
  %329 = vst [vmem:[%s320] ss:$9 sm:$0xff] %v296
  %v330 = vld [vmem:[#allocation1] sm:$0xff]
  %331 = vst [vmem:[#allocation1] ss:$9 sm:$0xff] %v297
  %332 = vst [vmem:[%s310] ss:$9 sm:$0xff] %v298
  %333 = vst [vmem:[%s312] ss:$9 sm:$0xff] %v279
  %334 = vst [vmem:[%s314] ss:$9 sm:$0xff] %v299
  %335 = vst [vmem:[%s316] ss:$9 sm:$0xff] %v300
  %336 = vst [vmem:[%s318] ss:$9 sm:$0xff] %v301
  %337 = vst [vmem:[%s320] ss:$9 sm:$0xff] %v302
  %v338 = vld [vmem:[#allocation1] sm:$0xff]
  %339 = vst [vmem:[#allocation1] ss:$9 sm:$0xff] %v303
  %340 = vst [vmem:[%s310] ss:$9 sm:$0xff] %v304
  %341 = vst [vmem:[%s312] ss:$9 sm:$0xff] %v305
  %342 = vst [vmem:[%s314] ss:$9 sm:$0xff] %v280
  %343 = vst [vmem:[%s316] ss:$9 sm:$0xff] %v306
  %344 = vst [vmem:[%s318] ss:$9 sm:$0xff] %v307
  %345 = vst [vmem:[%s320] ss:$9 sm:$0xff] %v308
  %v346 = vld [vmem:[#allocation1] sm:$0xff]
  %vm351 = vcmask 260096
  %352 = vst.msk [vmem:[#allocation2 + $0x1] sm:$0x7f] %vm351, %v322
  %353 = vst.msk [vmem:[#allocation2 + $0x9] sm:$0x7f] %vm351, %v330
  %354 = vst.msk [vmem:[#allocation2 + $0x11] sm:$0x7f] %vm351, %v338
  %355 = vst.msk [vmem:[#allocation2 + $0x19] sm:$0x7f] %vm351, %v346
  %vm356 = vcmp.ge.f32.partialorder %v249, 0.0
  %vm357 = vcmp.ge.f32.partialorder %v252, 0.0
  %v358 = vmul.f32 %v249, 0.01
  %v359 = vmul.f32 %v252, 0.01
  %v360 = vsel %vm356, %v249, %v358
  %v361 = vsel %vm357, %v252, %v359
  %vm362 = vcmask 261120
  %363 = vst.msk [vmem:[#allocation3] sm:$0xff] %vm362, %v360
  %vm364 = vcmask 254976
  %365 = vst.msk [vmem:[#allocation3 + $0x8] sm:$0x3] %vm364, %v361
  %v366 = vld [vmem:[%s7] sm:$0xf]
  %v367 = vld [vmem:[%s9] sm:$0xf]
  %v368 = vld [vmem:[%s11] sm:$0xff]
  %v369 = vld [vmem:[%s11 + $0x8] sm:$0x3]
  %v370 = vlaneseq
  %v371 = vand.u32 %v370, 127
  %v372 = vld [vmem:[#allocation2] sm:$0xff]
  %v373 = vld [vmem:[#allocation2 + $0x8] sm:$0xff]
  %v374 = vld [vmem:[#allocation2 + $0x10] sm:$0xff]
  %v375 = vld [vmem:[#allocation2 + $0x18] sm:$0xff]
  %v376 = vld [vmem:[#allocation3] sm:$0xff]
  %v377 = vld [vmem:[#allocation3 + $0x8] sm:$0x3]
  %v378 = vld [vmem:[%s25] sm:$0xff]
  %v379 = vld [vmem:[%s25 + $0x8] sm:$0xff]
  %v380 = vld [vmem:[%s25 + $0x10] sm:$0xff]
  %v381 = vld [vmem:[%s25 + $0x18] sm:$0xff]
  %v382 = vld [vmem:[%s27] sm:$0x1]
  %v384 = vperm.slane %v382, 0
  %v387 = vsel %vm362, %v372, 0
  %v390 = vsel %vm362, %v373, 0
  %v393 = vsel %vm362, %v374, 0
  %v396 = vsel %vm362, %v375, 0
  %398 = vmatpush.msra.mxu0 0.0
  %399 = vmatpush.msra.mxu0 0.0
  %400 = vmatpush.msra.mxu0 0.0
  %401 = vmatpush.msra.mxu0 0.0
  %402 = vmatpush.msra.mxu0 0.0
  %403 = vmatpush.msra.mxu0 0.0
  %404 = vmatpush.msra.mxu0 0.0
  %405 = vmatpush.msra.mxu0 0.0
  %406 = vmatpush.msra.mxu0 0.0
  %407 = vmatpush.msra.mxu0 0.0
  %408 = vmatpush.msra.mxu0 0.0
  %409 = vmatpush.msra.mxu0 0.0
  %410 = vmatpush.msra.mxu0 %v381
  %411 = vmatpush.msra.mxu0 %v380
  %412 = vmatpush.msra.mxu0 %v379
  %413 = vmatpush.msra.mxu0 %v378
  %414 = vmatmul.f32.gmra.mxu0 %v387
  %v415 = vpop.f32.mrf.mxu0
  %v416 = vadd.f32 %v384, %v415
  %417 = vmatmul.f32.gmra.mxu0 %v390
  %v418 = vpop.f32.mrf.mxu0
  %v419 = vadd.f32 %v384, %v418
  %420 = vmatmul.f32.gmra.mxu0 %v393
  %v421 = vpop.f32.mrf.mxu0
  %v422 = vadd.f32 %v384, %v421
  %423 = vmatmul.f32.gmra.mxu0 %v396
  %v424 = vpop.f32.mrf.mxu0
  %v425 = vadd.f32 %v384, %v424
  %426 = vdwg.mxu0
  %v427 = vld [vmem:[%s29] sm:$0xff]
  %v428 = vld [vmem:[%s29 + $0x8] sm:$0xff]
  %v429 = vld [vmem:[%s29 + $0x10] sm:$0xff]
  %v430 = vld [vmem:[%s29 + $0x18] sm:$0xff]
  %432 = vrot.lane.b32.xlu0 %v416, 96
  %v433 = vpop.permute.xlu0 %432
  %vm434 = vcmask 64512
  %v435 = vsel %vm434, %v416, 0
  %v437 = vsel %vm434, %v433, 0
  %439 = vmatpush.xpose.msra.mxu0 0.0
  %440 = vmatpush.xpose.msra.mxu0 0.0
  %441 = vmatpush.xpose.msra.mxu0 0.0
  %442 = vmatpush.xpose.msra.mxu0 0.0
  %443 = vmatpush.xpose.msra.mxu0 0.0
  %444 = vmatpush.xpose.msra.mxu0 0.0
  %445 = vmatpush.xpose.msra.mxu0 0.0
  %446 = vmatpush.xpose.msra.mxu0 0.0
  %447 = vmatpush.xpose.msra.mxu0 0.0
  %448 = vmatpush.xpose.msra.mxu0 0.0
  %449 = vmatpush.xpose.msra.mxu0 0.0
  %450 = vmatpush.xpose.msra.mxu0 0.0
  %451 = vmatpush.xpose.msra.mxu0 0.0
  %452 = vmatpush.xpose.msra.mxu0 0.0
  %453 = vmatpush.xpose.msra.mxu0 0.0
  %454 = vmatpush.xpose.msra.mxu0 %v437
  %455 = vmatmul.f32.gmra.mxu0 %v435
  %v456 = vpop.f32.mrf.mxu0
  %v457 = vadd.f32 0.0, %v456
  %458 = vdwg.mxu0
  %460 = vrot.lane.b32.xlu0 %v419, 96
  %v461 = vpop.permute.xlu0 %460
  %v462 = vsel %vm434, %v419, 0
  %v464 = vsel %vm434, %v461, 0
  %466 = vmatpush.xpose.msra.mxu0 0.0
  %467 = vmatpush.xpose.msra.mxu0 0.0
  %468 = vmatpush.xpose.msra.mxu0 0.0
  %469 = vmatpush.xpose.msra.mxu0 0.0
  %470 = vmatpush.xpose.msra.mxu0 0.0
  %471 = vmatpush.xpose.msra.mxu0 0.0
  %472 = vmatpush.xpose.msra.mxu0 0.0
  %473 = vmatpush.xpose.msra.mxu0 0.0
  %474 = vmatpush.xpose.msra.mxu0 0.0
  %475 = vmatpush.xpose.msra.mxu0 0.0
  %476 = vmatpush.xpose.msra.mxu0 0.0
  %477 = vmatpush.xpose.msra.mxu0 0.0
  %478 = vmatpush.xpose.msra.mxu0 0.0
  %479 = vmatpush.xpose.msra.mxu0 0.0
  %480 = vmatpush.xpose.msra.mxu0 0.0
  %481 = vmatpush.xpose.msra.mxu0 %v464
  %482 = vmatmul.f32.gmra.mxu0 %v462
  %v483 = vpop.f32.mrf.mxu0
  %v484 = vadd.f32 0.0, %v483
  %485 = vdwg.mxu0
  %487 = vrot.lane.b32.xlu0 %v422, 96
  %v488 = vpop.permute.xlu0 %487
  %v489 = vsel %vm434, %v422, 0
  %v491 = vsel %vm434, %v488, 0
  %493 = vmatpush.xpose.msra.mxu0 0.0
  %494 = vmatpush.xpose.msra.mxu0 0.0
  %495 = vmatpush.xpose.msra.mxu0 0.0
  %496 = vmatpush.xpose.msra.mxu0 0.0
  %497 = vmatpush.xpose.msra.mxu0 0.0
  %498 = vmatpush.xpose.msra.mxu0 0.0
  %499 = vmatpush.xpose.msra.mxu0 0.0
  %500 = vmatpush.xpose.msra.mxu0 0.0
  %501 = vmatpush.xpose.msra.mxu0 0.0
  %502 = vmatpush.xpose.msra.mxu0 0.0
  %503 = vmatpush.xpose.msra.mxu0 0.0
  %504 = vmatpush.xpose.msra.mxu0 0.0
  %505 = vmatpush.xpose.msra.mxu0 0.0
  %506 = vmatpush.xpose.msra.mxu0 0.0
  %507 = vmatpush.xpose.msra.mxu0 0.0
  %508 = vmatpush.xpose.msra.mxu0 %v491
  %509 = vmatmul.f32.gmra.mxu0 %v489
  %v510 = vpop.f32.mrf.mxu0
  %v511 = vadd.f32 0.0, %v510
  %512 = vdwg.mxu0
  %514 = vrot.lane.b32.xlu0 %v425, 96
  %v515 = vpop.permute.xlu0 %514
  %v516 = vsel %vm434, %v425, 0
  %v518 = vsel %vm434, %v515, 0
  %520 = vmatpush.xpose.msra.mxu0 0.0
  %521 = vmatpush.xpose.msra.mxu0 0.0
  %522 = vmatpush.xpose.msra.mxu0 0.0
  %523 = vmatpush.xpose.msra.mxu0 0.0
  %524 = vmatpush.xpose.msra.mxu0 0.0
  %525 = vmatpush.xpose.msra.mxu0 0.0
  %526 = vmatpush.xpose.msra.mxu0 0.0
  %527 = vmatpush.xpose.msra.mxu0 0.0
  %528 = vmatpush.xpose.msra.mxu0 0.0
  %529 = vmatpush.xpose.msra.mxu0 0.0
  %530 = vmatpush.xpose.msra.mxu0 0.0
  %531 = vmatpush.xpose.msra.mxu0 0.0
  %532 = vmatpush.xpose.msra.mxu0 0.0
  %533 = vmatpush.xpose.msra.mxu0 0.0
  %534 = vmatpush.xpose.msra.mxu0 0.0
  %535 = vmatpush.xpose.msra.mxu0 %v518
  %536 = vmatmul.f32.gmra.mxu0 %v516
  %v537 = vpop.f32.mrf.mxu0
  %v538 = vadd.f32 0.0, %v537
  %539 = vdwg.mxu0
  %v540 = vmul.f32 %v457, 0.35355338
  %v541 = vmul.f32 %v484, 0.35355338
  %v542 = vmul.f32 %v511, 0.35355338
  %v543 = vmul.f32 %v538, 0.35355338
  %v545 = vrot.slane %v366, 1
  %v546 = vrot.slane %v366, 2
  %v547 = vrot.slane %v366, 3
  %v548 = vperm.slane %v366, 0
  %v549 = vperm.slane %v545, 0
  %v550 = vperm.slane %v546, 0
  %v551 = vperm.slane %v547, 0
  %v556 = vadd.f32 %v540, %v548
  %v557 = vadd.f32 %v541, %v549
  %v558 = vadd.f32 %v542, %v550
  %v559 = vadd.f32 %v543, %v551
  %v560 = vsel %vm434, %v556, -inf
  %561 = vmax.xlane.f32.xlu0 %v560
  %v562 = vpop.xlane.xlu0 %561
  %v563 = vsel %vm434, %v557, -inf
  %564 = vmax.xlane.f32.xlu0 %v563
  %v565 = vpop.xlane.xlu0 %564
  %v566 = vsel %vm434, %v558, -inf
  %567 = vmax.xlane.f32.xlu0 %v566
  %v568 = vpop.xlane.xlu0 %567
  %v569 = vsel %vm434, %v559, -inf
  %570 = vmax.xlane.f32.xlu0 %v569
  %v571 = vpop.xlane.xlu0 %570
  %v572 = vsub.f32 %v556, %v562
  %v573 = vsub.f32 %v557, %v565
  %v574 = vsub.f32 %v558, %v568
  %v575 = vsub.f32 %v559, %v571
  %v576 = vmul.f32 %v572, 1.442695
  %v577 = vpow.pop %v576
  %v578 = vmul.f32 %v573, 1.442695
  %v579 = vpow.pop %v578
  %v580 = vmul.f32 %v574, 1.442695
  %v581 = vpow.pop %v580
  %v582 = vmul.f32 %v575, 1.442695
  %v583 = vpow.pop %v582
  %v584 = vsel %vm434, %v577, 0.0
  %585 = vadd.xlane.f32.xlu0 %v584
  %v586 = vpop.xlane.xlu0 %585
  %v587 = vsel %vm434, %v579, 0.0
  %588 = vadd.xlane.f32.xlu0 %v587
  %v589 = vpop.xlane.xlu0 %588
  %v590 = vsel %vm434, %v581, 0.0
  %591 = vadd.xlane.f32.xlu0 %v590
  %v592 = vpop.xlane.xlu0 %591
  %v593 = vsel %vm434, %v583, 0.0
  %594 = vadd.xlane.f32.xlu0 %v593
  %v595 = vpop.xlane.xlu0 %594
  %v596 = vrcp.pop %v586
  %v597 = vmul.f32 %v586, %v596
  %v598 = vsub.f32 1.0, %v597
  %v599 = vmul.f32 %v596, %v598
  %v600 = vadd.f32 %v596, %v599
  %vm601 = vweird.f32 %v586
  %vm602 = vweird.f32 %v596
  %vm603 = vmor %vm601, %vm602
  %v604 = vsel %vm603, %v596, %v600
  %v605 = vand.u32 2147483647, %v586
  %vm606 = vcmp.eq.f32.partialorder %v605, 8.507059e+37
  %v607 = vand.u32 %v586, 2147483648
  %v608 = vor.u32 1.1754944e-38, %v607
  %v609 = vsel %vm606, %v608, %v604
  %v610 = vmul.f32 %v577, %v609
  %v611 = vrcp.pop %v589
  %v612 = vmul.f32 %v589, %v611
  %v613 = vsub.f32 1.0, %v612
  %v614 = vmul.f32 %v611, %v613
  %v615 = vadd.f32 %v611, %v614
  %vm616 = vweird.f32 %v589
  %vm617 = vweird.f32 %v611
  %vm618 = vmor %vm616, %vm617
  %v619 = vsel %vm618, %v611, %v615
  %v620 = vand.u32 2147483647, %v589
  %vm621 = vcmp.eq.f32.partialorder %v620, 8.507059e+37
  %v622 = vand.u32 %v589, 2147483648
  %v623 = vor.u32 1.1754944e-38, %v622
  %v624 = vsel %vm621, %v623, %v619
  %v625 = vmul.f32 %v579, %v624
  %v626 = vrcp.pop %v592
  %v627 = vmul.f32 %v592, %v626
  %v628 = vsub.f32 1.0, %v627
  %v629 = vmul.f32 %v626, %v628
  %v630 = vadd.f32 %v626, %v629
  %vm631 = vweird.f32 %v592
  %vm632 = vweird.f32 %v626
  %vm633 = vmor %vm631, %vm632
  %v634 = vsel %vm633, %v626, %v630
  %v635 = vand.u32 2147483647, %v592
  %vm636 = vcmp.eq.f32.partialorder %v635, 8.507059e+37
  %v637 = vand.u32 %v592, 2147483648
  %v638 = vor.u32 1.1754944e-38, %v637
  %v639 = vsel %vm636, %v638, %v634
  %v640 = vmul.f32 %v581, %v639
  %v641 = vrcp.pop %v595
  %v642 = vmul.f32 %v595, %v641
  %v643 = vsub.f32 1.0, %v642
  %v644 = vmul.f32 %v641, %v643
  %v645 = vadd.f32 %v641, %v644
  %vm646 = vweird.f32 %v595
  %vm647 = vweird.f32 %v641
  %vm648 = vmor %vm646, %vm647
  %v649 = vsel %vm648, %v641, %v645
  %v650 = vand.u32 2147483647, %v595
  %vm651 = vcmp.eq.f32.partialorder %v650, 8.507059e+37
  %v652 = vand.u32 %v595, 2147483648
  %v653 = vor.u32 1.1754944e-38, %v652
  %v654 = vsel %vm651, %v653, %v649
  %v655 = vmul.f32 %v583, %v654
  %v656 = vadd.f32 %v610, 0.0
  %v657 = vadd.f32 %v625, 0.0
  %v658 = vadd.f32 %v640, 0.0
  %v659 = vadd.f32 %v655, 0.0
  %660 = vrot.lane.b32.xlu0 %v416, 64
  %v661 = vpop.permute.xlu0 %660
  %v664 = vsel %vm434, %v610, 0
  %666 = vmatpush.msra.mxu0 0.0
  %667 = vmatpush.msra.mxu0 0.0
  %668 = vmatpush.msra.mxu0 0.0
  %669 = vmatpush.msra.mxu0 0.0
  %670 = vmatpush.msra.mxu0 0.0
  %671 = vmatpush.msra.mxu0 0.0
  %672 = vmatpush.msra.mxu0 0.0
  %673 = vmatpush.msra.mxu0 0.0
  %674 = vmatpush.msra.mxu0 0.0
  %675 = vmatpush.msra.mxu0 0.0
  %676 = vmatpush.msra.mxu0 0.0
  %677 = vmatpush.msra.mxu0 0.0
  %678 = vmatpush.msra.mxu0 0.0
  %679 = vmatpush.msra.mxu0 0.0
  %680 = vmatpush.msra.mxu0 0.0
  %681 = vmatpush.msra.mxu0 %v661
  %682 = vmatmul.f32.gmra.mxu0 %v664
  %v683 = vpop.f32.mrf.mxu0
  %v684 = vadd.f32 0.0, %v683
  %685 = vdwg.mxu0
  %686 = vrot.lane.b32.xlu0 %v419, 64
  %v687 = vpop.permute.xlu0 %686
  %v690 = vsel %vm434, %v625, 0
  %692 = vmatpush.msra.mxu0 0.0
  %693 = vmatpush.msra.mxu0 0.0
  %694 = vmatpush.msra.mxu0 0.0
  %695 = vmatpush.msra.mxu0 0.0
  %696 = vmatpush.msra.mxu0 0.0
  %697 = vmatpush.msra.mxu0 0.0
  %698 = vmatpush.msra.mxu0 0.0
  %699 = vmatpush.msra.mxu0 0.0
  %700 = vmatpush.msra.mxu0 0.0
  %701 = vmatpush.msra.mxu0 0.0
  %702 = vmatpush.msra.mxu0 0.0
  %703 = vmatpush.msra.mxu0 0.0
  %704 = vmatpush.msra.mxu0 0.0
  %705 = vmatpush.msra.mxu0 0.0
  %706 = vmatpush.msra.mxu0 0.0
  %707 = vmatpush.msra.mxu0 %v687
  %708 = vmatmul.f32.gmra.mxu0 %v690
  %v709 = vpop.f32.mrf.mxu0
  %v710 = vadd.f32 0.0, %v709
  %711 = vdwg.mxu0
  %712 = vrot.lane.b32.xlu0 %v422, 64
  %v713 = vpop.permute.xlu0 %712
  %v716 = vsel %vm434, %v640, 0
  %718 = vmatpush.msra.mxu0 0.0
  %719 = vmatpush.msra.mxu0 0.0
  %720 = vmatpush.msra.mxu0 0.0
  %721 = vmatpush.msra.mxu0 0.0
  %722 = vmatpush.msra.mxu0 0.0
  %723 = vmatpush.msra.mxu0 0.0
  %724 = vmatpush.msra.mxu0 0.0
  %725 = vmatpush.msra.mxu0 0.0
  %726 = vmatpush.msra.mxu0 0.0
  %727 = vmatpush.msra.mxu0 0.0
  %728 = vmatpush.msra.mxu0 0.0
  %729 = vmatpush.msra.mxu0 0.0
  %730 = vmatpush.msra.mxu0 0.0
  %731 = vmatpush.msra.mxu0 0.0
  %732 = vmatpush.msra.mxu0 0.0
  %733 = vmatpush.msra.mxu0 %v713
  %734 = vmatmul.f32.gmra.mxu0 %v716
  %v735 = vpop.f32.mrf.mxu0
  %v736 = vadd.f32 0.0, %v735
  %737 = vdwg.mxu0
  %738 = vrot.lane.b32.xlu0 %v425, 64
  %v739 = vpop.permute.xlu0 %738
  %v742 = vsel %vm434, %v655, 0
  %744 = vmatpush.msra.mxu0 0.0
  %745 = vmatpush.msra.mxu0 0.0
  %746 = vmatpush.msra.mxu0 0.0
  %747 = vmatpush.msra.mxu0 0.0
  %748 = vmatpush.msra.mxu0 0.0
  %749 = vmatpush.msra.mxu0 0.0
  %750 = vmatpush.msra.mxu0 0.0
  %751 = vmatpush.msra.mxu0 0.0
  %752 = vmatpush.msra.mxu0 0.0
  %753 = vmatpush.msra.mxu0 0.0
  %754 = vmatpush.msra.mxu0 0.0
  %755 = vmatpush.msra.mxu0 0.0
  %756 = vmatpush.msra.mxu0 0.0
  %757 = vmatpush.msra.mxu0 0.0
  %758 = vmatpush.msra.mxu0 0.0
  %759 = vmatpush.msra.mxu0 %v739
  %760 = vmatmul.f32.gmra.mxu0 %v742
  %v761 = vpop.f32.mrf.mxu0
  %v762 = vadd.f32 0.0, %v761
  %763 = vdwg.mxu0
  %764 = vrot.lane.b32.xlu0 %v416, 120
  %v765 = vpop.permute.xlu0 %764
  %766 = vrot.lane.b32.xlu0 %v416, 88
  %v767 = vpop.permute.xlu0 %766
  %v768 = vsel %vm434, %v765, 0
  %v770 = vsel %vm434, %v767, 0
  %772 = vmatpush.xpose.msra.mxu0 0.0
  %773 = vmatpush.xpose.msra.mxu0 0.0
  %774 = vmatpush.xpose.msra.mxu0 0.0
  %775 = vmatpush.xpose.msra.mxu0 0.0
  %776 = vmatpush.xpose.msra.mxu0 0.0
  %777 = vmatpush.xpose.msra.mxu0 0.0
  %778 = vmatpush.xpose.msra.mxu0 0.0
  %779 = vmatpush.xpose.msra.mxu0 0.0
  %780 = vmatpush.xpose.msra.mxu0 0.0
  %781 = vmatpush.xpose.msra.mxu0 0.0
  %782 = vmatpush.xpose.msra.mxu0 0.0
  %783 = vmatpush.xpose.msra.mxu0 0.0
  %784 = vmatpush.xpose.msra.mxu0 0.0
  %785 = vmatpush.xpose.msra.mxu0 0.0
  %786 = vmatpush.xpose.msra.mxu0 0.0
  %787 = vmatpush.xpose.msra.mxu0 %v770
  %788 = vmatmul.f32.gmra.mxu0 %v768
  %v789 = vpop.f32.mrf.mxu0
  %v790 = vadd.f32 0.0, %v789
  %791 = vdwg.mxu0
  %792 = vrot.lane.b32.xlu0 %v419, 120
  %v793 = vpop.permute.xlu0 %792
  %794 = vrot.lane.b32.xlu0 %v419, 88
  %v795 = vpop.permute.xlu0 %794
  %v796 = vsel %vm434, %v793, 0
  %v798 = vsel %vm434, %v795, 0
  %800 = vmatpush.xpose.msra.mxu0 0.0
  %801 = vmatpush.xpose.msra.mxu0 0.0
  %802 = vmatpush.xpose.msra.mxu0 0.0
  %803 = vmatpush.xpose.msra.mxu0 0.0
  %804 = vmatpush.xpose.msra.mxu0 0.0
  %805 = vmatpush.xpose.msra.mxu0 0.0
  %806 = vmatpush.xpose.msra.mxu0 0.0
  %807 = vmatpush.xpose.msra.mxu0 0.0
  %808 = vmatpush.xpose.msra.mxu0 0.0
  %809 = vmatpush.xpose.msra.mxu0 0.0
  %810 = vmatpush.xpose.msra.mxu0 0.0
  %811 = vmatpush.xpose.msra.mxu0 0.0
  %812 = vmatpush.xpose.msra.mxu0 0.0
  %813 = vmatpush.xpose.msra.mxu0 0.0
  %814 = vmatpush.xpose.msra.mxu0 0.0
  %815 = vmatpush.xpose.msra.mxu0 %v798
  %816 = vmatmul.f32.gmra.mxu0 %v796
  %v817 = vpop.f32.mrf.mxu0
  %v818 = vadd.f32 0.0, %v817
  %819 = vdwg.mxu0
  %820 = vrot.lane.b32.xlu0 %v422, 120
  %v821 = vpop.permute.xlu0 %820
  %822 = vrot.lane.b32.xlu0 %v422, 88
  %v823 = vpop.permute.xlu0 %822
  %v824 = vsel %vm434, %v821, 0
  %v826 = vsel %vm434, %v823, 0
  %828 = vmatpush.xpose.msra.mxu0 0.0
  %829 = vmatpush.xpose.msra.mxu0 0.0
  %830 = vmatpush.xpose.msra.mxu0 0.0
  %831 = vmatpush.xpose.msra.mxu0 0.0
  %832 = vmatpush.xpose.msra.mxu0 0.0
  %833 = vmatpush.xpose.msra.mxu0 0.0
  %834 = vmatpush.xpose.msra.mxu0 0.0
  %835 = vmatpush.xpose.msra.mxu0 0.0
  %836 = vmatpush.xpose.msra.mxu0 0.0
  %837 = vmatpush.xpose.msra.mxu0 0.0
  %838 = vmatpush.xpose.msra.mxu0 0.0
  %839 = vmatpush.xpose.msra.mxu0 0.0
  %840 = vmatpush.xpose.msra.mxu0 0.0
  %841 = vmatpush.xpose.msra.mxu0 0.0
  %842 = vmatpush.xpose.msra.mxu0 0.0
  %843 = vmatpush.xpose.msra.mxu0 %v826
  %844 = vmatmul.f32.gmra.mxu0 %v824
  %v845 = vpop.f32.mrf.mxu0
  %v846 = vadd.f32 0.0, %v845
  %847 = vdwg.mxu0
  %848 = vrot.lane.b32.xlu0 %v425, 120
  %v849 = vpop.permute.xlu0 %848
  %850 = vrot.lane.b32.xlu0 %v425, 88
  %v851 = vpop.permute.xlu0 %850
  %v852 = vsel %vm434, %v849, 0
  %v854 = vsel %vm434, %v851, 0
  %856 = vmatpush.xpose.msra.mxu0 0.0
  %857 = vmatpush.xpose.msra.mxu0 0.0
  %858 = vmatpush.xpose.msra.mxu0 0.0
  %859 = vmatpush.xpose.msra.mxu0 0.0
  %860 = vmatpush.xpose.msra.mxu0 0.0
  %861 = vmatpush.xpose.msra.mxu0 0.0
  %862 = vmatpush.xpose.msra.mxu0 0.0
  %863 = vmatpush.xpose.msra.mxu0 0.0
  %864 = vmatpush.xpose.msra.mxu0 0.0
  %865 = vmatpush.xpose.msra.mxu0 0.0
  %866 = vmatpush.xpose.msra.mxu0 0.0
  %867 = vmatpush.xpose.msra.mxu0 0.0
  %868 = vmatpush.xpose.msra.mxu0 0.0
  %869 = vmatpush.xpose.msra.mxu0 0.0
  %870 = vmatpush.xpose.msra.mxu0 0.0
  %871 = vmatpush.xpose.msra.mxu0 %v854
  %872 = vmatmul.f32.gmra.mxu0 %v852
  %v873 = vpop.f32.mrf.mxu0
  %v874 = vadd.f32 0.0, %v873
  %875 = vdwg.mxu0
  %v876 = vmul.f32 %v790, 0.35355338
  %v877 = vmul.f32 %v818, 0.35355338
  %v878 = vmul.f32 %v846, 0.35355338
  %v879 = vmul.f32 %v874, 0.35355338
  %v880 = vadd.f32 %v876, %v548
  %v881 = vadd.f32 %v877, %v549
  %v882 = vadd.f32 %v878, %v550
  %v883 = vadd.f32 %v879, %v551
  %v884 = vsel %vm434, %v880, -inf
  %885 = vmax.xlane.f32.xlu0 %v884
  %v886 = vpop.xlane.xlu0 %885
  %v887 = vsel %vm434, %v881, -inf
  %888 = vmax.xlane.f32.xlu0 %v887
  %v889 = vpop.xlane.xlu0 %888
  %v890 = vsel %vm434, %v882, -inf
  %891 = vmax.xlane.f32.xlu0 %v890
  %v892 = vpop.xlane.xlu0 %891
  %v893 = vsel %vm434, %v883, -inf
  %894 = vmax.xlane.f32.xlu0 %v893
  %v895 = vpop.xlane.xlu0 %894
  %v896 = vsub.f32 %v880, %v886
  %v897 = vsub.f32 %v881, %v889
  %v898 = vsub.f32 %v882, %v892
  %v899 = vsub.f32 %v883, %v895
  %v900 = vmul.f32 %v896, 1.442695
  %v901 = vpow.pop %v900
  %v902 = vmul.f32 %v897, 1.442695
  %v903 = vpow.pop %v902
  %v904 = vmul.f32 %v898, 1.442695
  %v905 = vpow.pop %v904
  %v906 = vmul.f32 %v899, 1.442695
  %v907 = vpow.pop %v906
  %v908 = vsel %vm434, %v901, 0.0
  %909 = vadd.xlane.f32.xlu0 %v908
  %v910 = vpop.xlane.xlu0 %909
  %v911 = vsel %vm434, %v903, 0.0
  %912 = vadd.xlane.f32.xlu0 %v911
  %v913 = vpop.xlane.xlu0 %912
  %v914 = vsel %vm434, %v905, 0.0
  %915 = vadd.xlane.f32.xlu0 %v914
  %v916 = vpop.xlane.xlu0 %915
  %v917 = vsel %vm434, %v907, 0.0
  %918 = vadd.xlane.f32.xlu0 %v917
  %v919 = vpop.xlane.xlu0 %918
  %v920 = vrcp.pop %v910
  %v921 = vmul.f32 %v910, %v920
  %v922 = vsub.f32 1.0, %v921
  %v923 = vmul.f32 %v920, %v922
  %v924 = vadd.f32 %v920, %v923
  %vm925 = vweird.f32 %v910
  %vm926 = vweird.f32 %v920
  %vm927 = vmor %vm925, %vm926
  %v928 = vsel %vm927, %v920, %v924
  %v929 = vand.u32 2147483647, %v910
  %vm930 = vcmp.eq.f32.partialorder %v929, 8.507059e+37
  %v931 = vand.u32 %v910, 2147483648
  %v932 = vor.u32 1.1754944e-38, %v931
  %v933 = vsel %vm930, %v932, %v928
  %v934 = vmul.f32 %v901, %v933
  %v935 = vrcp.pop %v913
  %v936 = vmul.f32 %v913, %v935
  %v937 = vsub.f32 1.0, %v936
  %v938 = vmul.f32 %v935, %v937
  %v939 = vadd.f32 %v935, %v938
  %vm940 = vweird.f32 %v913
  %vm941 = vweird.f32 %v935
  %vm942 = vmor %vm940, %vm941
  %v943 = vsel %vm942, %v935, %v939
  %v944 = vand.u32 2147483647, %v913
  %vm945 = vcmp.eq.f32.partialorder %v944, 8.507059e+37
  %v946 = vand.u32 %v913, 2147483648
  %v947 = vor.u32 1.1754944e-38, %v946
  %v948 = vsel %vm945, %v947, %v943
  %v949 = vmul.f32 %v903, %v948
  %v950 = vrcp.pop %v916
  %v951 = vmul.f32 %v916, %v950
  %v952 = vsub.f32 1.0, %v951
  %v953 = vmul.f32 %v950, %v952
  %v954 = vadd.f32 %v950, %v953
  %vm955 = vweird.f32 %v916
  %vm956 = vweird.f32 %v950
  %vm957 = vmor %vm955, %vm956
  %v958 = vsel %vm957, %v950, %v954
  %v959 = vand.u32 2147483647, %v916
  %vm960 = vcmp.eq.f32.partialorder %v959, 8.507059e+37
  %v961 = vand.u32 %v916, 2147483648
  %v962 = vor.u32 1.1754944e-38, %v961
  %v963 = vsel %vm960, %v962, %v958
  %v964 = vmul.f32 %v905, %v963
  %v965 = vrcp.pop %v919
  %v966 = vmul.f32 %v919, %v965
  %v967 = vsub.f32 1.0, %v966
  %v968 = vmul.f32 %v965, %v967
  %v969 = vadd.f32 %v965, %v968
  %vm970 = vweird.f32 %v919
  %vm971 = vweird.f32 %v965
  %vm972 = vmor %vm970, %vm971
  %v973 = vsel %vm972, %v965, %v969
  %v974 = vand.u32 2147483647, %v919
  %vm975 = vcmp.eq.f32.partialorder %v974, 8.507059e+37
  %v976 = vand.u32 %v919, 2147483648
  %v977 = vor.u32 1.1754944e-38, %v976
  %v978 = vsel %vm975, %v977, %v973
  %v979 = vmul.f32 %v907, %v978
  %v980 = vadd.f32 %v656, %v934
  %v981 = vadd.f32 %v657, %v949
  %v982 = vadd.f32 %v658, %v964
  %v983 = vadd.f32 %v659, %v979
  %984 = vrot.lane.b32.xlu0 %v416, 56
  %v985 = vpop.permute.xlu0 %984
  %v988 = vsel %vm434, %v934, 0
  %990 = vmatpush.msra.mxu0 0.0
  %991 = vmatpush.msra.mxu0 0.0
  %992 = vmatpush.msra.mxu0 0.0
  %993 = vmatpush.msra.mxu0 0.0
  %994 = vmatpush.msra.mxu0 0.0
  %995 = vmatpush.msra.mxu0 0.0
  %996 = vmatpush.msra.mxu0 0.0
  %997 = vmatpush.msra.mxu0 0.0
  %998 = vmatpush.msra.mxu0 0.0
  %999 = vmatpush.msra.mxu0 0.0
  %1000 = vmatpush.msra.mxu0 0.0
  %1001 = vmatpush.msra.mxu0 0.0
  %1002 = vmatpush.msra.mxu0 0.0
  %1003 = vmatpush.msra.mxu0 0.0
  %1004 = vmatpush.msra.mxu0 0.0
  %1005 = vmatpush.msra.mxu0 %v985
  %1006 = vmatmul.f32.gmra.mxu0 %v988
  %v1007 = vpop.f32.mrf.mxu0
  %v1008 = vadd.f32 0.0, %v1007
  %1009 = vdwg.mxu0
  %1010 = vrot.lane.b32.xlu0 %v419, 56
  %v1011 = vpop.permute.xlu0 %1010
  %v1014 = vsel %vm434, %v949, 0
  %1016 = vmatpush.msra.mxu0 0.0
  %1017 = vmatpush.msra.mxu0 0.0
  %1018 = vmatpush.msra.mxu0 0.0
  %1019 = vmatpush.msra.mxu0 0.0
  %1020 = vmatpush.msra.mxu0 0.0
  %1021 = vmatpush.msra.mxu0 0.0
  %1022 = vmatpush.msra.mxu0 0.0
  %1023 = vmatpush.msra.mxu0 0.0
  %1024 = vmatpush.msra.mxu0 0.0
  %1025 = vmatpush.msra.mxu0 0.0
  %1026 = vmatpush.msra.mxu0 0.0
  %1027 = vmatpush.msra.mxu0 0.0
  %1028 = vmatpush.msra.mxu0 0.0
  %1029 = vmatpush.msra.mxu0 0.0
  %1030 = vmatpush.msra.mxu0 0.0
  %1031 = vmatpush.msra.mxu0 %v1011
  %1032 = vmatmul.f32.gmra.mxu0 %v1014
  %v1033 = vpop.f32.mrf.mxu0
  %v1034 = vadd.f32 0.0, %v1033
  %1035 = vdwg.mxu0
  %1036 = vrot.lane.b32.xlu0 %v422, 56
  %v1037 = vpop.permute.xlu0 %1036
  %v1040 = vsel %vm434, %v964, 0
  %1042 = vmatpush.msra.mxu0 0.0
  %1043 = vmatpush.msra.mxu0 0.0
  %1044 = vmatpush.msra.mxu0 0.0
  %1045 = vmatpush.msra.mxu0 0.0
  %1046 = vmatpush.msra.mxu0 0.0
  %1047 = vmatpush.msra.mxu0 0.0
  %1048 = vmatpush.msra.mxu0 0.0
  %1049 = vmatpush.msra.mxu0 0.0
  %1050 = vmatpush.msra.mxu0 0.0
  %1051 = vmatpush.msra.mxu0 0.0
  %1052 = vmatpush.msra.mxu0 0.0
  %1053 = vmatpush.msra.mxu0 0.0
  %1054 = vmatpush.msra.mxu0 0.0
  %1055 = vmatpush.msra.mxu0 0.0
  %1056 = vmatpush.msra.mxu0 0.0
  %1057 = vmatpush.msra.mxu0 %v1037
  %1058 = vmatmul.f32.gmra.mxu0 %v1040
  %v1059 = vpop.f32.mrf.mxu0
  %v1060 = vadd.f32 0.0, %v1059
  %1061 = vdwg.mxu0
  %1062 = vrot.lane.b32.xlu0 %v425, 56
  %v1063 = vpop.permute.xlu0 %1062
  %v1066 = vsel %vm434, %v979, 0
  %1068 = vmatpush.msra.mxu0 0.0
  %1069 = vmatpush.msra.mxu0 0.0
  %1070 = vmatpush.msra.mxu0 0.0
  %1071 = vmatpush.msra.mxu0 0.0
  %1072 = vmatpush.msra.mxu0 0.0
  %1073 = vmatpush.msra.mxu0 0.0
  %1074 = vmatpush.msra.mxu0 0.0
  %1075 = vmatpush.msra.mxu0 0.0
  %1076 = vmatpush.msra.mxu0 0.0
  %1077 = vmatpush.msra.mxu0 0.0
  %1078 = vmatpush.msra.mxu0 0.0
  %1079 = vmatpush.msra.mxu0 0.0
  %1080 = vmatpush.msra.mxu0 0.0
  %1081 = vmatpush.msra.mxu0 0.0
  %1082 = vmatpush.msra.mxu0 0.0
  %1083 = vmatpush.msra.mxu0 %v1063
  %1084 = vmatmul.f32.gmra.mxu0 %v1066
  %v1085 = vpop.f32.mrf.mxu0
  %v1086 = vadd.f32 0.0, %v1085
  %1087 = vdwg.mxu0
  %v1089 = vsel %vm434, %v1008, 0
  %v1092 = vsel %vm434, %v1034, 0
  %v1095 = vsel %vm434, %v1060, 0
  %v1098 = vsel %vm434, %v1086, 0
  %1100 = vmatpush.msra.mxu0 0.0
  %1101 = vmatpush.msra.mxu0 0.0
  %1102 = vmatpush.msra.mxu0 0.0
  %1103 = vmatpush.msra.mxu0 0.0
  %1104 = vmatpush.msra.mxu0 0.0
  %1105 = vmatpush.msra.mxu0 0.0
  %1106 = vmatpush.msra.mxu0 0.0
  %1107 = vmatpush.msra.mxu0 0.0
  %1108 = vmatpush.msra.mxu0 0.0
  %1109 = vmatpush.msra.mxu0 0.0
  %1110 = vmatpush.msra.mxu0 0.0
  %1111 = vmatpush.msra.mxu0 0.0
  %1112 = vmatpush.msra.mxu0 0.0
  %1113 = vmatpush.msra.mxu0 0.0
  %1114 = vmatpush.msra.mxu0 0.0
  %1115 = vmatpush.msra.mxu0 %v428
  %1116 = vmatmul.f32.gmra.mxu0 %v1089
  %v1117 = vpop.f32.mrf.mxu0
  %v1118 = vadd.f32 0.0, %v1117
  %1119 = vmatmul.f32.gmra.mxu0 %v1092
  %v1120 = vpop.f32.mrf.mxu0
  %v1121 = vadd.f32 0.0, %v1120
  %1122 = vmatmul.f32.gmra.mxu0 %v1095
  %v1123 = vpop.f32.mrf.mxu0
  %v1124 = vadd.f32 0.0, %v1123
  %1125 = vmatmul.f32.gmra.mxu0 %v1098
  %v1126 = vpop.f32.mrf.mxu0
  %v1127 = vadd.f32 0.0, %v1126
  %1128 = vdwg.mxu0
  %v1130 = vsel %vm434, %v684, 0
  %v1133 = vsel %vm434, %v710, 0
  %v1136 = vsel %vm434, %v736, 0
  %v1139 = vsel %vm434, %v762, 0
  %1141 = vmatpush.msra.mxu0 0.0
  %1142 = vmatpush.msra.mxu0 0.0
  %1143 = vmatpush.msra.mxu0 0.0
  %1144 = vmatpush.msra.mxu0 0.0
  %1145 = vmatpush.msra.mxu0 0.0
  %1146 = vmatpush.msra.mxu0 0.0
  %1147 = vmatpush.msra.mxu0 0.0
  %1148 = vmatpush.msra.mxu0 0.0
  %1149 = vmatpush.msra.mxu0 0.0
  %1150 = vmatpush.msra.mxu0 0.0
  %1151 = vmatpush.msra.mxu0 0.0
  %1152 = vmatpush.msra.mxu0 0.0
  %1153 = vmatpush.msra.mxu0 0.0
  %1154 = vmatpush.msra.mxu0 0.0
  %1155 = vmatpush.msra.mxu0 0.0
  %1156 = vmatpush.msra.mxu0 %v427
  %1157 = vmatmul.f32.gmra.mxu0 %v1130
  %v1158 = vpop.f32.mrf.mxu0
  %v1159 = vadd.f32 %v1118, %v1158
  %1160 = vmatmul.f32.gmra.mxu0 %v1133
  %v1161 = vpop.f32.mrf.mxu0
  %v1162 = vadd.f32 %v1121, %v1161
  %1163 = vmatmul.f32.gmra.mxu0 %v1136
  %v1164 = vpop.f32.mrf.mxu0
  %v1165 = vadd.f32 %v1124, %v1164
  %1166 = vmatmul.f32.gmra.mxu0 %v1139
  %v1167 = vpop.f32.mrf.mxu0
  %v1168 = vadd.f32 %v1127, %v1167
  %1169 = vdwg.mxu0
  %1170 = vrot.lane.b32.xlu0 %v416, 112
  %v1171 = vpop.permute.xlu0 %1170
  %1172 = vrot.lane.b32.xlu0 %v416, 80
  %v1173 = vpop.permute.xlu0 %1172
  %v1174 = vsel %vm434, %v1171, 0
  %v1176 = vsel %vm434, %v1173, 0
  %1178 = vmatpush.xpose.msra.mxu0 0.0
  %1179 = vmatpush.xpose.msra.mxu0 0.0
  %1180 = vmatpush.xpose.msra.mxu0 0.0
  %1181 = vmatpush.xpose.msra.mxu0 0.0
  %1182 = vmatpush.xpose.msra.mxu0 0.0
  %1183 = vmatpush.xpose.msra.mxu0 0.0
  %1184 = vmatpush.xpose.msra.mxu0 0.0
  %1185 = vmatpush.xpose.msra.mxu0 0.0
  %1186 = vmatpush.xpose.msra.mxu0 0.0
  %1187 = vmatpush.xpose.msra.mxu0 0.0
  %1188 = vmatpush.xpose.msra.mxu0 0.0
  %1189 = vmatpush.xpose.msra.mxu0 0.0
  %1190 = vmatpush.xpose.msra.mxu0 0.0
  %1191 = vmatpush.xpose.msra.mxu0 0.0
  %1192 = vmatpush.xpose.msra.mxu0 0.0
  %1193 = vmatpush.xpose.msra.mxu0 %v1176
  %1194 = vmatmul.f32.gmra.mxu0 %v1174
  %v1195 = vpop.f32.mrf.mxu0
  %v1196 = vadd.f32 0.0, %v1195
  %1197 = vdwg.mxu0
  %1198 = vrot.lane.b32.xlu0 %v419, 112
  %v1199 = vpop.permute.xlu0 %1198
  %1200 = vrot.lane.b32.xlu0 %v419, 80
  %v1201 = vpop.permute.xlu0 %1200
  %v1202 = vsel %vm434, %v1199, 0
  %v1204 = vsel %vm434, %v1201, 0
  %1206 = vmatpush.xpose.msra.mxu0 0.0
  %1207 = vmatpush.xpose.msra.mxu0 0.0
  %1208 = vmatpush.xpose.msra.mxu0 0.0
  %1209 = vmatpush.xpose.msra.mxu0 0.0
  %1210 = vmatpush.xpose.msra.mxu0 0.0
  %1211 = vmatpush.xpose.msra.mxu0 0.0
  %1212 = vmatpush.xpose.msra.mxu0 0.0
  %1213 = vmatpush.xpose.msra.mxu0 0.0
  %1214 = vmatpush.xpose.msra.mxu0 0.0
  %1215 = vmatpush.xpose.msra.mxu0 0.0
  %1216 = vmatpush.xpose.msra.mxu0 0.0
  %1217 = vmatpush.xpose.msra.mxu0 0.0
  %1218 = vmatpush.xpose.msra.mxu0 0.0
  %1219 = vmatpush.xpose.msra.mxu0 0.0
  %1220 = vmatpush.xpose.msra.mxu0 0.0
  %1221 = vmatpush.xpose.msra.mxu0 %v1204
  %1222 = vmatmul.f32.gmra.mxu0 %v1202
  %v1223 = vpop.f32.mrf.mxu0
  %v1224 = vadd.f32 0.0, %v1223
  %1225 = vdwg.mxu0
  %1226 = vrot.lane.b32.xlu0 %v422, 112
  %v1227 = vpop.permute.xlu0 %1226
  %1228 = vrot.lane.b32.xlu0 %v422, 80
  %v1229 = vpop.permute.xlu0 %1228
  %v1230 = vsel %vm434, %v1227, 0
  %v1232 = vsel %vm434, %v1229, 0
  %1234 = vmatpush.xpose.msra.mxu0 0.0
  %1235 = vmatpush.xpose.msra.mxu0 0.0
  %1236 = vmatpush.xpose.msra.mxu0 0.0
  %1237 = vmatpush.xpose.msra.mxu0 0.0
  %1238 = vmatpush.xpose.msra.mxu0 0.0
  %1239 = vmatpush.xpose.msra.mxu0 0.0
  %1240 = vmatpush.xpose.msra.mxu0 0.0
  %1241 = vmatpush.xpose.msra.mxu0 0.0
  %1242 = vmatpush.xpose.msra.mxu0 0.0
  %1243 = vmatpush.xpose.msra.mxu0 0.0
  %1244 = vmatpush.xpose.msra.mxu0 0.0
  %1245 = vmatpush.xpose.msra.mxu0 0.0
  %1246 = vmatpush.xpose.msra.mxu0 0.0
  %1247 = vmatpush.xpose.msra.mxu0 0.0
  %1248 = vmatpush.xpose.msra.mxu0 0.0
  %1249 = vmatpush.xpose.msra.mxu0 %v1232
  %1250 = vmatmul.f32.gmra.mxu0 %v1230
  %v1251 = vpop.f32.mrf.mxu0
  %v1252 = vadd.f32 0.0, %v1251
  %1253 = vdwg.mxu0
  %1254 = vrot.lane.b32.xlu0 %v425, 112
  %v1255 = vpop.permute.xlu0 %1254
  %1256 = vrot.lane.b32.xlu0 %v425, 80
  %v1257 = vpop.permute.xlu0 %1256
  %v1258 = vsel %vm434, %v1255, 0
  %v1260 = vsel %vm434, %v1257, 0
  %1262 = vmatpush.xpose.msra.mxu0 0.0
  %1263 = vmatpush.xpose.msra.mxu0 0.0
  %1264 = vmatpush.xpose.msra.mxu0 0.0
  %1265 = vmatpush.xpose.msra.mxu0 0.0
  %1266 = vmatpush.xpose.msra.mxu0 0.0
  %1267 = vmatpush.xpose.msra.mxu0 0.0
  %1268 = vmatpush.xpose.msra.mxu0 0.0
  %1269 = vmatpush.xpose.msra.mxu0 0.0
  %1270 = vmatpush.xpose.msra.mxu0 0.0
  %1271 = vmatpush.xpose.msra.mxu0 0.0
  %1272 = vmatpush.xpose.msra.mxu0 0.0
  %1273 = vmatpush.xpose.msra.mxu0 0.0
  %1274 = vmatpush.xpose.msra.mxu0 0.0
  %1275 = vmatpush.xpose.msra.mxu0 0.0
  %1276 = vmatpush.xpose.msra.mxu0 0.0
  %1277 = vmatpush.xpose.msra.mxu0 %v1260
  %1278 = vmatmul.f32.gmra.mxu0 %v1258
  %v1279 = vpop.f32.mrf.mxu0
  %v1280 = vadd.f32 0.0, %v1279
  %1281 = vdwg.mxu0
  %v1282 = vmul.f32 %v1196, 0.35355338
  %v1283 = vmul.f32 %v1224, 0.35355338
  %v1284 = vmul.f32 %v1252, 0.35355338
  %v1285 = vmul.f32 %v1280, 0.35355338
  %v1286 = vadd.f32 %v1282, %v548
  %v1287 = vadd.f32 %v1283, %v549
  %v1288 = vadd.f32 %v1284, %v550
  %v1289 = vadd.f32 %v1285, %v551
  %v1290 = vsel %vm434, %v1286, -inf
  %1291 = vmax.xlane.f32.xlu0 %v1290
  %v1292 = vpop.xlane.xlu0 %1291
  %v1293 = vsel %vm434, %v1287, -inf
  %1294 = vmax.xlane.f32.xlu0 %v1293
  %v1295 = vpop.xlane.xlu0 %1294
  %v1296 = vsel %vm434, %v1288, -inf
  %1297 = vmax.xlane.f32.xlu0 %v1296
  %v1298 = vpop.xlane.xlu0 %1297
  %v1299 = vsel %vm434, %v1289, -inf
  %1300 = vmax.xlane.f32.xlu0 %v1299
  %v1301 = vpop.xlane.xlu0 %1300
  %v1302 = vsub.f32 %v1286, %v1292
  %v1303 = vsub.f32 %v1287, %v1295
  %v1304 = vsub.f32 %v1288, %v1298
  %v1305 = vsub.f32 %v1289, %v1301
  %v1306 = vmul.f32 %v1302, 1.442695
  %v1307 = vpow.pop %v1306
  %v1308 = vmul.f32 %v1303, 1.442695
  %v1309 = vpow.pop %v1308
  %v1310 = vmul.f32 %v1304, 1.442695
  %v1311 = vpow.pop %v1310
  %v1312 = vmul.f32 %v1305, 1.442695
  %v1313 = vpow.pop %v1312
  %v1314 = vsel %vm434, %v1307, 0.0
  %1315 = vadd.xlane.f32.xlu0 %v1314
  %v1316 = vpop.xlane.xlu0 %1315
  %v1317 = vsel %vm434, %v1309, 0.0
  %1318 = vadd.xlane.f32.xlu0 %v1317
  %v1319 = vpop.xlane.xlu0 %1318
  %v1320 = vsel %vm434, %v1311, 0.0
  %1321 = vadd.xlane.f32.xlu0 %v1320
  %v1322 = vpop.xlane.xlu0 %1321
  %v1323 = vsel %vm434, %v1313, 0.0
  %1324 = vadd.xlane.f32.xlu0 %v1323
  %v1325 = vpop.xlane.xlu0 %1324
  %v1326 = vrcp.pop %v1316
  %v1327 = vmul.f32 %v1316, %v1326
  %v1328 = vsub.f32 1.0, %v1327
  %v1329 = vmul.f32 %v1326, %v1328
  %v1330 = vadd.f32 %v1326, %v1329
  %vm1331 = vweird.f32 %v1316
  %vm1332 = vweird.f32 %v1326
  %vm1333 = vmor %vm1331, %vm1332
  %v1334 = vsel %vm1333, %v1326, %v1330
  %v1335 = vand.u32 2147483647, %v1316
  %vm1336 = vcmp.eq.f32.partialorder %v1335, 8.507059e+37
  %v1337 = vand.u32 %v1316, 2147483648
  %v1338 = vor.u32 1.1754944e-38, %v1337
  %v1339 = vsel %vm1336, %v1338, %v1334
  %v1340 = vmul.f32 %v1307, %v1339
  %v1341 = vrcp.pop %v1319
  %v1342 = vmul.f32 %v1319, %v1341
  %v1343 = vsub.f32 1.0, %v1342
  %v1344 = vmul.f32 %v1341, %v1343
  %v1345 = vadd.f32 %v1341, %v1344
  %vm1346 = vweird.f32 %v1319
  %vm1347 = vweird.f32 %v1341
  %vm1348 = vmor %vm1346, %vm1347
  %v1349 = vsel %vm1348, %v1341, %v1345
  %v1350 = vand.u32 2147483647, %v1319
  %vm1351 = vcmp.eq.f32.partialorder %v1350, 8.507059e+37
  %v1352 = vand.u32 %v1319, 2147483648
  %v1353 = vor.u32 1.1754944e-38, %v1352
  %v1354 = vsel %vm1351, %v1353, %v1349
  %v1355 = vmul.f32 %v1309, %v1354
  %v1356 = vrcp.pop %v1322
  %v1357 = vmul.f32 %v1322, %v1356
  %v1358 = vsub.f32 1.0, %v1357
  %v1359 = vmul.f32 %v1356, %v1358
  %v1360 = vadd.f32 %v1356, %v1359
  %vm1361 = vweird.f32 %v1322
  %vm1362 = vweird.f32 %v1356
  %vm1363 = vmor %vm1361, %vm1362
  %v1364 = vsel %vm1363, %v1356, %v1360
  %v1365 = vand.u32 2147483647, %v1322
  %vm1366 = vcmp.eq.f32.partialorder %v1365, 8.507059e+37
  %v1367 = vand.u32 %v1322, 2147483648
  %v1368 = vor.u32 1.1754944e-38, %v1367
  %v1369 = vsel %vm1366, %v1368, %v1364
  %v1370 = vmul.f32 %v1311, %v1369
  %v1371 = vrcp.pop %v1325
  %v1372 = vmul.f32 %v1325, %v1371
  %v1373 = vsub.f32 1.0, %v1372
  %v1374 = vmul.f32 %v1371, %v1373
  %v1375 = vadd.f32 %v1371, %v1374
  %vm1376 = vweird.f32 %v1325
  %vm1377 = vweird.f32 %v1371
  %vm1378 = vmor %vm1376, %vm1377
  %v1379 = vsel %vm1378, %v1371, %v1375
  %v1380 = vand.u32 2147483647, %v1325
  %vm1381 = vcmp.eq.f32.partialorder %v1380, 8.507059e+37
  %v1382 = vand.u32 %v1325, 2147483648
  %v1383 = vor.u32 1.1754944e-38, %v1382
  %v1384 = vsel %vm1381, %v1383, %v1379
  %v1385 = vmul.f32 %v1313, %v1384
  %v1386 = vadd.f32 %v980, %v1340
  %v1387 = vadd.f32 %v981, %v1355
  %v1388 = vadd.f32 %v982, %v1370
  %v1389 = vadd.f32 %v983, %v1385
  %1390 = vrot.lane.b32.xlu0 %v416, 48
  %v1391 = vpop.permute.xlu0 %1390
  %v1394 = vsel %vm434, %v1340, 0
  %1396 = vmatpush.msra.mxu0 0.0
  %1397 = vmatpush.msra.mxu0 0.0
  %1398 = vmatpush.msra.mxu0 0.0
  %1399 = vmatpush.msra.mxu0 0.0
  %1400 = vmatpush.msra.mxu0 0.0
  %1401 = vmatpush.msra.mxu0 0.0
  %1402 = vmatpush.msra.mxu0 0.0
  %1403 = vmatpush.msra.mxu0 0.0
  %1404 = vmatpush.msra.mxu0 0.0
  %1405 = vmatpush.msra.mxu0 0.0
  %1406 = vmatpush.msra.mxu0 0.0
  %1407 = vmatpush.msra.mxu0 0.0
  %1408 = vmatpush.msra.mxu0 0.0
  %1409 = vmatpush.msra.mxu0 0.0
  %1410 = vmatpush.msra.mxu0 0.0
  %1411 = vmatpush.msra.mxu0 %v1391
  %1412 = vmatmul.f32.gmra.mxu0 %v1394
  %v1413 = vpop.f32.mrf.mxu0
  %v1414 = vadd.f32 0.0, %v1413
  %1415 = vdwg.mxu0
  %1416 = vrot.lane.b32.xlu0 %v419, 48
  %v1417 = vpop.permute.xlu0 %1416
  %v1420 = vsel %vm434, %v1355, 0
  %1422 = vmatpush.msra.mxu0 0.0
  %1423 = vmatpush.msra.mxu0 0.0
  %1424 = vmatpush.msra.mxu0 0.0
  %1425 = vmatpush.msra.mxu0 0.0
  %1426 = vmatpush.msra.mxu0 0.0
  %1427 = vmatpush.msra.mxu0 0.0
  %1428 = vmatpush.msra.mxu0 0.0
  %1429 = vmatpush.msra.mxu0 0.0
  %1430 = vmatpush.msra.mxu0 0.0
  %1431 = vmatpush.msra.mxu0 0.0
  %1432 = vmatpush.msra.mxu0 0.0
  %1433 = vmatpush.msra.mxu0 0.0
  %1434 = vmatpush.msra.mxu0 0.0
  %1435 = vmatpush.msra.mxu0 0.0
  %1436 = vmatpush.msra.mxu0 0.0
  %1437 = vmatpush.msra.mxu0 %v1417
  %1438 = vmatmul.f32.gmra.mxu0 %v1420
  %v1439 = vpop.f32.mrf.mxu0
  %v1440 = vadd.f32 0.0, %v1439
  %1441 = vdwg.mxu0
  %1442 = vrot.lane.b32.xlu0 %v422, 48
  %v1443 = vpop.permute.xlu0 %1442
  %v1446 = vsel %vm434, %v1370, 0
  %1448 = vmatpush.msra.mxu0 0.0
  %1449 = vmatpush.msra.mxu0 0.0
  %1450 = vmatpush.msra.mxu0 0.0
  %1451 = vmatpush.msra.mxu0 0.0
  %1452 = vmatpush.msra.mxu0 0.0
  %1453 = vmatpush.msra.mxu0 0.0
  %1454 = vmatpush.msra.mxu0 0.0
  %1455 = vmatpush.msra.mxu0 0.0
  %1456 = vmatpush.msra.mxu0 0.0
  %1457 = vmatpush.msra.mxu0 0.0
  %1458 = vmatpush.msra.mxu0 0.0
  %1459 = vmatpush.msra.mxu0 0.0
  %1460 = vmatpush.msra.mxu0 0.0
  %1461 = vmatpush.msra.mxu0 0.0
  %1462 = vmatpush.msra.mxu0 0.0
  %1463 = vmatpush.msra.mxu0 %v1443
  %1464 = vmatmul.f32.gmra.mxu0 %v1446
  %v1465 = vpop.f32.mrf.mxu0
  %v1466 = vadd.f32 0.0, %v1465
  %1467 = vdwg.mxu0
  %1468 = vrot.lane.b32.xlu0 %v425, 48
  %v1469 = vpop.permute.xlu0 %1468
  %v1472 = vsel %vm434, %v1385, 0
  %1474 = vmatpush.msra.mxu0 0.0
  %1475 = vmatpush.msra.mxu0 0.0
  %1476 = vmatpush.msra.mxu0 0.0
  %1477 = vmatpush.msra.mxu0 0.0
  %1478 = vmatpush.msra.mxu0 0.0
  %1479 = vmatpush.msra.mxu0 0.0
  %1480 = vmatpush.msra.mxu0 0.0
  %1481 = vmatpush.msra.mxu0 0.0
  %1482 = vmatpush.msra.mxu0 0.0
  %1483 = vmatpush.msra.mxu0 0.0
  %1484 = vmatpush.msra.mxu0 0.0
  %1485 = vmatpush.msra.mxu0 0.0
  %1486 = vmatpush.msra.mxu0 0.0
  %1487 = vmatpush.msra.mxu0 0.0
  %1488 = vmatpush.msra.mxu0 0.0
  %1489 = vmatpush.msra.mxu0 %v1469
  %1490 = vmatmul.f32.gmra.mxu0 %v1472
  %v1491 = vpop.f32.mrf.mxu0
  %v1492 = vadd.f32 0.0, %v1491
  %1493 = vdwg.mxu0
  %v1495 = vsel %vm434, %v1414, 0
  %v1498 = vsel %vm434, %v1440, 0
  %v1501 = vsel %vm434, %v1466, 0
  %v1504 = vsel %vm434, %v1492, 0
  %1506 = vmatpush.msra.mxu0 0.0
  %1507 = vmatpush.msra.mxu0 0.0
  %1508 = vmatpush.msra.mxu0 0.0
  %1509 = vmatpush.msra.mxu0 0.0
  %1510 = vmatpush.msra.mxu0 0.0
  %1511 = vmatpush.msra.mxu0 0.0
  %1512 = vmatpush.msra.mxu0 0.0
  %1513 = vmatpush.msra.mxu0 0.0
  %1514 = vmatpush.msra.mxu0 0.0
  %1515 = vmatpush.msra.mxu0 0.0
  %1516 = vmatpush.msra.mxu0 0.0
  %1517 = vmatpush.msra.mxu0 0.0
  %1518 = vmatpush.msra.mxu0 0.0
  %1519 = vmatpush.msra.mxu0 0.0
  %1520 = vmatpush.msra.mxu0 0.0
  %1521 = vmatpush.msra.mxu0 %v429
  %1522 = vmatmul.f32.gmra.mxu0 %v1495
  %v1523 = vpop.f32.mrf.mxu0
  %v1524 = vadd.f32 0.0, %v1523
  %1525 = vmatmul.f32.gmra.mxu0 %v1498
  %v1526 = vpop.f32.mrf.mxu0
  %v1527 = vadd.f32 0.0, %v1526
  %1528 = vmatmul.f32.gmra.mxu0 %v1501
  %v1529 = vpop.f32.mrf.mxu0
  %v1530 = vadd.f32 0.0, %v1529
  %1531 = vmatmul.f32.gmra.mxu0 %v1504
  %v1532 = vpop.f32.mrf.mxu0
  %v1533 = vadd.f32 0.0, %v1532
  %1534 = vdwg.mxu0
  %v1535 = vadd.f32 %v1159, %v1524
  %v1536 = vadd.f32 %v1162, %v1527
  %v1537 = vadd.f32 %v1165, %v1530
  %v1538 = vadd.f32 %v1168, %v1533
  %1539 = vrot.lane.b32.xlu0 %v416, 104
  %v1540 = vpop.permute.xlu0 %1539
  %1541 = vrot.lane.b32.xlu0 %v416, 72
  %v1542 = vpop.permute.xlu0 %1541
  %v1543 = vsel %vm434, %v1540, 0
  %v1545 = vsel %vm434, %v1542, 0
  %1547 = vmatpush.xpose.msra.mxu0 0.0
  %1548 = vmatpush.xpose.msra.mxu0 0.0
  %1549 = vmatpush.xpose.msra.mxu0 0.0
  %1550 = vmatpush.xpose.msra.mxu0 0.0
  %1551 = vmatpush.xpose.msra.mxu0 0.0
  %1552 = vmatpush.xpose.msra.mxu0 0.0
  %1553 = vmatpush.xpose.msra.mxu0 0.0
  %1554 = vmatpush.xpose.msra.mxu0 0.0
  %1555 = vmatpush.xpose.msra.mxu0 0.0
  %1556 = vmatpush.xpose.msra.mxu0 0.0
  %1557 = vmatpush.xpose.msra.mxu0 0.0
  %1558 = vmatpush.xpose.msra.mxu0 0.0
  %1559 = vmatpush.xpose.msra.mxu0 0.0
  %1560 = vmatpush.xpose.msra.mxu0 0.0
  %1561 = vmatpush.xpose.msra.mxu0 0.0
  %1562 = vmatpush.xpose.msra.mxu0 %v1545
  %1563 = vmatmul.f32.gmra.mxu0 %v1543
  %v1564 = vpop.f32.mrf.mxu0
  %v1565 = vadd.f32 0.0, %v1564
  %1566 = vdwg.mxu0
  %1567 = vrot.lane.b32.xlu0 %v419, 104
  %v1568 = vpop.permute.xlu0 %1567
  %1569 = vrot.lane.b32.xlu0 %v419, 72
  %v1570 = vpop.permute.xlu0 %1569
  %v1571 = vsel %vm434, %v1568, 0
  %v1573 = vsel %vm434, %v1570, 0
  %1575 = vmatpush.xpose.msra.mxu0 0.0
  %1576 = vmatpush.xpose.msra.mxu0 0.0
  %1577 = vmatpush.xpose.msra.mxu0 0.0
  %1578 = vmatpush.xpose.msra.mxu0 0.0
  %1579 = vmatpush.xpose.msra.mxu0 0.0
  %1580 = vmatpush.xpose.msra.mxu0 0.0
  %1581 = vmatpush.xpose.msra.mxu0 0.0
  %1582 = vmatpush.xpose.msra.mxu0 0.0
  %1583 = vmatpush.xpose.msra.mxu0 0.0
  %1584 = vmatpush.xpose.msra.mxu0 0.0
  %1585 = vmatpush.xpose.msra.mxu0 0.0
  %1586 = vmatpush.xpose.msra.mxu0 0.0
  %1587 = vmatpush.xpose.msra.mxu0 0.0
  %1588 = vmatpush.xpose.msra.mxu0 0.0
  %1589 = vmatpush.xpose.msra.mxu0 0.0
  %1590 = vmatpush.xpose.msra.mxu0 %v1573
  %1591 = vmatmul.f32.gmra.mxu0 %v1571
  %v1592 = vpop.f32.mrf.mxu0
  %v1593 = vadd.f32 0.0, %v1592
  %1594 = vdwg.mxu0
  %1595 = vrot.lane.b32.xlu0 %v422, 104
  %v1596 = vpop.permute.xlu0 %1595
  %1597 = vrot.lane.b32.xlu0 %v422, 72
  %v1598 = vpop.permute.xlu0 %1597
  %v1599 = vsel %vm434, %v1596, 0
  %v1601 = vsel %vm434, %v1598, 0
  %1603 = vmatpush.xpose.msra.mxu0 0.0
  %1604 = vmatpush.xpose.msra.mxu0 0.0
  %1605 = vmatpush.xpose.msra.mxu0 0.0
  %1606 = vmatpush.xpose.msra.mxu0 0.0
  %1607 = vmatpush.xpose.msra.mxu0 0.0
  %1608 = vmatpush.xpose.msra.mxu0 0.0
  %1609 = vmatpush.xpose.msra.mxu0 0.0
  %1610 = vmatpush.xpose.msra.mxu0 0.0
  %1611 = vmatpush.xpose.msra.mxu0 0.0
  %1612 = vmatpush.xpose.msra.mxu0 0.0
  %1613 = vmatpush.xpose.msra.mxu0 0.0
  %1614 = vmatpush.xpose.msra.mxu0 0.0
  %1615 = vmatpush.xpose.msra.mxu0 0.0
  %1616 = vmatpush.xpose.msra.mxu0 0.0
  %1617 = vmatpush.xpose.msra.mxu0 0.0
  %1618 = vmatpush.xpose.msra.mxu0 %v1601
  %1619 = vmatmul.f32.gmra.mxu0 %v1599
  %v1620 = vpop.f32.mrf.mxu0
  %v1621 = vadd.f32 0.0, %v1620
  %1622 = vdwg.mxu0
  %1623 = vrot.lane.b32.xlu0 %v425, 104
  %v1624 = vpop.permute.xlu0 %1623
  %1625 = vrot.lane.b32.xlu0 %v425, 72
  %v1626 = vpop.permute.xlu0 %1625
  %v1627 = vsel %vm434, %v1624, 0
  %v1629 = vsel %vm434, %v1626, 0
  %1631 = vmatpush.xpose.msra.mxu0 0.0
  %1632 = vmatpush.xpose.msra.mxu0 0.0
  %1633 = vmatpush.xpose.msra.mxu0 0.0
  %1634 = vmatpush.xpose.msra.mxu0 0.0
  %1635 = vmatpush.xpose.msra.mxu0 0.0
  %1636 = vmatpush.xpose.msra.mxu0 0.0
  %1637 = vmatpush.xpose.msra.mxu0 0.0
  %1638 = vmatpush.xpose.msra.mxu0 0.0
  %1639 = vmatpush.xpose.msra.mxu0 0.0
  %1640 = vmatpush.xpose.msra.mxu0 0.0
  %1641 = vmatpush.xpose.msra.mxu0 0.0
  %1642 = vmatpush.xpose.msra.mxu0 0.0
  %1643 = vmatpush.xpose.msra.mxu0 0.0
  %1644 = vmatpush.xpose.msra.mxu0 0.0
  %1645 = vmatpush.xpose.msra.mxu0 0.0
  %1646 = vmatpush.xpose.msra.mxu0 %v1629
  %1647 = vmatmul.f32.gmra.mxu0 %v1627
  %v1648 = vpop.f32.mrf.mxu0
  %v1649 = vadd.f32 0.0, %v1648
  %1650 = vdwg.mxu0
  %v1651 = vmul.f32 %v1565, 0.35355338
  %v1652 = vmul.f32 %v1593, 0.35355338
  %v1653 = vmul.f32 %v1621, 0.35355338
  %v1654 = vmul.f32 %v1649, 0.35355338
  %v1655 = vadd.f32 %v1651, %v548
  %v1656 = vadd.f32 %v1652, %v549
  %v1657 = vadd.f32 %v1653, %v550
  %v1658 = vadd.f32 %v1654, %v551
  %v1659 = vsel %vm434, %v1655, -inf
  %1660 = vmax.xlane.f32.xlu0 %v1659
  %v1661 = vpop.xlane.xlu0 %1660
  %v1662 = vsel %vm434, %v1656, -inf
  %1663 = vmax.xlane.f32.xlu0 %v1662
  %v1664 = vpop.xlane.xlu0 %1663
  %v1665 = vsel %vm434, %v1657, -inf
  %1666 = vmax.xlane.f32.xlu0 %v1665
  %v1667 = vpop.xlane.xlu0 %1666
  %v1668 = vsel %vm434, %v1658, -inf
  %1669 = vmax.xlane.f32.xlu0 %v1668
  %v1670 = vpop.xlane.xlu0 %1669
  %v1671 = vsub.f32 %v1655, %v1661
  %v1672 = vsub.f32 %v1656, %v1664
  %v1673 = vsub.f32 %v1657, %v1667
  %v1674 = vsub.f32 %v1658, %v1670
  %v1675 = vmul.f32 %v1671, 1.442695
  %v1676 = vpow.pop %v1675
  %v1677 = vmul.f32 %v1672, 1.442695
  %v1678 = vpow.pop %v1677
  %v1679 = vmul.f32 %v1673, 1.442695
  %v1680 = vpow.pop %v1679
  %v1681 = vmul.f32 %v1674, 1.442695
  %v1682 = vpow.pop %v1681
  %v1683 = vsel %vm434, %v1676, 0.0
  %1684 = vadd.xlane.f32.xlu0 %v1683
  %v1685 = vpop.xlane.xlu0 %1684
  %v1686 = vsel %vm434, %v1678, 0.0
  %1687 = vadd.xlane.f32.xlu0 %v1686
  %v1688 = vpop.xlane.xlu0 %1687
  %v1689 = vsel %vm434, %v1680, 0.0
  %1690 = vadd.xlane.f32.xlu0 %v1689
  %v1691 = vpop.xlane.xlu0 %1690
  %v1692 = vsel %vm434, %v1682, 0.0
  %1693 = vadd.xlane.f32.xlu0 %v1692
  %v1694 = vpop.xlane.xlu0 %1693
  %v1695 = vrcp.pop %v1685
  %v1696 = vmul.f32 %v1685, %v1695
  %v1697 = vsub.f32 1.0, %v1696
  %v1698 = vmul.f32 %v1695, %v1697
  %v1699 = vadd.f32 %v1695, %v1698
  %vm1700 = vweird.f32 %v1685
  %vm1701 = vweird.f32 %v1695
  %vm1702 = vmor %vm1700, %vm1701
  %v1703 = vsel %vm1702, %v1695, %v1699
  %v1704 = vand.u32 2147483647, %v1685
  %vm1705 = vcmp.eq.f32.partialorder %v1704, 8.507059e+37
  %v1706 = vand.u32 %v1685, 2147483648
  %v1707 = vor.u32 1.1754944e-38, %v1706
  %v1708 = vsel %vm1705, %v1707, %v1703
  %v1709 = vmul.f32 %v1676, %v1708
  %v1710 = vrcp.pop %v1688
  %v1711 = vmul.f32 %v1688, %v1710
  %v1712 = vsub.f32 1.0, %v1711
  %v1713 = vmul.f32 %v1710, %v1712
  %v1714 = vadd.f32 %v1710, %v1713
  %vm1715 = vweird.f32 %v1688
  %vm1716 = vweird.f32 %v1710
  %vm1717 = vmor %vm1715, %vm1716
  %v1718 = vsel %vm1717, %v1710, %v1714
  %v1719 = vand.u32 2147483647, %v1688
  %vm1720 = vcmp.eq.f32.partialorder %v1719, 8.507059e+37
  %v1721 = vand.u32 %v1688, 2147483648
  %v1722 = vor.u32 1.1754944e-38, %v1721
  %v1723 = vsel %vm1720, %v1722, %v1718
  %v1724 = vmul.f32 %v1678, %v1723
  %v1725 = vrcp.pop %v1691
  %v1726 = vmul.f32 %v1691, %v1725
  %v1727 = vsub.f32 1.0, %v1726
  %v1728 = vmul.f32 %v1725, %v1727
  %v1729 = vadd.f32 %v1725, %v1728
  %vm1730 = vweird.f32 %v1691
  %vm1731 = vweird.f32 %v1725
  %vm1732 = vmor %vm1730, %vm1731
  %v1733 = vsel %vm1732, %v1725, %v1729
  %v1734 = vand.u32 2147483647, %v1691
  %vm1735 = vcmp.eq.f32.partialorder %v1734, 8.507059e+37
  %v1736 = vand.u32 %v1691, 2147483648
  %v1737 = vor.u32 1.1754944e-38, %v1736
  %v1738 = vsel %vm1735, %v1737, %v1733
  %v1739 = vmul.f32 %v1680, %v1738
  %v1740 = vrcp.pop %v1694
  %v1741 = vmul.f32 %v1694, %v1740
  %v1742 = vsub.f32 1.0, %v1741
  %v1743 = vmul.f32 %v1740, %v1742
  %v1744 = vadd.f32 %v1740, %v1743
  %vm1745 = vweird.f32 %v1694
  %vm1746 = vweird.f32 %v1740
  %vm1747 = vmor %vm1745, %vm1746
  %v1748 = vsel %vm1747, %v1740, %v1744
  %v1749 = vand.u32 2147483647, %v1694
  %vm1750 = vcmp.eq.f32.partialorder %v1749, 8.507059e+37
  %v1751 = vand.u32 %v1694, 2147483648
  %v1752 = vor.u32 1.1754944e-38, %v1751
  %v1753 = vsel %vm1750, %v1752, %v1748
  %v1754 = vmul.f32 %v1682, %v1753
  %v1755 = vadd.f32 %v1386, %v1709
  %v1756 = vadd.f32 %v1387, %v1724
  %v1757 = vadd.f32 %v1388, %v1739
  %v1758 = vadd.f32 %v1389, %v1754
  %1759 = vrot.lane.b32.xlu0 %v416, 40
  %v1760 = vpop.permute.xlu0 %1759
  %v1763 = vsel %vm434, %v1709, 0
  %1765 = vmatpush.msra.mxu0 0.0
  %1766 = vmatpush.msra.mxu0 0.0
  %1767 = vmatpush.msra.mxu0 0.0
  %1768 = vmatpush.msra.mxu0 0.0
  %1769 = vmatpush.msra.mxu0 0.0
  %1770 = vmatpush.msra.mxu0 0.0
  %1771 = vmatpush.msra.mxu0 0.0
  %1772 = vmatpush.msra.mxu0 0.0
  %1773 = vmatpush.msra.mxu0 0.0
  %1774 = vmatpush.msra.mxu0 0.0
  %1775 = vmatpush.msra.mxu0 0.0
  %1776 = vmatpush.msra.mxu0 0.0
  %1777 = vmatpush.msra.mxu0 0.0
  %1778 = vmatpush.msra.mxu0 0.0
  %1779 = vmatpush.msra.mxu0 0.0
  %1780 = vmatpush.msra.mxu0 %v1760
  %1781 = vmatmul.f32.gmra.mxu0 %v1763
  %v1782 = vpop.f32.mrf.mxu0
  %v1783 = vadd.f32 0.0, %v1782
  %1784 = vdwg.mxu0
  %1785 = vrot.lane.b32.xlu0 %v419, 40
  %v1786 = vpop.permute.xlu0 %1785
  %v1789 = vsel %vm434, %v1724, 0
  %1791 = vmatpush.msra.mxu0 0.0
  %1792 = vmatpush.msra.mxu0 0.0
  %1793 = vmatpush.msra.mxu0 0.0
  %1794 = vmatpush.msra.mxu0 0.0
  %1795 = vmatpush.msra.mxu0 0.0
  %1796 = vmatpush.msra.mxu0 0.0
  %1797 = vmatpush.msra.mxu0 0.0
  %1798 = vmatpush.msra.mxu0 0.0
  %1799 = vmatpush.msra.mxu0 0.0
  %1800 = vmatpush.msra.mxu0 0.0
  %1801 = vmatpush.msra.mxu0 0.0
  %1802 = vmatpush.msra.mxu0 0.0
  %1803 = vmatpush.msra.mxu0 0.0
  %1804 = vmatpush.msra.mxu0 0.0
  %1805 = vmatpush.msra.mxu0 0.0
  %1806 = vmatpush.msra.mxu0 %v1786
  %1807 = vmatmul.f32.gmra.mxu0 %v1789
  %v1808 = vpop.f32.mrf.mxu0
  %v1809 = vadd.f32 0.0, %v1808
  %1810 = vdwg.mxu0
  %1811 = vrot.lane.b32.xlu0 %v422, 40
  %v1812 = vpop.permute.xlu0 %1811
  %v1815 = vsel %vm434, %v1739, 0
  %1817 = vmatpush.msra.mxu0 0.0
  %1818 = vmatpush.msra.mxu0 0.0
  %1819 = vmatpush.msra.mxu0 0.0
  %1820 = vmatpush.msra.mxu0 0.0
  %1821 = vmatpush.msra.mxu0 0.0
  %1822 = vmatpush.msra.mxu0 0.0
  %1823 = vmatpush.msra.mxu0 0.0
  %1824 = vmatpush.msra.mxu0 0.0
  %1825 = vmatpush.msra.mxu0 0.0
  %1826 = vmatpush.msra.mxu0 0.0
  %1827 = vmatpush.msra.mxu0 0.0
  %1828 = vmatpush.msra.mxu0 0.0
  %1829 = vmatpush.msra.mxu0 0.0
  %1830 = vmatpush.msra.mxu0 0.0
  %1831 = vmatpush.msra.mxu0 0.0
  %1832 = vmatpush.msra.mxu0 %v1812
  %1833 = vmatmul.f32.gmra.mxu0 %v1815
  %v1834 = vpop.f32.mrf.mxu0
  %v1835 = vadd.f32 0.0, %v1834
  %1836 = vdwg.mxu0
  %1837 = vrot.lane.b32.xlu0 %v425, 40
  %v1838 = vpop.permute.xlu0 %1837
  %v1841 = vsel %vm434, %v1754, 0
  %1843 = vmatpush.msra.mxu0 0.0
  %1844 = vmatpush.msra.mxu0 0.0
  %1845 = vmatpush.msra.mxu0 0.0
  %1846 = vmatpush.msra.mxu0 0.0
  %1847 = vmatpush.msra.mxu0 0.0
  %1848 = vmatpush.msra.mxu0 0.0
  %1849 = vmatpush.msra.mxu0 0.0
  %1850 = vmatpush.msra.mxu0 0.0
  %1851 = vmatpush.msra.mxu0 0.0
  %1852 = vmatpush.msra.mxu0 0.0
  %1853 = vmatpush.msra.mxu0 0.0
  %1854 = vmatpush.msra.mxu0 0.0
  %1855 = vmatpush.msra.mxu0 0.0
  %1856 = vmatpush.msra.mxu0 0.0
  %1857 = vmatpush.msra.mxu0 0.0
  %1858 = vmatpush.msra.mxu0 %v1838
  %1859 = vmatmul.f32.gmra.mxu0 %v1841
  %v1860 = vpop.f32.mrf.mxu0
  %v1861 = vadd.f32 0.0, %v1860
  %1862 = vdwg.mxu0
  %v1864 = vsel %vm434, %v1783, 0
  %v1867 = vsel %vm434, %v1809, 0
  %v1870 = vsel %vm434, %v1835, 0
  %v1873 = vsel %vm434, %v1861, 0
  %1875 = vmatpush.msra.mxu0 0.0
  %1876 = vmatpush.msra.mxu0 0.0
  %1877 = vmatpush.msra.mxu0 0.0
  %1878 = vmatpush.msra.mxu0 0.0
  %1879 = vmatpush.msra.mxu0 0.0
  %1880 = vmatpush.msra.mxu0 0.0
  %1881 = vmatpush.msra.mxu0 0.0
  %1882 = vmatpush.msra.mxu0 0.0
  %1883 = vmatpush.msra.mxu0 0.0
  %1884 = vmatpush.msra.mxu0 0.0
  %1885 = vmatpush.msra.mxu0 0.0
  %1886 = vmatpush.msra.mxu0 0.0
  %1887 = vmatpush.msra.mxu0 0.0
  %1888 = vmatpush.msra.mxu0 0.0
  %1889 = vmatpush.msra.mxu0 0.0
  %1890 = vmatpush.msra.mxu0 %v430
  %1891 = vmatmul.f32.gmra.mxu0 %v1864
  %v1892 = vpop.f32.mrf.mxu0
  %v1893 = vadd.f32 0.0, %v1892
  %1894 = vmatmul.f32.gmra.mxu0 %v1867
  %v1895 = vpop.f32.mrf.mxu0
  %v1896 = vadd.f32 0.0, %v1895
  %1897 = vmatmul.f32.gmra.mxu0 %v1870
  %v1898 = vpop.f32.mrf.mxu0
  %v1899 = vadd.f32 0.0, %v1898
  %1900 = vmatmul.f32.gmra.mxu0 %v1873
  %v1901 = vpop.f32.mrf.mxu0
  %v1902 = vadd.f32 0.0, %v1901
  %1903 = vdwg.mxu0
  %v1904 = vadd.f32 %v1535, %v1893
  %v1905 = vadd.f32 %v1536, %v1896
  %v1906 = vadd.f32 %v1537, %v1899
  %v1907 = vadd.f32 %v1538, %v1902
  %v1908 = vld [vmem:[%s31] sm:$0x1]
  %v1910 = vperm.slane %v1908, 0
  %v1912 = vadd.f32 %v1904, %v1910
  %v1913 = vadd.f32 %v1905, %v1910
  %v1914 = vadd.f32 %v1906, %v1910
  %v1915 = vadd.f32 %v1907, %v1910
  %v1916 = vmul.f32 %v1755, 0.25
  %v1917 = vmul.f32 %v1756, 0.25
  %v1918 = vmul.f32 %v1757, 0.25
  %v1919 = vmul.f32 %v1758, 0.25
  %vm1920 = vcmp.ge.s32.totalorder %v371, 0
  %vm1921 = vcmp.lt.s32.totalorder %v371, 2
  %vm1922 = vmand %vm1920, %vm1921
  %v1923 = vsel %vm1922, %v1916, 0.0
  %v1924 = vsel %vm1922, %v1917, 0.0
  %v1925 = vsel %vm1922, %v1918, 0.0
  %v1926 = vsel %vm1922, %v1919, 0.0
  %v1927 = vsel %vm434, %v1923, -inf
  %1928 = vmax.xlane.f32.xlu0 %v1927
  %v1929 = vpop.xlane.xlu0 %1928
  %v1930 = vsel %vm434, %v1924, -inf
  %1931 = vmax.xlane.f32.xlu0 %v1930
  %v1932 = vpop.xlane.xlu0 %1931
  %v1933 = vsel %vm434, %v1925, -inf
  %1934 = vmax.xlane.f32.xlu0 %v1933
  %v1935 = vpop.xlane.xlu0 %1934
  %v1936 = vsel %vm434, %v1926, -inf
  %1937 = vmax.xlane.f32.xlu0 %v1936
  %v1938 = vpop.xlane.xlu0 %1937
  %v1943 = vperm.slane %v1929, %v371
  %v1944 = vperm.slane %v1932, %v371
  %v1945 = vperm.slane %v1935, %v371
  %v1946 = vperm.slane %v1938, %v371
  %vm1947 = vcmask 1041409
  %v1948 = vsel %vm1947, %v1944, %v1943
  %vm1949 = vcmask 1042434
  %v1950 = vsel %vm1949, %v1945, %v1948
  %vm1951 = vcmask 1043459
  %v1952 = vsel %vm1951, %v1946, %v1950
  %v1954 = vsel %vm1922, %v1952, 0.0
  %vm1955 = vcmask 60416
  %v1956 = vsel %vm1955, %v1954, -inf
  %1957 = vmax.xlane.f32.xlu0 %v1956
  %v1958 = vpop.xlane.xlu0 %1957
  %v1959 = vld [vmem:[%s49] sm:$0x1]
  %v1960 = vperm.slane %v1959, 0
  %v1961 = vmul.f32 %v1958, %v1960
  %v1962 = vadd.f32 %v1961, 0.0
  %vm1963 = vcmp.ge.s32.totalorder %v371, 2
  %vm1964 = vcmp.lt.s32.totalorder %v371, 4
  %vm1965 = vmand %vm1963, %vm1964
  %v1966 = vsel %vm1965, %v1952, 0.0
  %v1967 = vsel %vm1955, %v1966, -inf
  %1968 = vmax.xlane.f32.xlu0 %v1967
  %v1969 = vpop.xlane.xlu0 %1968
  %v1970 = vld [vmem:[%s49 + $0x4] sm:$0x1]
  %v1971 = vperm.slane %v1970, 0
  %v1972 = vmul.f32 %v1969, %v1971
  %v1973 = vadd.f32 %v1962, %v1972
  %vm1974 = vcmp.ge.s32.totalorder %v371, 4
  %vm1975 = vcmp.lt.s32.totalorder %v371, 6
  %vm1976 = vmand %vm1974, %vm1975
  %v1977 = vsel %vm1976, %v1952, 0.0
  %v1978 = vsel %vm1955, %v1977, -inf
  %1979 = vmax.xlane.f32.xlu0 %v1978
  %v1980 = vpop.xlane.xlu0 %1979
  %v1981 = vld [vmem:[%s49 + $0x8] sm:$0x1]
  %v1982 = vperm.slane %v1981, 0
  %v1983 = vmul.f32 %v1980, %v1982
  %v1984 = vadd.f32 %v1973, %v1983
  %vm1985 = vcmp.ge.s32.totalorder %v371, 6
  %vm1986 = vcmp.lt.s32.totalorder %v371, 8
  %vm1987 = vmand %vm1985, %vm1986
  %v1988 = vsel %vm1987, %v1952, 0.0
  %v1989 = vsel %vm1955, %v1988, -inf
  %1990 = vmax.xlane.f32.xlu0 %v1989
  %v1991 = vpop.xlane.xlu0 %1990
  %v1992 = vld [vmem:[%s49 + $0xc] sm:$0x1]
  %v1993 = vperm.slane %v1992, 0
  %v1994 = vmul.f32 %v1991, %v1993
  %v1995 = vadd.f32 %v1984, %v1994
  %v1996 = vsel %vm1965, %v1916, 0.0
  %v1997 = vsel %vm1965, %v1917, 0.0
  %v1998 = vsel %vm1965, %v1918, 0.0
  %v1999 = vsel %vm1965, %v1919, 0.0
  %v2000 = vsel %vm434, %v1996, -inf
  %2001 = vmax.xlane.f32.xlu0 %v2000
  %v2002 = vpop.xlane.xlu0 %2001
  %v2003 = vsel %vm434, %v1997, -inf
  %2004 = vmax.xlane.f32.xlu0 %v2003
  %v2005 = vpop.xlane.xlu0 %2004
  %v2006 = vsel %vm434, %v1998, -inf
  %2007 = vmax.xlane.f32.xlu0 %v2006
  %v2008 = vpop.xlane.xlu0 %2007
  %v2009 = vsel %vm434, %v1999, -inf
  %2010 = vmax.xlane.f32.xlu0 %v2009
  %v2011 = vpop.xlane.xlu0 %2010
  %v2016 = vperm.slane %v2002, %v371
  %v2017 = vperm.slane %v2005, %v371
  %v2018 = vperm.slane %v2008, %v371
  %v2019 = vperm.slane %v2011, %v371
  %v2020 = vsel %vm1947, %v2017, %v2016
  %v2021 = vsel %vm1949, %v2018, %v2020
  %v2022 = vsel %vm1951, %v2019, %v2021
  %v2024 = vsel %vm1922, %v2022, 0.0
  %v2025 = vsel %vm1955, %v2024, -inf
  %2026 = vmax.xlane.f32.xlu0 %v2025
  %v2027 = vpop.xlane.xlu0 %2026
  %v2028 = vld [vmem:[%s49 + $0x1] sm:$0x1]
  %v2029 = vperm.slane %v2028, 0
  %v2030 = vmul.f32 %v2027, %v2029
  %v2031 = vadd.f32 %v1995, %v2030
  %v2032 = vsel %vm1965, %v2022, 0.0
  %v2033 = vsel %vm1955, %v2032, -inf
  %2034 = vmax.xlane.f32.xlu0 %v2033
  %v2035 = vpop.xlane.xlu0 %2034
  %v2036 = vld [vmem:[%s49 + $0x5] sm:$0x1]
  %v2037 = vperm.slane %v2036, 0
  %v2038 = vmul.f32 %v2035, %v2037
  %v2039 = vadd.f32 %v2031, %v2038
  %v2040 = vsel %vm1976, %v2022, 0.0
  %v2041 = vsel %vm1955, %v2040, -inf
  %2042 = vmax.xlane.f32.xlu0 %v2041
  %v2043 = vpop.xlane.xlu0 %2042
  %v2044 = vld [vmem:[%s49 + $0x9] sm:$0x1]
  %v2045 = vperm.slane %v2044, 0
  %v2046 = vmul.f32 %v2043, %v2045
  %v2047 = vadd.f32 %v2039, %v2046
  %v2048 = vsel %vm1987, %v2022, 0.0
  %v2049 = vsel %vm1955, %v2048, -inf
  %2050 = vmax.xlane.f32.xlu0 %v2049
  %v2051 = vpop.xlane.xlu0 %2050
  %v2052 = vld [vmem:[%s49 + $0xd] sm:$0x1]
  %v2053 = vperm.slane %v2052, 0
  %v2054 = vmul.f32 %v2051, %v2053
  %v2055 = vadd.f32 %v2047, %v2054
  %v2056 = vsel %vm1976, %v1916, 0.0
  %v2057 = vsel %vm1976, %v1917, 0.0
  %v2058 = vsel %vm1976, %v1918, 0.0
  %v2059 = vsel %vm1976, %v1919, 0.0
  %v2060 = vsel %vm434, %v2056, -inf
  %2061 = vmax.xlane.f32.xlu0 %v2060
  %v2062 = vpop.xlane.xlu0 %2061
  %v2063 = vsel %vm434, %v2057, -inf
  %2064 = vmax.xlane.f32.xlu0 %v2063
  %v2065 = vpop.xlane.xlu0 %2064
  %v2066 = vsel %vm434, %v2058, -inf
  %2067 = vmax.xlane.f32.xlu0 %v2066
  %v2068 = vpop.xlane.xlu0 %2067
  %v2069 = vsel %vm434, %v2059, -inf
  %2070 = vmax.xlane.f32.xlu0 %v2069
  %v2071 = vpop.xlane.xlu0 %2070
  %v2076 = vperm.slane %v2062, %v371
  %v2077 = vperm.slane %v2065, %v371
  %v2078 = vperm.slane %v2068, %v371
  %v2079 = vperm.slane %v2071, %v371
  %v2080 = vsel %vm1947, %v2077, %v2076
  %v2081 = vsel %vm1949, %v2078, %v2080
  %v2082 = vsel %vm1951, %v2079, %v2081
  %v2084 = vsel %vm1922, %v2082, 0.0
  %v2085 = vsel %vm1955, %v2084, -inf
  %2086 = vmax.xlane.f32.xlu0 %v2085
  %v2087 = vpop.xlane.xlu0 %2086
  %v2088 = vld [vmem:[%s49 + $0x2] sm:$0x1]
  %v2089 = vperm.slane %v2088, 0
  %v2090 = vmul.f32 %v2087, %v2089
  %v2091 = vadd.f32 %v2055, %v2090
  %v2092 = vsel %vm1965, %v2082, 0.0
  %v2093 = vsel %vm1955, %v2092, -inf
  %2094 = vmax.xlane.f32.xlu0 %v2093
  %v2095 = vpop.xlane.xlu0 %2094
  %v2096 = vld [vmem:[%s49 + $0x6] sm:$0x1]
  %v2097 = vperm.slane %v2096, 0
  %v2098 = vmul.f32 %v2095, %v2097
  %v2099 = vadd.f32 %v2091, %v2098
  %v2100 = vsel %vm1976, %v2082, 0.0
  %v2101 = vsel %vm1955, %v2100, -inf
  %2102 = vmax.xlane.f32.xlu0 %v2101
  %v2103 = vpop.xlane.xlu0 %2102
  %v2104 = vld [vmem:[%s49 + $0xa] sm:$0x1]
  %v2105 = vperm.slane %v2104, 0
  %v2106 = vmul.f32 %v2103, %v2105
  %v2107 = vadd.f32 %v2099, %v2106
  %v2108 = vsel %vm1987, %v2082, 0.0
  %v2109 = vsel %vm1955, %v2108, -inf
  %2110 = vmax.xlane.f32.xlu0 %v2109
  %v2111 = vpop.xlane.xlu0 %2110
  %v2112 = vld [vmem:[%s49 + $0xe] sm:$0x1]
  %v2113 = vperm.slane %v2112, 0
  %v2114 = vmul.f32 %v2111, %v2113
  %v2115 = vadd.f32 %v2107, %v2114
  %v2116 = vsel %vm1987, %v1916, 0.0
  %v2117 = vsel %vm1987, %v1917, 0.0
  %v2118 = vsel %vm1987, %v1918, 0.0
  %v2119 = vsel %vm1987, %v1919, 0.0
  %v2120 = vsel %vm434, %v2116, -inf
  %2121 = vmax.xlane.f32.xlu0 %v2120
  %v2122 = vpop.xlane.xlu0 %2121
  %v2123 = vsel %vm434, %v2117, -inf
  %2124 = vmax.xlane.f32.xlu0 %v2123
  %v2125 = vpop.xlane.xlu0 %2124
  %v2126 = vsel %vm434, %v2118, -inf
  %2127 = vmax.xlane.f32.xlu0 %v2126
  %v2128 = vpop.xlane.xlu0 %2127
  %v2129 = vsel %vm434, %v2119, -inf
  %2130 = vmax.xlane.f32.xlu0 %v2129
  %v2131 = vpop.xlane.xlu0 %2130
  %v2136 = vperm.slane %v2122, %v371
  %v2137 = vperm.slane %v2125, %v371
  %v2138 = vperm.slane %v2128, %v371
  %v2139 = vperm.slane %v2131, %v371
  %v2140 = vsel %vm1947, %v2137, %v2136
  %v2141 = vsel %vm1949, %v2138, %v2140
  %v2142 = vsel %vm1951, %v2139, %v2141
  %v2144 = vsel %vm1922, %v2142, 0.0
  %v2145 = vsel %vm1955, %v2144, -inf
  %2146 = vmax.xlane.f32.xlu0 %v2145
  %v2147 = vpop.xlane.xlu0 %2146
  %v2148 = vld [vmem:[%s49 + $0x3] sm:$0x1]
  %v2149 = vperm.slane %v2148, 0
  %v2150 = vmul.f32 %v2147, %v2149
  %v2151 = vadd.f32 %v2115, %v2150
  %v2152 = vsel %vm1965, %v2142, 0.0
  %v2153 = vsel %vm1955, %v2152, -inf
  %2154 = vmax.xlane.f32.xlu0 %v2153
  %v2155 = vpop.xlane.xlu0 %2154
  %v2156 = vld [vmem:[%s49 + $0x7] sm:$0x1]
  %v2157 = vperm.slane %v2156, 0
  %v2158 = vmul.f32 %v2155, %v2157
  %v2159 = vadd.f32 %v2151, %v2158
  %v2160 = vsel %vm1976, %v2142, 0.0
  %v2161 = vsel %vm1955, %v2160, -inf
  %2162 = vmax.xlane.f32.xlu0 %v2161
  %v2163 = vpop.xlane.xlu0 %2162
  %v2164 = vld [vmem:[%s49 + $0xb] sm:$0x1]
  %v2165 = vperm.slane %v2164, 0
  %v2166 = vmul.f32 %v2163, %v2165
  %v2167 = vadd.f32 %v2159, %v2166
  %v2168 = vsel %vm1987, %v2142, 0.0
  %v2169 = vsel %vm1955, %v2168, -inf
  %2170 = vmax.xlane.f32.xlu0 %v2169
  %v2171 = vpop.xlane.xlu0 %2170
  %v2172 = vld [vmem:[%s49 + $0xf] sm:$0x1]
  %v2173 = vperm.slane %v2172, 0
  %v2174 = vmul.f32 %v2171, %v2173
  %v2175 = vadd.f32 %v2167, %v2174
  %v2176 = vld [vmem:[%s33] sm:$0xff]
  %v2177 = vld [vmem:[%s33 + $0x8] sm:$0xff]
  %v2178 = vld [vmem:[%s33 + $0x10] sm:$0xff]
  %v2179 = vld [vmem:[%s33 + $0x18] sm:$0xff]
  %v2181 = vsel %vm362, %v376, 0
  %v2184 = vsel %vm362, %v377, 0
  %2186 = vmatpush.msra.mxu0 0.0
  %2187 = vmatpush.msra.mxu0 0.0
  %2188 = vmatpush.msra.mxu0 0.0
  %2189 = vmatpush.msra.mxu0 0.0
  %2190 = vmatpush.msra.mxu0 0.0
  %2191 = vmatpush.msra.mxu0 0.0
  %2192 = vmatpush.msra.mxu0 0.0
  %2193 = vmatpush.msra.mxu0 0.0
  %2194 = vmatpush.msra.mxu0 0.0
  %2195 = vmatpush.msra.mxu0 0.0
  %2196 = vmatpush.msra.mxu0 0.0
  %2197 = vmatpush.msra.mxu0 0.0
  %2198 = vmatpush.msra.mxu0 %v2179
  %2199 = vmatpush.msra.mxu0 %v2178
  %2200 = vmatpush.msra.mxu0 %v2177
  %2201 = vmatpush.msra.mxu0 %v2176
  %2202 = vmatmul.f32.gmra.mxu0 %v2181
  %v2203 = vpop.f32.mrf.mxu0
  %v2204 = vadd.f32 0.0, %v2203
  %2205 = vmatmul.f32.gmra.mxu0 %v2184
  %v2206 = vpop.f32.mrf.mxu0
  %v2207 = vadd.f32 0.0, %v2206
  %2208 = vdwg.mxu0
  %v2209 = vld [vmem:[%s35] sm:$0x1]
  %v2211 = vperm.slane %v2209, 0
  %vm2213 = vcmask 80896
  %v2215 = vsel %vm2213, %v368, 0
  %v2218 = vsel %vm2213, %v369, 0
  %vm2220 = vcmask 1041408
  %v2222 = vsel %vm2220, %v2207, 0
  %2224 = vmatpush.msra.mxu0 0.0
  %2225 = vmatpush.msra.mxu0 0.0
  %2226 = vmatpush.msra.mxu0 0.0
  %2227 = vmatpush.msra.mxu0 0.0
  %2228 = vmatpush.msra.mxu0 0.0
  %2229 = vmatpush.msra.mxu0 0.0
  %2230 = vmatpush.msra.mxu0 0.0
  %2231 = vmatpush.msra.mxu0 0.0
  %2232 = vmatpush.msra.mxu0 0.0
  %2233 = vmatpush.msra.mxu0 0.0
  %2234 = vmatpush.msra.mxu0 0.0
  %2235 = vmatpush.msra.mxu0 0.0
  %2236 = vmatpush.msra.mxu0 0.0
  %2237 = vmatpush.msra.mxu0 0.0
  %2238 = vmatpush.msra.mxu0 %v2222
  %2239 = vmatpush.msra.mxu0 %v2204
  %2240 = vmatmul.f32.gmra.mxu0 %v2215
  %v2241 = vpop.f32.mrf.mxu0
  %v2242 = vadd.f32 %v2211, %v2241
  %2243 = vmatmul.f32.gmra.mxu0 %v2218
  %v2244 = vpop.f32.mrf.mxu0
  %v2245 = vadd.f32 %v2211, %v2244
  %2246 = vdwg.mxu0
  %v2247 = vld [vmem:[%s37] sm:$0xff]
  %v2248 = vld [vmem:[%s37 + $0x8] sm:$0xff]
  %v2249 = vld [vmem:[%s37 + $0x10] sm:$0xff]
  %v2250 = vld [vmem:[%s37 + $0x18] sm:$0xff]
  %v2251 = vld [vmem:[%s39] sm:$0x1]
  %v2253 = vperm.slane %v2251, 0
  %v2256 = vsel %vm362, %v2242, 0
  %v2259 = vsel %vm362, %v2245, 0
  %2261 = vmatpush.msra.mxu0 0.0
  %2262 = vmatpush.msra.mxu0 0.0
  %2263 = vmatpush.msra.mxu0 0.0
  %2264 = vmatpush.msra.mxu0 0.0
  %2265 = vmatpush.msra.mxu0 0.0
  %2266 = vmatpush.msra.mxu0 0.0
  %2267 = vmatpush.msra.mxu0 0.0
  %2268 = vmatpush.msra.mxu0 0.0
  %2269 = vmatpush.msra.mxu0 0.0
  %2270 = vmatpush.msra.mxu0 0.0
  %2271 = vmatpush.msra.mxu0 0.0
  %2272 = vmatpush.msra.mxu0 0.0
  %2273 = vmatpush.msra.mxu0 %v2250
  %2274 = vmatpush.msra.mxu0 %v2249
  %2275 = vmatpush.msra.mxu0 %v2248
  %2276 = vmatpush.msra.mxu0 %v2247
  %2277 = vmatmul.f32.gmra.mxu0 %v2256
  %v2278 = vpop.f32.mrf.mxu0
  %v2279 = vadd.f32 %v2253, %v2278
  %2280 = vmatmul.f32.gmra.mxu0 %v2259
  %v2281 = vpop.f32.mrf.mxu0
  %v2282 = vadd.f32 %v2253, %v2281
  %2283 = vdwg.mxu0
  %v2284 = vld [vmem:[%s41] sm:$0xff]
  %v2285 = vld [vmem:[%s41 + $0x8] sm:$0xff]
  %v2286 = vld [vmem:[%s41 + $0x10] sm:$0xff]
  %v2287 = vld [vmem:[%s41 + $0x18] sm:$0xff]
  %2290 = vrot.lane.b32.xlu0 %v2279, 96
  %v2291 = vpop.permute.xlu0 %2290
  %2292 = vrot.lane.b32.xlu0 %v2282, 96
  %v2293 = vpop.permute.xlu0 %2292
  %v2294 = vsel %vm434, %v2279, 0
  %v2296 = vsel %vm434, %v2291, 0
  %v2298 = vsel %vm434, %v2293, 0
  %2300 = vmatpush.xpose.msra.mxu0 0.0
  %2301 = vmatpush.xpose.msra.mxu0 0.0
  %2302 = vmatpush.xpose.msra.mxu0 0.0
  %2303 = vmatpush.xpose.msra.mxu0 0.0
  %2304 = vmatpush.xpose.msra.mxu0 0.0
  %2305 = vmatpush.xpose.msra.mxu0 0.0
  %2306 = vmatpush.xpose.msra.mxu0 0.0
  %2307 = vmatpush.xpose.msra.mxu0 0.0
  %2308 = vmatpush.xpose.msra.mxu0 0.0
  %2309 = vmatpush.xpose.msra.mxu0 0.0
  %2310 = vmatpush.xpose.msra.mxu0 0.0
  %2311 = vmatpush.xpose.msra.mxu0 0.0
  %2312 = vmatpush.xpose.msra.mxu0 0.0
  %2313 = vmatpush.xpose.msra.mxu0 0.0
  %2314 = vmatpush.xpose.msra.mxu0 %v2298
  %2315 = vmatpush.xpose.msra.mxu0 %v2296
  %2316 = vmatmul.f32.gmra.mxu0 %v2294
  %v2317 = vpop.f32.mrf.mxu0
  %v2318 = vadd.f32 0.0, %v2317
  %2319 = vdwg.mxu0
  %v2320 = vmul.f32 %v2318, 0.35355338
  %v2321 = vadd.f32 %v2320, %v367
  %vm2322 = vcmask 76800
  %v2323 = vsel %vm2322, %v2321, -inf
  %2324 = vmax.xlane.f32.xlu0 %v2323
  %v2325 = vpop.xlane.xlu0 %2324
  %v2326 = vsub.f32 %v2321, %v2325
  %v2327 = vmul.f32 %v2326, 1.442695
  %v2328 = vpow.pop %v2327
  %v2329 = vsel %vm2322, %v2328, 0.0
  %2330 = vadd.xlane.f32.xlu0 %v2329
  %v2331 = vpop.xlane.xlu0 %2330
  %v2332 = vrcp.pop %v2331
  %v2333 = vmul.f32 %v2331, %v2332
  %v2334 = vsub.f32 1.0, %v2333
  %v2335 = vmul.f32 %v2332, %v2334
  %v2336 = vadd.f32 %v2332, %v2335
  %vm2337 = vweird.f32 %v2331
  %vm2338 = vweird.f32 %v2332
  %vm2339 = vmor %vm2337, %vm2338
  %v2340 = vsel %vm2339, %v2332, %v2336
  %v2341 = vand.u32 2147483647, %v2331
  %vm2342 = vcmp.eq.f32.partialorder %v2341, 8.507059e+37
  %v2343 = vand.u32 %v2331, 2147483648
  %v2344 = vor.u32 1.1754944e-38, %v2343
  %v2345 = vsel %vm2342, %v2344, %v2340
  %v2346 = vmul.f32 %v2328, %v2345
  %2347 = vrot.lane.b32.xlu0 %v2279, 64
  %v2348 = vpop.permute.xlu0 %2347
  %2349 = vrot.lane.b32.xlu0 %v2282, 64
  %v2350 = vpop.permute.xlu0 %2349
  %v2353 = vsel %vm2213, %v2346, 0
  %v2355 = vsel %vm2220, %v2350, 0
  %2357 = vmatpush.msra.mxu0 0.0
  %2358 = vmatpush.msra.mxu0 0.0
  %2359 = vmatpush.msra.mxu0 0.0
  %2360 = vmatpush.msra.mxu0 0.0
  %2361 = vmatpush.msra.mxu0 0.0
  %2362 = vmatpush.msra.mxu0 0.0
  %2363 = vmatpush.msra.mxu0 0.0
  %2364 = vmatpush.msra.mxu0 0.0
  %2365 = vmatpush.msra.mxu0 0.0
  %2366 = vmatpush.msra.mxu0 0.0
  %2367 = vmatpush.msra.mxu0 0.0
  %2368 = vmatpush.msra.mxu0 0.0
  %2369 = vmatpush.msra.mxu0 0.0
  %2370 = vmatpush.msra.mxu0 0.0
  %2371 = vmatpush.msra.mxu0 %v2355
  %2372 = vmatpush.msra.mxu0 %v2348
  %2373 = vmatmul.f32.gmra.mxu0 %v2353
  %v2374 = vpop.f32.mrf.mxu0
  %v2375 = vadd.f32 0.0, %v2374
  %2376 = vdwg.mxu0
  %2377 = vrot.lane.b32.xlu0 %v2279, 120
  %v2378 = vpop.permute.xlu0 %2377
  %2379 = vrot.lane.b32.xlu0 %v2279, 88
  %v2380 = vpop.permute.xlu0 %2379
  %2381 = vrot.lane.b32.xlu0 %v2282, 88
  %v2382 = vpop.permute.xlu0 %2381
  %v2383 = vsel %vm434, %v2378, 0
  %v2385 = vsel %vm434, %v2380, 0
  %v2387 = vsel %vm434, %v2382, 0
  %2389 = vmatpush.xpose.msra.mxu0 0.0
  %2390 = vmatpush.xpose.msra.mxu0 0.0
  %2391 = vmatpush.xpose.msra.mxu0 0.0
  %2392 = vmatpush.xpose.msra.mxu0 0.0
  %2393 = vmatpush.xpose.msra.mxu0 0.0
  %2394 = vmatpush.xpose.msra.mxu0 0.0
  %2395 = vmatpush.xpose.msra.mxu0 0.0
  %2396 = vmatpush.xpose.msra.mxu0 0.0
  %2397 = vmatpush.xpose.msra.mxu0 0.0
  %2398 = vmatpush.xpose.msra.mxu0 0.0
  %2399 = vmatpush.xpose.msra.mxu0 0.0
  %2400 = vmatpush.xpose.msra.mxu0 0.0
  %2401 = vmatpush.xpose.msra.mxu0 0.0
  %2402 = vmatpush.xpose.msra.mxu0 0.0
  %2403 = vmatpush.xpose.msra.mxu0 %v2387
  %2404 = vmatpush.xpose.msra.mxu0 %v2385
  %2405 = vmatmul.f32.gmra.mxu0 %v2383
  %v2406 = vpop.f32.mrf.mxu0
  %v2407 = vadd.f32 0.0, %v2406
  %2408 = vdwg.mxu0
  %v2409 = vmul.f32 %v2407, 0.35355338
  %v2410 = vadd.f32 %v2409, %v367
  %v2411 = vsel %vm2322, %v2410, -inf
  %2412 = vmax.xlane.f32.xlu0 %v2411
  %v2413 = vpop.xlane.xlu0 %2412
  %v2414 = vsub.f32 %v2410, %v2413
  %v2415 = vmul.f32 %v2414, 1.442695
  %v2416 = vpow.pop %v2415
  %v2417 = vsel %vm2322, %v2416, 0.0
  %2418 = vadd.xlane.f32.xlu0 %v2417
  %v2419 = vpop.xlane.xlu0 %2418
  %v2420 = vrcp.pop %v2419
  %v2421 = vmul.f32 %v2419, %v2420
  %v2422 = vsub.f32 1.0, %v2421
  %v2423 = vmul.f32 %v2420, %v2422
  %v2424 = vadd.f32 %v2420, %v2423
  %vm2425 = vweird.f32 %v2419
  %vm2426 = vweird.f32 %v2420
  %vm2427 = vmor %vm2425, %vm2426
  %v2428 = vsel %vm2427, %v2420, %v2424
  %v2429 = vand.u32 2147483647, %v2419
  %vm2430 = vcmp.eq.f32.partialorder %v2429, 8.507059e+37
  %v2431 = vand.u32 %v2419, 2147483648
  %v2432 = vor.u32 1.1754944e-38, %v2431
  %v2433 = vsel %vm2430, %v2432, %v2428
  %v2434 = vmul.f32 %v2416, %v2433
  %2435 = vrot.lane.b32.xlu0 %v2279, 56
  %v2436 = vpop.permute.xlu0 %2435
  %2437 = vrot.lane.b32.xlu0 %v2282, 56
  %v2438 = vpop.permute.xlu0 %2437
  %v2441 = vsel %vm2213, %v2434, 0
  %v2443 = vsel %vm2220, %v2438, 0
  %2445 = vmatpush.msra.mxu0 0.0
  %2446 = vmatpush.msra.mxu0 0.0
  %2447 = vmatpush.msra.mxu0 0.0
  %2448 = vmatpush.msra.mxu0 0.0
  %2449 = vmatpush.msra.mxu0 0.0
  %2450 = vmatpush.msra.mxu0 0.0
  %2451 = vmatpush.msra.mxu0 0.0
  %2452 = vmatpush.msra.mxu0 0.0
  %2453 = vmatpush.msra.mxu0 0.0
  %2454 = vmatpush.msra.mxu0 0.0
  %2455 = vmatpush.msra.mxu0 0.0
  %2456 = vmatpush.msra.mxu0 0.0
  %2457 = vmatpush.msra.mxu0 0.0
  %2458 = vmatpush.msra.mxu0 0.0
  %2459 = vmatpush.msra.mxu0 %v2443
  %2460 = vmatpush.msra.mxu0 %v2436
  %2461 = vmatmul.f32.gmra.mxu0 %v2441
  %v2462 = vpop.f32.mrf.mxu0
  %v2463 = vadd.f32 0.0, %v2462
  %2464 = vdwg.mxu0
  %v2466 = vsel %vm434, %v2463, 0
  %2468 = vmatpush.msra.mxu0 0.0
  %2469 = vmatpush.msra.mxu0 0.0
  %2470 = vmatpush.msra.mxu0 0.0
  %2471 = vmatpush.msra.mxu0 0.0
  %2472 = vmatpush.msra.mxu0 0.0
  %2473 = vmatpush.msra.mxu0 0.0
  %2474 = vmatpush.msra.mxu0 0.0
  %2475 = vmatpush.msra.mxu0 0.0
  %2476 = vmatpush.msra.mxu0 0.0
  %2477 = vmatpush.msra.mxu0 0.0
  %2478 = vmatpush.msra.mxu0 0.0
  %2479 = vmatpush.msra.mxu0 0.0
  %2480 = vmatpush.msra.mxu0 0.0
  %2481 = vmatpush.msra.mxu0 0.0
  %2482 = vmatpush.msra.mxu0 0.0
  %2483 = vmatpush.msra.mxu0 %v2285
  %2484 = vmatmul.f32.gmra.mxu0 %v2466
  %v2485 = vpop.f32.mrf.mxu0
  %v2486 = vadd.f32 0.0, %v2485
  %2487 = vdwg.mxu0
  %v2489 = vsel %vm434, %v2375, 0
  %2491 = vmatpush.msra.mxu0 0.0
  %2492 = vmatpush.msra.mxu0 0.0
  %2493 = vmatpush.msra.mxu0 0.0
  %2494 = vmatpush.msra.mxu0 0.0
  %2495 = vmatpush.msra.mxu0 0.0
  %2496 = vmatpush.msra.mxu0 0.0
  %2497 = vmatpush.msra.mxu0 0.0
  %2498 = vmatpush.msra.mxu0 0.0
  %2499 = vmatpush.msra.mxu0 0.0
  %2500 = vmatpush.msra.mxu0 0.0
  %2501 = vmatpush.msra.mxu0 0.0
  %2502 = vmatpush.msra.mxu0 0.0
  %2503 = vmatpush.msra.mxu0 0.0
  %2504 = vmatpush.msra.mxu0 0.0
  %2505 = vmatpush.msra.mxu0 0.0
  %2506 = vmatpush.msra.mxu0 %v2284
  %2507 = vmatmul.f32.gmra.mxu0 %v2489
  %v2508 = vpop.f32.mrf.mxu0
  %v2509 = vadd.f32 %v2486, %v2508
  %2510 = vdwg.mxu0
  %2511 = vrot.lane.b32.xlu0 %v2279, 112
  %v2512 = vpop.permute.xlu0 %2511
  %2513 = vrot.lane.b32.xlu0 %v2279, 80
  %v2514 = vpop.permute.xlu0 %2513
  %2515 = vrot.lane.b32.xlu0 %v2282, 80
  %v2516 = vpop.permute.xlu0 %2515
  %v2517 = vsel %vm434, %v2512, 0
  %v2519 = vsel %vm434, %v2514, 0
  %v2521 = vsel %vm434, %v2516, 0
  %2523 = vmatpush.xpose.msra.mxu0 0.0
  %2524 = vmatpush.xpose.msra.mxu0 0.0
  %2525 = vmatpush.xpose.msra.mxu0 0.0
  %2526 = vmatpush.xpose.msra.mxu0 0.0
  %2527 = vmatpush.xpose.msra.mxu0 0.0
  %2528 = vmatpush.xpose.msra.mxu0 0.0
  %2529 = vmatpush.xpose.msra.mxu0 0.0
  %2530 = vmatpush.xpose.msra.mxu0 0.0
  %2531 = vmatpush.xpose.msra.mxu0 0.0
  %2532 = vmatpush.xpose.msra.mxu0 0.0
  %2533 = vmatpush.xpose.msra.mxu0 0.0
  %2534 = vmatpush.xpose.msra.mxu0 0.0
  %2535 = vmatpush.xpose.msra.mxu0 0.0
  %2536 = vmatpush.xpose.msra.mxu0 0.0
  %2537 = vmatpush.xpose.msra.mxu0 %v2521
  %2538 = vmatpush.xpose.msra.mxu0 %v2519
  %2539 = vmatmul.f32.gmra.mxu0 %v2517
  %v2540 = vpop.f32.mrf.mxu0
  %v2541 = vadd.f32 0.0, %v2540
  %2542 = vdwg.mxu0
  %v2543 = vmul.f32 %v2541, 0.35355338
  %v2544 = vadd.f32 %v2543, %v367
  %v2545 = vsel %vm2322, %v2544, -inf
  %2546 = vmax.xlane.f32.xlu0 %v2545
  %v2547 = vpop.xlane.xlu0 %2546
  %v2548 = vsub.f32 %v2544, %v2547
  %v2549 = vmul.f32 %v2548, 1.442695
  %v2550 = vpow.pop %v2549
  %v2551 = vsel %vm2322, %v2550, 0.0
  %2552 = vadd.xlane.f32.xlu0 %v2551
  %v2553 = vpop.xlane.xlu0 %2552
  %v2554 = vrcp.pop %v2553
  %v2555 = vmul.f32 %v2553, %v2554
  %v2556 = vsub.f32 1.0, %v2555
  %v2557 = vmul.f32 %v2554, %v2556
  %v2558 = vadd.f32 %v2554, %v2557
  %vm2559 = vweird.f32 %v2553
  %vm2560 = vweird.f32 %v2554
  %vm2561 = vmor %vm2559, %vm2560
  %v2562 = vsel %vm2561, %v2554, %v2558
  %v2563 = vand.u32 2147483647, %v2553
  %vm2564 = vcmp.eq.f32.partialorder %v2563, 8.507059e+37
  %v2565 = vand.u32 %v2553, 2147483648
  %v2566 = vor.u32 1.1754944e-38, %v2565
  %v2567 = vsel %vm2564, %v2566, %v2562
  %v2568 = vmul.f32 %v2550, %v2567
  %2569 = vrot.lane.b32.xlu0 %v2279, 48
  %v2570 = vpop.permute.xlu0 %2569
  %2571 = vrot.lane.b32.xlu0 %v2282, 48
  %v2572 = vpop.permute.xlu0 %2571
  %v2575 = vsel %vm2213, %v2568, 0
  %v2577 = vsel %vm2220, %v2572, 0
  %2579 = vmatpush.msra.mxu0 0.0
  %2580 = vmatpush.msra.mxu0 0.0
  %2581 = vmatpush.msra.mxu0 0.0
  %2582 = vmatpush.msra.mxu0 0.0
  %2583 = vmatpush.msra.mxu0 0.0
  %2584 = vmatpush.msra.mxu0 0.0
  %2585 = vmatpush.msra.mxu0 0.0
  %2586 = vmatpush.msra.mxu0 0.0
  %2587 = vmatpush.msra.mxu0 0.0
  %2588 = vmatpush.msra.mxu0 0.0
  %2589 = vmatpush.msra.mxu0 0.0
  %2590 = vmatpush.msra.mxu0 0.0
  %2591 = vmatpush.msra.mxu0 0.0
  %2592 = vmatpush.msra.mxu0 0.0
  %2593 = vmatpush.msra.mxu0 %v2577
  %2594 = vmatpush.msra.mxu0 %v2570
  %2595 = vmatmul.f32.gmra.mxu0 %v2575
  %v2596 = vpop.f32.mrf.mxu0
  %v2597 = vadd.f32 0.0, %v2596
  %2598 = vdwg.mxu0
  %v2600 = vsel %vm434, %v2597, 0
  %2602 = vmatpush.msra.mxu0 0.0
  %2603 = vmatpush.msra.mxu0 0.0
  %2604 = vmatpush.msra.mxu0 0.0
  %2605 = vmatpush.msra.mxu0 0.0
  %2606 = vmatpush.msra.mxu0 0.0
  %2607 = vmatpush.msra.mxu0 0.0
  %2608 = vmatpush.msra.mxu0 0.0
  %2609 = vmatpush.msra.mxu0 0.0
  %2610 = vmatpush.msra.mxu0 0.0
  %2611 = vmatpush.msra.mxu0 0.0
  %2612 = vmatpush.msra.mxu0 0.0
  %2613 = vmatpush.msra.mxu0 0.0
  %2614 = vmatpush.msra.mxu0 0.0
  %2615 = vmatpush.msra.mxu0 0.0
  %2616 = vmatpush.msra.mxu0 0.0
  %2617 = vmatpush.msra.mxu0 %v2286
  %2618 = vmatmul.f32.gmra.mxu0 %v2600
  %v2619 = vpop.f32.mrf.mxu0
  %v2620 = vadd.f32 0.0, %v2619
  %2621 = vdwg.mxu0
  %v2622 = vadd.f32 %v2509, %v2620
  %2623 = vrot.lane.b32.xlu0 %v2279, 104
  %v2624 = vpop.permute.xlu0 %2623
  %2625 = vrot.lane.b32.xlu0 %v2279, 72
  %v2626 = vpop.permute.xlu0 %2625
  %2627 = vrot.lane.b32.xlu0 %v2282, 72
  %v2628 = vpop.permute.xlu0 %2627
  %v2629 = vsel %vm434, %v2624, 0
  %v2631 = vsel %vm434, %v2626, 0
  %v2633 = vsel %vm434, %v2628, 0
  %2635 = vmatpush.xpose.msra.mxu0 0.0
  %2636 = vmatpush.xpose.msra.mxu0 0.0
  %2637 = vmatpush.xpose.msra.mxu0 0.0
  %2638 = vmatpush.xpose.msra.mxu0 0.0
  %2639 = vmatpush.xpose.msra.mxu0 0.0
  %2640 = vmatpush.xpose.msra.mxu0 0.0
  %2641 = vmatpush.xpose.msra.mxu0 0.0
  %2642 = vmatpush.xpose.msra.mxu0 0.0
  %2643 = vmatpush.xpose.msra.mxu0 0.0
  %2644 = vmatpush.xpose.msra.mxu0 0.0
  %2645 = vmatpush.xpose.msra.mxu0 0.0
  %2646 = vmatpush.xpose.msra.mxu0 0.0
  %2647 = vmatpush.xpose.msra.mxu0 0.0
  %2648 = vmatpush.xpose.msra.mxu0 0.0
  %2649 = vmatpush.xpose.msra.mxu0 %v2633
  %2650 = vmatpush.xpose.msra.mxu0 %v2631
  %2651 = vmatmul.f32.gmra.mxu0 %v2629
  %v2652 = vpop.f32.mrf.mxu0
  %v2653 = vadd.f32 0.0, %v2652
  %2654 = vdwg.mxu0
  %v2655 = vmul.f32 %v2653, 0.35355338
  %v2656 = vadd.f32 %v2655, %v367
  %v2657 = vsel %vm2322, %v2656, -inf
  %2658 = vmax.xlane.f32.xlu0 %v2657
  %v2659 = vpop.xlane.xlu0 %2658
  %v2660 = vsub.f32 %v2656, %v2659
  %v2661 = vmul.f32 %v2660, 1.442695
  %v2662 = vpow.pop %v2661
  %v2663 = vsel %vm2322, %v2662, 0.0
  %2664 = vadd.xlane.f32.xlu0 %v2663
  %v2665 = vpop.xlane.xlu0 %2664
  %v2666 = vrcp.pop %v2665
  %v2667 = vmul.f32 %v2665, %v2666
  %v2668 = vsub.f32 1.0, %v2667
  %v2669 = vmul.f32 %v2666, %v2668
  %v2670 = vadd.f32 %v2666, %v2669
  %vm2671 = vweird.f32 %v2665
  %vm2672 = vweird.f32 %v2666
  %vm2673 = vmor %vm2671, %vm2672
  %v2674 = vsel %vm2673, %v2666, %v2670
  %v2675 = vand.u32 2147483647, %v2665
  %vm2676 = vcmp.eq.f32.partialorder %v2675, 8.507059e+37
  %v2677 = vand.u32 %v2665, 2147483648
  %v2678 = vor.u32 1.1754944e-38, %v2677
  %v2679 = vsel %vm2676, %v2678, %v2674
  %v2680 = vmul.f32 %v2662, %v2679
  %2681 = vrot.lane.b32.xlu0 %v2279, 40
  %v2682 = vpop.permute.xlu0 %2681
  %2683 = vrot.lane.b32.xlu0 %v2282, 40
  %v2684 = vpop.permute.xlu0 %2683
  %v2687 = vsel %vm2213, %v2680, 0
  %v2689 = vsel %vm2220, %v2684, 0
  %2691 = vmatpush.msra.mxu0 0.0
  %2692 = vmatpush.msra.mxu0 0.0
  %2693 = vmatpush.msra.mxu0 0.0
  %2694 = vmatpush.msra.mxu0 0.0
  %2695 = vmatpush.msra.mxu0 0.0
  %2696 = vmatpush.msra.mxu0 0.0
  %2697 = vmatpush.msra.mxu0 0.0
  %2698 = vmatpush.msra.mxu0 0.0
  %2699 = vmatpush.msra.mxu0 0.0
  %2700 = vmatpush.msra.mxu0 0.0
  %2701 = vmatpush.msra.mxu0 0.0
  %2702 = vmatpush.msra.mxu0 0.0
  %2703 = vmatpush.msra.mxu0 0.0
  %2704 = vmatpush.msra.mxu0 0.0
  %2705 = vmatpush.msra.mxu0 %v2689
  %2706 = vmatpush.msra.mxu0 %v2682
  %2707 = vmatmul.f32.gmra.mxu0 %v2687
  %v2708 = vpop.f32.mrf.mxu0
  %v2709 = vadd.f32 0.0, %v2708
  %2710 = vdwg.mxu0
  %v2712 = vsel %vm434, %v2709, 0
  %2714 = vmatpush.msra.mxu0 0.0
  %2715 = vmatpush.msra.mxu0 0.0
  %2716 = vmatpush.msra.mxu0 0.0
  %2717 = vmatpush.msra.mxu0 0.0
  %2718 = vmatpush.msra.mxu0 0.0
  %2719 = vmatpush.msra.mxu0 0.0
  %2720 = vmatpush.msra.mxu0 0.0
  %2721 = vmatpush.msra.mxu0 0.0
  %2722 = vmatpush.msra.mxu0 0.0
  %2723 = vmatpush.msra.mxu0 0.0
  %2724 = vmatpush.msra.mxu0 0.0
  %2725 = vmatpush.msra.mxu0 0.0
  %2726 = vmatpush.msra.mxu0 0.0
  %2727 = vmatpush.msra.mxu0 0.0
  %2728 = vmatpush.msra.mxu0 0.0
  %2729 = vmatpush.msra.mxu0 %v2287
  %2730 = vmatmul.f32.gmra.mxu0 %v2712
  %v2731 = vpop.f32.mrf.mxu0
  %v2732 = vadd.f32 0.0, %v2731
  %2733 = vdwg.mxu0
  %v2734 = vadd.f32 %v2622, %v2732
  %v2735 = vld [vmem:[%s43] sm:$0x1]
  %v2737 = vperm.slane %v2735, 0
  %v2739 = vadd.f32 %v2734, %v2737
  %2740 = vst.msk [vmem:[#allocation2] sm:$0xff] %vm362, %v1912
  %2741 = vst.msk [vmem:[#allocation2 + $0x8] sm:$0xff] %vm362, %v1913
  %2742 = vst.msk [vmem:[#allocation2 + $0x10] sm:$0xff] %vm362, %v1914
  %2743 = vst.msk [vmem:[#allocation2 + $0x18] sm:$0xff] %vm362, %v1915
  %v2744 = vld [vmem:[#allocation2] sm:$0x1]
  %v2745 = vld [vmem:[#allocation2 + $0x8] sm:$0x1]
  %v2746 = vld [vmem:[#allocation2 + $0x10] sm:$0x1]
  %v2747 = vld [vmem:[#allocation2 + $0x18] sm:$0x1]
  %v2748 = vld [vmem:[%s45] sm:$0xff]
  %v2749 = vld [vmem:[%s45 + $0x8] sm:$0xff]
  %v2750 = vld [vmem:[%s45 + $0x10] sm:$0xff]
  %v2751 = vld [vmem:[%s45 + $0x18] sm:$0xff]
  %v2756 = vrot.slane %v2745, 7
  %v2757 = vsel %vm1947, %v2756, %v2744
  %v2758 = vrot.slane %v2746, 6
  %v2759 = vsel %vm1949, %v2758, %v2757
  %v2760 = vrot.slane %v2747, 5
  %v2761 = vsel %vm1951, %v2760, %v2759
  %v2762 = vsel %vm362, %v2761, 0
  %2764 = vmatpush.msra.mxu0 0.0
  %2765 = vmatpush.msra.mxu0 0.0
  %2766 = vmatpush.msra.mxu0 0.0
  %2767 = vmatpush.msra.mxu0 0.0
  %2768 = vmatpush.msra.mxu0 0.0
  %2769 = vmatpush.msra.mxu0 0.0
  %2770 = vmatpush.msra.mxu0 0.0
  %2771 = vmatpush.msra.mxu0 0.0
  %2772 = vmatpush.msra.mxu0 0.0
  %2773 = vmatpush.msra.mxu0 0.0
  %2774 = vmatpush.msra.mxu0 0.0
  %2775 = vmatpush.msra.mxu0 0.0
  %2776 = vmatpush.msra.mxu0 %v2751
  %2777 = vmatpush.msra.mxu0 %v2750
  %2778 = vmatpush.msra.mxu0 %v2749
  %2779 = vmatpush.msra.mxu0 %v2748
  %2780 = vmatmul.f32.gmra.mxu0 %v2762
  %v2781 = vpop.f32.mrf.mxu0
  %v2782 = vadd.f32 0.0, %v2781
  %2783 = vdwg.mxu0
  %v2784 = vld [vmem:[%s47] sm:$0xff]
  %v2785 = vld [vmem:[%s47 + $0x8] sm:$0xff]
  %v2786 = vld [vmem:[%s47 + $0x10] sm:$0xff]
  %v2787 = vld [vmem:[%s47 + $0x18] sm:$0xff]
  %v2789 = vsel %vm362, %v2739, 0
  %2791 = vmatpush.msra.mxu0 0.0
  %2792 = vmatpush.msra.mxu0 0.0
  %2793 = vmatpush.msra.mxu0 0.0
  %2794 = vmatpush.msra.mxu0 0.0
  %2795 = vmatpush.msra.mxu0 0.0
  %2796 = vmatpush.msra.mxu0 0.0
  %2797 = vmatpush.msra.mxu0 0.0
  %2798 = vmatpush.msra.mxu0 0.0
  %2799 = vmatpush.msra.mxu0 0.0
  %2800 = vmatpush.msra.mxu0 0.0
  %2801 = vmatpush.msra.mxu0 0.0
  %2802 = vmatpush.msra.mxu0 0.0
  %2803 = vmatpush.msra.mxu0 %v2787
  %2804 = vmatpush.msra.mxu0 %v2786
  %2805 = vmatpush.msra.mxu0 %v2785
  %2806 = vmatpush.msra.mxu0 %v2784
  %2807 = vmatmul.f32.gmra.mxu0 %v2789
  %v2808 = vpop.f32.mrf.mxu0
  %v2809 = vadd.f32 0.0, %v2808
  %2810 = vdwg.mxu0
  %v2812 = vrot.slane %v2782, 1
  %v2813 = vrot.slane %v2782, 2
  %v2814 = vrot.slane %v2782, 3
  %v2819 = vmul.f32 %v2744, %v2782
  %v2820 = vmul.f32 %v2745, %v2812
  %v2821 = vmul.f32 %v2746, %v2813
  %v2822 = vmul.f32 %v2747, %v2814
  %v2827 = vrot.slane %v2820, 7
  %v2828 = vsel %vm1947, %v2827, %v2819
  %v2829 = vrot.slane %v2821, 6
  %v2830 = vsel %vm1949, %v2829, %v2828
  %v2831 = vrot.slane %v2822, 5
  %v2832 = vsel %vm1951, %v2831, %v2830
  %vm2834 = vcmask 257024
  %v2835 = vsel %vm2834, %v2832, 0.0
  %2836 = vadd.xlane.f32.xlu0 %v2835
  %v2837 = vpop.xlane.xlu0 %2836
  %v2839 = vrot.slane %v2809, 1
  %v2840 = vrot.slane %v2809, 2
  %v2841 = vrot.slane %v2809, 3
  %v2846 = vmul.f32 %v2744, %v2809
  %v2847 = vmul.f32 %v2745, %v2839
  %v2848 = vmul.f32 %v2746, %v2840
  %v2849 = vmul.f32 %v2747, %v2841
  %v2854 = vrot.slane %v2847, 7
  %v2855 = vsel %vm1947, %v2854, %v2846
  %v2856 = vrot.slane %v2848, 6
  %v2857 = vsel %vm1949, %v2856, %v2855
  %v2858 = vrot.slane %v2849, 5
  %v2859 = vsel %vm1951, %v2858, %v2857
  %v2861 = vsel %vm2834, %v2859, 0.0
  %2862 = vadd.xlane.f32.xlu0 %v2861
  %v2863 = vpop.xlane.xlu0 %2862
  %v2864 = vmul.f32 %v2739, %v2782
  %v2865 = vsel %vm2834, %v2864, 0.0
  %2866 = vadd.xlane.f32.xlu0 %v2865
  %v2867 = vpop.xlane.xlu0 %2866
  %v2868 = vmul.f32 %v2739, %v2809
  %v2869 = vsel %vm2834, %v2868, 0.0
  %2870 = vadd.xlane.f32.xlu0 %v2869
  %v2871 = vpop.xlane.xlu0 %2870
  %v2872 = vmax.f32 %v2837, %v2863
  %v2873 = vsub.f32 %v2837, %v2872
  %v2874 = vmul.f32 %v2873, 1.442695
  %v2875 = vpow.pop %v2874
  %v2876 = vsub.f32 %v2863, %v2872
  %v2877 = vmul.f32 %v2876, 1.442695
  %v2878 = vpow.pop %v2877
  %v2879 = vadd.f32 %v2875, %v2878
  %v2880 = vmax.f32 %v2867, %v2871
  %v2881 = vsub.f32 %v2867, %v2880
  %v2882 = vmul.f32 %v2881, 1.442695
  %v2883 = vpow.pop %v2882
  %v2884 = vsub.f32 %v2871, %v2880
  %v2885 = vmul.f32 %v2884, 1.442695
  %v2886 = vpow.pop %v2885
  %v2887 = vadd.f32 %v2883, %v2886
  %v2888 = vrcp.pop %v2879
  %v2889 = vmul.f32 %v2879, %v2888
  %v2890 = vsub.f32 1.0, %v2889
  %v2891 = vmul.f32 %v2888, %v2890
  %v2892 = vadd.f32 %v2888, %v2891
  %vm2893 = vweird.f32 %v2879
  %vm2894 = vweird.f32 %v2888
  %vm2895 = vmor %vm2893, %vm2894
  %v2896 = vsel %vm2895, %v2888, %v2892
  %v2897 = vand.u32 2147483647, %v2879
  %vm2898 = vcmp.eq.f32.partialorder %v2897, 8.507059e+37
  %v2899 = vand.u32 %v2879, 2147483648
  %v2900 = vor.u32 1.1754944e-38, %v2899
  %v2901 = vsel %vm2898, %v2900, %v2896
  %v2902 = vmul.f32 %v2875, %v2901
  %v2904 = vmul.f32 %v2902, %v2761
  %v2905 = vmul.f32 %v2878, %v2901
  %v2906 = vmul.f32 %v2905, %v2739
  %v2907 = vadd.f32 %v2904, %v2906
  %v2908 = vrcp.pop %v2887
  %v2909 = vmul.f32 %v2887, %v2908
  %v2910 = vsub.f32 1.0, %v2909
  %v2911 = vmul.f32 %v2908, %v2910
  %v2912 = vadd.f32 %v2908, %v2911
  %vm2913 = vweird.f32 %v2887
  %vm2914 = vweird.f32 %v2908
  %vm2915 = vmor %vm2913, %vm2914
  %v2916 = vsel %vm2915, %v2908, %v2912
  %v2917 = vand.u32 2147483647, %v2887
  %vm2918 = vcmp.eq.f32.partialorder %v2917, 8.507059e+37
  %v2919 = vand.u32 %v2887, 2147483648
  %v2920 = vor.u32 1.1754944e-38, %v2919
  %v2921 = vsel %vm2918, %v2920, %v2916
  %v2922 = vmul.f32 %v2883, %v2921
  %v2923 = vmul.f32 %v2922, %v2907
  %v2924 = vmul.f32 %v2886, %v2921
  %v2925 = vmul.f32 %v2924, %v2739
  %v2926 = vadd.f32 %v2923, %v2925
  %v2928 = vrot.slane %v2907, 1
  %v2929 = vrot.slane %v2907, 2
  %v2930 = vrot.slane %v2907, 3
  %2934 = vst.msk [vmem:[#allocation2] sm:$0x1] %vm264, %v2907
  %2935 = vst.msk [vmem:[#allocation2 + $0x8] sm:$0x1] %vm264, %v2928
  %2936 = vst.msk [vmem:[#allocation2 + $0x10] sm:$0x1] %vm264, %v2929
  %2937 = vst.msk [vmem:[#allocation2 + $0x18] sm:$0x1] %vm264, %v2930
  %2938 = vst.msk [vmem:[#allocation3] sm:$0xff] %vm362, %v2242
  %2939 = vst.msk [vmem:[#allocation3 + $0x8] sm:$0x3] %vm364, %v2245
  %2940 = vst.msk [vmem:[#allocation3] sm:$0xf] %vm2834, %v2926
  %v2941 = vld [vmem:[#allocation2] sm:$0xff]
  %v2942 = vld [vmem:[#allocation2 + $0x8] sm:$0xff]
  %v2943 = vld [vmem:[#allocation2 + $0x10] sm:$0xff]
  %v2944 = vld [vmem:[#allocation2 + $0x18] sm:$0xff]
  %v2945 = vld [vmem:[#allocation3] sm:$0xff]
  %v2946 = vld [vmem:[#allocation3 + $0x8] sm:$0x3]
  %s2947 = scalar_lea.vmem %s25, 32
  %v2948 = vld [vmem:[%s2947] sm:$0xff]
  %v2949 = vld [vmem:[%s2947 + $0x8] sm:$0xff]
  %v2950 = vld [vmem:[%s2947 + $0x10] sm:$0xff]
  %v2951 = vld [vmem:[%s2947 + $0x18] sm:$0xff]
  %s2952 = scalar_lea.vmem %s27, 1
  %v2953 = vld [vmem:[%s2952] sm:$0x1]
  %v2955 = vperm.slane %v2953, 0
  %v2958 = vsel %vm362, %v2941, 0
  %v2961 = vsel %vm362, %v2942, 0
  %v2964 = vsel %vm362, %v2943, 0
  %v2967 = vsel %vm362, %v2944, 0
  %2969 = vmatpush.msra.mxu0 0.0
  %2970 = vmatpush.msra.mxu0 0.0
  %2971 = vmatpush.msra.mxu0 0.0
  %2972 = vmatpush.msra.mxu0 0.0
  %2973 = vmatpush.msra.mxu0 0.0
  %2974 = vmatpush.msra.mxu0 0.0
  %2975 = vmatpush.msra.mxu0 0.0
  %2976 = vmatpush.msra.mxu0 0.0
  %2977 = vmatpush.msra.mxu0 0.0
  %2978 = vmatpush.msra.mxu0 0.0
  %2979 = vmatpush.msra.mxu0 0.0
  %2980 = vmatpush.msra.mxu0 0.0
  %2981 = vmatpush.msra.mxu0 %v2951
  %2982 = vmatpush.msra.mxu0 %v2950
  %2983 = vmatpush.msra.mxu0 %v2949
  %2984 = vmatpush.msra.mxu0 %v2948
  %2985 = vmatmul.f32.gmra.mxu0 %v2958
  %v2986 = vpop.f32.mrf.mxu0
  %v2987 = vadd.f32 %v2955, %v2986
  %2988 = vmatmul.f32.gmra.mxu0 %v2961
  %v2989 = vpop.f32.mrf.mxu0
  %v2990 = vadd.f32 %v2955, %v2989
  %2991 = vmatmul.f32.gmra.mxu0 %v2964
  %v2992 = vpop.f32.mrf.mxu0
  %v2993 = vadd.f32 %v2955, %v2992
  %2994 = vmatmul.f32.gmra.mxu0 %v2967
  %v2995 = vpop.f32.mrf.mxu0
  %v2996 = vadd.f32 %v2955, %v2995
  %2997 = vdwg.mxu0
  %s2998 = scalar_lea.vmem %s29, 32
  %v2999 = vld [vmem:[%s2998] sm:$0xff]
  %v3000 = vld [vmem:[%s2998 + $0x8] sm:$0xff]
  %v3001 = vld [vmem:[%s2998 + $0x10] sm:$0xff]
  %v3002 = vld [vmem:[%s2998 + $0x18] sm:$0xff]
  %3004 = vrot.lane.b32.xlu0 %v2987, 96
  %v3005 = vpop.permute.xlu0 %3004
  %v3006 = vsel %vm434, %v2987, 0
  %v3008 = vsel %vm434, %v3005, 0
  %3010 = vmatpush.xpose.msra.mxu0 0.0
  %3011 = vmatpush.xpose.msra.mxu0 0.0
  %3012 = vmatpush.xpose.msra.mxu0 0.0
  %3013 = vmatpush.xpose.msra.mxu0 0.0
  %3014 = vmatpush.xpose.msra.mxu0 0.0
  %3015 = vmatpush.xpose.msra.mxu0 0.0
  %3016 = vmatpush.xpose.msra.mxu0 0.0
  %3017 = vmatpush.xpose.msra.mxu0 0.0
  %3018 = vmatpush.xpose.msra.mxu0 0.0
  %3019 = vmatpush.xpose.msra.mxu0 0.0
  %3020 = vmatpush.xpose.msra.mxu0 0.0
  %3021 = vmatpush.xpose.msra.mxu0 0.0
  %3022 = vmatpush.xpose.msra.mxu0 0.0
  %3023 = vmatpush.xpose.msra.mxu0 0.0
  %3024 = vmatpush.xpose.msra.mxu0 0.0
  %3025 = vmatpush.xpose.msra.mxu0 %v3008
  %3026 = vmatmul.f32.gmra.mxu0 %v3006
  %v3027 = vpop.f32.mrf.mxu0
  %v3028 = vadd.f32 0.0, %v3027
  %3029 = vdwg.mxu0
  %3031 = vrot.lane.b32.xlu0 %v2990, 96
  %v3032 = vpop.permute.xlu0 %3031
  %v3033 = vsel %vm434, %v2990, 0
  %v3035 = vsel %vm434, %v3032, 0
  %3037 = vmatpush.xpose.msra.mxu0 0.0
  %3038 = vmatpush.xpose.msra.mxu0 0.0
  %3039 = vmatpush.xpose.msra.mxu0 0.0
  %3040 = vmatpush.xpose.msra.mxu0 0.0
  %3041 = vmatpush.xpose.msra.mxu0 0.0
  %3042 = vmatpush.xpose.msra.mxu0 0.0
  %3043 = vmatpush.xpose.msra.mxu0 0.0
  %3044 = vmatpush.xpose.msra.mxu0 0.0
  %3045 = vmatpush.xpose.msra.mxu0 0.0
  %3046 = vmatpush.xpose.msra.mxu0 0.0
  %3047 = vmatpush.xpose.msra.mxu0 0.0
  %3048 = vmatpush.xpose.msra.mxu0 0.0
  %3049 = vmatpush.xpose.msra.mxu0 0.0
  %3050 = vmatpush.xpose.msra.mxu0 0.0
  %3051 = vmatpush.xpose.msra.mxu0 0.0
  %3052 = vmatpush.xpose.msra.mxu0 %v3035
  %3053 = vmatmul.f32.gmra.mxu0 %v3033
  %v3054 = vpop.f32.mrf.mxu0
  %v3055 = vadd.f32 0.0, %v3054
  %3056 = vdwg.mxu0
  %3058 = vrot.lane.b32.xlu0 %v2993, 96
  %v3059 = vpop.permute.xlu0 %3058
  %v3060 = vsel %vm434, %v2993, 0
  %v3062 = vsel %vm434, %v3059, 0
  %3064 = vmatpush.xpose.msra.mxu0 0.0
  %3065 = vmatpush.xpose.msra.mxu0 0.0
  %3066 = vmatpush.xpose.msra.mxu0 0.0
  %3067 = vmatpush.xpose.msra.mxu0 0.0
  %3068 = vmatpush.xpose.msra.mxu0 0.0
  %3069 = vmatpush.xpose.msra.mxu0 0.0
  %3070 = vmatpush.xpose.msra.mxu0 0.0
  %3071 = vmatpush.xpose.msra.mxu0 0.0
  %3072 = vmatpush.xpose.msra.mxu0 0.0
  %3073 = vmatpush.xpose.msra.mxu0 0.0
  %3074 = vmatpush.xpose.msra.mxu0 0.0
  %3075 = vmatpush.xpose.msra.mxu0 0.0
  %3076 = vmatpush.xpose.msra.mxu0 0.0
  %3077 = vmatpush.xpose.msra.mxu0 0.0
  %3078 = vmatpush.xpose.msra.mxu0 0.0
  %3079 = vmatpush.xpose.msra.mxu0 %v3062
  %3080 = vmatmul.f32.gmra.mxu0 %v3060
  %v3081 = vpop.f32.mrf.mxu0
  %v3082 = vadd.f32 0.0, %v3081
  %3083 = vdwg.mxu0
  %3085 = vrot.lane.b32.xlu0 %v2996, 96
  %v3086 = vpop.permute.xlu0 %3085
  %v3087 = vsel %vm434, %v2996, 0
  %v3089 = vsel %vm434, %v3086, 0
  %3091 = vmatpush.xpose.msra.mxu0 0.0
  %3092 = vmatpush.xpose.msra.mxu0 0.0
  %3093 = vmatpush.xpose.msra.mxu0 0.0
  %3094 = vmatpush.xpose.msra.mxu0 0.0
  %3095 = vmatpush.xpose.msra.mxu0 0.0
  %3096 = vmatpush.xpose.msra.mxu0 0.0
  %3097 = vmatpush.xpose.msra.mxu0 0.0
  %3098 = vmatpush.xpose.msra.mxu0 0.0
  %3099 = vmatpush.xpose.msra.mxu0 0.0
  %3100 = vmatpush.xpose.msra.mxu0 0.0
  %3101 = vmatpush.xpose.msra.mxu0 0.0
  %3102 = vmatpush.xpose.msra.mxu0 0.0
  %3103 = vmatpush.xpose.msra.mxu0 0.0
  %3104 = vmatpush.xpose.msra.mxu0 0.0
  %3105 = vmatpush.xpose.msra.mxu0 0.0
  %3106 = vmatpush.xpose.msra.mxu0 %v3089
  %3107 = vmatmul.f32.gmra.mxu0 %v3087
  %v3108 = vpop.f32.mrf.mxu0
  %v3109 = vadd.f32 0.0, %v3108
  %3110 = vdwg.mxu0
  %v3111 = vmul.f32 %v3028, 0.35355338
  %v3112 = vmul.f32 %v3055, 0.35355338
  %v3113 = vmul.f32 %v3082, 0.35355338
  %v3114 = vmul.f32 %v3109, 0.35355338
  %v3115 = vadd.f32 %v3111, %v548
  %v3116 = vadd.f32 %v3112, %v549
  %v3117 = vadd.f32 %v3113, %v550
  %v3118 = vadd.f32 %v3114, %v551
  %v3119 = vsel %vm434, %v3115, -inf
  %3120 = vmax.xlane.f32.xlu0 %v3119
  %v3121 = vpop.xlane.xlu0 %3120
  %v3122 = vsel %vm434, %v3116, -inf
  %3123 = vmax.xlane.f32.xlu0 %v3122
  %v3124 = vpop.xlane.xlu0 %3123
  %v3125 = vsel %vm434, %v3117, -inf
  %3126 = vmax.xlane.f32.xlu0 %v3125
  %v3127 = vpop.xlane.xlu0 %3126
  %v3128 = vsel %vm434, %v3118, -inf
  %3129 = vmax.xlane.f32.xlu0 %v3128
  %v3130 = vpop.xlane.xlu0 %3129
  %v3131 = vsub.f32 %v3115, %v3121
  %v3132 = vsub.f32 %v3116, %v3124
  %v3133 = vsub.f32 %v3117, %v3127
  %v3134 = vsub.f32 %v3118, %v3130
  %v3135 = vmul.f32 %v3131, 1.442695
  %v3136 = vpow.pop %v3135
  %v3137 = vmul.f32 %v3132, 1.442695
  %v3138 = vpow.pop %v3137
  %v3139 = vmul.f32 %v3133, 1.442695
  %v3140 = vpow.pop %v3139
  %v3141 = vmul.f32 %v3134, 1.442695
  %v3142 = vpow.pop %v3141
  %v3143 = vsel %vm434, %v3136, 0.0
  %3144 = vadd.xlane.f32.xlu0 %v3143
  %v3145 = vpop.xlane.xlu0 %3144
  %v3146 = vsel %vm434, %v3138, 0.0
  %3147 = vadd.xlane.f32.xlu0 %v3146
  %v3148 = vpop.xlane.xlu0 %3147
  %v3149 = vsel %vm434, %v3140, 0.0
  %3150 = vadd.xlane.f32.xlu0 %v3149
  %v3151 = vpop.xlane.xlu0 %3150
  %v3152 = vsel %vm434, %v3142, 0.0
  %3153 = vadd.xlane.f32.xlu0 %v3152
  %v3154 = vpop.xlane.xlu0 %3153
  %v3155 = vrcp.pop %v3145
  %v3156 = vmul.f32 %v3145, %v3155
  %v3157 = vsub.f32 1.0, %v3156
  %v3158 = vmul.f32 %v3155, %v3157
  %v3159 = vadd.f32 %v3155, %v3158
  %vm3160 = vweird.f32 %v3145
  %vm3161 = vweird.f32 %v3155
  %vm3162 = vmor %vm3160, %vm3161
  %v3163 = vsel %vm3162, %v3155, %v3159
  %v3164 = vand.u32 2147483647, %v3145
  %vm3165 = vcmp.eq.f32.partialorder %v3164, 8.507059e+37
  %v3166 = vand.u32 %v3145, 2147483648
  %v3167 = vor.u32 1.1754944e-38, %v3166
  %v3168 = vsel %vm3165, %v3167, %v3163
  %v3169 = vmul.f32 %v3136, %v3168
  %v3170 = vrcp.pop %v3148
  %v3171 = vmul.f32 %v3148, %v3170
  %v3172 = vsub.f32 1.0, %v3171
  %v3173 = vmul.f32 %v3170, %v3172
  %v3174 = vadd.f32 %v3170, %v3173
  %vm3175 = vweird.f32 %v3148
  %vm3176 = vweird.f32 %v3170
  %vm3177 = vmor %vm3175, %vm3176
  %v3178 = vsel %vm3177, %v3170, %v3174
  %v3179 = vand.u32 2147483647, %v3148
  %vm3180 = vcmp.eq.f32.partialorder %v3179, 8.507059e+37
  %v3181 = vand.u32 %v3148, 2147483648
  %v3182 = vor.u32 1.1754944e-38, %v3181
  %v3183 = vsel %vm3180, %v3182, %v3178
  %v3184 = vmul.f32 %v3138, %v3183
  %v3185 = vrcp.pop %v3151
  %v3186 = vmul.f32 %v3151, %v3185
  %v3187 = vsub.f32 1.0, %v3186
  %v3188 = vmul.f32 %v3185, %v3187
  %v3189 = vadd.f32 %v3185, %v3188
  %vm3190 = vweird.f32 %v3151
  %vm3191 = vweird.f32 %v3185
  %vm3192 = vmor %vm3190, %vm3191
  %v3193 = vsel %vm3192, %v3185, %v3189
  %v3194 = vand.u32 2147483647, %v3151
  %vm3195 = vcmp.eq.f32.partialorder %v3194, 8.507059e+37
  %v3196 = vand.u32 %v3151, 2147483648
  %v3197 = vor.u32 1.1754944e-38, %v3196
  %v3198 = vsel %vm3195, %v3197, %v3193
  %v3199 = vmul.f32 %v3140, %v3198
  %v3200 = vrcp.pop %v3154
  %v3201 = vmul.f32 %v3154, %v3200
  %v3202 = vsub.f32 1.0, %v3201
  %v3203 = vmul.f32 %v3200, %v3202
  %v3204 = vadd.f32 %v3200, %v3203
  %vm3205 = vweird.f32 %v3154
  %vm3206 = vweird.f32 %v3200
  %vm3207 = vmor %vm3205, %vm3206
  %v3208 = vsel %vm3207, %v3200, %v3204
  %v3209 = vand.u32 2147483647, %v3154
  %vm3210 = vcmp.eq.f32.partialorder %v3209, 8.507059e+37
  %v3211 = vand.u32 %v3154, 2147483648
  %v3212 = vor.u32 1.1754944e-38, %v3211
  %v3213 = vsel %vm3210, %v3212, %v3208
  %v3214 = vmul.f32 %v3142, %v3213
  %v3215 = vadd.f32 %v3169, 0.0
  %v3216 = vadd.f32 %v3184, 0.0
  %v3217 = vadd.f32 %v3199, 0.0
  %v3218 = vadd.f32 %v3214, 0.0
  %3219 = vrot.lane.b32.xlu0 %v2987, 64
  %v3220 = vpop.permute.xlu0 %3219
  %v3223 = vsel %vm434, %v3169, 0
  %3225 = vmatpush.msra.mxu0 0.0
  %3226 = vmatpush.msra.mxu0 0.0
  %3227 = vmatpush.msra.mxu0 0.0
  %3228 = vmatpush.msra.mxu0 0.0
  %3229 = vmatpush.msra.mxu0 0.0
  %3230 = vmatpush.msra.mxu0 0.0
  %3231 = vmatpush.msra.mxu0 0.0
  %3232 = vmatpush.msra.mxu0 0.0
  %3233 = vmatpush.msra.mxu0 0.0
  %3234 = vmatpush.msra.mxu0 0.0
  %3235 = vmatpush.msra.mxu0 0.0
  %3236 = vmatpush.msra.mxu0 0.0
  %3237 = vmatpush.msra.mxu0 0.0
  %3238 = vmatpush.msra.mxu0 0.0
  %3239 = vmatpush.msra.mxu0 0.0
  %3240 = vmatpush.msra.mxu0 %v3220
  %3241 = vmatmul.f32.gmra.mxu0 %v3223
  %v3242 = vpop.f32.mrf.mxu0
  %v3243 = vadd.f32 0.0, %v3242
  %3244 = vdwg.mxu0
  %3245 = vrot.lane.b32.xlu0 %v2990, 64
  %v3246 = vpop.permute.xlu0 %3245
  %v3249 = vsel %vm434, %v3184, 0
  %3251 = vmatpush.msra.mxu0 0.0
  %3252 = vmatpush.msra.mxu0 0.0
  %3253 = vmatpush.msra.mxu0 0.0
  %3254 = vmatpush.msra.mxu0 0.0
  %3255 = vmatpush.msra.mxu0 0.0
  %3256 = vmatpush.msra.mxu0 0.0
  %3257 = vmatpush.msra.mxu0 0.0
  %3258 = vmatpush.msra.mxu0 0.0
  %3259 = vmatpush.msra.mxu0 0.0
  %3260 = vmatpush.msra.mxu0 0.0
  %3261 = vmatpush.msra.mxu0 0.0
  %3262 = vmatpush.msra.mxu0 0.0
  %3263 = vmatpush.msra.mxu0 0.0
  %3264 = vmatpush.msra.mxu0 0.0
  %3265 = vmatpush.msra.mxu0 0.0
  %3266 = vmatpush.msra.mxu0 %v3246
  %3267 = vmatmul.f32.gmra.mxu0 %v3249
  %v3268 = vpop.f32.mrf.mxu0
  %v3269 = vadd.f32 0.0, %v3268
  %3270 = vdwg.mxu0
  %3271 = vrot.lane.b32.xlu0 %v2993, 64
  %v3272 = vpop.permute.xlu0 %3271
  %v3275 = vsel %vm434, %v3199, 0
  %3277 = vmatpush.msra.mxu0 0.0
  %3278 = vmatpush.msra.mxu0 0.0
  %3279 = vmatpush.msra.mxu0 0.0
  %3280 = vmatpush.msra.mxu0 0.0
  %3281 = vmatpush.msra.mxu0 0.0
  %3282 = vmatpush.msra.mxu0 0.0
  %3283 = vmatpush.msra.mxu0 0.0
  %3284 = vmatpush.msra.mxu0 0.0
  %3285 = vmatpush.msra.mxu0 0.0
  %3286 = vmatpush.msra.mxu0 0.0
  %3287 = vmatpush.msra.mxu0 0.0
  %3288 = vmatpush.msra.mxu0 0.0
  %3289 = vmatpush.msra.mxu0 0.0
  %3290 = vmatpush.msra.mxu0 0.0
  %3291 = vmatpush.msra.mxu0 0.0
  %3292 = vmatpush.msra.mxu0 %v3272
  %3293 = vmatmul.f32.gmra.mxu0 %v3275
  %v3294 = vpop.f32.mrf.mxu0
  %v3295 = vadd.f32 0.0, %v3294
  %3296 = vdwg.mxu0
  %3297 = vrot.lane.b32.xlu0 %v2996, 64
  %v3298 = vpop.permute.xlu0 %3297
  %v3301 = vsel %vm434, %v3214, 0
  %3303 = vmatpush.msra.mxu0 0.0
  %3304 = vmatpush.msra.mxu0 0.0
  %3305 = vmatpush.msra.mxu0 0.0
  %3306 = vmatpush.msra.mxu0 0.0
  %3307 = vmatpush.msra.mxu0 0.0
  %3308 = vmatpush.msra.mxu0 0.0
  %3309 = vmatpush.msra.mxu0 0.0
  %3310 = vmatpush.msra.mxu0 0.0
  %3311 = vmatpush.msra.mxu0 0.0
  %3312 = vmatpush.msra.mxu0 0.0
  %3313 = vmatpush.msra.mxu0 0.0
  %3314 = vmatpush.msra.mxu0 0.0
  %3315 = vmatpush.msra.mxu0 0.0
  %3316 = vmatpush.msra.mxu0 0.0
  %3317 = vmatpush.msra.mxu0 0.0
  %3318 = vmatpush.msra.mxu0 %v3298
  %3319 = vmatmul.f32.gmra.mxu0 %v3301
  %v3320 = vpop.f32.mrf.mxu0
  %v3321 = vadd.f32 0.0, %v3320
  %3322 = vdwg.mxu0
  %3323 = vrot.lane.b32.xlu0 %v2987, 120
  %v3324 = vpop.permute.xlu0 %3323
  %3325 = vrot.lane.b32.xlu0 %v2987, 88
  %v3326 = vpop.permute.xlu0 %3325
  %v3327 = vsel %vm434, %v3324, 0
  %v3329 = vsel %vm434, %v3326, 0
  %3331 = vmatpush.xpose.msra.mxu0 0.0
  %3332 = vmatpush.xpose.msra.mxu0 0.0
  %3333 = vmatpush.xpose.msra.mxu0 0.0
  %3334 = vmatpush.xpose.msra.mxu0 0.0
  %3335 = vmatpush.xpose.msra.mxu0 0.0
  %3336 = vmatpush.xpose.msra.mxu0 0.0
  %3337 = vmatpush.xpose.msra.mxu0 0.0
  %3338 = vmatpush.xpose.msra.mxu0 0.0
  %3339 = vmatpush.xpose.msra.mxu0 0.0
  %3340 = vmatpush.xpose.msra.mxu0 0.0
  %3341 = vmatpush.xpose.msra.mxu0 0.0
  %3342 = vmatpush.xpose.msra.mxu0 0.0
  %3343 = vmatpush.xpose.msra.mxu0 0.0
  %3344 = vmatpush.xpose.msra.mxu0 0.0
  %3345 = vmatpush.xpose.msra.mxu0 0.0
  %3346 = vmatpush.xpose.msra.mxu0 %v3329
  %3347 = vmatmul.f32.gmra.mxu0 %v3327
  %v3348 = vpop.f32.mrf.mxu0
  %v3349 = vadd.f32 0.0, %v3348
  %3350 = vdwg.mxu0
  %3351 = vrot.lane.b32.xlu0 %v2990, 120
  %v3352 = vpop.permute.xlu0 %3351
  %3353 = vrot.lane.b32.xlu0 %v2990, 88
  %v3354 = vpop.permute.xlu0 %3353
  %v3355 = vsel %vm434, %v3352, 0
  %v3357 = vsel %vm434, %v3354, 0
  %3359 = vmatpush.xpose.msra.mxu0 0.0
  %3360 = vmatpush.xpose.msra.mxu0 0.0
  %3361 = vmatpush.xpose.msra.mxu0 0.0
  %3362 = vmatpush.xpose.msra.mxu0 0.0
  %3363 = vmatpush.xpose.msra.mxu0 0.0
  %3364 = vmatpush.xpose.msra.mxu0 0.0
  %3365 = vmatpush.xpose.msra.mxu0 0.0
  %3366 = vmatpush.xpose.msra.mxu0 0.0
  %3367 = vmatpush.xpose.msra.mxu0 0.0
  %3368 = vmatpush.xpose.msra.mxu0 0.0
  %3369 = vmatpush.xpose.msra.mxu0 0.0
  %3370 = vmatpush.xpose.msra.mxu0 0.0
  %3371 = vmatpush.xpose.msra.mxu0 0.0
  %3372 = vmatpush.xpose.msra.mxu0 0.0
  %3373 = vmatpush.xpose.msra.mxu0 0.0
  %3374 = vmatpush.xpose.msra.mxu0 %v3357
  %3375 = vmatmul.f32.gmra.mxu0 %v3355
  %v3376 = vpop.f32.mrf.mxu0
  %v3377 = vadd.f32 0.0, %v3376
  %3378 = vdwg.mxu0
  %3379 = vrot.lane.b32.xlu0 %v2993, 120
  %v3380 = vpop.permute.xlu0 %3379
  %3381 = vrot.lane.b32.xlu0 %v2993, 88
  %v3382 = vpop.permute.xlu0 %3381
  %v3383 = vsel %vm434, %v3380, 0
  %v3385 = vsel %vm434, %v3382, 0
  %3387 = vmatpush.xpose.msra.mxu0 0.0
  %3388 = vmatpush.xpose.msra.mxu0 0.0
  %3389 = vmatpush.xpose.msra.mxu0 0.0
  %3390 = vmatpush.xpose.msra.mxu0 0.0
  %3391 = vmatpush.xpose.msra.mxu0 0.0
  %3392 = vmatpush.xpose.msra.mxu0 0.0
  %3393 = vmatpush.xpose.msra.mxu0 0.0
  %3394 = vmatpush.xpose.msra.mxu0 0.0
  %3395 = vmatpush.xpose.msra.mxu0 0.0
  %3396 = vmatpush.xpose.msra.mxu0 0.0
  %3397 = vmatpush.xpose.msra.mxu0 0.0
  %3398 = vmatpush.xpose.msra.mxu0 0.0
  %3399 = vmatpush.xpose.msra.mxu0 0.0
  %3400 = vmatpush.xpose.msra.mxu0 0.0
  %3401 = vmatpush.xpose.msra.mxu0 0.0
  %3402 = vmatpush.xpose.msra.mxu0 %v3385
  %3403 = vmatmul.f32.gmra.mxu0 %v3383
  %v3404 = vpop.f32.mrf.mxu0
  %v3405 = vadd.f32 0.0, %v3404
  %3406 = vdwg.mxu0
  %3407 = vrot.lane.b32.xlu0 %v2996, 120
  %v3408 = vpop.permute.xlu0 %3407
  %3409 = vrot.lane.b32.xlu0 %v2996, 88
  %v3410 = vpop.permute.xlu0 %3409
  %v3411 = vsel %vm434, %v3408, 0
  %v3413 = vsel %vm434, %v3410, 0
  %3415 = vmatpush.xpose.msra.mxu0 0.0
  %3416 = vmatpush.xpose.msra.mxu0 0.0
  %3417 = vmatpush.xpose.msra.mxu0 0.0
  %3418 = vmatpush.xpose.msra.mxu0 0.0
  %3419 = vmatpush.xpose.msra.mxu0 0.0
  %3420 = vmatpush.xpose.msra.mxu0 0.0
  %3421 = vmatpush.xpose.msra.mxu0 0.0
  %3422 = vmatpush.xpose.msra.mxu0 0.0
  %3423 = vmatpush.xpose.msra.mxu0 0.0
  %3424 = vmatpush.xpose.msra.mxu0 0.0
  %3425 = vmatpush.xpose.msra.mxu0 0.0
  %3426 = vmatpush.xpose.msra.mxu0 0.0
  %3427 = vmatpush.xpose.msra.mxu0 0.0
  %3428 = vmatpush.xpose.msra.mxu0 0.0
  %3429 = vmatpush.xpose.msra.mxu0 0.0
  %3430 = vmatpush.xpose.msra.mxu0 %v3413
  %3431 = vmatmul.f32.gmra.mxu0 %v3411
  %v3432 = vpop.f32.mrf.mxu0
  %v3433 = vadd.f32 0.0, %v3432
  %3434 = vdwg.mxu0
  %v3435 = vmul.f32 %v3349, 0.35355338
  %v3436 = vmul.f32 %v3377, 0.35355338
  %v3437 = vmul.f32 %v3405, 0.35355338
  %v3438 = vmul.f32 %v3433, 0.35355338
  %v3439 = vadd.f32 %v3435, %v548
  %v3440 = vadd.f32 %v3436, %v549
  %v3441 = vadd.f32 %v3437, %v550
  %v3442 = vadd.f32 %v3438, %v551
  %v3443 = vsel %vm434, %v3439, -inf
  %3444 = vmax.xlane.f32.xlu0 %v3443
  %v3445 = vpop.xlane.xlu0 %3444
  %v3446 = vsel %vm434, %v3440, -inf
  %3447 = vmax.xlane.f32.xlu0 %v3446
  %v3448 = vpop.xlane.xlu0 %3447
  %v3449 = vsel %vm434, %v3441, -inf
  %3450 = vmax.xlane.f32.xlu0 %v3449
  %v3451 = vpop.xlane.xlu0 %3450
  %v3452 = vsel %vm434, %v3442, -inf
  %3453 = vmax.xlane.f32.xlu0 %v3452
  %v3454 = vpop.xlane.xlu0 %3453
  %v3455 = vsub.f32 %v3439, %v3445
  %v3456 = vsub.f32 %v3440, %v3448
  %v3457 = vsub.f32 %v3441, %v3451
  %v3458 = vsub.f32 %v3442, %v3454
  %v3459 = vmul.f32 %v3455, 1.442695
  %v3460 = vpow.pop %v3459
  %v3461 = vmul.f32 %v3456, 1.442695
  %v3462 = vpow.pop %v3461
  %v3463 = vmul.f32 %v3457, 1.442695
  %v3464 = vpow.pop %v3463
  %v3465 = vmul.f32 %v3458, 1.442695
  %v3466 = vpow.pop %v3465
  %v3467 = vsel %vm434, %v3460, 0.0
  %3468 = vadd.xlane.f32.xlu0 %v3467
  %v3469 = vpop.xlane.xlu0 %3468
  %v3470 = vsel %vm434, %v3462, 0.0
  %3471 = vadd.xlane.f32.xlu0 %v3470
  %v3472 = vpop.xlane.xlu0 %3471
  %v3473 = vsel %vm434, %v3464, 0.0
  %3474 = vadd.xlane.f32.xlu0 %v3473
  %v3475 = vpop.xlane.xlu0 %3474
  %v3476 = vsel %vm434, %v3466, 0.0
  %3477 = vadd.xlane.f32.xlu0 %v3476
  %v3478 = vpop.xlane.xlu0 %3477
  %v3479 = vrcp.pop %v3469
  %v3480 = vmul.f32 %v3469, %v3479
  %v3481 = vsub.f32 1.0, %v3480
  %v3482 = vmul.f32 %v3479, %v3481
  %v3483 = vadd.f32 %v3479, %v3482
  %vm3484 = vweird.f32 %v3469
  %vm3485 = vweird.f32 %v3479
  %vm3486 = vmor %vm3484, %vm3485
  %v3487 = vsel %vm3486, %v3479, %v3483
  %v3488 = vand.u32 2147483647, %v3469
  %vm3489 = vcmp.eq.f32.partialorder %v3488, 8.507059e+37
  %v3490 = vand.u32 %v3469, 2147483648
  %v3491 = vor.u32 1.1754944e-38, %v3490
  %v3492 = vsel %vm3489, %v3491, %v3487
  %v3493 = vmul.f32 %v3460, %v3492
  %v3494 = vrcp.pop %v3472
  %v3495 = vmul.f32 %v3472, %v3494
  %v3496 = vsub.f32 1.0, %v3495
  %v3497 = vmul.f32 %v3494, %v3496
  %v3498 = vadd.f32 %v3494, %v3497
  %vm3499 = vweird.f32 %v3472
  %vm3500 = vweird.f32 %v3494
  %vm3501 = vmor %vm3499, %vm3500
  %v3502 = vsel %vm3501, %v3494, %v3498
  %v3503 = vand.u32 2147483647, %v3472
  %vm3504 = vcmp.eq.f32.partialorder %v3503, 8.507059e+37
  %v3505 = vand.u32 %v3472, 2147483648
  %v3506 = vor.u32 1.1754944e-38, %v3505
  %v3507 = vsel %vm3504, %v3506, %v3502
  %v3508 = vmul.f32 %v3462, %v3507
  %v3509 = vrcp.pop %v3475
  %v3510 = vmul.f32 %v3475, %v3509
  %v3511 = vsub.f32 1.0, %v3510
  %v3512 = vmul.f32 %v3509, %v3511
  %v3513 = vadd.f32 %v3509, %v3512
  %vm3514 = vweird.f32 %v3475
  %vm3515 = vweird.f32 %v3509
  %vm3516 = vmor %vm3514, %vm3515
  %v3517 = vsel %vm3516, %v3509, %v3513
  %v3518 = vand.u32 2147483647, %v3475
  %vm3519 = vcmp.eq.f32.partialorder %v3518, 8.507059e+37
  %v3520 = vand.u32 %v3475, 2147483648
  %v3521 = vor.u32 1.1754944e-38, %v3520
  %v3522 = vsel %vm3519, %v3521, %v3517
  %v3523 = vmul.f32 %v3464, %v3522
  %v3524 = vrcp.pop %v3478
  %v3525 = vmul.f32 %v3478, %v3524
  %v3526 = vsub.f32 1.0, %v3525
  %v3527 = vmul.f32 %v3524, %v3526
  %v3528 = vadd.f32 %v3524, %v3527
  %vm3529 = vweird.f32 %v3478
  %vm3530 = vweird.f32 %v3524
  %vm3531 = vmor %vm3529, %vm3530
  %v3532 = vsel %vm3531, %v3524, %v3528
  %v3533 = vand.u32 2147483647, %v3478
  %vm3534 = vcmp.eq.f32.partialorder %v3533, 8.507059e+37
  %v3535 = vand.u32 %v3478, 2147483648
  %v3536 = vor.u32 1.1754944e-38, %v3535
  %v3537 = vsel %vm3534, %v3536, %v3532
  %v3538 = vmul.f32 %v3466, %v3537
  %v3539 = vadd.f32 %v3215, %v3493
  %v3540 = vadd.f32 %v3216, %v3508
  %v3541 = vadd.f32 %v3217, %v3523
  %v3542 = vadd.f32 %v3218, %v3538
  %3543 = vrot.lane.b32.xlu0 %v2987, 56
  %v3544 = vpop.permute.xlu0 %3543
  %v3547 = vsel %vm434, %v3493, 0
  %3549 = vmatpush.msra.mxu0 0.0
  %3550 = vmatpush.msra.mxu0 0.0
  %3551 = vmatpush.msra.mxu0 0.0
  %3552 = vmatpush.msra.mxu0 0.0
  %3553 = vmatpush.msra.mxu0 0.0
  %3554 = vmatpush.msra.mxu0 0.0
  %3555 = vmatpush.msra.mxu0 0.0
  %3556 = vmatpush.msra.mxu0 0.0
  %3557 = vmatpush.msra.mxu0 0.0
  %3558 = vmatpush.msra.mxu0 0.0
  %3559 = vmatpush.msra.mxu0 0.0
  %3560 = vmatpush.msra.mxu0 0.0
  %3561 = vmatpush.msra.mxu0 0.0
  %3562 = vmatpush.msra.mxu0 0.0
  %3563 = vmatpush.msra.mxu0 0.0
  %3564 = vmatpush.msra.mxu0 %v3544
  %3565 = vmatmul.f32.gmra.mxu0 %v3547
  %v3566 = vpop.f32.mrf.mxu0
  %v3567 = vadd.f32 0.0, %v3566
  %3568 = vdwg.mxu0
  %3569 = vrot.lane.b32.xlu0 %v2990, 56
  %v3570 = vpop.permute.xlu0 %3569
  %v3573 = vsel %vm434, %v3508, 0
  %3575 = vmatpush.msra.mxu0 0.0
  %3576 = vmatpush.msra.mxu0 0.0
  %3577 = vmatpush.msra.mxu0 0.0
  %3578 = vmatpush.msra.mxu0 0.0
  %3579 = vmatpush.msra.mxu0 0.0
  %3580 = vmatpush.msra.mxu0 0.0
  %3581 = vmatpush.msra.mxu0 0.0
  %3582 = vmatpush.msra.mxu0 0.0
  %3583 = vmatpush.msra.mxu0 0.0
  %3584 = vmatpush.msra.mxu0 0.0
  %3585 = vmatpush.msra.mxu0 0.0
  %3586 = vmatpush.msra.mxu0 0.0
  %3587 = vmatpush.msra.mxu0 0.0
  %3588 = vmatpush.msra.mxu0 0.0
  %3589 = vmatpush.msra.mxu0 0.0
  %3590 = vmatpush.msra.mxu0 %v3570
  %3591 = vmatmul.f32.gmra.mxu0 %v3573
  %v3592 = vpop.f32.mrf.mxu0
  %v3593 = vadd.f32 0.0, %v3592
  %3594 = vdwg.mxu0
  %3595 = vrot.lane.b32.xlu0 %v2993, 56
  %v3596 = vpop.permute.xlu0 %3595
  %v3599 = vsel %vm434, %v3523, 0
  %3601 = vmatpush.msra.mxu0 0.0
  %3602 = vmatpush.msra.mxu0 0.0
  %3603 = vmatpush.msra.mxu0 0.0
  %3604 = vmatpush.msra.mxu0 0.0
  %3605 = vmatpush.msra.mxu0 0.0
  %3606 = vmatpush.msra.mxu0 0.0
  %3607 = vmatpush.msra.mxu0 0.0
  %3608 = vmatpush.msra.mxu0 0.0
  %3609 = vmatpush.msra.mxu0 0.0
  %3610 = vmatpush.msra.mxu0 0.0
  %3611 = vmatpush.msra.mxu0 0.0
  %3612 = vmatpush.msra.mxu0 0.0
  %3613 = vmatpush.msra.mxu0 0.0
  %3614 = vmatpush.msra.mxu0 0.0
  %3615 = vmatpush.msra.mxu0 0.0
  %3616 = vmatpush.msra.mxu0 %v3596
  %3617 = vmatmul.f32.gmra.mxu0 %v3599
  %v3618 = vpop.f32.mrf.mxu0
  %v3619 = vadd.f32 0.0, %v3618
  %3620 = vdwg.mxu0
  %3621 = vrot.lane.b32.xlu0 %v2996, 56
  %v3622 = vpop.permute.xlu0 %3621
  %v3625 = vsel %vm434, %v3538, 0
  %3627 = vmatpush.msra.mxu0 0.0
  %3628 = vmatpush.msra.mxu0 0.0
  %3629 = vmatpush.msra.mxu0 0.0
  %3630 = vmatpush.msra.mxu0 0.0
  %3631 = vmatpush.msra.mxu0 0.0
  %3632 = vmatpush.msra.mxu0 0.0
  %3633 = vmatpush.msra.mxu0 0.0
  %3634 = vmatpush.msra.mxu0 0.0
  %3635 = vmatpush.msra.mxu0 0.0
  %3636 = vmatpush.msra.mxu0 0.0
  %3637 = vmatpush.msra.mxu0 0.0
  %3638 = vmatpush.msra.mxu0 0.0
  %3639 = vmatpush.msra.mxu0 0.0
  %3640 = vmatpush.msra.mxu0 0.0
  %3641 = vmatpush.msra.mxu0 0.0
  %3642 = vmatpush.msra.mxu0 %v3622
  %3643 = vmatmul.f32.gmra.mxu0 %v3625
  %v3644 = vpop.f32.mrf.mxu0
  %v3645 = vadd.f32 0.0, %v3644
  %3646 = vdwg.mxu0
  %v3648 = vsel %vm434, %v3567, 0
  %v3651 = vsel %vm434, %v3593, 0
  %v3654 = vsel %vm434, %v3619, 0
  %v3657 = vsel %vm434, %v3645, 0
  %3659 = vmatpush.msra.mxu0 0.0
  %3660 = vmatpush.msra.mxu0 0.0
  %3661 = vmatpush.msra.mxu0 0.0
  %3662 = vmatpush.msra.mxu0 0.0
  %3663 = vmatpush.msra.mxu0 0.0
  %3664 = vmatpush.msra.mxu0 0.0
  %3665 = vmatpush.msra.mxu0 0.0
  %3666 = vmatpush.msra.mxu0 0.0
  %3667 = vmatpush.msra.mxu0 0.0
  %3668 = vmatpush.msra.mxu0 0.0
  %3669 = vmatpush.msra.mxu0 0.0
  %3670 = vmatpush.msra.mxu0 0.0
  %3671 = vmatpush.msra.mxu0 0.0
  %3672 = vmatpush.msra.mxu0 0.0
  %3673 = vmatpush.msra.mxu0 0.0
  %3674 = vmatpush.msra.mxu0 %v3000
  %3675 = vmatmul.f32.gmra.mxu0 %v3648
  %v3676 = vpop.f32.mrf.mxu0
  %v3677 = vadd.f32 0.0, %v3676
  %3678 = vmatmul.f32.gmra.mxu0 %v3651
  %v3679 = vpop.f32.mrf.mxu0
  %v3680 = vadd.f32 0.0, %v3679
  %3681 = vmatmul.f32.gmra.mxu0 %v3654
  %v3682 = vpop.f32.mrf.mxu0
  %v3683 = vadd.f32 0.0, %v3682
  %3684 = vmatmul.f32.gmra.mxu0 %v3657
  %v3685 = vpop.f32.mrf.mxu0
  %v3686 = vadd.f32 0.0, %v3685
  %3687 = vdwg.mxu0
  %v3689 = vsel %vm434, %v3243, 0
  %v3692 = vsel %vm434, %v3269, 0
  %v3695 = vsel %vm434, %v3295, 0
  %v3698 = vsel %vm434, %v3321, 0
  %3700 = vmatpush.msra.mxu0 0.0
  %3701 = vmatpush.msra.mxu0 0.0
  %3702 = vmatpush.msra.mxu0 0.0
  %3703 = vmatpush.msra.mxu0 0.0
  %3704 = vmatpush.msra.mxu0 0.0
  %3705 = vmatpush.msra.mxu0 0.0
  %3706 = vmatpush.msra.mxu0 0.0
  %3707 = vmatpush.msra.mxu0 0.0
  %3708 = vmatpush.msra.mxu0 0.0
  %3709 = vmatpush.msra.mxu0 0.0
  %3710 = vmatpush.msra.mxu0 0.0
  %3711 = vmatpush.msra.mxu0 0.0
  %3712 = vmatpush.msra.mxu0 0.0
  %3713 = vmatpush.msra.mxu0 0.0
  %3714 = vmatpush.msra.mxu0 0.0
  %3715 = vmatpush.msra.mxu0 %v2999
  %3716 = vmatmul.f32.gmra.mxu0 %v3689
  %v3717 = vpop.f32.mrf.mxu0
  %v3718 = vadd.f32 %v3677, %v3717
  %3719 = vmatmul.f32.gmra.mxu0 %v3692
  %v3720 = vpop.f32.mrf.mxu0
  %v3721 = vadd.f32 %v3680, %v3720
  %3722 = vmatmul.f32.gmra.mxu0 %v3695
  %v3723 = vpop.f32.mrf.mxu0
  %v3724 = vadd.f32 %v3683, %v3723
  %3725 = vmatmul.f32.gmra.mxu0 %v3698
  %v3726 = vpop.f32.mrf.mxu0
  %v3727 = vadd.f32 %v3686, %v3726
  %3728 = vdwg.mxu0
  %3729 = vrot.lane.b32.xlu0 %v2987, 112
  %v3730 = vpop.permute.xlu0 %3729
  %3731 = vrot.lane.b32.xlu0 %v2987, 80
  %v3732 = vpop.permute.xlu0 %3731
  %v3733 = vsel %vm434, %v3730, 0
  %v3735 = vsel %vm434, %v3732, 0
  %3737 = vmatpush.xpose.msra.mxu0 0.0
  %3738 = vmatpush.xpose.msra.mxu0 0.0
  %3739 = vmatpush.xpose.msra.mxu0 0.0
  %3740 = vmatpush.xpose.msra.mxu0 0.0
  %3741 = vmatpush.xpose.msra.mxu0 0.0
  %3742 = vmatpush.xpose.msra.mxu0 0.0
  %3743 = vmatpush.xpose.msra.mxu0 0.0
  %3744 = vmatpush.xpose.msra.mxu0 0.0
  %3745 = vmatpush.xpose.msra.mxu0 0.0
  %3746 = vmatpush.xpose.msra.mxu0 0.0
  %3747 = vmatpush.xpose.msra.mxu0 0.0
  %3748 = vmatpush.xpose.msra.mxu0 0.0
  %3749 = vmatpush.xpose.msra.mxu0 0.0
  %3750 = vmatpush.xpose.msra.mxu0 0.0
  %3751 = vmatpush.xpose.msra.mxu0 0.0
  %3752 = vmatpush.xpose.msra.mxu0 %v3735
  %3753 = vmatmul.f32.gmra.mxu0 %v3733
  %v3754 = vpop.f32.mrf.mxu0
  %v3755 = vadd.f32 0.0, %v3754
  %3756 = vdwg.mxu0
  %3757 = vrot.lane.b32.xlu0 %v2990, 112
  %v3758 = vpop.permute.xlu0 %3757
  %3759 = vrot.lane.b32.xlu0 %v2990, 80
  %v3760 = vpop.permute.xlu0 %3759
  %v3761 = vsel %vm434, %v3758, 0
  %v3763 = vsel %vm434, %v3760, 0
  %3765 = vmatpush.xpose.msra.mxu0 0.0
  %3766 = vmatpush.xpose.msra.mxu0 0.0
  %3767 = vmatpush.xpose.msra.mxu0 0.0
  %3768 = vmatpush.xpose.msra.mxu0 0.0
  %3769 = vmatpush.xpose.msra.mxu0 0.0
  %3770 = vmatpush.xpose.msra.mxu0 0.0
  %3771 = vmatpush.xpose.msra.mxu0 0.0
  %3772 = vmatpush.xpose.msra.mxu0 0.0
  %3773 = vmatpush.xpose.msra.mxu0 0.0
  %3774 = vmatpush.xpose.msra.mxu0 0.0
  %3775 = vmatpush.xpose.msra.mxu0 0.0
  %3776 = vmatpush.xpose.msra.mxu0 0.0
  %3777 = vmatpush.xpose.msra.mxu0 0.0
  %3778 = vmatpush.xpose.msra.mxu0 0.0
  %3779 = vmatpush.xpose.msra.mxu0 0.0
  %3780 = vmatpush.xpose.msra.mxu0 %v3763
  %3781 = vmatmul.f32.gmra.mxu0 %v3761
  %v3782 = vpop.f32.mrf.mxu0
  %v3783 = vadd.f32 0.0, %v3782
  %3784 = vdwg.mxu0
  %3785 = vrot.lane.b32.xlu0 %v2993, 112
  %v3786 = vpop.permute.xlu0 %3785
  %3787 = vrot.lane.b32.xlu0 %v2993, 80
  %v3788 = vpop.permute.xlu0 %3787
  %v3789 = vsel %vm434, %v3786, 0
  %v3791 = vsel %vm434, %v3788, 0
  %3793 = vmatpush.xpose.msra.mxu0 0.0
  %3794 = vmatpush.xpose.msra.mxu0 0.0
  %3795 = vmatpush.xpose.msra.mxu0 0.0
  %3796 = vmatpush.xpose.msra.mxu0 0.0
  %3797 = vmatpush.xpose.msra.mxu0 0.0
  %3798 = vmatpush.xpose.msra.mxu0 0.0
  %3799 = vmatpush.xpose.msra.mxu0 0.0
  %3800 = vmatpush.xpose.msra.mxu0 0.0
  %3801 = vmatpush.xpose.msra.mxu0 0.0
  %3802 = vmatpush.xpose.msra.mxu0 0.0
  %3803 = vmatpush.xpose.msra.mxu0 0.0
  %3804 = vmatpush.xpose.msra.mxu0 0.0
  %3805 = vmatpush.xpose.msra.mxu0 0.0
  %3806 = vmatpush.xpose.msra.mxu0 0.0
  %3807 = vmatpush.xpose.msra.mxu0 0.0
  %3808 = vmatpush.xpose.msra.mxu0 %v3791
  %3809 = vmatmul.f32.gmra.mxu0 %v3789
  %v3810 = vpop.f32.mrf.mxu0
  %v3811 = vadd.f32 0.0, %v3810
  %3812 = vdwg.mxu0
  %3813 = vrot.lane.b32.xlu0 %v2996, 112
  %v3814 = vpop.permute.xlu0 %3813
  %3815 = vrot.lane.b32.xlu0 %v2996, 80
  %v3816 = vpop.permute.xlu0 %3815
  %v3817 = vsel %vm434, %v3814, 0
  %v3819 = vsel %vm434, %v3816, 0
  %3821 = vmatpush.xpose.msra.mxu0 0.0
  %3822 = vmatpush.xpose.msra.mxu0 0.0
  %3823 = vmatpush.xpose.msra.mxu0 0.0
  %3824 = vmatpush.xpose.msra.mxu0 0.0
  %3825 = vmatpush.xpose.msra.mxu0 0.0
  %3826 = vmatpush.xpose.msra.mxu0 0.0
  %3827 = vmatpush.xpose.msra.mxu0 0.0
  %3828 = vmatpush.xpose.msra.mxu0 0.0
  %3829 = vmatpush.xpose.msra.mxu0 0.0
  %3830 = vmatpush.xpose.msra.mxu0 0.0
  %3831 = vmatpush.xpose.msra.mxu0 0.0
  %3832 = vmatpush.xpose.msra.mxu0 0.0
  %3833 = vmatpush.xpose.msra.mxu0 0.0
  %3834 = vmatpush.xpose.msra.mxu0 0.0
  %3835 = vmatpush.xpose.msra.mxu0 0.0
  %3836 = vmatpush.xpose.msra.mxu0 %v3819
  %3837 = vmatmul.f32.gmra.mxu0 %v3817
  %v3838 = vpop.f32.mrf.mxu0
  %v3839 = vadd.f32 0.0, %v3838
  %3840 = vdwg.mxu0
  %v3841 = vmul.f32 %v3755, 0.35355338
  %v3842 = vmul.f32 %v3783, 0.35355338
  %v3843 = vmul.f32 %v3811, 0.35355338
  %v3844 = vmul.f32 %v3839, 0.35355338
  %v3845 = vadd.f32 %v3841, %v548
  %v3846 = vadd.f32 %v3842, %v549
  %v3847 = vadd.f32 %v3843, %v550
  %v3848 = vadd.f32 %v3844, %v551
  %v3849 = vsel %vm434, %v3845, -inf
  %3850 = vmax.xlane.f32.xlu0 %v3849
  %v3851 = vpop.xlane.xlu0 %3850
  %v3852 = vsel %vm434, %v3846, -inf
  %3853 = vmax.xlane.f32.xlu0 %v3852
  %v3854 = vpop.xlane.xlu0 %3853
  %v3855 = vsel %vm434, %v3847, -inf
  %3856 = vmax.xlane.f32.xlu0 %v3855
  %v3857 = vpop.xlane.xlu0 %3856
  %v3858 = vsel %vm434, %v3848, -inf
  %3859 = vmax.xlane.f32.xlu0 %v3858
  %v3860 = vpop.xlane.xlu0 %3859
  %v3861 = vsub.f32 %v3845, %v3851
  %v3862 = vsub.f32 %v3846, %v3854
  %v3863 = vsub.f32 %v3847, %v3857
  %v3864 = vsub.f32 %v3848, %v3860
  %v3865 = vmul.f32 %v3861, 1.442695
  %v3866 = vpow.pop %v3865
  %v3867 = vmul.f32 %v3862, 1.442695
  %v3868 = vpow.pop %v3867
  %v3869 = vmul.f32 %v3863, 1.442695
  %v3870 = vpow.pop %v3869
  %v3871 = vmul.f32 %v3864, 1.442695
  %v3872 = vpow.pop %v3871
  %v3873 = vsel %vm434, %v3866, 0.0
  %3874 = vadd.xlane.f32.xlu0 %v3873
  %v3875 = vpop.xlane.xlu0 %3874
  %v3876 = vsel %vm434, %v3868, 0.0
  %3877 = vadd.xlane.f32.xlu0 %v3876
  %v3878 = vpop.xlane.xlu0 %3877
  %v3879 = vsel %vm434, %v3870, 0.0
  %3880 = vadd.xlane.f32.xlu0 %v3879
  %v3881 = vpop.xlane.xlu0 %3880
  %v3882 = vsel %vm434, %v3872, 0.0
  %3883 = vadd.xlane.f32.xlu0 %v3882
  %v3884 = vpop.xlane.xlu0 %3883
  %v3885 = vrcp.pop %v3875
  %v3886 = vmul.f32 %v3875, %v3885
  %v3887 = vsub.f32 1.0, %v3886
  %v3888 = vmul.f32 %v3885, %v3887
  %v3889 = vadd.f32 %v3885, %v3888
  %vm3890 = vweird.f32 %v3875
  %vm3891 = vweird.f32 %v3885
  %vm3892 = vmor %vm3890, %vm3891
  %v3893 = vsel %vm3892, %v3885, %v3889
  %v3894 = vand.u32 2147483647, %v3875
  %vm3895 = vcmp.eq.f32.partialorder %v3894, 8.507059e+37
  %v3896 = vand.u32 %v3875, 2147483648
  %v3897 = vor.u32 1.1754944e-38, %v3896
  %v3898 = vsel %vm3895, %v3897, %v3893
  %v3899 = vmul.f32 %v3866, %v3898
  %v3900 = vrcp.pop %v3878
  %v3901 = vmul.f32 %v3878, %v3900
  %v3902 = vsub.f32 1.0, %v3901
  %v3903 = vmul.f32 %v3900, %v3902
  %v3904 = vadd.f32 %v3900, %v3903
  %vm3905 = vweird.f32 %v3878
  %vm3906 = vweird.f32 %v3900
  %vm3907 = vmor %vm3905, %vm3906
  %v3908 = vsel %vm3907, %v3900, %v3904
  %v3909 = vand.u32 2147483647, %v3878
  %vm3910 = vcmp.eq.f32.partialorder %v3909, 8.507059e+37
  %v3911 = vand.u32 %v3878, 2147483648
  %v3912 = vor.u32 1.1754944e-38, %v3911
  %v3913 = vsel %vm3910, %v3912, %v3908
  %v3914 = vmul.f32 %v3868, %v3913
  %v3915 = vrcp.pop %v3881
  %v3916 = vmul.f32 %v3881, %v3915
  %v3917 = vsub.f32 1.0, %v3916
  %v3918 = vmul.f32 %v3915, %v3917
  %v3919 = vadd.f32 %v3915, %v3918
  %vm3920 = vweird.f32 %v3881
  %vm3921 = vweird.f32 %v3915
  %vm3922 = vmor %vm3920, %vm3921
  %v3923 = vsel %vm3922, %v3915, %v3919
  %v3924 = vand.u32 2147483647, %v3881
  %vm3925 = vcmp.eq.f32.partialorder %v3924, 8.507059e+37
  %v3926 = vand.u32 %v3881, 2147483648
  %v3927 = vor.u32 1.1754944e-38, %v3926
  %v3928 = vsel %vm3925, %v3927, %v3923
  %v3929 = vmul.f32 %v3870, %v3928
  %v3930 = vrcp.pop %v3884
  %v3931 = vmul.f32 %v3884, %v3930
  %v3932 = vsub.f32 1.0, %v3931
  %v3933 = vmul.f32 %v3930, %v3932
  %v3934 = vadd.f32 %v3930, %v3933
  %vm3935 = vweird.f32 %v3884
  %vm3936 = vweird.f32 %v3930
  %vm3937 = vmor %vm3935, %vm3936
  %v3938 = vsel %vm3937, %v3930, %v3934
  %v3939 = vand.u32 2147483647, %v3884
  %vm3940 = vcmp.eq.f32.partialorder %v3939, 8.507059e+37
  %v3941 = vand.u32 %v3884, 2147483648
  %v3942 = vor.u32 1.1754944e-38, %v3941
  %v3943 = vsel %vm3940, %v3942, %v3938
  %v3944 = vmul.f32 %v3872, %v3943
  %v3945 = vadd.f32 %v3539, %v3899
  %v3946 = vadd.f32 %v3540, %v3914
  %v3947 = vadd.f32 %v3541, %v3929
  %v3948 = vadd.f32 %v3542, %v3944
  %3949 = vrot.lane.b32.xlu0 %v2987, 48
  %v3950 = vpop.permute.xlu0 %3949
  %v3953 = vsel %vm434, %v3899, 0
  %3955 = vmatpush.msra.mxu0 0.0
  %3956 = vmatpush.msra.mxu0 0.0
  %3957 = vmatpush.msra.mxu0 0.0
  %3958 = vmatpush.msra.mxu0 0.0
  %3959 = vmatpush.msra.mxu0 0.0
  %3960 = vmatpush.msra.mxu0 0.0
  %3961 = vmatpush.msra.mxu0 0.0
  %3962 = vmatpush.msra.mxu0 0.0
  %3963 = vmatpush.msra.mxu0 0.0
  %3964 = vmatpush.msra.mxu0 0.0
  %3965 = vmatpush.msra.mxu0 0.0
  %3966 = vmatpush.msra.mxu0 0.0
  %3967 = vmatpush.msra.mxu0 0.0
  %3968 = vmatpush.msra.mxu0 0.0
  %3969 = vmatpush.msra.mxu0 0.0
  %3970 = vmatpush.msra.mxu0 %v3950
  %3971 = vmatmul.f32.gmra.mxu0 %v3953
  %v3972 = vpop.f32.mrf.mxu0
  %v3973 = vadd.f32 0.0, %v3972
  %3974 = vdwg.mxu0
  %3975 = vrot.lane.b32.xlu0 %v2990, 48
  %v3976 = vpop.permute.xlu0 %3975
  %v3979 = vsel %vm434, %v3914, 0
  %3981 = vmatpush.msra.mxu0 0.0
  %3982 = vmatpush.msra.mxu0 0.0
  %3983 = vmatpush.msra.mxu0 0.0
  %3984 = vmatpush.msra.mxu0 0.0
  %3985 = vmatpush.msra.mxu0 0.0
  %3986 = vmatpush.msra.mxu0 0.0
  %3987 = vmatpush.msra.mxu0 0.0
  %3988 = vmatpush.msra.mxu0 0.0
  %3989 = vmatpush.msra.mxu0 0.0
  %3990 = vmatpush.msra.mxu0 0.0
  %3991 = vmatpush.msra.mxu0 0.0
  %3992 = vmatpush.msra.mxu0 0.0
  %3993 = vmatpush.msra.mxu0 0.0
  %3994 = vmatpush.msra.mxu0 0.0
  %3995 = vmatpush.msra.mxu0 0.0
  %3996 = vmatpush.msra.mxu0 %v3976
  %3997 = vmatmul.f32.gmra.mxu0 %v3979
  %v3998 = vpop.f32.mrf.mxu0
  %v3999 = vadd.f32 0.0, %v3998
  %4000 = vdwg.mxu0
  %4001 = vrot.lane.b32.xlu0 %v2993, 48
  %v4002 = vpop.permute.xlu0 %4001
  %v4005 = vsel %vm434, %v3929, 0
  %4007 = vmatpush.msra.mxu0 0.0
  %4008 = vmatpush.msra.mxu0 0.0
  %4009 = vmatpush.msra.mxu0 0.0
  %4010 = vmatpush.msra.mxu0 0.0
  %4011 = vmatpush.msra.mxu0 0.0
  %4012 = vmatpush.msra.mxu0 0.0
  %4013 = vmatpush.msra.mxu0 0.0
  %4014 = vmatpush.msra.mxu0 0.0
  %4015 = vmatpush.msra.mxu0 0.0
  %4016 = vmatpush.msra.mxu0 0.0
  %4017 = vmatpush.msra.mxu0 0.0
  %4018 = vmatpush.msra.mxu0 0.0
  %4019 = vmatpush.msra.mxu0 0.0
  %4020 = vmatpush.msra.mxu0 0.0
  %4021 = vmatpush.msra.mxu0 0.0
  %4022 = vmatpush.msra.mxu0 %v4002
  %4023 = vmatmul.f32.gmra.mxu0 %v4005
  %v4024 = vpop.f32.mrf.mxu0
  %v4025 = vadd.f32 0.0, %v4024
  %4026 = vdwg.mxu0
  %4027 = vrot.lane.b32.xlu0 %v2996, 48
  %v4028 = vpop.permute.xlu0 %4027
  %v4031 = vsel %vm434, %v3944, 0
  %4033 = vmatpush.msra.mxu0 0.0
  %4034 = vmatpush.msra.mxu0 0.0
  %4035 = vmatpush.msra.mxu0 0.0
  %4036 = vmatpush.msra.mxu0 0.0
  %4037 = vmatpush.msra.mxu0 0.0
  %4038 = vmatpush.msra.mxu0 0.0
  %4039 = vmatpush.msra.mxu0 0.0
  %4040 = vmatpush.msra.mxu0 0.0
  %4041 = vmatpush.msra.mxu0 0.0
  %4042 = vmatpush.msra.mxu0 0.0
  %4043 = vmatpush.msra.mxu0 0.0
  %4044 = vmatpush.msra.mxu0 0.0
  %4045 = vmatpush.msra.mxu0 0.0
  %4046 = vmatpush.msra.mxu0 0.0
  %4047 = vmatpush.msra.mxu0 0.0
  %4048 = vmatpush.msra.mxu0 %v4028
  %4049 = vmatmul.f32.gmra.mxu0 %v4031
  %v4050 = vpop.f32.mrf.mxu0
  %v4051 = vadd.f32 0.0, %v4050
  %4052 = vdwg.mxu0
  %v4054 = vsel %vm434, %v3973, 0
  %v4057 = vsel %vm434, %v3999, 0
  %v4060 = vsel %vm434, %v4025, 0
  %v4063 = vsel %vm434, %v4051, 0
  %4065 = vmatpush.msra.mxu0 0.0
  %4066 = vmatpush.msra.mxu0 0.0
  %4067 = vmatpush.msra.mxu0 0.0
  %4068 = vmatpush.msra.mxu0 0.0
  %4069 = vmatpush.msra.mxu0 0.0
  %4070 = vmatpush.msra.mxu0 0.0
  %4071 = vmatpush.msra.mxu0 0.0
  %4072 = vmatpush.msra.mxu0 0.0
  %4073 = vmatpush.msra.mxu0 0.0
  %4074 = vmatpush.msra.mxu0 0.0
  %4075 = vmatpush.msra.mxu0 0.0
  %4076 = vmatpush.msra.mxu0 0.0
  %4077 = vmatpush.msra.mxu0 0.0
  %4078 = vmatpush.msra.mxu0 0.0
  %4079 = vmatpush.msra.mxu0 0.0
  %4080 = vmatpush.msra.mxu0 %v3001
  %4081 = vmatmul.f32.gmra.mxu0 %v4054
  %v4082 = vpop.f32.mrf.mxu0
  %v4083 = vadd.f32 0.0, %v4082
  %4084 = vmatmul.f32.gmra.mxu0 %v4057
  %v4085 = vpop.f32.mrf.mxu0
  %v4086 = vadd.f32 0.0, %v4085
  %4087 = vmatmul.f32.gmra.mxu0 %v4060
  %v4088 = vpop.f32.mrf.mxu0
  %v4089 = vadd.f32 0.0, %v4088
  %4090 = vmatmul.f32.gmra.mxu0 %v4063
  %v4091 = vpop.f32.mrf.mxu0
  %v4092 = vadd.f32 0.0, %v4091
  %4093 = vdwg.mxu0
  %v4094 = vadd.f32 %v3718, %v4083
  %v4095 = vadd.f32 %v3721, %v4086
  %v4096 = vadd.f32 %v3724, %v4089
  %v4097 = vadd.f32 %v3727, %v4092
  %4098 = vrot.lane.b32.xlu0 %v2987, 104
  %v4099 = vpop.permute.xlu0 %4098
  %4100 = vrot.lane.b32.xlu0 %v2987, 72
  %v4101 = vpop.permute.xlu0 %4100
  %v4102 = vsel %vm434, %v4099, 0
  %v4104 = vsel %vm434, %v4101, 0
  %4106 = vmatpush.xpose.msra.mxu0 0.0
  %4107 = vmatpush.xpose.msra.mxu0 0.0
  %4108 = vmatpush.xpose.msra.mxu0 0.0
  %4109 = vmatpush.xpose.msra.mxu0 0.0
  %4110 = vmatpush.xpose.msra.mxu0 0.0
  %4111 = vmatpush.xpose.msra.mxu0 0.0
  %4112 = vmatpush.xpose.msra.mxu0 0.0
  %4113 = vmatpush.xpose.msra.mxu0 0.0
  %4114 = vmatpush.xpose.msra.mxu0 0.0
  %4115 = vmatpush.xpose.msra.mxu0 0.0
  %4116 = vmatpush.xpose.msra.mxu0 0.0
  %4117 = vmatpush.xpose.msra.mxu0 0.0
  %4118 = vmatpush.xpose.msra.mxu0 0.0
  %4119 = vmatpush.xpose.msra.mxu0 0.0
  %4120 = vmatpush.xpose.msra.mxu0 0.0
  %4121 = vmatpush.xpose.msra.mxu0 %v4104
  %4122 = vmatmul.f32.gmra.mxu0 %v4102
  %v4123 = vpop.f32.mrf.mxu0
  %v4124 = vadd.f32 0.0, %v4123
  %4125 = vdwg.mxu0
  %4126 = vrot.lane.b32.xlu0 %v2990, 104
  %v4127 = vpop.permute.xlu0 %4126
  %4128 = vrot.lane.b32.xlu0 %v2990, 72
  %v4129 = vpop.permute.xlu0 %4128
  %v4130 = vsel %vm434, %v4127, 0
  %v4132 = vsel %vm434, %v4129, 0
  %4134 = vmatpush.xpose.msra.mxu0 0.0
  %4135 = vmatpush.xpose.msra.mxu0 0.0
  %4136 = vmatpush.xpose.msra.mxu0 0.0
  %4137 = vmatpush.xpose.msra.mxu0 0.0
  %4138 = vmatpush.xpose.msra.mxu0 0.0
  %4139 = vmatpush.xpose.msra.mxu0 0.0
  %4140 = vmatpush.xpose.msra.mxu0 0.0
  %4141 = vmatpush.xpose.msra.mxu0 0.0
  %4142 = vmatpush.xpose.msra.mxu0 0.0
  %4143 = vmatpush.xpose.msra.mxu0 0.0
  %4144 = vmatpush.xpose.msra.mxu0 0.0
  %4145 = vmatpush.xpose.msra.mxu0 0.0
  %4146 = vmatpush.xpose.msra.mxu0 0.0
  %4147 = vmatpush.xpose.msra.mxu0 0.0
  %4148 = vmatpush.xpose.msra.mxu0 0.0
  %4149 = vmatpush.xpose.msra.mxu0 %v4132
  %4150 = vmatmul.f32.gmra.mxu0 %v4130
  %v4151 = vpop.f32.mrf.mxu0
  %v4152 = vadd.f32 0.0, %v4151
  %4153 = vdwg.mxu0
  %4154 = vrot.lane.b32.xlu0 %v2993, 104
  %v4155 = vpop.permute.xlu0 %4154
  %4156 = vrot.lane.b32.xlu0 %v2993, 72
  %v4157 = vpop.permute.xlu0 %4156
  %v4158 = vsel %vm434, %v4155, 0
  %v4160 = vsel %vm434, %v4157, 0
  %4162 = vmatpush.xpose.msra.mxu0 0.0
  %4163 = vmatpush.xpose.msra.mxu0 0.0
  %4164 = vmatpush.xpose.msra.mxu0 0.0
  %4165 = vmatpush.xpose.msra.mxu0 0.0
  %4166 = vmatpush.xpose.msra.mxu0 0.0
  %4167 = vmatpush.xpose.msra.mxu0 0.0
  %4168 = vmatpush.xpose.msra.mxu0 0.0
  %4169 = vmatpush.xpose.msra.mxu0 0.0
  %4170 = vmatpush.xpose.msra.mxu0 0.0
  %4171 = vmatpush.xpose.msra.mxu0 0.0
  %4172 = vmatpush.xpose.msra.mxu0 0.0
  %4173 = vmatpush.xpose.msra.mxu0 0.0
  %4174 = vmatpush.xpose.msra.mxu0 0.0
  %4175 = vmatpush.xpose.msra.mxu0 0.0
  %4176 = vmatpush.xpose.msra.mxu0 0.0
  %4177 = vmatpush.xpose.msra.mxu0 %v4160
  %4178 = vmatmul.f32.gmra.mxu0 %v4158
  %v4179 = vpop.f32.mrf.mxu0
  %v4180 = vadd.f32 0.0, %v4179
  %4181 = vdwg.mxu0
  %4182 = vrot.lane.b32.xlu0 %v2996, 104
  %v4183 = vpop.permute.xlu0 %4182
  %4184 = vrot.lane.b32.xlu0 %v2996, 72
  %v4185 = vpop.permute.xlu0 %4184
  %v4186 = vsel %vm434, %v4183, 0
  %v4188 = vsel %vm434, %v4185, 0
  %4190 = vmatpush.xpose.msra.mxu0 0.0
  %4191 = vmatpush.xpose.msra.mxu0 0.0
  %4192 = vmatpush.xpose.msra.mxu0 0.0
  %4193 = vmatpush.xpose.msra.mxu0 0.0
  %4194 = vmatpush.xpose.msra.mxu0 0.0
  %4195 = vmatpush.xpose.msra.mxu0 0.0
  %4196 = vmatpush.xpose.msra.mxu0 0.0
  %4197 = vmatpush.xpose.msra.mxu0 0.0
  %4198 = vmatpush.xpose.msra.mxu0 0.0
  %4199 = vmatpush.xpose.msra.mxu0 0.0
  %4200 = vmatpush.xpose.msra.mxu0 0.0
  %4201 = vmatpush.xpose.msra.mxu0 0.0
  %4202 = vmatpush.xpose.msra.mxu0 0.0
  %4203 = vmatpush.xpose.msra.mxu0 0.0
  %4204 = vmatpush.xpose.msra.mxu0 0.0
  %4205 = vmatpush.xpose.msra.mxu0 %v4188
  %4206 = vmatmul.f32.gmra.mxu0 %v4186
  %v4207 = vpop.f32.mrf.mxu0
  %v4208 = vadd.f32 0.0, %v4207
  %4209 = vdwg.mxu0
  %v4210 = vmul.f32 %v4124, 0.35355338
  %v4211 = vmul.f32 %v4152, 0.35355338
  %v4212 = vmul.f32 %v4180, 0.35355338
  %v4213 = vmul.f32 %v4208, 0.35355338
  %v4214 = vadd.f32 %v4210, %v548
  %v4215 = vadd.f32 %v4211, %v549
  %v4216 = vadd.f32 %v4212, %v550
  %v4217 = vadd.f32 %v4213, %v551
  %v4218 = vsel %vm434, %v4214, -inf
  %4219 = vmax.xlane.f32.xlu0 %v4218
  %v4220 = vpop.xlane.xlu0 %4219
  %v4221 = vsel %vm434, %v4215, -inf
  %4222 = vmax.xlane.f32.xlu0 %v4221
  %v4223 = vpop.xlane.xlu0 %4222
  %v4224 = vsel %vm434, %v4216, -inf
  %4225 = vmax.xlane.f32.xlu0 %v4224
  %v4226 = vpop.xlane.xlu0 %4225
  %v4227 = vsel %vm434, %v4217, -inf
  %4228 = vmax.xlane.f32.xlu0 %v4227
  %v4229 = vpop.xlane.xlu0 %4228
  %v4230 = vsub.f32 %v4214, %v4220
  %v4231 = vsub.f32 %v4215, %v4223
  %v4232 = vsub.f32 %v4216, %v4226
  %v4233 = vsub.f32 %v4217, %v4229
  %v4234 = vmul.f32 %v4230, 1.442695
  %v4235 = vpow.pop %v4234
  %v4236 = vmul.f32 %v4231, 1.442695
  %v4237 = vpow.pop %v4236
  %v4238 = vmul.f32 %v4232, 1.442695
  %v4239 = vpow.pop %v4238
  %v4240 = vmul.f32 %v4233, 1.442695
  %v4241 = vpow.pop %v4240
  %v4242 = vsel %vm434, %v4235, 0.0
  %4243 = vadd.xlane.f32.xlu0 %v4242
  %v4244 = vpop.xlane.xlu0 %4243
  %v4245 = vsel %vm434, %v4237, 0.0
  %4246 = vadd.xlane.f32.xlu0 %v4245
  %v4247 = vpop.xlane.xlu0 %4246
  %v4248 = vsel %vm434, %v4239, 0.0
  %4249 = vadd.xlane.f32.xlu0 %v4248
  %v4250 = vpop.xlane.xlu0 %4249
  %v4251 = vsel %vm434, %v4241, 0.0
  %4252 = vadd.xlane.f32.xlu0 %v4251
  %v4253 = vpop.xlane.xlu0 %4252
  %v4254 = vrcp.pop %v4244
  %v4255 = vmul.f32 %v4244, %v4254
  %v4256 = vsub.f32 1.0, %v4255
  %v4257 = vmul.f32 %v4254, %v4256
  %v4258 = vadd.f32 %v4254, %v4257
  %vm4259 = vweird.f32 %v4244
  %vm4260 = vweird.f32 %v4254
  %vm4261 = vmor %vm4259, %vm4260
  %v4262 = vsel %vm4261, %v4254, %v4258
  %v4263 = vand.u32 2147483647, %v4244
  %vm4264 = vcmp.eq.f32.partialorder %v4263, 8.507059e+37
  %v4265 = vand.u32 %v4244, 2147483648
  %v4266 = vor.u32 1.1754944e-38, %v4265
  %v4267 = vsel %vm4264, %v4266, %v4262
  %v4268 = vmul.f32 %v4235, %v4267
  %v4269 = vrcp.pop %v4247
  %v4270 = vmul.f32 %v4247, %v4269
  %v4271 = vsub.f32 1.0, %v4270
  %v4272 = vmul.f32 %v4269, %v4271
  %v4273 = vadd.f32 %v4269, %v4272
  %vm4274 = vweird.f32 %v4247
  %vm4275 = vweird.f32 %v4269
  %vm4276 = vmor %vm4274, %vm4275
  %v4277 = vsel %vm4276, %v4269, %v4273
  %v4278 = vand.u32 2147483647, %v4247
  %vm4279 = vcmp.eq.f32.partialorder %v4278, 8.507059e+37
  %v4280 = vand.u32 %v4247, 2147483648
  %v4281 = vor.u32 1.1754944e-38, %v4280
  %v4282 = vsel %vm4279, %v4281, %v4277
  %v4283 = vmul.f32 %v4237, %v4282
  %v4284 = vrcp.pop %v4250
  %v4285 = vmul.f32 %v4250, %v4284
  %v4286 = vsub.f32 1.0, %v4285
  %v4287 = vmul.f32 %v4284, %v4286
  %v4288 = vadd.f32 %v4284, %v4287
  %vm4289 = vweird.f32 %v4250
  %vm4290 = vweird.f32 %v4284
  %vm4291 = vmor %vm4289, %vm4290
  %v4292 = vsel %vm4291, %v4284, %v4288
  %v4293 = vand.u32 2147483647, %v4250
  %vm4294 = vcmp.eq.f32.partialorder %v4293, 8.507059e+37
  %v4295 = vand.u32 %v4250, 2147483648
  %v4296 = vor.u32 1.1754944e-38, %v4295
  %v4297 = vsel %vm4294, %v4296, %v4292
  %v4298 = vmul.f32 %v4239, %v4297
  %v4299 = vrcp.pop %v4253
  %v4300 = vmul.f32 %v4253, %v4299
  %v4301 = vsub.f32 1.0, %v4300
  %v4302 = vmul.f32 %v4299, %v4301
  %v4303 = vadd.f32 %v4299, %v4302
  %vm4304 = vweird.f32 %v4253
  %vm4305 = vweird.f32 %v4299
  %vm4306 = vmor %vm4304, %vm4305
  %v4307 = vsel %vm4306, %v4299, %v4303
  %v4308 = vand.u32 2147483647, %v4253
  %vm4309 = vcmp.eq.f32.partialorder %v4308, 8.507059e+37
  %v4310 = vand.u32 %v4253, 2147483648
  %v4311 = vor.u32 1.1754944e-38, %v4310
  %v4312 = vsel %vm4309, %v4311, %v4307
  %v4313 = vmul.f32 %v4241, %v4312
  %v4314 = vadd.f32 %v3945, %v4268
  %v4315 = vadd.f32 %v3946, %v4283
  %v4316 = vadd.f32 %v3947, %v4298
  %v4317 = vadd.f32 %v3948, %v4313
  %4318 = vrot.lane.b32.xlu0 %v2987, 40
  %v4319 = vpop.permute.xlu0 %4318
  %v4322 = vsel %vm434, %v4268, 0
  %4324 = vmatpush.msra.mxu0 0.0
  %4325 = vmatpush.msra.mxu0 0.0
  %4326 = vmatpush.msra.mxu0 0.0
  %4327 = vmatpush.msra.mxu0 0.0
  %4328 = vmatpush.msra.mxu0 0.0
  %4329 = vmatpush.msra.mxu0 0.0
  %4330 = vmatpush.msra.mxu0 0.0
  %4331 = vmatpush.msra.mxu0 0.0
  %4332 = vmatpush.msra.mxu0 0.0
  %4333 = vmatpush.msra.mxu0 0.0
  %4334 = vmatpush.msra.mxu0 0.0
  %4335 = vmatpush.msra.mxu0 0.0
  %4336 = vmatpush.msra.mxu0 0.0
  %4337 = vmatpush.msra.mxu0 0.0
  %4338 = vmatpush.msra.mxu0 0.0
  %4339 = vmatpush.msra.mxu0 %v4319
  %4340 = vmatmul.f32.gmra.mxu0 %v4322
  %v4341 = vpop.f32.mrf.mxu0
  %v4342 = vadd.f32 0.0, %v4341
  %4343 = vdwg.mxu0
  %4344 = vrot.lane.b32.xlu0 %v2990, 40
  %v4345 = vpop.permute.xlu0 %4344
  %v4348 = vsel %vm434, %v4283, 0
  %4350 = vmatpush.msra.mxu0 0.0
  %4351 = vmatpush.msra.mxu0 0.0
  %4352 = vmatpush.msra.mxu0 0.0
  %4353 = vmatpush.msra.mxu0 0.0
  %4354 = vmatpush.msra.mxu0 0.0
  %4355 = vmatpush.msra.mxu0 0.0
  %4356 = vmatpush.msra.mxu0 0.0
  %4357 = vmatpush.msra.mxu0 0.0
  %4358 = vmatpush.msra.mxu0 0.0
  %4359 = vmatpush.msra.mxu0 0.0
  %4360 = vmatpush.msra.mxu0 0.0
  %4361 = vmatpush.msra.mxu0 0.0
  %4362 = vmatpush.msra.mxu0 0.0
  %4363 = vmatpush.msra.mxu0 0.0
  %4364 = vmatpush.msra.mxu0 0.0
  %4365 = vmatpush.msra.mxu0 %v4345
  %4366 = vmatmul.f32.gmra.mxu0 %v4348
  %v4367 = vpop.f32.mrf.mxu0
  %v4368 = vadd.f32 0.0, %v4367
  %4369 = vdwg.mxu0
  %4370 = vrot.lane.b32.xlu0 %v2993, 40
  %v4371 = vpop.permute.xlu0 %4370
  %v4374 = vsel %vm434, %v4298, 0
  %4376 = vmatpush.msra.mxu0 0.0
  %4377 = vmatpush.msra.mxu0 0.0
  %4378 = vmatpush.msra.mxu0 0.0
  %4379 = vmatpush.msra.mxu0 0.0
  %4380 = vmatpush.msra.mxu0 0.0
  %4381 = vmatpush.msra.mxu0 0.0
  %4382 = vmatpush.msra.mxu0 0.0
  %4383 = vmatpush.msra.mxu0 0.0
  %4384 = vmatpush.msra.mxu0 0.0
  %4385 = vmatpush.msra.mxu0 0.0
  %4386 = vmatpush.msra.mxu0 0.0
  %4387 = vmatpush.msra.mxu0 0.0
  %4388 = vmatpush.msra.mxu0 0.0
  %4389 = vmatpush.msra.mxu0 0.0
  %4390 = vmatpush.msra.mxu0 0.0
  %4391 = vmatpush.msra.mxu0 %v4371
  %4392 = vmatmul.f32.gmra.mxu0 %v4374
  %v4393 = vpop.f32.mrf.mxu0
  %v4394 = vadd.f32 0.0, %v4393
  %4395 = vdwg.mxu0
  %4396 = vrot.lane.b32.xlu0 %v2996, 40
  %v4397 = vpop.permute.xlu0 %4396
  %v4400 = vsel %vm434, %v4313, 0
  %4402 = vmatpush.msra.mxu0 0.0
  %4403 = vmatpush.msra.mxu0 0.0
  %4404 = vmatpush.msra.mxu0 0.0
  %4405 = vmatpush.msra.mxu0 0.0
  %4406 = vmatpush.msra.mxu0 0.0
  %4407 = vmatpush.msra.mxu0 0.0
  %4408 = vmatpush.msra.mxu0 0.0
  %4409 = vmatpush.msra.mxu0 0.0
  %4410 = vmatpush.msra.mxu0 0.0
  %4411 = vmatpush.msra.mxu0 0.0
  %4412 = vmatpush.msra.mxu0 0.0
  %4413 = vmatpush.msra.mxu0 0.0
  %4414 = vmatpush.msra.mxu0 0.0
  %4415 = vmatpush.msra.mxu0 0.0
  %4416 = vmatpush.msra.mxu0 0.0
  %4417 = vmatpush.msra.mxu0 %v4397
  %4418 = vmatmul.f32.gmra.mxu0 %v4400
  %v4419 = vpop.f32.mrf.mxu0
  %v4420 = vadd.f32 0.0, %v4419
  %4421 = vdwg.mxu0
  %v4423 = vsel %vm434, %v4342, 0
  %v4426 = vsel %vm434, %v4368, 0
  %v4429 = vsel %vm434, %v4394, 0
  %v4432 = vsel %vm434, %v4420, 0
  %4434 = vmatpush.msra.mxu0 0.0
  %4435 = vmatpush.msra.mxu0 0.0
  %4436 = vmatpush.msra.mxu0 0.0
  %4437 = vmatpush.msra.mxu0 0.0
  %4438 = vmatpush.msra.mxu0 0.0
  %4439 = vmatpush.msra.mxu0 0.0
  %4440 = vmatpush.msra.mxu0 0.0
  %4441 = vmatpush.msra.mxu0 0.0
  %4442 = vmatpush.msra.mxu0 0.0
  %4443 = vmatpush.msra.mxu0 0.0
  %4444 = vmatpush.msra.mxu0 0.0
  %4445 = vmatpush.msra.mxu0 0.0
  %4446 = vmatpush.msra.mxu0 0.0
  %4447 = vmatpush.msra.mxu0 0.0
  %4448 = vmatpush.msra.mxu0 0.0
  %4449 = vmatpush.msra.mxu0 %v3002
  %4450 = vmatmul.f32.gmra.mxu0 %v4423
  %v4451 = vpop.f32.mrf.mxu0
  %v4452 = vadd.f32 0.0, %v4451
  %4453 = vmatmul.f32.gmra.mxu0 %v4426
  %v4454 = vpop.f32.mrf.mxu0
  %v4455 = vadd.f32 0.0, %v4454
  %4456 = vmatmul.f32.gmra.mxu0 %v4429
  %v4457 = vpop.f32.mrf.mxu0
  %v4458 = vadd.f32 0.0, %v4457
  %4459 = vmatmul.f32.gmra.mxu0 %v4432
  %v4460 = vpop.f32.mrf.mxu0
  %v4461 = vadd.f32 0.0, %v4460
  %4462 = vdwg.mxu0
  %v4463 = vadd.f32 %v4094, %v4452
  %v4464 = vadd.f32 %v4095, %v4455
  %v4465 = vadd.f32 %v4096, %v4458
  %v4466 = vadd.f32 %v4097, %v4461
  %s4467 = scalar_lea.vmem %s31, 1
  %v4468 = vld [vmem:[%s4467] sm:$0x1]
  %v4470 = vperm.slane %v4468, 0
  %v4472 = vadd.f32 %v4463, %v4470
  %v4473 = vadd.f32 %v4464, %v4470
  %v4474 = vadd.f32 %v4465, %v4470
  %v4475 = vadd.f32 %v4466, %v4470
  %v4476 = vmul.f32 %v4314, 0.25
  %v4477 = vmul.f32 %v4315, 0.25
  %v4478 = vmul.f32 %v4316, 0.25
  %v4479 = vmul.f32 %v4317, 0.25
  %v4480 = vsel %vm1922, %v4476, 0.0
  %v4481 = vsel %vm1922, %v4477, 0.0
  %v4482 = vsel %vm1922, %v4478, 0.0
  %v4483 = vsel %vm1922, %v4479, 0.0
  %v4484 = vsel %vm434, %v4480, -inf
  %4485 = vmax.xlane.f32.xlu0 %v4484
  %v4486 = vpop.xlane.xlu0 %4485
  %v4487 = vsel %vm434, %v4481, -inf
  %4488 = vmax.xlane.f32.xlu0 %v4487
  %v4489 = vpop.xlane.xlu0 %4488
  %v4490 = vsel %vm434, %v4482, -inf
  %4491 = vmax.xlane.f32.xlu0 %v4490
  %v4492 = vpop.xlane.xlu0 %4491
  %v4493 = vsel %vm434, %v4483, -inf
  %4494 = vmax.xlane.f32.xlu0 %v4493
  %v4495 = vpop.xlane.xlu0 %4494
  %v4500 = vperm.slane %v4486, %v371
  %v4501 = vperm.slane %v4489, %v371
  %v4502 = vperm.slane %v4492, %v371
  %v4503 = vperm.slane %v4495, %v371
  %v4504 = vsel %vm1947, %v4501, %v4500
  %v4505 = vsel %vm1949, %v4502, %v4504
  %v4506 = vsel %vm1951, %v4503, %v4505
  %v4508 = vsel %vm1922, %v4506, 0.0
  %v4509 = vsel %vm1955, %v4508, -inf
  %4510 = vmax.xlane.f32.xlu0 %v4509
  %v4511 = vpop.xlane.xlu0 %4510
  %v4512 = vld [vmem:[%s49] sm:$0x1]
  %v4513 = vperm.slane %v4512, 0
  %v4514 = vmul.f32 %v4511, %v4513
  %v4515 = vadd.f32 %v2175, %v4514
  %v4516 = vsel %vm1965, %v4506, 0.0
  %v4517 = vsel %vm1955, %v4516, -inf
  %4518 = vmax.xlane.f32.xlu0 %v4517
  %v4519 = vpop.xlane.xlu0 %4518
  %v4520 = vld [vmem:[%s49 + $0x4] sm:$0x1]
  %v4521 = vperm.slane %v4520, 0
  %v4522 = vmul.f32 %v4519, %v4521
  %v4523 = vadd.f32 %v4515, %v4522
  %v4524 = vsel %vm1976, %v4506, 0.0
  %v4525 = vsel %vm1955, %v4524, -inf
  %4526 = vmax.xlane.f32.xlu0 %v4525
  %v4527 = vpop.xlane.xlu0 %4526
  %v4528 = vld [vmem:[%s49 + $0x8] sm:$0x1]
  %v4529 = vperm.slane %v4528, 0
  %v4530 = vmul.f32 %v4527, %v4529
  %v4531 = vadd.f32 %v4523, %v4530
  %v4532 = vsel %vm1987, %v4506, 0.0
  %v4533 = vsel %vm1955, %v4532, -inf
  %4534 = vmax.xlane.f32.xlu0 %v4533
  %v4535 = vpop.xlane.xlu0 %4534
  %v4536 = vld [vmem:[%s49 + $0xc] sm:$0x1]
  %v4537 = vperm.slane %v4536, 0
  %v4538 = vmul.f32 %v4535, %v4537
  %v4539 = vadd.f32 %v4531, %v4538
  %v4540 = vsel %vm1965, %v4476, 0.0
  %v4541 = vsel %vm1965, %v4477, 0.0
  %v4542 = vsel %vm1965, %v4478, 0.0
  %v4543 = vsel %vm1965, %v4479, 0.0
  %v4544 = vsel %vm434, %v4540, -inf
  %4545 = vmax.xlane.f32.xlu0 %v4544
  %v4546 = vpop.xlane.xlu0 %4545
  %v4547 = vsel %vm434, %v4541, -inf
  %4548 = vmax.xlane.f32.xlu0 %v4547
  %v4549 = vpop.xlane.xlu0 %4548
  %v4550 = vsel %vm434, %v4542, -inf
  %4551 = vmax.xlane.f32.xlu0 %v4550
  %v4552 = vpop.xlane.xlu0 %4551
  %v4553 = vsel %vm434, %v4543, -inf
  %4554 = vmax.xlane.f32.xlu0 %v4553
  %v4555 = vpop.xlane.xlu0 %4554
  %v4560 = vperm.slane %v4546, %v371
  %v4561 = vperm.slane %v4549, %v371
  %v4562 = vperm.slane %v4552, %v371
  %v4563 = vperm.slane %v4555, %v371
  %v4564 = vsel %vm1947, %v4561, %v4560
  %v4565 = vsel %vm1949, %v4562, %v4564
  %v4566 = vsel %vm1951, %v4563, %v4565
  %v4568 = vsel %vm1922, %v4566, 0.0
  %v4569 = vsel %vm1955, %v4568, -inf
  %4570 = vmax.xlane.f32.xlu0 %v4569
  %v4571 = vpop.xlane.xlu0 %4570
  %v4572 = vld [vmem:[%s49 + $0x1] sm:$0x1]
  %v4573 = vperm.slane %v4572, 0
  %v4574 = vmul.f32 %v4571, %v4573
  %v4575 = vadd.f32 %v4539, %v4574
  %v4576 = vsel %vm1965, %v4566, 0.0
  %v4577 = vsel %vm1955, %v4576, -inf
  %4578 = vmax.xlane.f32.xlu0 %v4577
  %v4579 = vpop.xlane.xlu0 %4578
  %v4580 = vld [vmem:[%s49 + $0x5] sm:$0x1]
  %v4581 = vperm.slane %v4580, 0
  %v4582 = vmul.f32 %v4579, %v4581
  %v4583 = vadd.f32 %v4575, %v4582
  %v4584 = vsel %vm1976, %v4566, 0.0
  %v4585 = vsel %vm1955, %v4584, -inf
  %4586 = vmax.xlane.f32.xlu0 %v4585
  %v4587 = vpop.xlane.xlu0 %4586
  %v4588 = vld [vmem:[%s49 + $0x9] sm:$0x1]
  %v4589 = vperm.slane %v4588, 0
  %v4590 = vmul.f32 %v4587, %v4589
  %v4591 = vadd.f32 %v4583, %v4590
  %v4592 = vsel %vm1987, %v4566, 0.0
  %v4593 = vsel %vm1955, %v4592, -inf
  %4594 = vmax.xlane.f32.xlu0 %v4593
  %v4595 = vpop.xlane.xlu0 %4594
  %v4596 = vld [vmem:[%s49 + $0xd] sm:$0x1]
  %v4597 = vperm.slane %v4596, 0
  %v4598 = vmul.f32 %v4595, %v4597
  %v4599 = vadd.f32 %v4591, %v4598
  %v4600 = vsel %vm1976, %v4476, 0.0
  %v4601 = vsel %vm1976, %v4477, 0.0
  %v4602 = vsel %vm1976, %v4478, 0.0
  %v4603 = vsel %vm1976, %v4479, 0.0
  %v4604 = vsel %vm434, %v4600, -inf
  %4605 = vmax.xlane.f32.xlu0 %v4604
  %v4606 = vpop.xlane.xlu0 %4605
  %v4607 = vsel %vm434, %v4601, -inf
  %4608 = vmax.xlane.f32.xlu0 %v4607
  %v4609 = vpop.xlane.xlu0 %4608
  %v4610 = vsel %vm434, %v4602, -inf
  %4611 = vmax.xlane.f32.xlu0 %v4610
  %v4612 = vpop.xlane.xlu0 %4611
  %v4613 = vsel %vm434, %v4603, -inf
  %4614 = vmax.xlane.f32.xlu0 %v4613
  %v4615 = vpop.xlane.xlu0 %4614
  %v4620 = vperm.slane %v4606, %v371
  %v4621 = vperm.slane %v4609, %v371
  %v4622 = vperm.slane %v4612, %v371
  %v4623 = vperm.slane %v4615, %v371
  %v4624 = vsel %vm1947, %v4621, %v4620
  %v4625 = vsel %vm1949, %v4622, %v4624
  %v4626 = vsel %vm1951, %v4623, %v4625
  %v4628 = vsel %vm1922, %v4626, 0.0
  %v4629 = vsel %vm1955, %v4628, -inf
  %4630 = vmax.xlane.f32.xlu0 %v4629
  %v4631 = vpop.xlane.xlu0 %4630
  %v4632 = vld [vmem:[%s49 + $0x2] sm:$0x1]
  %v4633 = vperm.slane %v4632, 0
  %v4634 = vmul.f32 %v4631, %v4633
  %v4635 = vadd.f32 %v4599, %v4634
  %v4636 = vsel %vm1965, %v4626, 0.0
  %v4637 = vsel %vm1955, %v4636, -inf
  %4638 = vmax.xlane.f32.xlu0 %v4637
  %v4639 = vpop.xlane.xlu0 %4638
  %v4640 = vld [vmem:[%s49 + $0x6] sm:$0x1]
  %v4641 = vperm.slane %v4640, 0
  %v4642 = vmul.f32 %v4639, %v4641
  %v4643 = vadd.f32 %v4635, %v4642
  %v4644 = vsel %vm1976, %v4626, 0.0
  %v4645 = vsel %vm1955, %v4644, -inf
  %4646 = vmax.xlane.f32.xlu0 %v4645
  %v4647 = vpop.xlane.xlu0 %4646
  %v4648 = vld [vmem:[%s49 + $0xa] sm:$0x1]
  %v4649 = vperm.slane %v4648, 0
  %v4650 = vmul.f32 %v4647, %v4649
  %v4651 = vadd.f32 %v4643, %v4650
  %v4652 = vsel %vm1987, %v4626, 0.0
  %v4653 = vsel %vm1955, %v4652, -inf
  %4654 = vmax.xlane.f32.xlu0 %v4653
  %v4655 = vpop.xlane.xlu0 %4654
  %v4656 = vld [vmem:[%s49 + $0xe] sm:$0x1]
  %v4657 = vperm.slane %v4656, 0
  %v4658 = vmul.f32 %v4655, %v4657
  %v4659 = vadd.f32 %v4651, %v4658
  %v4660 = vsel %vm1987, %v4476, 0.0
  %v4661 = vsel %vm1987, %v4477, 0.0
  %v4662 = vsel %vm1987, %v4478, 0.0
  %v4663 = vsel %vm1987, %v4479, 0.0
  %v4664 = vsel %vm434, %v4660, -inf
  %4665 = vmax.xlane.f32.xlu0 %v4664
  %v4666 = vpop.xlane.xlu0 %4665
  %v4667 = vsel %vm434, %v4661, -inf
  %4668 = vmax.xlane.f32.xlu0 %v4667
  %v4669 = vpop.xlane.xlu0 %4668
  %v4670 = vsel %vm434, %v4662, -inf
  %4671 = vmax.xlane.f32.xlu0 %v4670
  %v4672 = vpop.xlane.xlu0 %4671
  %v4673 = vsel %vm434, %v4663, -inf
  %4674 = vmax.xlane.f32.xlu0 %v4673
  %v4675 = vpop.xlane.xlu0 %4674
  %v4680 = vperm.slane %v4666, %v371
  %v4681 = vperm.slane %v4669, %v371
  %v4682 = vperm.slane %v4672, %v371
  %v4683 = vperm.slane %v4675, %v371
  %v4684 = vsel %vm1947, %v4681, %v4680
  %v4685 = vsel %vm1949, %v4682, %v4684
  %v4686 = vsel %vm1951, %v4683, %v4685
  %v4688 = vsel %vm1922, %v4686, 0.0
  %v4689 = vsel %vm1955, %v4688, -inf
  %4690 = vmax.xlane.f32.xlu0 %v4689
  %v4691 = vpop.xlane.xlu0 %4690
  %v4692 = vld [vmem:[%s49 + $0x3] sm:$0x1]
  %v4693 = vperm.slane %v4692, 0
  %v4694 = vmul.f32 %v4691, %v4693
  %v4695 = vadd.f32 %v4659, %v4694
  %v4696 = vsel %vm1965, %v4686, 0.0
  %v4697 = vsel %vm1955, %v4696, -inf
  %4698 = vmax.xlane.f32.xlu0 %v4697
  %v4699 = vpop.xlane.xlu0 %4698
  %v4700 = vld [vmem:[%s49 + $0x7] sm:$0x1]
  %v4701 = vperm.slane %v4700, 0
  %v4702 = vmul.f32 %v4699, %v4701
  %v4703 = vadd.f32 %v4695, %v4702
  %v4704 = vsel %vm1976, %v4686, 0.0
  %v4705 = vsel %vm1955, %v4704, -inf
  %4706 = vmax.xlane.f32.xlu0 %v4705
  %v4707 = vpop.xlane.xlu0 %4706
  %v4708 = vld [vmem:[%s49 + $0xb] sm:$0x1]
  %v4709 = vperm.slane %v4708, 0
  %v4710 = vmul.f32 %v4707, %v4709
  %v4711 = vadd.f32 %v4703, %v4710
  %v4712 = vsel %vm1987, %v4686, 0.0
  %v4713 = vsel %vm1955, %v4712, -inf
  %4714 = vmax.xlane.f32.xlu0 %v4713
  %v4715 = vpop.xlane.xlu0 %4714
  %v4716 = vld [vmem:[%s49 + $0xf] sm:$0x1]
  %v4717 = vperm.slane %v4716, 0
  %v4718 = vmul.f32 %v4715, %v4717
  %v4719 = vadd.f32 %v4711, %v4718
  %s4720 = scalar_lea.vmem %s33, 32
  %v4721 = vld [vmem:[%s4720] sm:$0xff]
  %v4722 = vld [vmem:[%s4720 + $0x8] sm:$0xff]
  %v4723 = vld [vmem:[%s4720 + $0x10] sm:$0xff]
  %v4724 = vld [vmem:[%s4720 + $0x18] sm:$0xff]
  %v4726 = vsel %vm362, %v2945, 0
  %v4729 = vsel %vm362, %v2946, 0
  %4731 = vmatpush.msra.mxu0 0.0
  %4732 = vmatpush.msra.mxu0 0.0
  %4733 = vmatpush.msra.mxu0 0.0
  %4734 = vmatpush.msra.mxu0 0.0
  %4735 = vmatpush.msra.mxu0 0.0
  %4736 = vmatpush.msra.mxu0 0.0
  %4737 = vmatpush.msra.mxu0 0.0
  %4738 = vmatpush.msra.mxu0 0.0
  %4739 = vmatpush.msra.mxu0 0.0
  %4740 = vmatpush.msra.mxu0 0.0
  %4741 = vmatpush.msra.mxu0 0.0
  %4742 = vmatpush.msra.mxu0 0.0
  %4743 = vmatpush.msra.mxu0 %v4724
  %4744 = vmatpush.msra.mxu0 %v4723
  %4745 = vmatpush.msra.mxu0 %v4722
  %4746 = vmatpush.msra.mxu0 %v4721
  %4747 = vmatmul.f32.gmra.mxu0 %v4726
  %v4748 = vpop.f32.mrf.mxu0
  %v4749 = vadd.f32 0.0, %v4748
  %4750 = vmatmul.f32.gmra.mxu0 %v4729
  %v4751 = vpop.f32.mrf.mxu0
  %v4752 = vadd.f32 0.0, %v4751
  %4753 = vdwg.mxu0
  %s4754 = scalar_lea.vmem %s35, 1
  %v4755 = vld [vmem:[%s4754] sm:$0x1]
  %v4757 = vperm.slane %v4755, 0
  %v4760 = vsel %vm2220, %v4752, 0
  %4762 = vmatpush.msra.mxu0 0.0
  %4763 = vmatpush.msra.mxu0 0.0
  %4764 = vmatpush.msra.mxu0 0.0
  %4765 = vmatpush.msra.mxu0 0.0
  %4766 = vmatpush.msra.mxu0 0.0
  %4767 = vmatpush.msra.mxu0 0.0
  %4768 = vmatpush.msra.mxu0 0.0
  %4769 = vmatpush.msra.mxu0 0.0
  %4770 = vmatpush.msra.mxu0 0.0
  %4771 = vmatpush.msra.mxu0 0.0
  %4772 = vmatpush.msra.mxu0 0.0
  %4773 = vmatpush.msra.mxu0 0.0
  %4774 = vmatpush.msra.mxu0 0.0
  %4775 = vmatpush.msra.mxu0 0.0
  %4776 = vmatpush.msra.mxu0 %v4760
  %4777 = vmatpush.msra.mxu0 %v4749
  %4778 = vmatmul.f32.gmra.mxu0 %v2215
  %v4779 = vpop.f32.mrf.mxu0
  %v4780 = vadd.f32 %v4757, %v4779
  %4781 = vmatmul.f32.gmra.mxu0 %v2218
  %v4782 = vpop.f32.mrf.mxu0
  %v4783 = vadd.f32 %v4757, %v4782
  %4784 = vdwg.mxu0
  %s4785 = scalar_lea.vmem %s37, 32
  %v4786 = vld [vmem:[%s4785] sm:$0xff]
  %v4787 = vld [vmem:[%s4785 + $0x8] sm:$0xff]
  %v4788 = vld [vmem:[%s4785 + $0x10] sm:$0xff]
  %v4789 = vld [vmem:[%s4785 + $0x18] sm:$0xff]
  %s4790 = scalar_lea.vmem %s39, 1
  %v4791 = vld [vmem:[%s4790] sm:$0x1]
  %v4793 = vperm.slane %v4791, 0
  %v4796 = vsel %vm362, %v4780, 0
  %v4799 = vsel %vm362, %v4783, 0
  %4801 = vmatpush.msra.mxu0 0.0
  %4802 = vmatpush.msra.mxu0 0.0
  %4803 = vmatpush.msra.mxu0 0.0
  %4804 = vmatpush.msra.mxu0 0.0
  %4805 = vmatpush.msra.mxu0 0.0
  %4806 = vmatpush.msra.mxu0 0.0
  %4807 = vmatpush.msra.mxu0 0.0
  %4808 = vmatpush.msra.mxu0 0.0
  %4809 = vmatpush.msra.mxu0 0.0
  %4810 = vmatpush.msra.mxu0 0.0
  %4811 = vmatpush.msra.mxu0 0.0
  %4812 = vmatpush.msra.mxu0 0.0
  %4813 = vmatpush.msra.mxu0 %v4789
  %4814 = vmatpush.msra.mxu0 %v4788
  %4815 = vmatpush.msra.mxu0 %v4787
  %4816 = vmatpush.msra.mxu0 %v4786
  %4817 = vmatmul.f32.gmra.mxu0 %v4796
  %v4818 = vpop.f32.mrf.mxu0
  %v4819 = vadd.f32 %v4793, %v4818
  %4820 = vmatmul.f32.gmra.mxu0 %v4799
  %v4821 = vpop.f32.mrf.mxu0
  %v4822 = vadd.f32 %v4793, %v4821
  %4823 = vdwg.mxu0
  %s4824 = scalar_lea.vmem %s41, 32
  %v4825 = vld [vmem:[%s4824] sm:$0xff]
  %v4826 = vld [vmem:[%s4824 + $0x8] sm:$0xff]
  %v4827 = vld [vmem:[%s4824 + $0x10] sm:$0xff]
  %v4828 = vld [vmem:[%s4824 + $0x18] sm:$0xff]
  %4831 = vrot.lane.b32.xlu0 %v4819, 96
  %v4832 = vpop.permute.xlu0 %4831
  %4833 = vrot.lane.b32.xlu0 %v4822, 96
  %v4834 = vpop.permute.xlu0 %4833
  %v4835 = vsel %vm434, %v4819, 0
  %v4837 = vsel %vm434, %v4832, 0
  %v4839 = vsel %vm434, %v4834, 0
  %4841 = vmatpush.xpose.msra.mxu0 0.0
  %4842 = vmatpush.xpose.msra.mxu0 0.0
  %4843 = vmatpush.xpose.msra.mxu0 0.0
  %4844 = vmatpush.xpose.msra.mxu0 0.0
  %4845 = vmatpush.xpose.msra.mxu0 0.0
  %4846 = vmatpush.xpose.msra.mxu0 0.0
  %4847 = vmatpush.xpose.msra.mxu0 0.0
  %4848 = vmatpush.xpose.msra.mxu0 0.0
  %4849 = vmatpush.xpose.msra.mxu0 0.0
  %4850 = vmatpush.xpose.msra.mxu0 0.0
  %4851 = vmatpush.xpose.msra.mxu0 0.0
  %4852 = vmatpush.xpose.msra.mxu0 0.0
  %4853 = vmatpush.xpose.msra.mxu0 0.0
  %4854 = vmatpush.xpose.msra.mxu0 0.0
  %4855 = vmatpush.xpose.msra.mxu0 %v4839
  %4856 = vmatpush.xpose.msra.mxu0 %v4837
  %4857 = vmatmul.f32.gmra.mxu0 %v4835
  %v4858 = vpop.f32.mrf.mxu0
  %v4859 = vadd.f32 0.0, %v4858
  %4860 = vdwg.mxu0
  %v4861 = vmul.f32 %v4859, 0.35355338
  %v4862 = vadd.f32 %v4861, %v367
  %v4863 = vsel %vm2322, %v4862, -inf
  %4864 = vmax.xlane.f32.xlu0 %v4863
  %v4865 = vpop.xlane.xlu0 %4864
  %v4866 = vsub.f32 %v4862, %v4865
  %v4867 = vmul.f32 %v4866, 1.442695
  %v4868 = vpow.pop %v4867
  %v4869 = vsel %vm2322, %v4868, 0.0
  %4870 = vadd.xlane.f32.xlu0 %v4869
  %v4871 = vpop.xlane.xlu0 %4870
  %v4872 = vrcp.pop %v4871
  %v4873 = vmul.f32 %v4871, %v4872
  %v4874 = vsub.f32 1.0, %v4873
  %v4875 = vmul.f32 %v4872, %v4874
  %v4876 = vadd.f32 %v4872, %v4875
  %vm4877 = vweird.f32 %v4871
  %vm4878 = vweird.f32 %v4872
  %vm4879 = vmor %vm4877, %vm4878
  %v4880 = vsel %vm4879, %v4872, %v4876
  %v4881 = vand.u32 2147483647, %v4871
  %vm4882 = vcmp.eq.f32.partialorder %v4881, 8.507059e+37
  %v4883 = vand.u32 %v4871, 2147483648
  %v4884 = vor.u32 1.1754944e-38, %v4883
  %v4885 = vsel %vm4882, %v4884, %v4880
  %v4886 = vmul.f32 %v4868, %v4885
  %4887 = vrot.lane.b32.xlu0 %v4819, 64
  %v4888 = vpop.permute.xlu0 %4887
  %4889 = vrot.lane.b32.xlu0 %v4822, 64
  %v4890 = vpop.permute.xlu0 %4889
  %v4893 = vsel %vm2213, %v4886, 0
  %v4895 = vsel %vm2220, %v4890, 0
  %4897 = vmatpush.msra.mxu0 0.0
  %4898 = vmatpush.msra.mxu0 0.0
  %4899 = vmatpush.msra.mxu0 0.0
  %4900 = vmatpush.msra.mxu0 0.0
  %4901 = vmatpush.msra.mxu0 0.0
  %4902 = vmatpush.msra.mxu0 0.0
  %4903 = vmatpush.msra.mxu0 0.0
  %4904 = vmatpush.msra.mxu0 0.0
  %4905 = vmatpush.msra.mxu0 0.0
  %4906 = vmatpush.msra.mxu0 0.0
  %4907 = vmatpush.msra.mxu0 0.0
  %4908 = vmatpush.msra.mxu0 0.0
  %4909 = vmatpush.msra.mxu0 0.0
  %4910 = vmatpush.msra.mxu0 0.0
  %4911 = vmatpush.msra.mxu0 %v4895
  %4912 = vmatpush.msra.mxu0 %v4888
  %4913 = vmatmul.f32.gmra.mxu0 %v4893
  %v4914 = vpop.f32.mrf.mxu0
  %v4915 = vadd.f32 0.0, %v4914
  %4916 = vdwg.mxu0
  %4917 = vrot.lane.b32.xlu0 %v4819, 120
  %v4918 = vpop.permute.xlu0 %4917
  %4919 = vrot.lane.b32.xlu0 %v4819, 88
  %v4920 = vpop.permute.xlu0 %4919
  %4921 = vrot.lane.b32.xlu0 %v4822, 88
  %v4922 = vpop.permute.xlu0 %4921
  %v4923 = vsel %vm434, %v4918, 0
  %v4925 = vsel %vm434, %v4920, 0
  %v4927 = vsel %vm434, %v4922, 0
  %4929 = vmatpush.xpose.msra.mxu0 0.0
  %4930 = vmatpush.xpose.msra.mxu0 0.0
  %4931 = vmatpush.xpose.msra.mxu0 0.0
  %4932 = vmatpush.xpose.msra.mxu0 0.0
  %4933 = vmatpush.xpose.msra.mxu0 0.0
  %4934 = vmatpush.xpose.msra.mxu0 0.0
  %4935 = vmatpush.xpose.msra.mxu0 0.0
  %4936 = vmatpush.xpose.msra.mxu0 0.0
  %4937 = vmatpush.xpose.msra.mxu0 0.0
  %4938 = vmatpush.xpose.msra.mxu0 0.0
  %4939 = vmatpush.xpose.msra.mxu0 0.0
  %4940 = vmatpush.xpose.msra.mxu0 0.0
  %4941 = vmatpush.xpose.msra.mxu0 0.0
  %4942 = vmatpush.xpose.msra.mxu0 0.0
  %4943 = vmatpush.xpose.msra.mxu0 %v4927
  %4944 = vmatpush.xpose.msra.mxu0 %v4925
  %4945 = vmatmul.f32.gmra.mxu0 %v4923
  %v4946 = vpop.f32.mrf.mxu0
  %v4947 = vadd.f32 0.0, %v4946
  %4948 = vdwg.mxu0
  %v4949 = vmul.f32 %v4947, 0.35355338
  %v4950 = vadd.f32 %v4949, %v367
  %v4951 = vsel %vm2322, %v4950, -inf
  %4952 = vmax.xlane.f32.xlu0 %v4951
  %v4953 = vpop.xlane.xlu0 %4952
  %v4954 = vsub.f32 %v4950, %v4953
  %v4955 = vmul.f32 %v4954, 1.442695
  %v4956 = vpow.pop %v4955
  %v4957 = vsel %vm2322, %v4956, 0.0
  %4958 = vadd.xlane.f32.xlu0 %v4957
  %v4959 = vpop.xlane.xlu0 %4958
  %v4960 = vrcp.pop %v4959
  %v4961 = vmul.f32 %v4959, %v4960
  %v4962 = vsub.f32 1.0, %v4961
  %v4963 = vmul.f32 %v4960, %v4962
  %v4964 = vadd.f32 %v4960, %v4963
  %vm4965 = vweird.f32 %v4959
  %vm4966 = vweird.f32 %v4960
  %vm4967 = vmor %vm4965, %vm4966
  %v4968 = vsel %vm4967, %v4960, %v4964
  %v4969 = vand.u32 2147483647, %v4959
  %vm4970 = vcmp.eq.f32.partialorder %v4969, 8.507059e+37
  %v4971 = vand.u32 %v4959, 2147483648
  %v4972 = vor.u32 1.1754944e-38, %v4971
  %v4973 = vsel %vm4970, %v4972, %v4968
  %v4974 = vmul.f32 %v4956, %v4973
  %4975 = vrot.lane.b32.xlu0 %v4819, 56
  %v4976 = vpop.permute.xlu0 %4975
  %4977 = vrot.lane.b32.xlu0 %v4822, 56
  %v4978 = vpop.permute.xlu0 %4977
  %v4981 = vsel %vm2213, %v4974, 0
  %v4983 = vsel %vm2220, %v4978, 0
  %4985 = vmatpush.msra.mxu0 0.0
  %4986 = vmatpush.msra.mxu0 0.0
  %4987 = vmatpush.msra.mxu0 0.0
  %4988 = vmatpush.msra.mxu0 0.0
  %4989 = vmatpush.msra.mxu0 0.0
  %4990 = vmatpush.msra.mxu0 0.0
  %4991 = vmatpush.msra.mxu0 0.0
  %4992 = vmatpush.msra.mxu0 0.0
  %4993 = vmatpush.msra.mxu0 0.0
  %4994 = vmatpush.msra.mxu0 0.0
  %4995 = vmatpush.msra.mxu0 0.0
  %4996 = vmatpush.msra.mxu0 0.0
  %4997 = vmatpush.msra.mxu0 0.0
  %4998 = vmatpush.msra.mxu0 0.0
  %4999 = vmatpush.msra.mxu0 %v4983
  %5000 = vmatpush.msra.mxu0 %v4976
  %5001 = vmatmul.f32.gmra.mxu0 %v4981
  %v5002 = vpop.f32.mrf.mxu0
  %v5003 = vadd.f32 0.0, %v5002
  %5004 = vdwg.mxu0
  %v5006 = vsel %vm434, %v5003, 0
  %5008 = vmatpush.msra.mxu0 0.0
  %5009 = vmatpush.msra.mxu0 0.0
  %5010 = vmatpush.msra.mxu0 0.0
  %5011 = vmatpush.msra.mxu0 0.0
  %5012 = vmatpush.msra.mxu0 0.0
  %5013 = vmatpush.msra.mxu0 0.0
  %5014 = vmatpush.msra.mxu0 0.0
  %5015 = vmatpush.msra.mxu0 0.0
  %5016 = vmatpush.msra.mxu0 0.0
  %5017 = vmatpush.msra.mxu0 0.0
  %5018 = vmatpush.msra.mxu0 0.0
  %5019 = vmatpush.msra.mxu0 0.0
  %5020 = vmatpush.msra.mxu0 0.0
  %5021 = vmatpush.msra.mxu0 0.0
  %5022 = vmatpush.msra.mxu0 0.0
  %5023 = vmatpush.msra.mxu0 %v4826
  %5024 = vmatmul.f32.gmra.mxu0 %v5006
  %v5025 = vpop.f32.mrf.mxu0
  %v5026 = vadd.f32 0.0, %v5025
  %5027 = vdwg.mxu0
  %v5029 = vsel %vm434, %v4915, 0
  %5031 = vmatpush.msra.mxu0 0.0
  %5032 = vmatpush.msra.mxu0 0.0
  %5033 = vmatpush.msra.mxu0 0.0
  %5034 = vmatpush.msra.mxu0 0.0
  %5035 = vmatpush.msra.mxu0 0.0
  %5036 = vmatpush.msra.mxu0 0.0
  %5037 = vmatpush.msra.mxu0 0.0
  %5038 = vmatpush.msra.mxu0 0.0
  %5039 = vmatpush.msra.mxu0 0.0
  %5040 = vmatpush.msra.mxu0 0.0
  %5041 = vmatpush.msra.mxu0 0.0
  %5042 = vmatpush.msra.mxu0 0.0
  %5043 = vmatpush.msra.mxu0 0.0
  %5044 = vmatpush.msra.mxu0 0.0
  %5045 = vmatpush.msra.mxu0 0.0
  %5046 = vmatpush.msra.mxu0 %v4825
  %5047 = vmatmul.f32.gmra.mxu0 %v5029
  %v5048 = vpop.f32.mrf.mxu0
  %v5049 = vadd.f32 %v5026, %v5048
  %5050 = vdwg.mxu0
  %5051 = vrot.lane.b32.xlu0 %v4819, 112
  %v5052 = vpop.permute.xlu0 %5051
  %5053 = vrot.lane.b32.xlu0 %v4819, 80
  %v5054 = vpop.permute.xlu0 %5053
  %5055 = vrot.lane.b32.xlu0 %v4822, 80
  %v5056 = vpop.permute.xlu0 %5055
  %v5057 = vsel %vm434, %v5052, 0
  %v5059 = vsel %vm434, %v5054, 0
  %v5061 = vsel %vm434, %v5056, 0
  %5063 = vmatpush.xpose.msra.mxu0 0.0
  %5064 = vmatpush.xpose.msra.mxu0 0.0
  %5065 = vmatpush.xpose.msra.mxu0 0.0
  %5066 = vmatpush.xpose.msra.mxu0 0.0
  %5067 = vmatpush.xpose.msra.mxu0 0.0
  %5068 = vmatpush.xpose.msra.mxu0 0.0
  %5069 = vmatpush.xpose.msra.mxu0 0.0
  %5070 = vmatpush.xpose.msra.mxu0 0.0
  %5071 = vmatpush.xpose.msra.mxu0 0.0
  %5072 = vmatpush.xpose.msra.mxu0 0.0
  %5073 = vmatpush.xpose.msra.mxu0 0.0
  %5074 = vmatpush.xpose.msra.mxu0 0.0
  %5075 = vmatpush.xpose.msra.mxu0 0.0
  %5076 = vmatpush.xpose.msra.mxu0 0.0
  %5077 = vmatpush.xpose.msra.mxu0 %v5061
  %5078 = vmatpush.xpose.msra.mxu0 %v5059
  %5079 = vmatmul.f32.gmra.mxu0 %v5057
  %v5080 = vpop.f32.mrf.mxu0
  %v5081 = vadd.f32 0.0, %v5080
  %5082 = vdwg.mxu0
  %v5083 = vmul.f32 %v5081, 0.35355338
  %v5084 = vadd.f32 %v5083, %v367
  %v5085 = vsel %vm2322, %v5084, -inf
  %5086 = vmax.xlane.f32.xlu0 %v5085
  %v5087 = vpop.xlane.xlu0 %5086
  %v5088 = vsub.f32 %v5084, %v5087
  %v5089 = vmul.f32 %v5088, 1.442695
  %v5090 = vpow.pop %v5089
  %v5091 = vsel %vm2322, %v5090, 0.0
  %5092 = vadd.xlane.f32.xlu0 %v5091
  %v5093 = vpop.xlane.xlu0 %5092
  %v5094 = vrcp.pop %v5093
  %v5095 = vmul.f32 %v5093, %v5094
  %v5096 = vsub.f32 1.0, %v5095
  %v5097 = vmul.f32 %v5094, %v5096
  %v5098 = vadd.f32 %v5094, %v5097
  %vm5099 = vweird.f32 %v5093
  %vm5100 = vweird.f32 %v5094
  %vm5101 = vmor %vm5099, %vm5100
  %v5102 = vsel %vm5101, %v5094, %v5098
  %v5103 = vand.u32 2147483647, %v5093
  %vm5104 = vcmp.eq.f32.partialorder %v5103, 8.507059e+37
  %v5105 = vand.u32 %v5093, 2147483648
  %v5106 = vor.u32 1.1754944e-38, %v5105
  %v5107 = vsel %vm5104, %v5106, %v5102
  %v5108 = vmul.f32 %v5090, %v5107
  %5109 = vrot.lane.b32.xlu0 %v4819, 48
  %v5110 = vpop.permute.xlu0 %5109
  %5111 = vrot.lane.b32.xlu0 %v4822, 48
  %v5112 = vpop.permute.xlu0 %5111
  %v5115 = vsel %vm2213, %v5108, 0
  %v5117 = vsel %vm2220, %v5112, 0
  %5119 = vmatpush.msra.mxu0 0.0
  %5120 = vmatpush.msra.mxu0 0.0
  %5121 = vmatpush.msra.mxu0 0.0
  %5122 = vmatpush.msra.mxu0 0.0
  %5123 = vmatpush.msra.mxu0 0.0
  %5124 = vmatpush.msra.mxu0 0.0
  %5125 = vmatpush.msra.mxu0 0.0
  %5126 = vmatpush.msra.mxu0 0.0
  %5127 = vmatpush.msra.mxu0 0.0
  %5128 = vmatpush.msra.mxu0 0.0
  %5129 = vmatpush.msra.mxu0 0.0
  %5130 = vmatpush.msra.mxu0 0.0
  %5131 = vmatpush.msra.mxu0 0.0
  %5132 = vmatpush.msra.mxu0 0.0
  %5133 = vmatpush.msra.mxu0 %v5117
  %5134 = vmatpush.msra.mxu0 %v5110
  %5135 = vmatmul.f32.gmra.mxu0 %v5115
  %v5136 = vpop.f32.mrf.mxu0
  %v5137 = vadd.f32 0.0, %v5136
  %5138 = vdwg.mxu0
  %v5140 = vsel %vm434, %v5137, 0
  %5142 = vmatpush.msra.mxu0 0.0
  %5143 = vmatpush.msra.mxu0 0.0
  %5144 = vmatpush.msra.mxu0 0.0
  %5145 = vmatpush.msra.mxu0 0.0
  %5146 = vmatpush.msra.mxu0 0.0
  %5147 = vmatpush.msra.mxu0 0.0
  %5148 = vmatpush.msra.mxu0 0.0
  %5149 = vmatpush.msra.mxu0 0.0
  %5150 = vmatpush.msra.mxu0 0.0
  %5151 = vmatpush.msra.mxu0 0.0
  %5152 = vmatpush.msra.mxu0 0.0
  %5153 = vmatpush.msra.mxu0 0.0
  %5154 = vmatpush.msra.mxu0 0.0
  %5155 = vmatpush.msra.mxu0 0.0
  %5156 = vmatpush.msra.mxu0 0.0
  %5157 = vmatpush.msra.mxu0 %v4827
  %5158 = vmatmul.f32.gmra.mxu0 %v5140
  %v5159 = vpop.f32.mrf.mxu0
  %v5160 = vadd.f32 0.0, %v5159
  %5161 = vdwg.mxu0
  %v5162 = vadd.f32 %v5049, %v5160
  %5163 = vrot.lane.b32.xlu0 %v4819, 104
  %v5164 = vpop.permute.xlu0 %5163
  %5165 = vrot.lane.b32.xlu0 %v4819, 72
  %v5166 = vpop.permute.xlu0 %5165
  %5167 = vrot.lane.b32.xlu0 %v4822, 72
  %v5168 = vpop.permute.xlu0 %5167
  %v5169 = vsel %vm434, %v5164, 0
  %v5171 = vsel %vm434, %v5166, 0
  %v5173 = vsel %vm434, %v5168, 0
  %5175 = vmatpush.xpose.msra.mxu0 0.0
  %5176 = vmatpush.xpose.msra.mxu0 0.0
  %5177 = vmatpush.xpose.msra.mxu0 0.0
  %5178 = vmatpush.xpose.msra.mxu0 0.0
  %5179 = vmatpush.xpose.msra.mxu0 0.0
  %5180 = vmatpush.xpose.msra.mxu0 0.0
  %5181 = vmatpush.xpose.msra.mxu0 0.0
  %5182 = vmatpush.xpose.msra.mxu0 0.0
  %5183 = vmatpush.xpose.msra.mxu0 0.0
  %5184 = vmatpush.xpose.msra.mxu0 0.0
  %5185 = vmatpush.xpose.msra.mxu0 0.0
  %5186 = vmatpush.xpose.msra.mxu0 0.0
  %5187 = vmatpush.xpose.msra.mxu0 0.0
  %5188 = vmatpush.xpose.msra.mxu0 0.0
  %5189 = vmatpush.xpose.msra.mxu0 %v5173
  %5190 = vmatpush.xpose.msra.mxu0 %v5171
  %5191 = vmatmul.f32.gmra.mxu0 %v5169
  %v5192 = vpop.f32.mrf.mxu0
  %v5193 = vadd.f32 0.0, %v5192
  %5194 = vdwg.mxu0
  %v5195 = vmul.f32 %v5193, 0.35355338
  %v5196 = vadd.f32 %v5195, %v367
  %v5197 = vsel %vm2322, %v5196, -inf
  %5198 = vmax.xlane.f32.xlu0 %v5197
  %v5199 = vpop.xlane.xlu0 %5198
  %v5200 = vsub.f32 %v5196, %v5199
  %v5201 = vmul.f32 %v5200, 1.442695
  %v5202 = vpow.pop %v5201
  %v5203 = vsel %vm2322, %v5202, 0.0
  %5204 = vadd.xlane.f32.xlu0 %v5203
  %v5205 = vpop.xlane.xlu0 %5204
  %v5206 = vrcp.pop %v5205
  %v5207 = vmul.f32 %v5205, %v5206
  %v5208 = vsub.f32 1.0, %v5207
  %v5209 = vmul.f32 %v5206, %v5208
  %v5210 = vadd.f32 %v5206, %v5209
  %vm5211 = vweird.f32 %v5205
  %vm5212 = vweird.f32 %v5206
  %vm5213 = vmor %vm5211, %vm5212
  %v5214 = vsel %vm5213, %v5206, %v5210
  %v5215 = vand.u32 2147483647, %v5205
  %vm5216 = vcmp.eq.f32.partialorder %v5215, 8.507059e+37
  %v5217 = vand.u32 %v5205, 2147483648
  %v5218 = vor.u32 1.1754944e-38, %v5217
  %v5219 = vsel %vm5216, %v5218, %v5214
  %v5220 = vmul.f32 %v5202, %v5219
  %5221 = vrot.lane.b32.xlu0 %v4819, 40
  %v5222 = vpop.permute.xlu0 %5221
  %5223 = vrot.lane.b32.xlu0 %v4822, 40
  %v5224 = vpop.permute.xlu0 %5223
  %v5227 = vsel %vm2213, %v5220, 0
  %v5229 = vsel %vm2220, %v5224, 0
  %5231 = vmatpush.msra.mxu0 0.0
  %5232 = vmatpush.msra.mxu0 0.0
  %5233 = vmatpush.msra.mxu0 0.0
  %5234 = vmatpush.msra.mxu0 0.0
  %5235 = vmatpush.msra.mxu0 0.0
  %5236 = vmatpush.msra.mxu0 0.0
  %5237 = vmatpush.msra.mxu0 0.0
  %5238 = vmatpush.msra.mxu0 0.0
  %5239 = vmatpush.msra.mxu0 0.0
  %5240 = vmatpush.msra.mxu0 0.0
  %5241 = vmatpush.msra.mxu0 0.0
  %5242 = vmatpush.msra.mxu0 0.0
  %5243 = vmatpush.msra.mxu0 0.0
  %5244 = vmatpush.msra.mxu0 0.0
  %5245 = vmatpush.msra.mxu0 %v5229
  %5246 = vmatpush.msra.mxu0 %v5222
  %5247 = vmatmul.f32.gmra.mxu0 %v5227
  %v5248 = vpop.f32.mrf.mxu0
  %v5249 = vadd.f32 0.0, %v5248
  %5250 = vdwg.mxu0
  %v5252 = vsel %vm434, %v5249, 0
  %5254 = vmatpush.msra.mxu0 0.0
  %5255 = vmatpush.msra.mxu0 0.0
  %5256 = vmatpush.msra.mxu0 0.0
  %5257 = vmatpush.msra.mxu0 0.0
  %5258 = vmatpush.msra.mxu0 0.0
  %5259 = vmatpush.msra.mxu0 0.0
  %5260 = vmatpush.msra.mxu0 0.0
  %5261 = vmatpush.msra.mxu0 0.0
  %5262 = vmatpush.msra.mxu0 0.0
  %5263 = vmatpush.msra.mxu0 0.0
  %5264 = vmatpush.msra.mxu0 0.0
  %5265 = vmatpush.msra.mxu0 0.0
  %5266 = vmatpush.msra.mxu0 0.0
  %5267 = vmatpush.msra.mxu0 0.0
  %5268 = vmatpush.msra.mxu0 0.0
  %5269 = vmatpush.msra.mxu0 %v4828
  %5270 = vmatmul.f32.gmra.mxu0 %v5252
  %v5271 = vpop.f32.mrf.mxu0
  %v5272 = vadd.f32 0.0, %v5271
  %5273 = vdwg.mxu0
  %v5274 = vadd.f32 %v5162, %v5272
  %s5275 = scalar_lea.vmem %s43, 1
  %v5276 = vld [vmem:[%s5275] sm:$0x1]
  %v5278 = vperm.slane %v5276, 0
  %v5280 = vadd.f32 %v5274, %v5278
  %5281 = vst.msk [vmem:[#allocation2] sm:$0xff] %vm362, %v4472
  %5282 = vst.msk [vmem:[#allocation2 + $0x8] sm:$0xff] %vm362, %v4473
  %5283 = vst.msk [vmem:[#allocation2 + $0x10] sm:$0xff] %vm362, %v4474
  %5284 = vst.msk [vmem:[#allocation2 + $0x18] sm:$0xff] %vm362, %v4475
  %v5285 = vld [vmem:[#allocation2] sm:$0x1]
  %v5286 = vld [vmem:[#allocation2 + $0x8] sm:$0x1]
  %v5287 = vld [vmem:[#allocation2 + $0x10] sm:$0x1]
  %v5288 = vld [vmem:[#allocation2 + $0x18] sm:$0x1]
  %s5289 = scalar_lea.vmem %s45, 32
  %v5290 = vld [vmem:[%s5289] sm:$0xff]
  %v5291 = vld [vmem:[%s5289 + $0x8] sm:$0xff]
  %v5292 = vld [vmem:[%s5289 + $0x10] sm:$0xff]
  %v5293 = vld [vmem:[%s5289 + $0x18] sm:$0xff]
  %v5298 = vrot.slane %v5286, 7
  %v5299 = vsel %vm1947, %v5298, %v5285
  %v5300 = vrot.slane %v5287, 6
  %v5301 = vsel %vm1949, %v5300, %v5299
  %v5302 = vrot.slane %v5288, 5
  %v5303 = vsel %vm1951, %v5302, %v5301
  %v5304 = vsel %vm362, %v5303, 0
  %5306 = vmatpush.msra.mxu0 0.0
  %5307 = vmatpush.msra.mxu0 0.0
  %5308 = vmatpush.msra.mxu0 0.0
  %5309 = vmatpush.msra.mxu0 0.0
  %5310 = vmatpush.msra.mxu0 0.0
  %5311 = vmatpush.msra.mxu0 0.0
  %5312 = vmatpush.msra.mxu0 0.0
  %5313 = vmatpush.msra.mxu0 0.0
  %5314 = vmatpush.msra.mxu0 0.0
  %5315 = vmatpush.msra.mxu0 0.0
  %5316 = vmatpush.msra.mxu0 0.0
  %5317 = vmatpush.msra.mxu0 0.0
  %5318 = vmatpush.msra.mxu0 %v5293
  %5319 = vmatpush.msra.mxu0 %v5292
  %5320 = vmatpush.msra.mxu0 %v5291
  %5321 = vmatpush.msra.mxu0 %v5290
  %5322 = vmatmul.f32.gmra.mxu0 %v5304
  %v5323 = vpop.f32.mrf.mxu0
  %v5324 = vadd.f32 0.0, %v5323
  %5325 = vdwg.mxu0
  %s5326 = scalar_lea.vmem %s47, 32
  %v5327 = vld [vmem:[%s5326] sm:$0xff]
  %v5328 = vld [vmem:[%s5326 + $0x8] sm:$0xff]
  %v5329 = vld [vmem:[%s5326 + $0x10] sm:$0xff]
  %v5330 = vld [vmem:[%s5326 + $0x18] sm:$0xff]
  %v5332 = vsel %vm362, %v5280, 0
  %5334 = vmatpush.msra.mxu0 0.0
  %5335 = vmatpush.msra.mxu0 0.0
  %5336 = vmatpush.msra.mxu0 0.0
  %5337 = vmatpush.msra.mxu0 0.0
  %5338 = vmatpush.msra.mxu0 0.0
  %5339 = vmatpush.msra.mxu0 0.0
  %5340 = vmatpush.msra.mxu0 0.0
  %5341 = vmatpush.msra.mxu0 0.0
  %5342 = vmatpush.msra.mxu0 0.0
  %5343 = vmatpush.msra.mxu0 0.0
  %5344 = vmatpush.msra.mxu0 0.0
  %5345 = vmatpush.msra.mxu0 0.0
  %5346 = vmatpush.msra.mxu0 %v5330
  %5347 = vmatpush.msra.mxu0 %v5329
  %5348 = vmatpush.msra.mxu0 %v5328
  %5349 = vmatpush.msra.mxu0 %v5327
  %5350 = vmatmul.f32.gmra.mxu0 %v5332
  %v5351 = vpop.f32.mrf.mxu0
  %v5352 = vadd.f32 0.0, %v5351
  %5353 = vdwg.mxu0
  %v5355 = vrot.slane %v5324, 1
  %v5356 = vrot.slane %v5324, 2
  %v5357 = vrot.slane %v5324, 3
  %v5362 = vmul.f32 %v5285, %v5324
  %v5363 = vmul.f32 %v5286, %v5355
  %v5364 = vmul.f32 %v5287, %v5356
  %v5365 = vmul.f32 %v5288, %v5357
  %v5370 = vrot.slane %v5363, 7
  %v5371 = vsel %vm1947, %v5370, %v5362
  %v5372 = vrot.slane %v5364, 6
  %v5373 = vsel %vm1949, %v5372, %v5371
  %v5374 = vrot.slane %v5365, 5
  %v5375 = vsel %vm1951, %v5374, %v5373
  %v5377 = vsel %vm2834, %v5375, 0.0
  %5378 = vadd.xlane.f32.xlu0 %v5377
  %v5379 = vpop.xlane.xlu0 %5378
  %v5381 = vrot.slane %v5352, 1
  %v5382 = vrot.slane %v5352, 2
  %v5383 = vrot.slane %v5352, 3
  %v5388 = vmul.f32 %v5285, %v5352
  %v5389 = vmul.f32 %v5286, %v5381
  %v5390 = vmul.f32 %v5287, %v5382
  %v5391 = vmul.f32 %v5288, %v5383
  %v5396 = vrot.slane %v5389, 7
  %v5397 = vsel %vm1947, %v5396, %v5388
  %v5398 = vrot.slane %v5390, 6
  %v5399 = vsel %vm1949, %v5398, %v5397
  %v5400 = vrot.slane %v5391, 5
  %v5401 = vsel %vm1951, %v5400, %v5399
  %v5403 = vsel %vm2834, %v5401, 0.0
  %5404 = vadd.xlane.f32.xlu0 %v5403
  %v5405 = vpop.xlane.xlu0 %5404
  %v5406 = vmul.f32 %v5280, %v5324
  %v5407 = vsel %vm2834, %v5406, 0.0
  %5408 = vadd.xlane.f32.xlu0 %v5407
  %v5409 = vpop.xlane.xlu0 %5408
  %v5410 = vmul.f32 %v5280, %v5352
  %v5411 = vsel %vm2834, %v5410, 0.0
  %5412 = vadd.xlane.f32.xlu0 %v5411
  %v5413 = vpop.xlane.xlu0 %5412
  %v5414 = vmax.f32 %v5379, %v5405
  %v5415 = vsub.f32 %v5379, %v5414
  %v5416 = vmul.f32 %v5415, 1.442695
  %v5417 = vpow.pop %v5416
  %v5418 = vsub.f32 %v5405, %v5414
  %v5419 = vmul.f32 %v5418, 1.442695
  %v5420 = vpow.pop %v5419
  %v5421 = vadd.f32 %v5417, %v5420
  %v5422 = vmax.f32 %v5409, %v5413
  %v5423 = vsub.f32 %v5409, %v5422
  %v5424 = vmul.f32 %v5423, 1.442695
  %v5425 = vpow.pop %v5424
  %v5426 = vsub.f32 %v5413, %v5422
  %v5427 = vmul.f32 %v5426, 1.442695
  %v5428 = vpow.pop %v5427
  %v5429 = vadd.f32 %v5425, %v5428
  %v5430 = vrcp.pop %v5421
  %v5431 = vmul.f32 %v5421, %v5430
  %v5432 = vsub.f32 1.0, %v5431
  %v5433 = vmul.f32 %v5430, %v5432
  %v5434 = vadd.f32 %v5430, %v5433
  %vm5435 = vweird.f32 %v5421
  %vm5436 = vweird.f32 %v5430
  %vm5437 = vmor %vm5435, %vm5436
  %v5438 = vsel %vm5437, %v5430, %v5434
  %v5439 = vand.u32 2147483647, %v5421
  %vm5440 = vcmp.eq.f32.partialorder %v5439, 8.507059e+37
  %v5441 = vand.u32 %v5421, 2147483648
  %v5442 = vor.u32 1.1754944e-38, %v5441
  %v5443 = vsel %vm5440, %v5442, %v5438
  %v5444 = vmul.f32 %v5417, %v5443
  %v5446 = vmul.f32 %v5444, %v5303
  %v5447 = vmul.f32 %v5420, %v5443
  %v5448 = vmul.f32 %v5447, %v5280
  %v5449 = vadd.f32 %v5446, %v5448
  %v5450 = vrcp.pop %v5429
  %v5451 = vmul.f32 %v5429, %v5450
  %v5452 = vsub.f32 1.0, %v5451
  %v5453 = vmul.f32 %v5450, %v5452
  %v5454 = vadd.f32 %v5450, %v5453
  %vm5455 = vweird.f32 %v5429
  %vm5456 = vweird.f32 %v5450
  %vm5457 = vmor %vm5455, %vm5456
  %v5458 = vsel %vm5457, %v5450, %v5454
  %v5459 = vand.u32 2147483647, %v5429
  %vm5460 = vcmp.eq.f32.partialorder %v5459, 8.507059e+37
  %v5461 = vand.u32 %v5429, 2147483648
  %v5462 = vor.u32 1.1754944e-38, %v5461
  %v5463 = vsel %vm5460, %v5462, %v5458
  %v5464 = vmul.f32 %v5425, %v5463
  %v5465 = vmul.f32 %v5464, %v5449
  %v5466 = vmul.f32 %v5428, %v5463
  %v5467 = vmul.f32 %v5466, %v5280
  %v5468 = vadd.f32 %v5465, %v5467
  %v5470 = vrot.slane %v5449, 1
  %v5471 = vrot.slane %v5449, 2
  %v5472 = vrot.slane %v5449, 3
  %5476 = vst.msk [vmem:[#allocation2] sm:$0x1] %vm264, %v5449
  %5477 = vst.msk [vmem:[#allocation2 + $0x8] sm:$0x1] %vm264, %v5470
  %5478 = vst.msk [vmem:[#allocation2 + $0x10] sm:$0x1] %vm264, %v5471
  %5479 = vst.msk [vmem:[#allocation2 + $0x18] sm:$0x1] %vm264, %v5472
  %5480 = vst.msk [vmem:[#allocation3] sm:$0xff] %vm362, %v4780
  %5481 = vst.msk [vmem:[#allocation3 + $0x8] sm:$0x3] %vm364, %v4783
  %5482 = vst.msk [vmem:[#allocation3] sm:$0xf] %vm2834, %v5468
  %v5483 = vld [vmem:[#allocation2] sm:$0x1]
  %v5484 = vld [vmem:[#allocation2 + $0x8] sm:$0x1]
  %v5485 = vld [vmem:[#allocation2 + $0x10] sm:$0x1]
  %v5486 = vld [vmem:[#allocation2 + $0x18] sm:$0x1]
  %v5487 = vld [vmem:[#allocation3] sm:$0xf]
  %v5492 = vrot.slane %v5484, 7
  %v5493 = vsel %vm1947, %v5492, %v5483
  %v5494 = vrot.slane %v5485, 6
  %v5495 = vsel %vm1949, %v5494, %v5493
  %v5496 = vrot.slane %v5486, 5
  %v5497 = vsel %vm1951, %v5496, %v5495
  %v5499 = vadd.f32 %v155, %v5497
  %vm5500 = vcmp.ge.f32.partialorder %v5499, 0.0
  %v5501 = vmul.f32 %v5499, 0.01
  %v5502 = vsel %vm5500, %v5499, %v5501
  %v5503 = vadd.f32 %v249, %v5487
  %vm5504 = vcmp.ge.f32.partialorder %v5503, 0.0
  %v5505 = vmul.f32 %v5503, 0.01
  %v5506 = vsel %vm5504, %v5503, %v5505
  %v5507 = vmul.f32 %v4719, 0.5
  %v5508 = vld [vmem:[%s51] sm:$0x1]
  %v5510 = vperm.slane %v5508, 0
  %v5512 = vadd.f32 %v5507, %v5510
  %vm5513 = vcmp.ge.f32.partialorder %v5512, 0.0
  %v5514 = vmul.f32 %v5512, 0.01
  %v5515 = vsel %vm5513, %v5512, %v5514
  %v5516 = vld [vmem:[%s53] sm:$0xff]
  %v5517 = vld [vmem:[%s53 + $0x8] sm:$0xff]
  %v5518 = vld [vmem:[%s53 + $0x10] sm:$0xff]
  %v5519 = vld [vmem:[%s53 + $0x18] sm:$0xff]
  %v5520 = vld [vmem:[%s53 + $0x20] sm:$0xff]
  %v5521 = vld [vmem:[%s53 + $0x28] sm:$0xff]
  %v5522 = vld [vmem:[%s53 + $0x30] sm:$0xff]
  %v5523 = vld [vmem:[%s53 + $0x38] sm:$0xff]
  %v5524 = vld [vmem:[%s53 + $0x40] sm:$0xff]
  %v5525 = vld [vmem:[%s53 + $0x48] sm:$0xff]
  %v5526 = vld [vmem:[%s53 + $0x50] sm:$0xff]
  %v5527 = vld [vmem:[%s53 + $0x58] sm:$0xff]
  %v5529 = vsel %vm362, %v5506, 0
  %5531 = vmatpush.msra.mxu0 0.0
  %5532 = vmatpush.msra.mxu0 0.0
  %5533 = vmatpush.msra.mxu0 0.0
  %5534 = vmatpush.msra.mxu0 0.0
  %5535 = vmatpush.msra.mxu0 0.0
  %5536 = vmatpush.msra.mxu0 0.0
  %5537 = vmatpush.msra.mxu0 0.0
  %5538 = vmatpush.msra.mxu0 0.0
  %5539 = vmatpush.msra.mxu0 0.0
  %5540 = vmatpush.msra.mxu0 0.0
  %5541 = vmatpush.msra.mxu0 0.0
  %5542 = vmatpush.msra.mxu0 0.0
  %5543 = vmatpush.msra.mxu0 %v5523
  %5544 = vmatpush.msra.mxu0 %v5522
  %5545 = vmatpush.msra.mxu0 %v5521
  %5546 = vmatpush.msra.mxu0 %v5520
  %5547 = vmatmul.f32.gmra.mxu0 %v5529
  %v5548 = vpop.f32.mrf.mxu0
  %v5549 = vadd.f32 0.0, %v5548
  %5550 = vdwg.mxu0
  %v5552 = vsel %vm362, %v5502, 0
  %5554 = vmatpush.msra.mxu0 0.0
  %5555 = vmatpush.msra.mxu0 0.0
  %5556 = vmatpush.msra.mxu0 0.0
  %5557 = vmatpush.msra.mxu0 0.0
  %5558 = vmatpush.msra.mxu0 0.0
  %5559 = vmatpush.msra.mxu0 0.0
  %5560 = vmatpush.msra.mxu0 0.0
  %5561 = vmatpush.msra.mxu0 0.0
  %5562 = vmatpush.msra.mxu0 0.0
  %5563 = vmatpush.msra.mxu0 0.0
  %5564 = vmatpush.msra.mxu0 0.0
  %5565 = vmatpush.msra.mxu0 0.0
  %5566 = vmatpush.msra.mxu0 %v5519
  %5567 = vmatpush.msra.mxu0 %v5518
  %5568 = vmatpush.msra.mxu0 %v5517
  %5569 = vmatpush.msra.mxu0 %v5516
  %5570 = vmatmul.f32.gmra.mxu0 %v5552
  %v5571 = vpop.f32.mrf.mxu0
  %v5572 = vadd.f32 %v5549, %v5571
  %5573 = vdwg.mxu0
  %v5575 = vsel %vm362, %v5515, 0
  %5577 = vmatpush.msra.mxu0 0.0
  %5578 = vmatpush.msra.mxu0 0.0
  %5579 = vmatpush.msra.mxu0 0.0
  %5580 = vmatpush.msra.mxu0 0.0
  %5581 = vmatpush.msra.mxu0 0.0
  %5582 = vmatpush.msra.mxu0 0.0
  %5583 = vmatpush.msra.mxu0 0.0
  %5584 = vmatpush.msra.mxu0 0.0
  %5585 = vmatpush.msra.mxu0 0.0
  %5586 = vmatpush.msra.mxu0 0.0
  %5587 = vmatpush.msra.mxu0 0.0
  %5588 = vmatpush.msra.mxu0 0.0
  %5589 = vmatpush.msra.mxu0 %v5527
  %5590 = vmatpush.msra.mxu0 %v5526
  %5591 = vmatpush.msra.mxu0 %v5525
  %5592 = vmatpush.msra.mxu0 %v5524
  %5593 = vmatmul.f32.gmra.mxu0 %v5575
  %v5594 = vpop.f32.mrf.mxu0
  %v5595 = vadd.f32 0.0, %v5594
  %5596 = vdwg.mxu0
  %v5597 = vadd.f32 %v5572, %v5595
  %v5598 = vld [vmem:[%s55] sm:$0x1]
  %v5600 = vperm.slane %v5598, 0
  %v5602 = vadd.f32 %v5597, %v5600
  %vm5603 = vcmp.ge.f32.partialorder %v5602, 0.0
  %v5604 = vmul.f32 %v5602, 0.01
  %v5605 = vsel %vm5603, %v5602, %v5604
  %v5606 = vld [vmem:[%s57] sm:$0xff]
  %v5607 = vld [vmem:[%s57 + $0x8] sm:$0xff]
  %v5608 = vld [vmem:[%s57 + $0x10] sm:$0xff]
  %v5609 = vld [vmem:[%s57 + $0x18] sm:$0xff]
  %v5610 = vld [vmem:[%s59] sm:$0x1]
  %v5612 = vperm.slane %v5610, 0
  %v5615 = vsel %vm362, %v5605, 0
  %5617 = vmatpush.msra.mxu0 0.0
  %5618 = vmatpush.msra.mxu0 0.0
  %5619 = vmatpush.msra.mxu0 0.0
  %5620 = vmatpush.msra.mxu0 0.0
  %5621 = vmatpush.msra.mxu0 0.0
  %5622 = vmatpush.msra.mxu0 0.0
  %5623 = vmatpush.msra.mxu0 0.0
  %5624 = vmatpush.msra.mxu0 0.0
  %5625 = vmatpush.msra.mxu0 0.0
  %5626 = vmatpush.msra.mxu0 0.0
  %5627 = vmatpush.msra.mxu0 0.0
  %5628 = vmatpush.msra.mxu0 0.0
  %5629 = vmatpush.msra.mxu0 %v5609
  %5630 = vmatpush.msra.mxu0 %v5608
  %5631 = vmatpush.msra.mxu0 %v5607
  %5632 = vmatpush.msra.mxu0 %v5606
  %5633 = vmatmul.f32.gmra.mxu0 %v5615
  %v5634 = vpop.f32.mrf.mxu0
  %v5635 = vadd.f32 %v5612, %v5634
  %5636 = vdwg.mxu0
  %vm5637 = vcmask 11264
  %5638 = vst.msk [vmem:[%s61] sm:$0xf] %vm5637, %v5635
  // Predicated region
  $region122: #{bic_forward.1} parent=0 // pred_check
    _
  $region123: #{bic_forward.1} parent=0 // pred_check_branch
    %5640 = sbr.rel (0) target = $region125
  $region124: #{bic_forward.1} parent=0 // pred_region
    _
  $region125: #{bic_forward.1} parent=0 // pred_fallthru
    _
  // Predicated region
  $region126: #{bic_forward.1} parent=0 // pred_check
    _
  $region127: #{bic_forward.1} parent=0 // pred_check_branch
    %5642 = sbr.rel (0) target = $region129
  $region128: #{bic_forward.1} parent=0 // pred_region
    _
  $region129: #{bic_forward.1} parent=0 // pred_fallthru
    _

</llo_original>
